<compile_context>
chip_gen: v5e
topology: v5e:2x2
jax: 0.10.0
libtpu: 0.0.40
codegen_flags: <defaults>
</compile_context>

<pallas_src>
import functools

import numpy as np
import jax
import jax.numpy as jnp
from jax.experimental import pallas as pl
from jax.experimental.pallas import tpu as pltpu


CP = 128  # pad every channel axis to a multiple of 128 lanes (lane-dense)

_COMPILER_PARAMS = pltpu.CompilerParams(
    dimension_semantics=("parallel",),
    vmem_limit_bytes=32 * 1024 * 1024)


# ------------------------------ Pallas kernels ------------------------------

def _conv_bn_act_kernel(*refs, kh, kw, ho, wo, act, has_residual):
    """Fused stride-1 conv (pre-padded input, BN scale folded into weights)
    + BN shift (+ optional residual add) + activation; one image per grid step.

      x_ref : (1, ho+kh-1, wo+kw-1, cin)  bf16  spatially padded input
      w_ref : (kh*kw, cin, cout)          bf16  tap-major, BN-scale-folded weights
      b_ref : (1, cout)                   f32   folded BN shift
      r_ref : (1, ho, wo, cout)           bf16  optional residual (pre-act add)
      o_ref : (1, ho, wo, cout)           bf16  output

    The tap loop uses contiguous VMEM window slices -> MXU matmuls; no im2col
    tensor is ever materialized in HBM.
    """
    if has_residual:
        x_ref, w_ref, b_ref, r_ref, o_ref = refs
    else:
        x_ref, w_ref, b_ref, o_ref = refs
        r_ref = None
    cin = x_ref.shape[-1]
    cout = o_ref.shape[-1]

    acc = None
    for a in range(kh):
        for b in range(kw):
            win = x_ref[0, a:a + ho, b:b + wo, :].reshape(ho * wo, cin)
            part = jnp.dot(win, w_ref[a * kw + b],
                           preferred_element_type=jnp.float32)
            acc = part if acc is None else acc + part

    y = acc + b_ref[...]
    if r_ref is not None:
        y = y + r_ref[0].reshape(ho * wo, cout).astype(jnp.float32)
    if act == "relu":
        y = jnp.maximum(y, 0.0)
    o_ref[0] = y.reshape(ho, wo, cout).astype(o_ref.dtype)


def conv_bn_act(x, pack, *, act, residual=None):
    """x: (B, Hp, Wp, Cin) bf16 NHWC, already spatially padded for this conv."""
    B, Hp, Wp, Cin = x.shape
    kh, kw = pack["kh"], pack["kw"]
    T, CinP, Cout = pack["w"].shape
    assert T == kh * kw and CinP == Cin
    Ho, Wo = Hp - kh + 1, Wp - kw + 1

    kern = functools.partial(_conv_bn_act_kernel, kh=kh, kw=kw, ho=Ho, wo=Wo,
                             act=act, has_residual=residual is not None)
    in_specs = [
        pl.BlockSpec((1, Hp, Wp, Cin), lambda i: (i, 0, 0, 0)),
        pl.BlockSpec((T, Cin, Cout), lambda i: (0, 0, 0)),
        pl.BlockSpec((1, Cout), lambda i: (0, 0)),
    ]
    args = [x, pack["w"], pack["shift"]]
    if residual is not None:
        in_specs.append(pl.BlockSpec((1, Ho, Wo, Cout), lambda i: (i, 0, 0, 0)))
        args.append(residual)

    return pl.pallas_call(
        kern,
        out_shape=jax.ShapeDtypeStruct((B, Ho, Wo, Cout), jnp.bfloat16),
        grid=(B,),
        in_specs=in_specs,
        out_specs=pl.BlockSpec((1, Ho, Wo, Cout), lambda i: (i, 0, 0, 0)),
        compiler_params=_COMPILER_PARAMS,
    )(*args)


def _expand_proj_add_kernel(h_ref, x_ref, we_ref, be_ref, wd_ref, bd_ref, o_ref,
                            *, ho, wo):
    """Fused bottleneck tail with projection shortcut:
        out = relu( conv1x1(h)*BNe + conv1x1(x0)*BNd )
    Both 1x1 convs are single MXU matmuls on flattened spatial maps.
      h_ref : (1, ho, wo, cmid)   bf16   output of the 3x3 conv
      x_ref : (1, ho, wo, cin0)   bf16   block input (shortcut source)
      we_ref: (1, cmid, cout)     bf16   expand weights (BN scale folded)
      be_ref: (1, cout)           f32    expand BN shift
      wd_ref: (1, cin0, cout)     bf16   downsample/projection weights
      bd_ref: (1, cout)           f32    downsample BN shift
      o_ref : (1, ho, wo, cout)   bf16
    """
    cm = h_ref.shape[-1]
    c0 = x_ref.shape[-1]
    cout = o_ref.shape[-1]
    hm = h_ref[0].reshape(ho * wo, cm)
    xm = x_ref[0].reshape(ho * wo, c0)
    y = (jnp.dot(hm, we_ref[0], preferred_element_type=jnp.float32) + be_ref[...]
         + jnp.dot(xm, wd_ref[0], preferred_element_type=jnp.float32) + bd_ref[...])
    y = jnp.maximum(y, 0.0)
    o_ref[0] = y.reshape(ho, wo, cout).astype(o_ref.dtype)


def expand_plus_proj(h, x0, pack_e, pack_d):
    """Fused expand-conv + projection-shortcut-conv + add + ReLU (block 1)."""
    B, Ho, Wo, Cm = h.shape
    _, _, _, C0 = x0.shape
    Cout = pack_e["w"].shape[-1]
    return pl.pallas_call(
        functools.partial(_expand_proj_add_kernel, ho=Ho, wo=Wo),
        out_shape=jax.ShapeDtypeStruct((B, Ho, Wo, Cout), jnp.bfloat16),
        grid=(B,),
        in_specs=[
            pl.BlockSpec((1, Ho, Wo, Cm), lambda i: (i, 0, 0, 0)),
            pl.BlockSpec((1, Ho, Wo, C0), lambda i: (i, 0, 0, 0)),
            pl.BlockSpec((1, Cm, Cout), lambda i: (0, 0, 0)),
            pl.BlockSpec((1, Cout), lambda i: (0, 0)),
            pl.BlockSpec((1, C0, Cout), lambda i: (0, 0, 0)),
            pl.BlockSpec((1, Cout), lambda i: (0, 0)),
        ],
        out_specs=pl.BlockSpec((1, Ho, Wo, Cout), lambda i: (i, 0, 0, 0)),
        compiler_params=_COMPILER_PARAMS,
    )(h, x0, pack_e["w"], pack_e["shift"], pack_d["w"], pack_d["shift"])


def _maxpool3x3s2_kernel(x_ref, o_ref, *, ho, wo, c):
    """MaxPool 3x3 / stride 2 / pad 1, expressed on a 2x2 space-to-depth input
    so every read is a contiguous, lane-aligned VMEM slice.
      x_ref: (1, ho+1, wo+1, 4*c)   o_ref: (1, ho, wo, c)
    """
    out = None
    for a in range(2):
        for b in range(2):
            for p in range(2):
                if 2 * a + p > 2:
                    continue
                for q in range(2):
                    if 2 * b + q > 2:
                        continue
                    ph = (p * 2 + q) * c
                    v = x_ref[0, a:a + ho, b:b + wo, ph:ph + c]
                    out = v if out is None else jnp.maximum(out, v)
    o_ref[0] = out.astype(o_ref.dtype)


def maxpool3x3_s2(y):
    """y: (B, H, W, C) bf16, post-ReLU (>=0) so zero padding == -inf padding."""
    B, H, W, C = y.shape
    yp = jnp.pad(y, ((0, 0), (1, 1), (1, 1), (0, 0)))
    Hs, Ws = (H + 2) // 2, (W + 2) // 2
    ys = jnp.transpose(yp.reshape(B, Hs, 2, Ws, 2, C),
                       (0, 1, 3, 2, 4, 5)).reshape(B, Hs, Ws, 4 * C)
    Ho, Wo = Hs - 1, Ws - 1
    return pl.pallas_call(
        functools.partial(_maxpool3x3s2_kernel, ho=Ho, wo=Wo, c=C),
        out_shape=jax.ShapeDtypeStruct((B, Ho, Wo, C), jnp.bfloat16),
        grid=(B,),
        in_specs=[pl.BlockSpec((1, Hs, Ws, 4 * C), lambda i: (i, 0, 0, 0))],
        out_specs=pl.BlockSpec((1, Ho, Wo, C), lambda i: (i, 0, 0, 0)),
        compiler_params=_COMPILER_PARAMS,
    )(ys)


def _pool_fc_kernel(x_ref, w_ref, b_ref, o_ref):
    """Fused tail: global spatial max pool (MaxPool2d over the full map) +
    Linear classifier.  x: (B,H,W,C) bf16; w: (C, Npad) bf16; b: (1, Npad) f32."""
    bsz, h, w, c = x_ref.shape
    feat = jnp.max(x_ref[...].reshape(bsz, h * w, c), axis=1)         # (B, C)
    o_ref[...] = (jnp.dot(feat, w_ref[...],
                          preferred_element_type=jnp.float32) + b_ref[...])


def global_maxpool_linear(x, w, bias):
    B = x.shape[0]
    NP = w.shape[1]
    return pl.pallas_call(
        _pool_fc_kernel,
        out_shape=jax.ShapeDtypeStruct((B, NP), jnp.float32),
    )(x, w, bias)


# ------------------------------- glue (JAX) --------------------------------

def _space_to_depth2(x):
    B, H, W, C = x.shape
    x = x.reshape(B, H // 2, 2, W // 2, 2, C)
    x = jnp.transpose(x, (0, 1, 3, 2, 4, 5))
    return x.reshape(B, H // 2, W // 2, 4 * C)


def _pad1(x):
    return jnp.pad(x, ((0, 0), (1, 1), (1, 1), (0, 0)))


# ---------------------------- parameter packing -----------------------------

def _fold_bn(gamma, beta, mean, var, eps=1e-5):
    scale = gamma / jnp.sqrt(var + eps)
    shift = beta - mean * scale
    return scale, shift


def _pad_shift(shift, cout_p):
    c = shift.shape[0]
    return jnp.zeros((1, cout_p), jnp.float32).at[0, :c].set(shift)


def _conv_pack(w_true, gamma, beta, mean, var, cin_p, cout_p):
    cout, cin, kh, kw = w_true.shape
    scale, shift = _fold_bn(gamma, beta, mean, var)
    # fold BN scale into the (f32) weights, then pad + cast to bf16
    wt = (jnp.transpose(w_true, (2, 3, 1, 0)).reshape(kh * kw, cin, cout)
          * scale[None, None, :])
    wp = jnp.zeros((kh * kw, cin_p, cout_p), jnp.float32).at[:, :cin, :cout].set(wt)
    return {"w": wp.astype(jnp.bfloat16), "shift": _pad_shift(shift, cout_p),
            "kh": kh, "kw": kw}


def _stem_pack(w7, gamma, beta, mean, var, cout_p):
    # conv 7x7 / stride 2 re-expressed as a stride-1 4x4 conv over a 2x2
    # space-to-depth input (channel order p*2*cin + q*cin + c); phantom taps
    # (2a+p == 7 or 2b+q == 7) get zero weights.  BN scale folded into weights.
    cout, cin, kh, kw = w7.shape
    scale, shift = _fold_bn(gamma, beta, mean, var)
    w7n = np.asarray(w7 * scale[:, None, None, None])
    ws = np.zeros((4, 4, 2, 2, cin, cout_p), np.float32)
    for a in range(4):
        for p in range(2):
            i = 2 * a + p
            if i >= kh:
                continue
            for b in range(4):
                for q in range(2):
                    j = 2 * b + q
                    if j >= kw:
                        continue
                    ws[a, b, p, q, :, :cout] = w7n[:, :, i, j].T
    wp = jnp.asarray(ws.reshape(16, 4 * cin, cout_p), jnp.bfloat16)
    return {"w": wp, "shift": _pad_shift(shift, cout_p), "kh": 4, "kw": 4}


def init_params(key, *, num_classes=80):
    stem_c, mid_c, out_c = 16, 16, 64          # reduced widths (ResNet-101: 64/64/256...)
    ncp = -(-num_classes // 128) * 128

    keys = jax.random.split(key, 64)
    kit = iter(keys)

    def nrm(shape, s=0.1):
        return jax.random.normal(next(kit), shape, jnp.float32) * s

    def bn_params(c):
        gamma = 1.0 + 0.1 * jax.random.normal(next(kit), (c,), jnp.float32)
        beta = 0.05 * jax.random.normal(next(kit), (c,), jnp.float32)
        mean = 0.05 * jax.random.normal(next(kit), (c,), jnp.float32)
        var = jnp.ones((c,), jnp.float32)
        return gamma, beta, mean, var

    p = {"num_classes": num_classes}
    p["stem"] = _stem_pack(nrm((stem_c, 3, 7, 7)), *bn_params(stem_c), CP)

    # bottleneck block 1 (projection shortcut)
    p["b1_reduce"] = _conv_pack(nrm((mid_c, stem_c, 1, 1)), *bn_params(mid_c), CP, CP)
    p["b1_conv3"] = _conv_pack(nrm((mid_c, mid_c, 3, 3)), *bn_params(mid_c), CP, CP)
    p["b1_expand"] = _conv_pack(nrm((out_c, mid_c, 1, 1)), *bn_params(out_c), CP, CP)
    p["b1_down"] = _conv_pack(nrm((out_c, stem_c, 1, 1)), *bn_params(out_c), CP, CP)
    # bottleneck block 2 (identity shortcut)
    p["b2_reduce"] = _conv_pack(nrm((mid_c, out_c, 1, 1)), *bn_params(mid_c), CP, CP)
    p["b2_conv3"] = _conv_pack(nrm((mid_c, mid_c, 3, 3)), *bn_params(mid_c), CP, CP)
    p["b2_expand"] = _conv_pack(nrm((out_c, mid_c, 1, 1)), *bn_params(out_c), CP, CP)

    fc_w = nrm((num_classes, out_c))
    fc_b = nrm((num_classes,), 0.05)
    p["fc_w"] = (jnp.zeros((CP, ncp), jnp.float32)
                 .at[:out_c, :num_classes].set(fc_w.T)).astype(jnp.bfloat16)
    p["fc_b"] = jnp.zeros((1, ncp), jnp.float32).at[0, :num_classes].set(fc_b)
    return p


# -------------------------------- forward ----------------------------------

def resnet101_gradcam_forward(imgs, params, labels=None, return_cam=False):
    """imgs: (B, 3, H, W) float32 (PyTorch NCHW). Returns (B, num_classes) logits."""
    x = jnp.transpose(imgs, (0, 2, 3, 1)).astype(jnp.float32)      # NHWC
    B, H, W, _ = x.shape
    assert H % 2 == 0 and W % 2 == 0

    # --- stem: conv7x7/s2/p3 + BN + ReLU (stride-1 inside the kernel via s2d) ---
    xp = jnp.pad(x, ((0, 0), (3, 3), (3, 3), (0, 0)))
    xs = _space_to_depth2(xp).astype(jnp.bfloat16)
    y = conv_bn_act(xs, params["stem"], act="relu")

    # --- maxpool 3x3/s2/p1 (zero padding is exact post-ReLU) ---
    x0 = maxpool3x3_s2(y)

    # --- bottleneck block 1 (projection shortcut); stand-in for layer1..layer4 ---
    h = conv_bn_act(x0, params["b1_reduce"], act="relu")
    h = conv_bn_act(_pad1(h), params["b1_conv3"], act="relu")
    x1 = expand_plus_proj(h, x0, params["b1_expand"], params["b1_down"])

    # --- bottleneck block 2 (identity shortcut) ---
    h = conv_bn_act(x1, params["b2_reduce"], act="relu")
    h = conv_bn_act(_pad1(h), params["b2_conv3"], act="relu")
    x2 = conv_bn_act(h, params["b2_expand"], act="relu", residual=x1)

    # --- fused tail: global max pool (nn.MaxPool2d over full map) + Linear ---
    logits_padded = global_maxpool_linear(x2, params["fc_w"], params["fc_b"])
    logits = logits_padded[:, :params["num_classes"]]

    if return_cam:
        # TODO(synk): GradCAM CAM extraction needs gradients / backward hooks on
        # the last conv feature map; only forward logits are produced here.
        pass
    return logits


if __name__ == "__main__":
    key = jax.random.PRNGKey(0)
    k_params, k_imgs = jax.random.split(key)
    params = init_params(k_params, num_classes=80)
    imgs = jax.random.normal(k_imgs, (2, 3, 32, 32), jnp.float32)

    fwd = jax.jit(lambda im: resnet101_gradcam_forward(im, params))
    logits = jax.block_until_ready(fwd(imgs))
    assert logits.shape == (2, 80), logits.shape
    assert bool(jnp.all(jnp.isfinite(logits)))
    print("KERNEL_OK")
</pallas_src>

<mosaic_0001>
module attributes {stable_mosaic.version = 11 : i64} {
  func.func @_conv_bn_act_kernel(%arg0: i32, %arg1: memref<1x19x19x12xbf16, #tpu.memory_space<vmem>>, %arg2: memref<16x12x128xbf16, #tpu.memory_space<vmem>>, %arg3: memref<1x128xf32, #tpu.memory_space<vmem>>, %arg4: memref<1x16x16x128xbf16, #tpu.memory_space<vmem>>) attributes {dimension_semantics = [#tpu.dimension_semantics<parallel>], iteration_bounds = array<i64: 2>, scalar_prefetch = 0 : i64, scratch_operands = 0 : i64, tpu.core_type = #tpu.core_type<tc>, window_params = [{transform_indices = @transform_0, window_bounds = array<i64: 1, 19, 19, 12>}, {pipeline_mode = #tpu.pipeline_mode<synchronous>, transform_indices = @transform_1, window_bounds = array<i64: 16, 12, 128>}, {pipeline_mode = #tpu.pipeline_mode<synchronous>, transform_indices = @transform_2, window_bounds = array<i64: 1, 128>}, {transform_indices = @transform_3, window_bounds = array<i64: 1, 16, 16, 128>}]} {
    %c0 = arith.constant 0 : index
    %c0_0 = arith.constant 0 : index
    %c0_1 = arith.constant 0 : index
    %c0_2 = arith.constant 0 : index
    %0 = vector.load %arg1[%c0, %c0_0, %c0_1, %c0_2] : memref<1x19x19x12xbf16, #tpu.memory_space<vmem>>, vector<1x16x16x12xbf16>
    %1 = vector.shape_cast %0 : vector<1x16x16x12xbf16> to vector<16x16x12xbf16>
    %2 = vector.shape_cast %1 : vector<16x16x12xbf16> to vector<256x12xbf16>
    %c0_3 = arith.constant 0 : index
    %c0_4 = arith.constant 0 : index
    %c0_5 = arith.constant 0 : index
    %3 = vector.load %arg2[%c0_3, %c0_4, %c0_5] : memref<16x12x128xbf16, #tpu.memory_space<vmem>>, vector<1x12x128xbf16>
    %4 = vector.shape_cast %3 : vector<1x12x128xbf16> to vector<12x128xbf16>
    %cst = arith.constant dense<0.000000e+00> : vector<256x128xf32>
    %5 = tpu.matmul %2, %4, %cst {dimension_numbers = #tpu.dot_dimension_numbers<[1], [0], [0], [1], [0, 0, 1, 1], [], []>} : vector<256x12xbf16>, vector<12x128xbf16>, vector<256x128xf32> -> vector<256x128xf32>
    %c0_6 = arith.constant 0 : index
    %c0_7 = arith.constant 0 : index
    %c1 = arith.constant 1 : index
    %c0_8 = arith.constant 0 : index
    %6 = vector.load %arg1[%c0_6, %c0_7, %c1, %c0_8] : memref<1x19x19x12xbf16, #tpu.memory_space<vmem>>, vector<1x16x16x12xbf16>
    %7 = vector.shape_cast %6 : vector<1x16x16x12xbf16> to vector<16x16x12xbf16>
    %8 = vector.shape_cast %7 : vector<16x16x12xbf16> to vector<256x12xbf16>
    %c1_9 = arith.constant 1 : index
    %c0_10 = arith.constant 0 : index
    %c0_11 = arith.constant 0 : index
    %9 = vector.load %arg2[%c1_9, %c0_10, %c0_11] : memref<16x12x128xbf16, #tpu.memory_space<vmem>>, vector<1x12x128xbf16>
    %10 = vector.shape_cast %9 : vector<1x12x128xbf16> to vector<12x128xbf16>
    %cst_12 = arith.constant dense<0.000000e+00> : vector<256x128xf32>
    %11 = tpu.matmul %8, %10, %cst_12 {dimension_numbers = #tpu.dot_dimension_numbers<[1], [0], [0], [1], [0, 0, 1, 1], [], []>} : vector<256x12xbf16>, vector<12x128xbf16>, vector<256x128xf32> -> vector<256x128xf32>
    %12 = arith.addf %5, %11 : vector<256x128xf32>
    %c0_13 = arith.constant 0 : index
    %c0_14 = arith.constant 0 : index
    %c2 = arith.constant 2 : index
    %c0_15 = arith.constant 0 : index
    %13 = vector.load %arg1[%c0_13, %c0_14, %c2, %c0_15] : memref<1x19x19x12xbf16, #tpu.memory_space<vmem>>, vector<1x16x16x12xbf16>
    %14 = vector.shape_cast %13 : vector<1x16x16x12xbf16> to vector<16x16x12xbf16>
    %15 = vector.shape_cast %14 : vector<16x16x12xbf16> to vector<256x12xbf16>
    %c2_16 = arith.constant 2 : index
    %c0_17 = arith.constant 0 : index
    %c0_18 = arith.constant 0 : index
    %16 = vector.load %arg2[%c2_16, %c0_17, %c0_18] : memref<16x12x128xbf16, #tpu.memory_space<vmem>>, vector<1x12x128xbf16>
    %17 = vector.shape_cast %16 : vector<1x12x128xbf16> to vector<12x128xbf16>
    %cst_19 = arith.constant dense<0.000000e+00> : vector<256x128xf32>
    %18 = tpu.matmul %15, %17, %cst_19 {dimension_numbers = #tpu.dot_dimension_numbers<[1], [0], [0], [1], [0, 0, 1, 1], [], []>} : vector<256x12xbf16>, vector<12x128xbf16>, vector<256x128xf32> -> vector<256x128xf32>
    %19 = arith.addf %12, %18 : vector<256x128xf32>
    %c0_20 = arith.constant 0 : index
    %c0_21 = arith.constant 0 : index
    %c3 = arith.constant 3 : index
    %c0_22 = arith.constant 0 : index
    %20 = vector.load %arg1[%c0_20, %c0_21, %c3, %c0_22] : memref<1x19x19x12xbf16, #tpu.memory_space<vmem>>, vector<1x16x16x12xbf16>
    %21 = vector.shape_cast %20 : vector<1x16x16x12xbf16> to vector<16x16x12xbf16>
    %22 = vector.shape_cast %21 : vector<16x16x12xbf16> to vector<256x12xbf16>
    %c3_23 = arith.constant 3 : index
    %c0_24 = arith.constant 0 : index
    %c0_25 = arith.constant 0 : index
    %23 = vector.load %arg2[%c3_23, %c0_24, %c0_25] : memref<16x12x128xbf16, #tpu.memory_space<vmem>>, vector<1x12x128xbf16>
    %24 = vector.shape_cast %23 : vector<1x12x128xbf16> to vector<12x128xbf16>
    %cst_26 = arith.constant dense<0.000000e+00> : vector<256x128xf32>
    %25 = tpu.matmul %22, %24, %cst_26 {dimension_numbers = #tpu.dot_dimension_numbers<[1], [0], [0], [1], [0, 0, 1, 1], [], []>} : vector<256x12xbf16>, vector<12x128xbf16>, vector<256x128xf32> -> vector<256x128xf32>
    %26 = arith.addf %19, %25 : vector<256x128xf32>
    %c0_27 = arith.constant 0 : index
    %c1_28 = arith.constant 1 : index
    %c0_29 = arith.constant 0 : index
    %c0_30 = arith.constant 0 : index
    %27 = vector.load %arg1[%c0_27, %c1_28, %c0_29, %c0_30] : memref<1x19x19x12xbf16, #tpu.memory_space<vmem>>, vector<1x16x16x12xbf16>
    %28 = vector.shape_cast %27 : vector<1x16x16x12xbf16> to vector<16x16x12xbf16>
    %29 = vector.shape_cast %28 : vector<16x16x12xbf16> to vector<256x12xbf16>
    %c4 = arith.constant 4 : index
    %c0_31 = arith.constant 0 : index
    %c0_32 = arith.constant 0 : index
    %30 = vector.load %arg2[%c4, %c0_31, %c0_32] : memref<16x12x128xbf16, #tpu.memory_space<vmem>>, vector<1x12x128xbf16>
    %31 = vector.shape_cast %30 : vector<1x12x128xbf16> to vector<12x128xbf16>
    %cst_33 = arith.constant dense<0.000000e+00> : vector<256x128xf32>
    %32 = tpu.matmul %29, %31, %cst_33 {dimension_numbers = #tpu.dot_dimension_numbers<[1], [0], [0], [1], [0, 0, 1, 1], [], []>} : vector<256x12xbf16>, vector<12x128xbf16>, vector<256x128xf32> -> vector<256x128xf32>
    %33 = arith.addf %26, %32 : vector<256x128xf32>
    %c0_34 = arith.constant 0 : index
    %c1_35 = arith.constant 1 : index
    %c1_36 = arith.constant 1 : index
    %c0_37 = arith.constant 0 : index
    %34 = vector.load %arg1[%c0_34, %c1_35, %c1_36, %c0_37] : memref<1x19x19x12xbf16, #tpu.memory_space<vmem>>, vector<1x16x16x12xbf16>
    %35 = vector.shape_cast %34 : vector<1x16x16x12xbf16> to vector<16x16x12xbf16>
    %36 = vector.shape_cast %35 : vector<16x16x12xbf16> to vector<256x12xbf16>
    %c5 = arith.constant 5 : index
    %c0_38 = arith.constant 0 : index
    %c0_39 = arith.constant 0 : index
    %37 = vector.load %arg2[%c5, %c0_38, %c0_39] : memref<16x12x128xbf16, #tpu.memory_space<vmem>>, vector<1x12x128xbf16>
    %38 = vector.shape_cast %37 : vector<1x12x128xbf16> to vector<12x128xbf16>
    %cst_40 = arith.constant dense<0.000000e+00> : vector<256x128xf32>
    %39 = tpu.matmul %36, %38, %cst_40 {dimension_numbers = #tpu.dot_dimension_numbers<[1], [0], [0], [1], [0, 0, 1, 1], [], []>} : vector<256x12xbf16>, vector<12x128xbf16>, vector<256x128xf32> -> vector<256x128xf32>
    %40 = arith.addf %33, %39 : vector<256x128xf32>
    %c0_41 = arith.constant 0 : index
    %c1_42 = arith.constant 1 : index
    %c2_43 = arith.constant 2 : index
    %c0_44 = arith.constant 0 : index
    %41 = vector.load %arg1[%c0_41, %c1_42, %c2_43, %c0_44] : memref<1x19x19x12xbf16, #tpu.memory_space<vmem>>, vector<1x16x16x12xbf16>
    %42 = vector.shape_cast %41 : vector<1x16x16x12xbf16> to vector<16x16x12xbf16>
    %43 = vector.shape_cast %42 : vector<16x16x12xbf16> to vector<256x12xbf16>
    %c6 = arith.constant 6 : index
    %c0_45 = arith.constant 0 : index
    %c0_46 = arith.constant 0 : index
    %44 = vector.load %arg2[%c6, %c0_45, %c0_46] : memref<16x12x128xbf16, #tpu.memory_space<vmem>>, vector<1x12x128xbf16>
    %45 = vector.shape_cast %44 : vector<1x12x128xbf16> to vector<12x128xbf16>
    %cst_47 = arith.constant dense<0.000000e+00> : vector<256x128xf32>
    %46 = tpu.matmul %43, %45, %cst_47 {dimension_numbers = #tpu.dot_dimension_numbers<[1], [0], [0], [1], [0, 0, 1, 1], [], []>} : vector<256x12xbf16>, vector<12x128xbf16>, vector<256x128xf32> -> vector<256x128xf32>
    %47 = arith.addf %40, %46 : vector<256x128xf32>
    %c0_48 = arith.constant 0 : index
    %c1_49 = arith.constant 1 : index
    %c3_50 = arith.constant 3 : index
    %c0_51 = arith.constant 0 : index
    %48 = vector.load %arg1[%c0_48, %c1_49, %c3_50, %c0_51] : memref<1x19x19x12xbf16, #tpu.memory_space<vmem>>, vector<1x16x16x12xbf16>
    %49 = vector.shape_cast %48 : vector<1x16x16x12xbf16> to vector<16x16x12xbf16>
    %50 = vector.shape_cast %49 : vector<16x16x12xbf16> to vector<256x12xbf16>
    %c7 = arith.constant 7 : index
    %c0_52 = arith.constant 0 : index
    %c0_53 = arith.constant 0 : index
    %51 = vector.load %arg2[%c7, %c0_52, %c0_53] : memref<16x12x128xbf16, #tpu.memory_space<vmem>>, vector<1x12x128xbf16>
    %52 = vector.shape_cast %51 : vector<1x12x128xbf16> to vector<12x128xbf16>
    %cst_54 = arith.constant dense<0.000000e+00> : vector<256x128xf32>
    %53 = tpu.matmul %50, %52, %cst_54 {dimension_numbers = #tpu.dot_dimension_numbers<[1], [0], [0], [1], [0, 0, 1, 1], [], []>} : vector<256x12xbf16>, vector<12x128xbf16>, vector<256x128xf32> -> vector<256x128xf32>
    %54 = arith.addf %47, %53 : vector<256x128xf32>
    %c0_55 = arith.constant 0 : index
    %c2_56 = arith.constant 2 : index
    %c0_57 = arith.constant 0 : index
    %c0_58 = arith.constant 0 : index
    %55 = vector.load %arg1[%c0_55, %c2_56, %c0_57, %c0_58] : memref<1x19x19x12xbf16, #tpu.memory_space<vmem>>, vector<1x16x16x12xbf16>
    %56 = vector.shape_cast %55 : vector<1x16x16x12xbf16> to vector<16x16x12xbf16>
    %57 = vector.shape_cast %56 : vector<16x16x12xbf16> to vector<256x12xbf16>
    %c8 = arith.constant 8 : index
    %c0_59 = arith.constant 0 : index
    %c0_60 = arith.constant 0 : index
    %58 = vector.load %arg2[%c8, %c0_59, %c0_60] : memref<16x12x128xbf16, #tpu.memory_space<vmem>>, vector<1x12x128xbf16>
    %59 = vector.shape_cast %58 : vector<1x12x128xbf16> to vector<12x128xbf16>
    %cst_61 = arith.constant dense<0.000000e+00> : vector<256x128xf32>
    %60 = tpu.matmul %57, %59, %cst_61 {dimension_numbers = #tpu.dot_dimension_numbers<[1], [0], [0], [1], [0, 0, 1, 1], [], []>} : vector<256x12xbf16>, vector<12x128xbf16>, vector<256x128xf32> -> vector<256x128xf32>
    %61 = arith.addf %54, %60 : vector<256x128xf32>
    %c0_62 = arith.constant 0 : index
    %c2_63 = arith.constant 2 : index
    %c1_64 = arith.constant 1 : index
    %c0_65 = arith.constant 0 : index
    %62 = vector.load %arg1[%c0_62, %c2_63, %c1_64, %c0_65] : memref<1x19x19x12xbf16, #tpu.memory_space<vmem>>, vector<1x16x16x12xbf16>
    %63 = vector.shape_cast %62 : vector<1x16x16x12xbf16> to vector<16x16x12xbf16>
    %64 = vector.shape_cast %63 : vector<16x16x12xbf16> to vector<256x12xbf16>
    %c9 = arith.constant 9 : index
    %c0_66 = arith.constant 0 : index
    %c0_67 = arith.constant 0 : index
    %65 = vector.load %arg2[%c9, %c0_66, %c0_67] : memref<16x12x128xbf16, #tpu.memory_space<vmem>>, vector<1x12x128xbf16>
    %66 = vector.shape_cast %65 : vector<1x12x128xbf16> to vector<12x128xbf16>
    %cst_68 = arith.constant dense<0.000000e+00> : vector<256x128xf32>
    %67 = tpu.matmul %64, %66, %cst_68 {dimension_numbers = #tpu.dot_dimension_numbers<[1], [0], [0], [1], [0, 0, 1, 1], [], []>} : vector<256x12xbf16>, vector<12x128xbf16>, vector<256x128xf32> -> vector<256x128xf32>
    %68 = arith.addf %61, %67 : vector<256x128xf32>
    %c0_69 = arith.constant 0 : index
    %c2_70 = arith.constant 2 : index
    %c2_71 = arith.constant 2 : index
    %c0_72 = arith.constant 0 : index
    %69 = vector.load %arg1[%c0_69, %c2_70, %c2_71, %c0_72] : memref<1x19x19x12xbf16, #tpu.memory_space<vmem>>, vector<1x16x16x12xbf16>
    %70 = vector.shape_cast %69 : vector<1x16x16x12xbf16> to vector<16x16x12xbf16>
    %71 = vector.shape_cast %70 : vector<16x16x12xbf16> to vector<256x12xbf16>
    %c10 = arith.constant 10 : index
    %c0_73 = arith.constant 0 : index
    %c0_74 = arith.constant 0 : index
    %72 = vector.load %arg2[%c10, %c0_73, %c0_74] : memref<16x12x128xbf16, #tpu.memory_space<vmem>>, vector<1x12x128xbf16>
    %73 = vector.shape_cast %72 : vector<1x12x128xbf16> to vector<12x128xbf16>
    %cst_75 = arith.constant dense<0.000000e+00> : vector<256x128xf32>
    %74 = tpu.matmul %71, %73, %cst_75 {dimension_numbers = #tpu.dot_dimension_numbers<[1], [0], [0], [1], [0, 0, 1, 1], [], []>} : vector<256x12xbf16>, vector<12x128xbf16>, vector<256x128xf32> -> vector<256x128xf32>
    %75 = arith.addf %68, %74 : vector<256x128xf32>
    %c0_76 = arith.constant 0 : index
    %c2_77 = arith.constant 2 : index
    %c3_78 = arith.constant 3 : index
    %c0_79 = arith.constant 0 : index
    %76 = vector.load %arg1[%c0_76, %c2_77, %c3_78, %c0_79] : memref<1x19x19x12xbf16, #tpu.memory_space<vmem>>, vector<1x16x16x12xbf16>
    %77 = vector.shape_cast %76 : vector<1x16x16x12xbf16> to vector<16x16x12xbf16>
    %78 = vector.shape_cast %77 : vector<16x16x12xbf16> to vector<256x12xbf16>
    %c11 = arith.constant 11 : index
    %c0_80 = arith.constant 0 : index
    %c0_81 = arith.constant 0 : index
    %79 = vector.load %arg2[%c11, %c0_80, %c0_81] : memref<16x12x128xbf16, #tpu.memory_space<vmem>>, vector<1x12x128xbf16>
    %80 = vector.shape_cast %79 : vector<1x12x128xbf16> to vector<12x128xbf16>
    %cst_82 = arith.constant dense<0.000000e+00> : vector<256x128xf32>
    %81 = tpu.matmul %78, %80, %cst_82 {dimension_numbers = #tpu.dot_dimension_numbers<[1], [0], [0], [1], [0, 0, 1, 1], [], []>} : vector<256x12xbf16>, vector<12x128xbf16>, vector<256x128xf32> -> vector<256x128xf32>
    %82 = arith.addf %75, %81 : vector<256x128xf32>
    %c0_83 = arith.constant 0 : index
    %c3_84 = arith.constant 3 : index
    %c0_85 = arith.constant 0 : index
    %c0_86 = arith.constant 0 : index
    %83 = vector.load %arg1[%c0_83, %c3_84, %c0_85, %c0_86] : memref<1x19x19x12xbf16, #tpu.memory_space<vmem>>, vector<1x16x16x12xbf16>
    %84 = vector.shape_cast %83 : vector<1x16x16x12xbf16> to vector<16x16x12xbf16>
    %85 = vector.shape_cast %84 : vector<16x16x12xbf16> to vector<256x12xbf16>
    %c12 = arith.constant 12 : index
    %c0_87 = arith.constant 0 : index
    %c0_88 = arith.constant 0 : index
    %86 = vector.load %arg2[%c12, %c0_87, %c0_88] : memref<16x12x128xbf16, #tpu.memory_space<vmem>>, vector<1x12x128xbf16>
    %87 = vector.shape_cast %86 : vector<1x12x128xbf16> to vector<12x128xbf16>
    %cst_89 = arith.constant dense<0.000000e+00> : vector<256x128xf32>
    %88 = tpu.matmul %85, %87, %cst_89 {dimension_numbers = #tpu.dot_dimension_numbers<[1], [0], [0], [1], [0, 0, 1, 1], [], []>} : vector<256x12xbf16>, vector<12x128xbf16>, vector<256x128xf32> -> vector<256x128xf32>
    %89 = arith.addf %82, %88 : vector<256x128xf32>
    %c0_90 = arith.constant 0 : index
    %c3_91 = arith.constant 3 : index
    %c1_92 = arith.constant 1 : index
    %c0_93 = arith.constant 0 : index
    %90 = vector.load %arg1[%c0_90, %c3_91, %c1_92, %c0_93] : memref<1x19x19x12xbf16, #tpu.memory_space<vmem>>, vector<1x16x16x12xbf16>
    %91 = vector.shape_cast %90 : vector<1x16x16x12xbf16> to vector<16x16x12xbf16>
    %92 = vector.shape_cast %91 : vector<16x16x12xbf16> to vector<256x12xbf16>
    %c13 = arith.constant 13 : index
    %c0_94 = arith.constant 0 : index
    %c0_95 = arith.constant 0 : index
    %93 = vector.load %arg2[%c13, %c0_94, %c0_95] : memref<16x12x128xbf16, #tpu.memory_space<vmem>>, vector<1x12x128xbf16>
    %94 = vector.shape_cast %93 : vector<1x12x128xbf16> to vector<12x128xbf16>
    %cst_96 = arith.constant dense<0.000000e+00> : vector<256x128xf32>
    %95 = tpu.matmul %92, %94, %cst_96 {dimension_numbers = #tpu.dot_dimension_numbers<[1], [0], [0], [1], [0, 0, 1, 1], [], []>} : vector<256x12xbf16>, vector<12x128xbf16>, vector<256x128xf32> -> vector<256x128xf32>
    %96 = arith.addf %89, %95 : vector<256x128xf32>
    %c0_97 = arith.constant 0 : index
    %c3_98 = arith.constant 3 : index
    %c2_99 = arith.constant 2 : index
    %c0_100 = arith.constant 0 : index
    %97 = vector.load %arg1[%c0_97, %c3_98, %c2_99, %c0_100] : memref<1x19x19x12xbf16, #tpu.memory_space<vmem>>, vector<1x16x16x12xbf16>
    %98 = vector.shape_cast %97 : vector<1x16x16x12xbf16> to vector<16x16x12xbf16>
    %99 = vector.shape_cast %98 : vector<16x16x12xbf16> to vector<256x12xbf16>
    %c14 = arith.constant 14 : index
    %c0_101 = arith.constant 0 : index
    %c0_102 = arith.constant 0 : index
    %100 = vector.load %arg2[%c14, %c0_101, %c0_102] : memref<16x12x128xbf16, #tpu.memory_space<vmem>>, vector<1x12x128xbf16>
    %101 = vector.shape_cast %100 : vector<1x12x128xbf16> to vector<12x128xbf16>
    %cst_103 = arith.constant dense<0.000000e+00> : vector<256x128xf32>
    %102 = tpu.matmul %99, %101, %cst_103 {dimension_numbers = #tpu.dot_dimension_numbers<[1], [0], [0], [1], [0, 0, 1, 1], [], []>} : vector<256x12xbf16>, vector<12x128xbf16>, vector<256x128xf32> -> vector<256x128xf32>
    %103 = arith.addf %96, %102 : vector<256x128xf32>
    %c0_104 = arith.constant 0 : index
    %c3_105 = arith.constant 3 : index
    %c3_106 = arith.constant 3 : index
    %c0_107 = arith.constant 0 : index
    %104 = vector.load %arg1[%c0_104, %c3_105, %c3_106, %c0_107] : memref<1x19x19x12xbf16, #tpu.memory_space<vmem>>, vector<1x16x16x12xbf16>
    %105 = vector.shape_cast %104 : vector<1x16x16x12xbf16> to vector<16x16x12xbf16>
    %106 = vector.shape_cast %105 : vector<16x16x12xbf16> to vector<256x12xbf16>
    %c15 = arith.constant 15 : index
    %c0_108 = arith.constant 0 : index
    %c0_109 = arith.constant 0 : index
    %107 = vector.load %arg2[%c15, %c0_108, %c0_109] : memref<16x12x128xbf16, #tpu.memory_space<vmem>>, vector<1x12x128xbf16>
    %108 = vector.shape_cast %107 : vector<1x12x128xbf16> to vector<12x128xbf16>
    %cst_110 = arith.constant dense<0.000000e+00> : vector<256x128xf32>
    %109 = tpu.matmul %106, %108, %cst_110 {dimension_numbers = #tpu.dot_dimension_numbers<[1], [0], [0], [1], [0, 0, 1, 1], [], []>} : vector<256x12xbf16>, vector<12x128xbf16>, vector<256x128xf32> -> vector<256x128xf32>
    %110 = arith.addf %103, %109 : vector<256x128xf32>
    %c0_111 = arith.constant 0 : index
    %c0_112 = arith.constant 0 : index
    %111 = vector.load %arg3[%c0_111, %c0_112] : memref<1x128xf32, #tpu.memory_space<vmem>>, vector<1x128xf32>
    %112 = vector.broadcast %111 : vector<1x128xf32> to vector<256x128xf32>
    %113 = arith.addf %110, %112 : vector<256x128xf32>
    %cst_113 = arith.constant 0.000000e+00 : f32
    %114 = vector.broadcast %cst_113 : f32 to vector<256x128xf32>
    %115 = arith.maximumf %113, %114 : vector<256x128xf32>
    %116 = vector.shape_cast %115 : vector<256x128xf32> to vector<16x16x128xf32>
    %117 = arith.truncf %116 : vector<16x16x128xf32> to vector<16x16x128xbf16>
    %c0_114 = arith.constant 0 : index
    %c0_115 = arith.constant 0 : index
    %c0_116 = arith.constant 0 : index
    %c0_117 = arith.constant 0 : index
    %118 = vector.load %arg4[%c0_114, %c0_115, %c0_116, %c0_117] : memref<1x16x16x128xbf16, #tpu.memory_space<vmem>>, vector<1x16x16x128xbf16>
    %119 = vector.shape_cast %118 : vector<1x16x16x128xbf16> to vector<16x16x128xbf16>
    %120 = vector.shape_cast %117 : vector<16x16x128xbf16> to vector<1x16x16x128xbf16>
    tpu.vector_store %arg4[%c0_114, %c0_115, %c0_116, %c0_117], %120 {strides = array<i32>} : memref<1x16x16x128xbf16, #tpu.memory_space<vmem>>, vector<1x16x16x128xbf16>,
    return
  }
  func.func @transform_0(%arg0: i32) -> (i32, i32, i32, i32) {
    %c0_i32 = arith.constant 0 : i32
    %c0_i32_0 = arith.constant 0 : i32
    %c0_i32_1 = arith.constant 0 : i32
    %c0_i32_2 = arith.constant 0 : i32
    return %arg0, %c0_i32, %c0_i32_0, %c0_i32_1 : i32, i32, i32, i32
  }
  func.func @transform_1(%arg0: i32) -> (i32, i32, i32) {
    %c0_i32 = arith.constant 0 : i32
    %c0_i32_0 = arith.constant 0 : i32
    %c0_i32_1 = arith.constant 0 : i32
    %c0_i32_2 = arith.constant 0 : i32
    return %c0_i32, %c0_i32_0, %c0_i32_1 : i32, i32, i32
  }
  func.func @transform_2(%arg0: i32) -> (i32, i32) {
    %c0_i32 = arith.constant 0 : i32
    %c0_i32_0 = arith.constant 0 : i32
    %c0_i32_1 = arith.constant 0 : i32
    return %c0_i32, %c0_i32_0 : i32, i32
  }
  func.func @transform_3(%arg0: i32) -> (i32, i32, i32, i32) {
    %c0_i32 = arith.constant 0 : i32
    %c0_i32_0 = arith.constant 0 : i32
    %c0_i32_1 = arith.constant 0 : i32
    %c0_i32_2 = arith.constant 0 : i32
    return %arg0, %c0_i32, %c0_i32_0, %c0_i32_1 : i32, i32, i32, i32
  }
}

module attributes {stable_mosaic.version = 11 : i64} {
  func.func @_maxpool3x3s2_kernel(%arg0: i32, %arg1: memref<1x9x9x512xbf16, #tpu.memory_space<vmem>>, %arg2: memref<1x8x8x128xbf16, #tpu.memory_space<vmem>>) attributes {dimension_semantics = [#tpu.dimension_semantics<parallel>], iteration_bounds = array<i64: 2>, scalar_prefetch = 0 : i64, scratch_operands = 0 : i64, tpu.core_type = #tpu.core_type<tc>, window_params = [{transform_indices = @transform_0, window_bounds = array<i64: 1, 9, 9, 512>}, {transform_indices = @transform_1, window_bounds = array<i64: 1, 8, 8, 128>}]} {
    %c0 = arith.constant 0 : index
    %c0_0 = arith.constant 0 : index
    %c0_1 = arith.constant 0 : index
    %c0_2 = arith.constant 0 : index
    %0 = vector.load %arg1[%c0, %c0_0, %c0_1, %c0_2] : memref<1x9x9x512xbf16, #tpu.memory_space<vmem>>, vector<1x8x8x128xbf16>
    %1 = vector.shape_cast %0 : vector<1x8x8x128xbf16> to vector<8x8x128xbf16>
    %c0_3 = arith.constant 0 : index
    %c0_4 = arith.constant 0 : index
    %c0_5 = arith.constant 0 : index
    %c128 = arith.constant 128 : index
    %2 = vector.load %arg1[%c0_3, %c0_4, %c0_5, %c128] : memref<1x9x9x512xbf16, #tpu.memory_space<vmem>>, vector<1x8x8x128xbf16>
    %3 = vector.shape_cast %2 : vector<1x8x8x128xbf16> to vector<8x8x128xbf16>
    %4 = arith.maximumf %1, %3 : vector<8x8x128xbf16>
    %c0_6 = arith.constant 0 : index
    %c0_7 = arith.constant 0 : index
    %c0_8 = arith.constant 0 : index
    %c256 = arith.constant 256 : index
    %5 = vector.load %arg1[%c0_6, %c0_7, %c0_8, %c256] : memref<1x9x9x512xbf16, #tpu.memory_space<vmem>>, vector<1x8x8x128xbf16>
    %6 = vector.shape_cast %5 : vector<1x8x8x128xbf16> to vector<8x8x128xbf16>
    %7 = arith.maximumf %4, %6 : vector<8x8x128xbf16>
    %c0_9 = arith.constant 0 : index
    %c0_10 = arith.constant 0 : index
    %c0_11 = arith.constant 0 : index
    %c384 = arith.constant 384 : index
    %8 = vector.load %arg1[%c0_9, %c0_10, %c0_11, %c384] : memref<1x9x9x512xbf16, #tpu.memory_space<vmem>>, vector<1x8x8x128xbf16>
    %9 = vector.shape_cast %8 : vector<1x8x8x128xbf16> to vector<8x8x128xbf16>
    %10 = arith.maximumf %7, %9 : vector<8x8x128xbf16>
    %c0_12 = arith.constant 0 : index
    %c0_13 = arith.constant 0 : index
    %c1 = arith.constant 1 : index
    %c0_14 = arith.constant 0 : index
    %11 = vector.load %arg1[%c0_12, %c0_13, %c1, %c0_14] : memref<1x9x9x512xbf16, #tpu.memory_space<vmem>>, vector<1x8x8x128xbf16>
    %12 = vector.shape_cast %11 : vector<1x8x8x128xbf16> to vector<8x8x128xbf16>
    %13 = arith.maximumf %10, %12 : vector<8x8x128xbf16>
    %c0_15 = arith.constant 0 : index
    %c0_16 = arith.constant 0 : index
    %c1_17 = arith.constant 1 : index
    %c256_18 = arith.constant 256 : index
    %14 = vector.load %arg1[%c0_15, %c0_16, %c1_17, %c256_18] : memref<1x9x9x512xbf16, #tpu.memory_space<vmem>>, vector<1x8x8x128xbf16>
    %15 = vector.shape_cast %14 : vector<1x8x8x128xbf16> to vector<8x8x128xbf16>
    %16 = arith.maximumf %13, %15 : vector<8x8x128xbf16>
    %c0_19 = arith.constant 0 : index
    %c1_20 = arith.constant 1 : index
    %c0_21 = arith.constant 0 : index
    %c0_22 = arith.constant 0 : index
    %17 = vector.load %arg1[%c0_19, %c1_20, %c0_21, %c0_22] : memref<1x9x9x512xbf16, #tpu.memory_space<vmem>>, vector<1x8x8x128xbf16>
    %18 = vector.shape_cast %17 : vector<1x8x8x128xbf16> to vector<8x8x128xbf16>
    %19 = arith.maximumf %16, %18 : vector<8x8x128xbf16>
    %c0_23 = arith.constant 0 : index
    %c1_24 = arith.constant 1 : index
    %c0_25 = arith.constant 0 : index
    %c128_26 = arith.constant 128 : index
    %20 = vector.load %arg1[%c0_23, %c1_24, %c0_25, %c128_26] : memref<1x9x9x512xbf16, #tpu.memory_space<vmem>>, vector<1x8x8x128xbf16>
    %21 = vector.shape_cast %20 : vector<1x8x8x128xbf16> to vector<8x8x128xbf16>
    %22 = arith.maximumf %19, %21 : vector<8x8x128xbf16>
    %c0_27 = arith.constant 0 : index
    %c1_28 = arith.constant 1 : index
    %c1_29 = arith.constant 1 : index
    %c0_30 = arith.constant 0 : index
    %23 = vector.load %arg1[%c0_27, %c1_28, %c1_29, %c0_30] : memref<1x9x9x512xbf16, #tpu.memory_space<vmem>>, vector<1x8x8x128xbf16>
    %24 = vector.shape_cast %23 : vector<1x8x8x128xbf16> to vector<8x8x128xbf16>
    %25 = arith.maximumf %22, %24 : vector<8x8x128xbf16>
    %c0_31 = arith.constant 0 : index
    %c0_32 = arith.constant 0 : index
    %c0_33 = arith.constant 0 : index
    %c0_34 = arith.constant 0 : index
    %26 = vector.load %arg2[%c0_31, %c0_32, %c0_33, %c0_34] : memref<1x8x8x128xbf16, #tpu.memory_space<vmem>>, vector<1x8x8x128xbf16>
    %27 = vector.shape_cast %26 : vector<1x8x8x128xbf16> to vector<8x8x128xbf16>
    %28 = vector.shape_cast %25 : vector<8x8x128xbf16> to vector<1x8x8x128xbf16>
    tpu.vector_store %arg2[%c0_31, %c0_32, %c0_33, %c0_34], %28 {strides = array<i32>} : memref<1x8x8x128xbf16, #tpu.memory_space<vmem>>, vector<1x8x8x128xbf16>,
    return
  }
  func.func @transform_0(%arg0: i32) -> (i32, i32, i32, i32) {
    %c0_i32 = arith.constant 0 : i32
    %c0_i32_0 = arith.constant 0 : i32
    %c0_i32_1 = arith.constant 0 : i32
    %c0_i32_2 = arith.constant 0 : i32
    return %arg0, %c0_i32, %c0_i32_0, %c0_i32_1 : i32, i32, i32, i32
  }
  func.func @transform_1(%arg0: i32) -> (i32, i32, i32, i32) {
    %c0_i32 = arith.constant 0 : i32
    %c0_i32_0 = arith.constant 0 : i32
    %c0_i32_1 = arith.constant 0 : i32
    %c0_i32_2 = arith.constant 0 : i32
    return %arg0, %c0_i32, %c0_i32_0, %c0_i32_1 : i32, i32, i32, i32
  }
}

module attributes {stable_mosaic.version = 11 : i64} {
  func.func @_conv_bn_act_kernel(%arg0: i32, %arg1: memref<1x8x8x128xbf16, #tpu.memory_space<vmem>>, %arg2: memref<1x128x128xbf16, #tpu.memory_space<vmem>>, %arg3: memref<1x128xf32, #tpu.memory_space<vmem>>, %arg4: memref<1x8x8x128xbf16, #tpu.memory_space<vmem>>) attributes {dimension_semantics = [#tpu.dimension_semantics<parallel>], iteration_bounds = array<i64: 2>, scalar_prefetch = 0 : i64, scratch_operands = 0 : i64, tpu.core_type = #tpu.core_type<tc>, window_params = [{transform_indices = @transform_0, window_bounds = array<i64: 1, 8, 8, 128>}, {pipeline_mode = #tpu.pipeline_mode<synchronous>, transform_indices = @transform_1, window_bounds = array<i64: 1, 128, 128>}, {pipeline_mode = #tpu.pipeline_mode<synchronous>, transform_indices = @transform_2, window_bounds = array<i64: 1, 128>}, {transform_indices = @transform_3, window_bounds = array<i64: 1, 8, 8, 128>}]} {
    %c0 = arith.constant 0 : index
    %c0_0 = arith.constant 0 : index
    %c0_1 = arith.constant 0 : index
    %c0_2 = arith.constant 0 : index
    %0 = vector.load %arg1[%c0, %c0_0, %c0_1, %c0_2] : memref<1x8x8x128xbf16, #tpu.memory_space<vmem>>, vector<1x8x8x128xbf16>
    %1 = vector.shape_cast %0 : vector<1x8x8x128xbf16> to vector<8x8x128xbf16>
    %2 = vector.shape_cast %1 : vector<8x8x128xbf16> to vector<64x128xbf16>
    %c0_3 = arith.constant 0 : index
    %c0_4 = arith.constant 0 : index
    %c0_5 = arith.constant 0 : index
    %3 = vector.load %arg2[%c0_3, %c0_4, %c0_5] : memref<1x128x128xbf16, #tpu.memory_space<vmem>>, vector<1x128x128xbf16>
    %4 = vector.shape_cast %3 : vector<1x128x128xbf16> to vector<128x128xbf16>
    %cst = arith.constant dense<0.000000e+00> : vector<64x128xf32>
    %5 = tpu.matmul %2, %4, %cst {dimension_numbers = #tpu.dot_dimension_numbers<[1], [0], [0], [1], [0, 0, 1, 1], [], []>} : vector<64x128xbf16>, vector<128x128xbf16>, vector<64x128xf32> -> vector<64x128xf32>
    %c0_6 = arith.constant 0 : index
    %c0_7 = arith.constant 0 : index
    %6 = vector.load %arg3[%c0_6, %c0_7] : memref<1x128xf32, #tpu.memory_space<vmem>>, vector<1x128xf32>
    %7 = vector.broadcast %6 : vector<1x128xf32> to vector<64x128xf32>
    %8 = arith.addf %5, %7 : vector<64x128xf32>
    %cst_8 = arith.constant 0.000000e+00 : f32
    %9 = vector.broadcast %cst_8 : f32 to vector<64x128xf32>
    %10 = arith.maximumf %8, %9 : vector<64x128xf32>
    %11 = vector.shape_cast %10 : vector<64x128xf32> to vector<8x8x128xf32>
    %12 = arith.truncf %11 : vector<8x8x128xf32> to vector<8x8x128xbf16>
    %c0_9 = arith.constant 0 : index
    %c0_10 = arith.constant 0 : index
    %c0_11 = arith.constant 0 : index
    %c0_12 = arith.constant 0 : index
    %13 = vector.load %arg4[%c0_9, %c0_10, %c0_11, %c0_12] : memref<1x8x8x128xbf16, #tpu.memory_space<vmem>>, vector<1x8x8x128xbf16>
    %14 = vector.shape_cast %13 : vector<1x8x8x128xbf16> to vector<8x8x128xbf16>
    %15 = vector.shape_cast %12 : vector<8x8x128xbf16> to vector<1x8x8x128xbf16>
    tpu.vector_store %arg4[%c0_9, %c0_10, %c0_11, %c0_12], %15 {strides = array<i32>} : memref<1x8x8x128xbf16, #tpu.memory_space<vmem>>, vector<1x8x8x128xbf16>,
    return
  }
  func.func @transform_0(%arg0: i32) -> (i32, i32, i32, i32) {
    %c0_i32 = arith.constant 0 : i32
    %c0_i32_0 = arith.constant 0 : i32
    %c0_i32_1 = arith.constant 0 : i32
    %c0_i32_2 = arith.constant 0 : i32
    return %arg0, %c0_i32, %c0_i32_0, %c0_i32_1 : i32, i32, i32, i32
  }
  func.func @transform_1(%arg0: i32) -> (i32, i32, i32) {
    %c0_i32 = arith.constant 0 : i32
    %c0_i32_0 = arith.constant 0 : i32
    %c0_i32_1 = arith.constant 0 : i32
    %c0_i32_2 = arith.constant 0 : i32
    return %c0_i32, %c0_i32_0, %c0_i32_1 : i32, i32, i32
  }
  func.func @transform_2(%arg0: i32) -> (i32, i32) {
    %c0_i32 = arith.constant 0 : i32
    %c0_i32_0 = arith.constant 0 : i32
    %c0_i32_1 = arith.constant 0 : i32
    return %c0_i32, %c0_i32_0 : i32, i32
  }
  func.func @transform_3(%arg0: i32) -> (i32, i32, i32, i32) {
    %c0_i32 = arith.constant 0 : i32
    %c0_i32_0 = arith.constant 0 : i32
    %c0_i32_1 = arith.constant 0 : i32
    %c0_i32_2 = arith.constant 0 : i32
    return %arg0, %c0_i32, %c0_i32_0, %c0_i32_1 : i32, i32, i32, i32
  }
}

module attributes {stable_mosaic.version = 11 : i64} {
  func.func @_conv_bn_act_kernel(%arg0: i32, %arg1: memref<1x10x10x128xbf16, #tpu.memory_space<vmem>>, %arg2: memref<9x128x128xbf16, #tpu.memory_space<vmem>>, %arg3: memref<1x128xf32, #tpu.memory_space<vmem>>, %arg4: memref<1x8x8x128xbf16, #tpu.memory_space<vmem>>) attributes {dimension_semantics = [#tpu.dimension_semantics<parallel>], iteration_bounds = array<i64: 2>, scalar_prefetch = 0 : i64, scratch_operands = 0 : i64, tpu.core_type = #tpu.core_type<tc>, window_params = [{transform_indices = @transform_0, window_bounds = array<i64: 1, 10, 10, 128>}, {pipeline_mode = #tpu.pipeline_mode<synchronous>, transform_indices = @transform_1, window_bounds = array<i64: 9, 128, 128>}, {pipeline_mode = #tpu.pipeline_mode<synchronous>, transform_indices = @transform_2, window_bounds = array<i64: 1, 128>}, {transform_indices = @transform_3, window_bounds = array<i64: 1, 8, 8, 128>}]} {
    %c0 = arith.constant 0 : index
    %c0_0 = arith.constant 0 : index
    %c0_1 = arith.constant 0 : index
    %c0_2 = arith.constant 0 : index
    %0 = vector.load %arg1[%c0, %c0_0, %c0_1, %c0_2] : memref<1x10x10x128xbf16, #tpu.memory_space<vmem>>, vector<1x8x8x128xbf16>
    %1 = vector.shape_cast %0 : vector<1x8x8x128xbf16> to vector<8x8x128xbf16>
    %2 = vector.shape_cast %1 : vector<8x8x128xbf16> to vector<64x128xbf16>
    %c0_3 = arith.constant 0 : index
    %c0_4 = arith.constant 0 : index
    %c0_5 = arith.constant 0 : index
    %3 = vector.load %arg2[%c0_3, %c0_4, %c0_5] : memref<9x128x128xbf16, #tpu.memory_space<vmem>>, vector<1x128x128xbf16>
    %4 = vector.shape_cast %3 : vector<1x128x128xbf16> to vector<128x128xbf16>
    %cst = arith.constant dense<0.000000e+00> : vector<64x128xf32>
    %5 = tpu.matmul %2, %4, %cst {dimension_numbers = #tpu.dot_dimension_numbers<[1], [0], [0], [1], [0, 0, 1, 1], [], []>} : vector<64x128xbf16>, vector<128x128xbf16>, vector<64x128xf32> -> vector<64x128xf32>
    %c0_6 = arith.constant 0 : index
    %c0_7 = arith.constant 0 : index
    %c1 = arith.constant 1 : index
    %c0_8 = arith.constant 0 : index
    %6 = vector.load %arg1[%c0_6, %c0_7, %c1, %c0_8] : memref<1x10x10x128xbf16, #tpu.memory_space<vmem>>, vector<1x8x8x128xbf16>
    %7 = vector.shape_cast %6 : vector<1x8x8x128xbf16> to vector<8x8x128xbf16>
    %8 = vector.shape_cast %7 : vector<8x8x128xbf16> to vector<64x128xbf16>
    %c1_9 = arith.constant 1 : index
    %c0_10 = arith.constant 0 : index
    %c0_11 = arith.constant 0 : index
    %9 = vector.load %arg2[%c1_9, %c0_10, %c0_11] : memref<9x128x128xbf16, #tpu.memory_space<vmem>>, vector<1x128x128xbf16>
    %10 = vector.shape_cast %9 : vector<1x128x128xbf16> to vector<128x128xbf16>
    %cst_12 = arith.constant dense<0.000000e+00> : vector<64x128xf32>
    %11 = tpu.matmul %8, %10, %cst_12 {dimension_numbers = #tpu.dot_dimension_numbers<[1], [0], [0], [1], [0, 0, 1, 1], [], []>} : vector<64x128xbf16>, vector<128x128xbf16>, vector<64x128xf32> -> vector<64x128xf32>
    %12 = arith.addf %5, %11 : vector<64x128xf32>
    %c0_13 = arith.constant 0 : index
    %c0_14 = arith.constant 0 : index
    %c2 = arith.constant 2 : index
    %c0_15 = arith.constant 0 : index
    %13 = vector.load %arg1[%c0_13, %c0_14, %c2, %c0_15] : memref<1x10x10x128xbf16, #tpu.memory_space<vmem>>, vector<1x8x8x128xbf16>
    %14 = vector.shape_cast %13 : vector<1x8x8x128xbf16> to vector<8x8x128xbf16>
    %15 = vector.shape_cast %14 : vector<8x8x128xbf16> to vector<64x128xbf16>
    %c2_16 = arith.constant 2 : index
    %c0_17 = arith.constant 0 : index
    %c0_18 = arith.constant 0 : index
    %16 = vector.load %arg2[%c2_16, %c0_17, %c0_18] : memref<9x128x128xbf16, #tpu.memory_space<vmem>>, vector<1x128x128xbf16>
    %17 = vector.shape_cast %16 : vector<1x128x128xbf16> to vector<128x128xbf16>
    %cst_19 = arith.constant dense<0.000000e+00> : vector<64x128xf32>
    %18 = tpu.matmul %15, %17, %cst_19 {dimension_numbers = #tpu.dot_dimension_numbers<[1], [0], [0], [1], [0, 0, 1, 1], [], []>} : vector<64x128xbf16>, vector<128x128xbf16>, vector<64x128xf32> -> vector<64x128xf32>
    %19 = arith.addf %12, %18 : vector<64x128xf32>
    %c0_20 = arith.constant 0 : index
    %c1_21 = arith.constant 1 : index
    %c0_22 = arith.constant 0 : index
    %c0_23 = arith.constant 0 : index
    %20 = vector.load %arg1[%c0_20, %c1_21, %c0_22, %c0_23] : memref<1x10x10x128xbf16, #tpu.memory_space<vmem>>, vector<1x8x8x128xbf16>
    %21 = vector.shape_cast %20 : vector<1x8x8x128xbf16> to vector<8x8x128xbf16>
    %22 = vector.shape_cast %21 : vector<8x8x128xbf16> to vector<64x128xbf16>
    %c3 = arith.constant 3 : index
    %c0_24 = arith.constant 0 : index
    %c0_25 = arith.constant 0 : index
    %23 = vector.load %arg2[%c3, %c0_24, %c0_25] : memref<9x128x128xbf16, #tpu.memory_space<vmem>>, vector<1x128x128xbf16>
    %24 = vector.shape_cast %23 : vector<1x128x128xbf16> to vector<128x128xbf16>
    %cst_26 = arith.constant dense<0.000000e+00> : vector<64x128xf32>
    %25 = tpu.matmul %22, %24, %cst_26 {dimension_numbers = #tpu.dot_dimension_numbers<[1], [0], [0], [1], [0, 0, 1, 1], [], []>} : vector<64x128xbf16>, vector<128x128xbf16>, vector<64x128xf32> -> vector<64x128xf32>
    %26 = arith.addf %19, %25 : vector<64x128xf32>
    %c0_27 = arith.constant 0 : index
    %c1_28 = arith.constant 1 : index
    %c1_29 = arith.constant 1 : index
    %c0_30 = arith.constant 0 : index
    %27 = vector.load %arg1[%c0_27, %c1_28, %c1_29, %c0_30] : memref<1x10x10x128xbf16, #tpu.memory_space<vmem>>, vector<1x8x8x128xbf16>
    %28 = vector.shape_cast %27 : vector<1x8x8x128xbf16> to vector<8x8x128xbf16>
    %29 = vector.shape_cast %28 : vector<8x8x128xbf16> to vector<64x128xbf16>
    %c4 = arith.constant 4 : index
    %c0_31 = arith.constant 0 : index
    %c0_32 = arith.constant 0 : index
    %30 = vector.load %arg2[%c4, %c0_31, %c0_32] : memref<9x128x128xbf16, #tpu.memory_space<vmem>>, vector<1x128x128xbf16>
    %31 = vector.shape_cast %30 : vector<1x128x128xbf16> to vector<128x128xbf16>
    %cst_33 = arith.constant dense<0.000000e+00> : vector<64x128xf32>
    %32 = tpu.matmul %29, %31, %cst_33 {dimension_numbers = #tpu.dot_dimension_numbers<[1], [0], [0], [1], [0, 0, 1, 1], [], []>} : vector<64x128xbf16>, vector<128x128xbf16>, vector<64x128xf32> -> vector<64x128xf32>
    %33 = arith.addf %26, %32 : vector<64x128xf32>
    %c0_34 = arith.constant 0 : index
    %c1_35 = arith.constant 1 : index
    %c2_36 = arith.constant 2 : index
    %c0_37 = arith.constant 0 : index
    %34 = vector.load %arg1[%c0_34, %c1_35, %c2_36, %c0_37] : memref<1x10x10x128xbf16, #tpu.memory_space<vmem>>, vector<1x8x8x128xbf16>
    %35 = vector.shape_cast %34 : vector<1x8x8x128xbf16> to vector<8x8x128xbf16>
    %36 = vector.shape_cast %35 : vector<8x8x128xbf16> to vector<64x128xbf16>
    %c5 = arith.constant 5 : index
    %c0_38 = arith.constant 0 : index
    %c0_39 = arith.constant 0 : index
    %37 = vector.load %arg2[%c5, %c0_38, %c0_39] : memref<9x128x128xbf16, #tpu.memory_space<vmem>>, vector<1x128x128xbf16>
    %38 = vector.shape_cast %37 : vector<1x128x128xbf16> to vector<128x128xbf16>
    %cst_40 = arith.constant dense<0.000000e+00> : vector<64x128xf32>
    %39 = tpu.matmul %36, %38, %cst_40 {dimension_numbers = #tpu.dot_dimension_numbers<[1], [0], [0], [1], [0, 0, 1, 1], [], []>} : vector<64x128xbf16>, vector<128x128xbf16>, vector<64x128xf32> -> vector<64x128xf32>
    %40 = arith.addf %33, %39 : vector<64x128xf32>
    %c0_41 = arith.constant 0 : index
    %c2_42 = arith.constant 2 : index
    %c0_43 = arith.constant 0 : index
    %c0_44 = arith.constant 0 : index
    %41 = vector.load %arg1[%c0_41, %c2_42, %c0_43, %c0_44] : memref<1x10x10x128xbf16, #tpu.memory_space<vmem>>, vector<1x8x8x128xbf16>
    %42 = vector.shape_cast %41 : vector<1x8x8x128xbf16> to vector<8x8x128xbf16>
    %43 = vector.shape_cast %42 : vector<8x8x128xbf16> to vector<64x128xbf16>
    %c6 = arith.constant 6 : index
    %c0_45 = arith.constant 0 : index
    %c0_46 = arith.constant 0 : index
    %44 = vector.load %arg2[%c6, %c0_45, %c0_46] : memref<9x128x128xbf16, #tpu.memory_space<vmem>>, vector<1x128x128xbf16>
    %45 = vector.shape_cast %44 : vector<1x128x128xbf16> to vector<128x128xbf16>
    %cst_47 = arith.constant dense<0.000000e+00> : vector<64x128xf32>
    %46 = tpu.matmul %43, %45, %cst_47 {dimension_numbers = #tpu.dot_dimension_numbers<[1], [0], [0], [1], [0, 0, 1, 1], [], []>} : vector<64x128xbf16>, vector<128x128xbf16>, vector<64x128xf32> -> vector<64x128xf32>
    %47 = arith.addf %40, %46 : vector<64x128xf32>
    %c0_48 = arith.constant 0 : index
    %c2_49 = arith.constant 2 : index
    %c1_50 = arith.constant 1 : index
    %c0_51 = arith.constant 0 : index
    %48 = vector.load %arg1[%c0_48, %c2_49, %c1_50, %c0_51] : memref<1x10x10x128xbf16, #tpu.memory_space<vmem>>, vector<1x8x8x128xbf16>
    %49 = vector.shape_cast %48 : vector<1x8x8x128xbf16> to vector<8x8x128xbf16>
    %50 = vector.shape_cast %49 : vector<8x8x128xbf16> to vector<64x128xbf16>
    %c7 = arith.constant 7 : index
    %c0_52 = arith.constant 0 : index
    %c0_53 = arith.constant 0 : index
    %51 = vector.load %arg2[%c7, %c0_52, %c0_53] : memref<9x128x128xbf16, #tpu.memory_space<vmem>>, vector<1x128x128xbf16>
    %52 = vector.shape_cast %51 : vector<1x128x128xbf16> to vector<128x128xbf16>
    %cst_54 = arith.constant dense<0.000000e+00> : vector<64x128xf32>
    %53 = tpu.matmul %50, %52, %cst_54 {dimension_numbers = #tpu.dot_dimension_numbers<[1], [0], [0], [1], [0, 0, 1, 1], [], []>} : vector<64x128xbf16>, vector<128x128xbf16>, vector<64x128xf32> -> vector<64x128xf32>
    %54 = arith.addf %47, %53 : vector<64x128xf32>
    %c0_55 = arith.constant 0 : index
    %c2_56 = arith.constant 2 : index
    %c2_57 = arith.constant 2 : index
    %c0_58 = arith.constant 0 : index
    %55 = vector.load %arg1[%c0_55, %c2_56, %c2_57, %c0_58] : memref<1x10x10x128xbf16, #tpu.memory_space<vmem>>, vector<1x8x8x128xbf16>
    %56 = vector.shape_cast %55 : vector<1x8x8x128xbf16> to vector<8x8x128xbf16>
    %57 = vector.shape_cast %56 : vector<8x8x128xbf16> to vector<64x128xbf16>
    %c8 = arith.constant 8 : index
    %c0_59 = arith.constant 0 : index
    %c0_60 = arith.constant 0 : index
    %58 = vector.load %arg2[%c8, %c0_59, %c0_60] : memref<9x128x128xbf16, #tpu.memory_space<vmem>>, vector<1x128x128xbf16>
    %59 = vector.shape_cast %58 : vector<1x128x128xbf16> to vector<128x128xbf16>
    %cst_61 = arith.constant dense<0.000000e+00> : vector<64x128xf32>
    %60 = tpu.matmul %57, %59, %cst_61 {dimension_numbers = #tpu.dot_dimension_numbers<[1], [0], [0], [1], [0, 0, 1, 1], [], []>} : vector<64x128xbf16>, vector<128x128xbf16>, vector<64x128xf32> -> vector<64x128xf32>
    %61 = arith.addf %54, %60 : vector<64x128xf32>
    %c0_62 = arith.constant 0 : index
    %c0_63 = arith.constant 0 : index
    %62 = vector.load %arg3[%c0_62, %c0_63] : memref<1x128xf32, #tpu.memory_space<vmem>>, vector<1x128xf32>
    %63 = vector.broadcast %62 : vector<1x128xf32> to vector<64x128xf32>
    %64 = arith.addf %61, %63 : vector<64x128xf32>
    %cst_64 = arith.constant 0.000000e+00 : f32
    %65 = vector.broadcast %cst_64 : f32 to vector<64x128xf32>
    %66 = arith.maximumf %64, %65 : vector<64x128xf32>
    %67 = vector.shape_cast %66 : vector<64x128xf32> to vector<8x8x128xf32>
    %68 = arith.truncf %67 : vector<8x8x128xf32> to vector<8x8x128xbf16>
    %c0_65 = arith.constant 0 : index
    %c0_66 = arith.constant 0 : index
    %c0_67 = arith.constant 0 : index
    %c0_68 = arith.constant 0 : index
    %69 = vector.load %arg4[%c0_65, %c0_66, %c0_67, %c0_68] : memref<1x8x8x128xbf16, #tpu.memory_space<vmem>>, vector<1x8x8x128xbf16>
    %70 = vector.shape_cast %69 : vector<1x8x8x128xbf16> to vector<8x8x128xbf16>
    %71 = vector.shape_cast %68 : vector<8x8x128xbf16> to vector<1x8x8x128xbf16>
    tpu.vector_store %arg4[%c0_65, %c0_66, %c0_67, %c0_68], %71 {strides = array<i32>} : memref<1x8x8x128xbf16, #tpu.memory_space<vmem>>, vector<1x8x8x128xbf16>,
    return
  }
  func.func @transform_0(%arg0: i32) -> (i32, i32, i32, i32) {
    %c0_i32 = arith.constant 0 : i32
    %c0_i32_0 = arith.constant 0 : i32
    %c0_i32_1 = arith.constant 0 : i32
    %c0_i32_2 = arith.constant 0 : i32
    return %arg0, %c0_i32, %c0_i32_0, %c0_i32_1 : i32, i32, i32, i32
  }
  func.func @transform_1(%arg0: i32) -> (i32, i32, i32) {
    %c0_i32 = arith.constant 0 : i32
    %c0_i32_0 = arith.constant 0 : i32
    %c0_i32_1 = arith.constant 0 : i32
    %c0_i32_2 = arith.constant 0 : i32
    return %c0_i32, %c0_i32_0, %c0_i32_1 : i32, i32, i32
  }
  func.func @transform_2(%arg0: i32) -> (i32, i32) {
    %c0_i32 = arith.constant 0 : i32
    %c0_i32_0 = arith.constant 0 : i32
    %c0_i32_1 = arith.constant 0 : i32
    return %c0_i32, %c0_i32_0 : i32, i32
  }
  func.func @transform_3(%arg0: i32) -> (i32, i32, i32, i32) {
    %c0_i32 = arith.constant 0 : i32
    %c0_i32_0 = arith.constant 0 : i32
    %c0_i32_1 = arith.constant 0 : i32
    %c0_i32_2 = arith.constant 0 : i32
    return %arg0, %c0_i32, %c0_i32_0, %c0_i32_1 : i32, i32, i32, i32
  }
}

module attributes {stable_mosaic.version = 11 : i64} {
  func.func @_expand_proj_add_kernel(%arg0: i32, %arg1: memref<1x8x8x128xbf16, #tpu.memory_space<vmem>>, %arg2: memref<1x8x8x128xbf16, #tpu.memory_space<vmem>>, %arg3: memref<1x128x128xbf16, #tpu.memory_space<vmem>>, %arg4: memref<1x128xf32, #tpu.memory_space<vmem>>, %arg5: memref<1x128x128xbf16, #tpu.memory_space<vmem>>, %arg6: memref<1x128xf32, #tpu.memory_space<vmem>>, %arg7: memref<1x8x8x128xbf16, #tpu.memory_space<vmem>>) attributes {dimension_semantics = [#tpu.dimension_semantics<parallel>], iteration_bounds = array<i64: 2>, scalar_prefetch = 0 : i64, scratch_operands = 0 : i64, tpu.core_type = #tpu.core_type<tc>, window_params = [{transform_indices = @transform_0, window_bounds = array<i64: 1, 8, 8, 128>}, {transform_indices = @transform_1, window_bounds = array<i64: 1, 8, 8, 128>}, {pipeline_mode = #tpu.pipeline_mode<synchronous>, transform_indices = @transform_2, window_bounds = array<i64: 1, 128, 128>}, {pipeline_mode = #tpu.pipeline_mode<synchronous>, transform_indices = @transform_3, window_bounds = array<i64: 1, 128>}, {pipeline_mode = #tpu.pipeline_mode<synchronous>, transform_indices = @transform_4, window_bounds = array<i64: 1, 128, 128>}, {pipeline_mode = #tpu.pipeline_mode<synchronous>, transform_indices = @transform_5, window_bounds = array<i64: 1, 128>}, {transform_indices = @transform_6, window_bounds = array<i64: 1, 8, 8, 128>}]} {
    %c0 = arith.constant 0 : index
    %c0_0 = arith.constant 0 : index
    %c0_1 = arith.constant 0 : index
    %c0_2 = arith.constant 0 : index
    %0 = vector.load %arg1[%c0, %c0_0, %c0_1, %c0_2] : memref<1x8x8x128xbf16, #tpu.memory_space<vmem>>, vector<1x8x8x128xbf16>
    %1 = vector.shape_cast %0 : vector<1x8x8x128xbf16> to vector<8x8x128xbf16>
    %2 = vector.shape_cast %1 : vector<8x8x128xbf16> to vector<64x128xbf16>
    %c0_3 = arith.constant 0 : index
    %c0_4 = arith.constant 0 : index
    %c0_5 = arith.constant 0 : index
    %c0_6 = arith.constant 0 : index
    %3 = vector.load %arg2[%c0_3, %c0_4, %c0_5, %c0_6] : memref<1x8x8x128xbf16, #tpu.memory_space<vmem>>, vector<1x8x8x128xbf16>
    %4 = vector.shape_cast %3 : vector<1x8x8x128xbf16> to vector<8x8x128xbf16>
    %5 = vector.shape_cast %4 : vector<8x8x128xbf16> to vector<64x128xbf16>
    %c0_7 = arith.constant 0 : index
    %c0_8 = arith.constant 0 : index
    %c0_9 = arith.constant 0 : index
    %6 = vector.load %arg3[%c0_7, %c0_8, %c0_9] : memref<1x128x128xbf16, #tpu.memory_space<vmem>>, vector<1x128x128xbf16>
    %7 = vector.shape_cast %6 : vector<1x128x128xbf16> to vector<128x128xbf16>
    %cst = arith.constant dense<0.000000e+00> : vector<64x128xf32>
    %8 = tpu.matmul %2, %7, %cst {dimension_numbers = #tpu.dot_dimension_numbers<[1], [0], [0], [1], [0, 0, 1, 1], [], []>} : vector<64x128xbf16>, vector<128x128xbf16>, vector<64x128xf32> -> vector<64x128xf32>
    %c0_10 = arith.constant 0 : index
    %c0_11 = arith.constant 0 : index
    %9 = vector.load %arg4[%c0_10, %c0_11] : memref<1x128xf32, #tpu.memory_space<vmem>>, vector<1x128xf32>
    %10 = vector.broadcast %9 : vector<1x128xf32> to vector<64x128xf32>
    %11 = arith.addf %8, %10 : vector<64x128xf32>
    %c0_12 = arith.constant 0 : index
    %c0_13 = arith.constant 0 : index
    %c0_14 = arith.constant 0 : index
    %12 = vector.load %arg5[%c0_12, %c0_13, %c0_14] : memref<1x128x128xbf16, #tpu.memory_space<vmem>>, vector<1x128x128xbf16>
    %13 = vector.shape_cast %12 : vector<1x128x128xbf16> to vector<128x128xbf16>
    %cst_15 = arith.constant dense<0.000000e+00> : vector<64x128xf32>
    %14 = tpu.matmul %5, %13, %cst_15 {dimension_numbers = #tpu.dot_dimension_numbers<[1], [0], [0], [1], [0, 0, 1, 1], [], []>} : vector<64x128xbf16>, vector<128x128xbf16>, vector<64x128xf32> -> vector<64x128xf32>
    %15 = arith.addf %11, %14 : vector<64x128xf32>
    %c0_16 = arith.constant 0 : index
    %c0_17 = arith.constant 0 : index
    %16 = vector.load %arg6[%c0_16, %c0_17] : memref<1x128xf32, #tpu.memory_space<vmem>>, vector<1x128xf32>
    %17 = vector.broadcast %16 : vector<1x128xf32> to vector<64x128xf32>
    %18 = arith.addf %15, %17 : vector<64x128xf32>
    %cst_18 = arith.constant 0.000000e+00 : f32
    %19 = vector.broadcast %cst_18 : f32 to vector<64x128xf32>
    %20 = arith.maximumf %18, %19 : vector<64x128xf32>
    %21 = vector.shape_cast %20 : vector<64x128xf32> to vector<8x8x128xf32>
    %22 = arith.truncf %21 : vector<8x8x128xf32> to vector<8x8x128xbf16>
    %c0_19 = arith.constant 0 : index
    %c0_20 = arith.constant 0 : index
    %c0_21 = arith.constant 0 : index
    %c0_22 = arith.constant 0 : index
    %23 = vector.load %arg7[%c0_19, %c0_20, %c0_21, %c0_22] : memref<1x8x8x128xbf16, #tpu.memory_space<vmem>>, vector<1x8x8x128xbf16>
    %24 = vector.shape_cast %23 : vector<1x8x8x128xbf16> to vector<8x8x128xbf16>
    %25 = vector.shape_cast %22 : vector<8x8x128xbf16> to vector<1x8x8x128xbf16>
    tpu.vector_store %arg7[%c0_19, %c0_20, %c0_21, %c0_22], %25 {strides = array<i32>} : memref<1x8x8x128xbf16, #tpu.memory_space<vmem>>, vector<1x8x8x128xbf16>,
    return
  }
  func.func @transform_0(%arg0: i32) -> (i32, i32, i32, i32) {
    %c0_i32 = arith.constant 0 : i32
    %c0_i32_0 = arith.constant 0 : i32
    %c0_i32_1 = arith.constant 0 : i32
    %c0_i32_2 = arith.constant 0 : i32
    return %arg0, %c0_i32, %c0_i32_0, %c0_i32_1 : i32, i32, i32, i32
  }
  func.func @transform_1(%arg0: i32) -> (i32, i32, i32, i32) {
    %c0_i32 = arith.constant 0 : i32
    %c0_i32_0 = arith.constant 0 : i32
    %c0_i32_1 = arith.constant 0 : i32
    %c0_i32_2 = arith.constant 0 : i32
    return %arg0, %c0_i32, %c0_i32_0, %c0_i32_1 : i32, i32, i32, i32
  }
  func.func @transform_2(%arg0: i32) -> (i32, i32, i32) {
    %c0_i32 = arith.constant 0 : i32
    %c0_i32_0 = arith.constant 0 : i32
    %c0_i32_1 = arith.constant 0 : i32
    %c0_i32_2 = arith.constant 0 : i32
    return %c0_i32, %c0_i32_0, %c0_i32_1 : i32, i32, i32
  }
  func.func @transform_3(%arg0: i32) -> (i32, i32) {
    %c0_i32 = arith.constant 0 : i32
    %c0_i32_0 = arith.constant 0 : i32
    %c0_i32_1 = arith.constant 0 : i32
    return %c0_i32, %c0_i32_0 : i32, i32
  }
  func.func @transform_4(%arg0: i32) -> (i32, i32, i32) {
    %c0_i32 = arith.constant 0 : i32
    %c0_i32_0 = arith.constant 0 : i32
    %c0_i32_1 = arith.constant 0 : i32
    %c0_i32_2 = arith.constant 0 : i32
    return %c0_i32, %c0_i32_0, %c0_i32_1 : i32, i32, i32
  }
  func.func @transform_5(%arg0: i32) -> (i32, i32) {
    %c0_i32 = arith.constant 0 : i32
    %c0_i32_0 = arith.constant 0 : i32
    %c0_i32_1 = arith.constant 0 : i32
    return %c0_i32, %c0_i32_0 : i32, i32
  }
  func.func @transform_6(%arg0: i32) -> (i32, i32, i32, i32) {
    %c0_i32 = arith.constant 0 : i32
    %c0_i32_0 = arith.constant 0 : i32
    %c0_i32_1 = arith.constant 0 : i32
    %c0_i32_2 = arith.constant 0 : i32
    return %arg0, %c0_i32, %c0_i32_0, %c0_i32_1 : i32, i32, i32, i32
  }
}

module attributes {stable_mosaic.version = 11 : i64} {
  func.func @_conv_bn_act_kernel(%arg0: i32, %arg1: memref<1x8x8x128xbf16, #tpu.memory_space<vmem>>, %arg2: memref<1x128x128xbf16, #tpu.memory_space<vmem>>, %arg3: memref<1x128xf32, #tpu.memory_space<vmem>>, %arg4: memref<1x8x8x128xbf16, #tpu.memory_space<vmem>>, %arg5: memref<1x8x8x128xbf16, #tpu.memory_space<vmem>>) attributes {dimension_semantics = [#tpu.dimension_semantics<parallel>], iteration_bounds = array<i64: 2>, scalar_prefetch = 0 : i64, scratch_operands = 0 : i64, tpu.core_type = #tpu.core_type<tc>, window_params = [{transform_indices = @transform_0, window_bounds = array<i64: 1, 8, 8, 128>}, {pipeline_mode = #tpu.pipeline_mode<synchronous>, transform_indices = @transform_1, window_bounds = array<i64: 1, 128, 128>}, {pipeline_mode = #tpu.pipeline_mode<synchronous>, transform_indices = @transform_2, window_bounds = array<i64: 1, 128>}, {transform_indices = @transform_3, window_bounds = array<i64: 1, 8, 8, 128>}, {transform_indices = @transform_4, window_bounds = array<i64: 1, 8, 8, 128>}]} {
    %c0 = arith.constant 0 : index
    %c0_0 = arith.constant 0 : index
    %c0_1 = arith.constant 0 : index
    %c0_2 = arith.constant 0 : index
    %0 = vector.load %arg1[%c0, %c0_0, %c0_1, %c0_2] : memref<1x8x8x128xbf16, #tpu.memory_space<vmem>>, vector<1x8x8x128xbf16>
    %1 = vector.shape_cast %0 : vector<1x8x8x128xbf16> to vector<8x8x128xbf16>
    %2 = vector.shape_cast %1 : vector<8x8x128xbf16> to vector<64x128xbf16>
    %c0_3 = arith.constant 0 : index
    %c0_4 = arith.constant 0 : index
    %c0_5 = arith.constant 0 : index
    %3 = vector.load %arg2[%c0_3, %c0_4, %c0_5] : memref<1x128x128xbf16, #tpu.memory_space<vmem>>, vector<1x128x128xbf16>
    %4 = vector.shape_cast %3 : vector<1x128x128xbf16> to vector<128x128xbf16>
    %cst = arith.constant dense<0.000000e+00> : vector<64x128xf32>
    %5 = tpu.matmul %2, %4, %cst {dimension_numbers = #tpu.dot_dimension_numbers<[1], [0], [0], [1], [0, 0, 1, 1], [], []>} : vector<64x128xbf16>, vector<128x128xbf16>, vector<64x128xf32> -> vector<64x128xf32>
    %c0_6 = arith.constant 0 : index
    %c0_7 = arith.constant 0 : index
    %6 = vector.load %arg3[%c0_6, %c0_7] : memref<1x128xf32, #tpu.memory_space<vmem>>, vector<1x128xf32>
    %7 = vector.broadcast %6 : vector<1x128xf32> to vector<64x128xf32>
    %8 = arith.addf %5, %7 : vector<64x128xf32>
    %c0_8 = arith.constant 0 : index
    %c0_9 = arith.constant 0 : index
    %c0_10 = arith.constant 0 : index
    %c0_11 = arith.constant 0 : index
    %9 = vector.load %arg4[%c0_8, %c0_9, %c0_10, %c0_11] : memref<1x8x8x128xbf16, #tpu.memory_space<vmem>>, vector<1x8x8x128xbf16>
    %10 = vector.shape_cast %9 : vector<1x8x8x128xbf16> to vector<8x8x128xbf16>
    %11 = vector.shape_cast %10 : vector<8x8x128xbf16> to vector<64x128xbf16>
    %12 = arith.extf %11 : vector<64x128xbf16> to vector<64x128xf32>
    %13 = arith.addf %8, %12 : vector<64x128xf32>
    %cst_12 = arith.constant 0.000000e+00 : f32
    %14 = vector.broadcast %cst_12 : f32 to vector<64x128xf32>
    %15 = arith.maximumf %13, %14 : vector<64x128xf32>
    %16 = vector.shape_cast %15 : vector<64x128xf32> to vector<8x8x128xf32>
    %17 = arith.truncf %16 : vector<8x8x128xf32> to vector<8x8x128xbf16>
    %c0_13 = arith.constant 0 : index
    %c0_14 = arith.constant 0 : index
    %c0_15 = arith.constant 0 : index
    %c0_16 = arith.constant 0 : index
    %18 = vector.load %arg5[%c0_13, %c0_14, %c0_15, %c0_16] : memref<1x8x8x128xbf16, #tpu.memory_space<vmem>>, vector<1x8x8x128xbf16>
    %19 = vector.shape_cast %18 : vector<1x8x8x128xbf16> to vector<8x8x128xbf16>
    %20 = vector.shape_cast %17 : vector<8x8x128xbf16> to vector<1x8x8x128xbf16>
    tpu.vector_store %arg5[%c0_13, %c0_14, %c0_15, %c0_16], %20 {strides = array<i32>} : memref<1x8x8x128xbf16, #tpu.memory_space<vmem>>, vector<1x8x8x128xbf16>,
    return
  }
  func.func @transform_0(%arg0: i32) -> (i32, i32, i32, i32) {
    %c0_i32 = arith.constant 0 : i32
    %c0_i32_0 = arith.constant 0 : i32
    %c0_i32_1 = arith.constant 0 : i32
    %c0_i32_2 = arith.constant 0 : i32
    return %arg0, %c0_i32, %c0_i32_0, %c0_i32_1 : i32, i32, i32, i32
  }
  func.func @transform_1(%arg0: i32) -> (i32, i32, i32) {
    %c0_i32 = arith.constant 0 : i32
    %c0_i32_0 = arith.constant 0 : i32
    %c0_i32_1 = arith.constant 0 : i32
    %c0_i32_2 = arith.constant 0 : i32
    return %c0_i32, %c0_i32_0, %c0_i32_1 : i32, i32, i32
  }
  func.func @transform_2(%arg0: i32) -> (i32, i32) {
    %c0_i32 = arith.constant 0 : i32
    %c0_i32_0 = arith.constant 0 : i32
    %c0_i32_1 = arith.constant 0 : i32
    return %c0_i32, %c0_i32_0 : i32, i32
  }
  func.func @transform_3(%arg0: i32) -> (i32, i32, i32, i32) {
    %c0_i32 = arith.constant 0 : i32
    %c0_i32_0 = arith.constant 0 : i32
    %c0_i32_1 = arith.constant 0 : i32
    %c0_i32_2 = arith.constant 0 : i32
    return %arg0, %c0_i32, %c0_i32_0, %c0_i32_1 : i32, i32, i32, i32
  }
  func.func @transform_4(%arg0: i32) -> (i32, i32, i32, i32) {
    %c0_i32 = arith.constant 0 : i32
    %c0_i32_0 = arith.constant 0 : i32
    %c0_i32_1 = arith.constant 0 : i32
    %c0_i32_2 = arith.constant 0 : i32
    return %arg0, %c0_i32, %c0_i32_0, %c0_i32_1 : i32, i32, i32, i32
  }
}

module attributes {stable_mosaic.version = 11 : i64} {
  func.func @_pool_fc_kernel(%arg0: memref<2x8x8x128xbf16, #tpu.memory_space<vmem>>, %arg1: memref<128x128xbf16, #tpu.memory_space<vmem>>, %arg2: memref<1x128xf32, #tpu.memory_space<vmem>>, %arg3: memref<2x128xf32, #tpu.memory_space<vmem>>) attributes {dimension_semantics = [], scalar_prefetch = 0 : i64, scratch_operands = 0 : i64, tpu.core_type = #tpu.core_type<tc>} {
    %c0 = arith.constant 0 : index
    %c0_0 = arith.constant 0 : index
    %c0_1 = arith.constant 0 : index
    %c0_2 = arith.constant 0 : index
    %0 = vector.load %arg0[%c0, %c0_0, %c0_1, %c0_2] : memref<2x8x8x128xbf16, #tpu.memory_space<vmem>>, vector<2x8x8x128xbf16>
    %1 = vector.shape_cast %0 : vector<2x8x8x128xbf16> to vector<2x64x128xbf16>
    %cst = arith.constant dense<0xFF80> : vector<2x128xbf16>
    %2 = vector.multi_reduction <maximumf>, %1, %cst [1] : vector<2x64x128xbf16> to vector<2x128xbf16>
    %c0_3 = arith.constant 0 : index
    %c0_4 = arith.constant 0 : index
    %3 = vector.load %arg1[%c0_3, %c0_4] : memref<128x128xbf16, #tpu.memory_space<vmem>>, vector<128x128xbf16>
    %cst_5 = arith.constant dense<0.000000e+00> : vector<2x128xf32>
    %4 = tpu.matmul %2, %3, %cst_5 {dimension_numbers = #tpu.dot_dimension_numbers<[1], [0], [0], [1], [0, 0, 1, 1], [], []>} : vector<2x128xbf16>, vector<128x128xbf16>, vector<2x128xf32> -> vector<2x128xf32>
    %c0_6 = arith.constant 0 : index
    %c0_7 = arith.constant 0 : index
    %5 = vector.load %arg2[%c0_6, %c0_7] : memref<1x128xf32, #tpu.memory_space<vmem>>, vector<1x128xf32>
    %6 = vector.broadcast %5 : vector<1x128xf32> to vector<2x128xf32>
    %7 = arith.addf %4, %6 : vector<2x128xf32>
    %c0_8 = arith.constant 0 : index
    %c0_9 = arith.constant 0 : index
    %8 = vector.load %arg3[%c0_8, %c0_9] : memref<2x128xf32, #tpu.memory_space<vmem>>, vector<2x128xf32>
    tpu.vector_store %arg3[%c0_8, %c0_9], %7 {strides = array<i32>} : memref<2x128xf32, #tpu.memory_space<vmem>>, vector<2x128xf32>,
    return
  }
}

</mosaic_0001>

<llo_original>
// kernel: _lambda_.10
$region0: #{_lambda_.10}
  #allocation0 [shape = 'u32[]', space=smem, size = 0x4, offset = 0x4, fixed_abs, tag = 'smem constant byte address 0x4 - core index']
  #allocation1 [shape = 'u32[72,128]{1,0:T(1,128)}', space=vmem, size = 0x9000, scoped, tag = 'internal scratch']
  %s0 = inlined_call_operand.vmem [shape: bf16[2,9,9,512], index: 0, kind: input, shape index: {}]
  %s1 = inlined_call_operand.vmem [shape: bf16[2,8,8,128], index: 1, kind: output, shape index: {}]
  %s2 = sld [smem:[#allocation0]]
  $region37: #{_lambda_.10} parent=0
    _
  %s4 = ssub.s32 1, %s2
  %s5 = scalar_select 0, %s4, %s2
  loop: start=0, step=1, limit=4
  $region2: #{_lambda_.10} parent=0 // loop_pre_header
    _
  $region3: #{_lambda_.10} parent=0 // loop_header
    %s7 = sphi 0, %s11
    %p8 = scmp.ge.s32.totalorder %s7, 4
    %s17 = sphi 0, %s19
    %s20 = sphi 0, %s17
    %s21 = sphi 0, %s20
    %s37 = sphi 0, %s21
    %s43 = sphi 0, %s45
    %s46 = sphi 0, %s43
    %s47 = sphi 0, %s46
    %s63 = sphi 0, %s47
  $region4: #{_lambda_.10} parent=0 // loop_header_branch
    %10 = sbr.rel (%p8) target = $region8
  $region5: #{_lambda_.10} parent=0 // loop_body
    %s12 = ssub.s32 %s7, 1
    %s13 = ssub.s32 %s7, 2
    %s14 = sadd.s32 %s7, 1
    %s15 = ssub.s32 %s7, %s14
    %p16 = scmp.eq.s32.totalorder %s15, 0
    %s18 = sadd.s32 %s17, 1
    %s19 = scalar_select %p16, %s17, %s18
    %p22 = pneg %p16
    %p23 = scmp.eq.s32.totalorder %s7, 1
    %p24 = por %p22, %p23
    %p25 = scmp.ne.s32.totalorder %s17, %s20
    %p26 = scmp.eq.s32.totalorder %s7, 0
    %p27 = por %p25, %p26
    %p28 = scmp.ne.s32.totalorder %s17, %s20
    %p29 = scmp.eq.s32.totalorder %s12, 1
    %p30 = por %p28, %p29
    %p31 = scmp.ne.s32.totalorder %s20, %s21
    %p32 = scmp.eq.s32.totalorder %s12, 0
    %p33 = por %p31, %p32
    %p34 = scmp.ne.s32.totalorder %s20, %s21
    %p35 = scmp.eq.s32.totalorder %s13, 1
    %p36 = por %p34, %p35
    %p38 = scmp.ne.s32.totalorder %s21, %s37
    %p39 = scmp.eq.s32.totalorder %s13, 0
    %p40 = por %p38, %p39
    %s41 = ssub.s32 %s7, %s14
    %p42 = scmp.eq.s32.totalorder %s41, 0
    %s44 = sadd.s32 %s43, 1
    %s45 = scalar_select %p42, %s43, %s44
    %p48 = pneg %p42
    %p49 = scmp.eq.s32.totalorder %s7, 1
    %p50 = por %p48, %p49
    %p51 = scmp.ne.s32.totalorder %s43, %s46
    %p52 = scmp.eq.s32.totalorder %s7, 0
    %p53 = por %p51, %p52
    %p54 = scmp.ne.s32.totalorder %s43, %s46
    %p55 = scmp.eq.s32.totalorder %s12, 1
    %p56 = por %p54, %p55
    %p57 = scmp.ne.s32.totalorder %s46, %s47
    %p58 = scmp.eq.s32.totalorder %s12, 0
    %p59 = por %p57, %p58
    %p60 = scmp.ne.s32.totalorder %s46, %s47
    %p61 = scmp.eq.s32.totalorder %s13, 1
    %p62 = por %p60, %p61
    %p64 = scmp.ne.s32.totalorder %s47, %s63
    %p65 = scmp.eq.s32.totalorder %s13, 0
    %p66 = por %p64, %p65
    %p67 = scmp.le.s32.totalorder 1, %s7
    %p68 = scmp.lt.s32.totalorder %s7, 3
    %p69 = pnand %p67, %p68
    %p70 = pneg %p69
    // Predicated region
    $region9: #{_lambda_.10} parent=5 // pred_check
      _
    $region10: #{_lambda_.10} parent=5 // pred_check_branch
      %72 = sbr.rel (%p69) target = $region12
    $region11: #{_lambda_.10} parent=5 // pred_region
      %s73 = ssub.s32 %s7, 1
    $region12: #{_lambda_.10} parent=5 // pred_fallthru
      _
    %p74 = scmp.lt.s32.totalorder %s7, 2
    // Predicated region
    $region13: #{_lambda_.10} parent=5 // pred_check
      %p75 = pneg %p74
    $region14: #{_lambda_.10} parent=5 // pred_check_branch
      %77 = sbr.rel (%p75) target = $region16
    $region15: #{_lambda_.10} parent=5 // pred_region
      // Predicated region
      $region17: #{_lambda_.10} parent=15 // pred_check
        %p78 = pneg %p27
      $region18: #{_lambda_.10} parent=15 // pred_check_branch
        %80 = sbr.rel (%p78) target = $region20
      $region19: #{_lambda_.10} parent=15 // pred_region
        %p81 = scmp.lt.s32.totalorder %s7, 1
        %s82 = scalar_select %p81, %s7, 1
        %s83 = smul.addr %s82, 72
        %s84 = smul.addr %s83, 4
        %s85 = scalar_lea.vmem %s0, %s84
      $region20: #{_lambda_.10} parent=15 // pred_fallthru
        _
    $region16: #{_lambda_.10} parent=5 // pred_fallthru
      _
    %p86 = scmp.le.s32.totalorder 1, %s7
    %p87 = scmp.lt.s32.totalorder %s7, 3
    %p88 = pnand %p86, %p87
    %p89 = pneg %p88
    // Predicated region
    $region21: #{_lambda_.10} parent=5 // pred_check
      _
    $region22: #{_lambda_.10} parent=5 // pred_check_branch
      %91 = sbr.rel (%p88) target = $region24
    $region23: #{_lambda_.10} parent=5 // pred_region
      %s92 = ssub.s32 %s7, 1
      %p93 = scmp.lt.s32.totalorder %s12, 1
      %s94 = scalar_select %p93, %s12, 1
      %s95 = smul.addr %s94, 72
      %s96 = smul.addr %s95, 4
      %s97 = scalar_lea.vmem %s0, %s96
      %p98 = pneg %p33
      %p99 = pneg %p30
      %p100 = pneg %p59
      %p101 = pneg %p56
      %p102 = scmp.lt.s32.totalorder %s12, 1
      %s103 = scalar_select %p102, %s12, 1
      %s104 = smul.addr %s103, 8
      %s105 = smul.addr %s104, 4
      %s106 = scalar_lea.vmem %s1, %s105
      %p107 = scmp.lt.s32.totalorder %s12, 1
      %s108 = scalar_select %p107, %s12, 1
      %s109 = smul.addr %s108, 72
      %s110 = smul.addr %s109, 4
      %s111 = scalar_lea.vmem %s0, %s110
      %p112 = scmp.lt.s32.totalorder %s12, 1
      %s113 = scalar_select %p112, %s12, 1
      %s114 = smul.addr %s113, 8
      %s115 = smul.addr %s114, 4
      %s116 = scalar_lea.vmem %s1, %s115
      %v117 = vld [vmem:[%s111] sm:$0xf]
      %v118 = vld [vmem:[%s111 + $0x20] sm:$0xf]
      %v119 = vld [vmem:[%s111 + $0x40] sm:$0xf]
      %v120 = vld [vmem:[%s111 + $0x60] sm:$0xf]
      %v121 = vld [vmem:[%s111 + $0x80] sm:$0xf]
      %v122 = vld [vmem:[%s111 + $0xa0] sm:$0xf]
      %v123 = vld [vmem:[%s111 + $0xc0] sm:$0xf]
      %v124 = vld [vmem:[%s111 + $0xe0] sm:$0xf]
      %v125 = vld [vmem:[%s111 + $0x4] sm:$0xf]
      %v126 = vld [vmem:[%s111 + $0x24] sm:$0xf]
      %v127 = vld [vmem:[%s111 + $0x44] sm:$0xf]
      %v128 = vld [vmem:[%s111 + $0x64] sm:$0xf]
      %v129 = vld [vmem:[%s111 + $0x84] sm:$0xf]
      %v130 = vld [vmem:[%s111 + $0xa4] sm:$0xf]
      %v131 = vld [vmem:[%s111 + $0xc4] sm:$0xf]
      %v132 = vld [vmem:[%s111 + $0xe4] sm:$0xf]
      %v133 = vunpack.c.l.bf16 %v117
      %v134 = vunpack.c.l.bf16 %v118
      %v135 = vunpack.c.l.bf16 %v119
      %v136 = vunpack.c.l.bf16 %v120
      %v137 = vunpack.c.l.bf16 %v121
      %v138 = vunpack.c.l.bf16 %v122
      %v139 = vunpack.c.l.bf16 %v123
      %v140 = vunpack.c.l.bf16 %v124
      %v141 = vunpack.c.l.bf16 %v125
      %v142 = vunpack.c.l.bf16 %v126
      %v143 = vunpack.c.l.bf16 %v127
      %v144 = vunpack.c.l.bf16 %v128
      %v145 = vunpack.c.l.bf16 %v129
      %v146 = vunpack.c.l.bf16 %v130
      %v147 = vunpack.c.l.bf16 %v131
      %v148 = vunpack.c.l.bf16 %v132
      %v149 = vmax.f32 %v133, %v141
      %v150 = vmax.f32 %v134, %v142
      %v151 = vmax.f32 %v135, %v143
      %v152 = vmax.f32 %v136, %v144
      %v153 = vmax.f32 %v137, %v145
      %v154 = vmax.f32 %v138, %v146
      %v155 = vmax.f32 %v139, %v147
      %v156 = vmax.f32 %v140, %v148
      %v157 = vpack.c.bf16 %v149, %v149
      %v158 = vpack.c.bf16 %v150, %v150
      %v159 = vpack.c.bf16 %v151, %v151
      %v160 = vpack.c.bf16 %v152, %v152
      %v161 = vpack.c.bf16 %v153, %v153
      %v162 = vpack.c.bf16 %v154, %v154
      %v163 = vpack.c.bf16 %v155, %v155
      %v164 = vpack.c.bf16 %v156, %v156
      %v165 = vld [vmem:[%s111 + $0x8] sm:$0xf]
      %v166 = vld [vmem:[%s111 + $0x28] sm:$0xf]
      %v167 = vld [vmem:[%s111 + $0x48] sm:$0xf]
      %v168 = vld [vmem:[%s111 + $0x68] sm:$0xf]
      %v169 = vld [vmem:[%s111 + $0x88] sm:$0xf]
      %v170 = vld [vmem:[%s111 + $0xa8] sm:$0xf]
      %v171 = vld [vmem:[%s111 + $0xc8] sm:$0xf]
      %v172 = vld [vmem:[%s111 + $0xe8] sm:$0xf]
      %v173 = vunpack.c.l.bf16 %v157
      %v174 = vunpack.c.l.bf16 %v158
      %v175 = vunpack.c.l.bf16 %v159
      %v176 = vunpack.c.l.bf16 %v160
      %v177 = vunpack.c.l.bf16 %v161
      %v178 = vunpack.c.l.bf16 %v162
      %v179 = vunpack.c.l.bf16 %v163
      %v180 = vunpack.c.l.bf16 %v164
      %v181 = vunpack.c.l.bf16 %v165
      %v182 = vunpack.c.l.bf16 %v166
      %v183 = vunpack.c.l.bf16 %v167
      %v184 = vunpack.c.l.bf16 %v168
      %v185 = vunpack.c.l.bf16 %v169
      %v186 = vunpack.c.l.bf16 %v170
      %v187 = vunpack.c.l.bf16 %v171
      %v188 = vunpack.c.l.bf16 %v172
      %v189 = vmax.f32 %v173, %v181
      %v190 = vmax.f32 %v174, %v182
      %v191 = vmax.f32 %v175, %v183
      %v192 = vmax.f32 %v176, %v184
      %v193 = vmax.f32 %v177, %v185
      %v194 = vmax.f32 %v178, %v186
      %v195 = vmax.f32 %v179, %v187
      %v196 = vmax.f32 %v180, %v188
      %v197 = vpack.c.bf16 %v189, %v189
      %v198 = vpack.c.bf16 %v190, %v190
      %v199 = vpack.c.bf16 %v191, %v191
      %v200 = vpack.c.bf16 %v192, %v192
      %v201 = vpack.c.bf16 %v193, %v193
      %v202 = vpack.c.bf16 %v194, %v194
      %v203 = vpack.c.bf16 %v195, %v195
      %v204 = vpack.c.bf16 %v196, %v196
      %v205 = vld [vmem:[%s111 + $0xc] sm:$0xf]
      %v206 = vld [vmem:[%s111 + $0x2c] sm:$0xf]
      %v207 = vld [vmem:[%s111 + $0x4c] sm:$0xf]
      %v208 = vld [vmem:[%s111 + $0x6c] sm:$0xf]
      %v209 = vld [vmem:[%s111 + $0x8c] sm:$0xf]
      %v210 = vld [vmem:[%s111 + $0xac] sm:$0xf]
      %v211 = vld [vmem:[%s111 + $0xcc] sm:$0xf]
      %v212 = vld [vmem:[%s111 + $0xec] sm:$0xf]
      %v213 = vunpack.c.l.bf16 %v197
      %v214 = vunpack.c.l.bf16 %v198
      %v215 = vunpack.c.l.bf16 %v199
      %v216 = vunpack.c.l.bf16 %v200
      %v217 = vunpack.c.l.bf16 %v201
      %v218 = vunpack.c.l.bf16 %v202
      %v219 = vunpack.c.l.bf16 %v203
      %v220 = vunpack.c.l.bf16 %v204
      %v221 = vunpack.c.l.bf16 %v205
      %v222 = vunpack.c.l.bf16 %v206
      %v223 = vunpack.c.l.bf16 %v207
      %v224 = vunpack.c.l.bf16 %v208
      %v225 = vunpack.c.l.bf16 %v209
      %v226 = vunpack.c.l.bf16 %v210
      %v227 = vunpack.c.l.bf16 %v211
      %v228 = vunpack.c.l.bf16 %v212
      %v229 = vmax.f32 %v213, %v221
      %v230 = vmax.f32 %v214, %v222
      %v231 = vmax.f32 %v215, %v223
      %v232 = vmax.f32 %v216, %v224
      %v233 = vmax.f32 %v217, %v225
      %v234 = vmax.f32 %v218, %v226
      %v235 = vmax.f32 %v219, %v227
      %v236 = vmax.f32 %v220, %v228
      %v237 = vpack.c.bf16 %v229, %v229
      %v238 = vpack.c.bf16 %v230, %v230
      %v239 = vpack.c.bf16 %v231, %v231
      %v240 = vpack.c.bf16 %v232, %v232
      %v241 = vpack.c.bf16 %v233, %v233
      %v242 = vpack.c.bf16 %v234, %v234
      %v243 = vpack.c.bf16 %v235, %v235
      %v244 = vpack.c.bf16 %v236, %v236
      %v245 = vld [vmem:[%s111 + $0x10] sm:$0x1]
      %v246 = vld [vmem:[%s111 + $0x30] sm:$0x1]
      %v247 = vld [vmem:[%s111 + $0x50] sm:$0x1]
      %v248 = vld [vmem:[%s111 + $0x70] sm:$0x1]
      %v249 = vld [vmem:[%s111 + $0x90] sm:$0x1]
      %v250 = vld [vmem:[%s111 + $0xb0] sm:$0x1]
      %v251 = vld [vmem:[%s111 + $0xd0] sm:$0x1]
      %v252 = vld [vmem:[%s111 + $0xf0] sm:$0x1]
      %v253 = vunpack.c.l.bf16 %v237
      %v254 = vunpack.c.l.bf16 %v238
      %v255 = vunpack.c.l.bf16 %v239
      %v256 = vunpack.c.l.bf16 %v240
      %v257 = vunpack.c.l.bf16 %v241
      %v258 = vunpack.c.l.bf16 %v242
      %v259 = vunpack.c.l.bf16 %v243
      %v260 = vunpack.c.l.bf16 %v244
      %v261 = vunpack.c.l.bf16 %v245
      %v262 = vunpack.c.l.bf16 %v246
      %v263 = vunpack.c.l.bf16 %v247
      %v264 = vunpack.c.l.bf16 %v248
      %v265 = vunpack.c.l.bf16 %v249
      %v266 = vunpack.c.l.bf16 %v250
      %v267 = vunpack.c.l.bf16 %v251
      %v268 = vunpack.c.l.bf16 %v252
      %vm285 = vcmask 1046528
      %v286 = vrot.slane %v133, 1
      %v287 = vrot.slane %v261, 1
      %v288 = vsel %vm285, %v286, %v287
      %v289 = vrot.slane %v134, 1
      %v290 = vrot.slane %v262, 1
      %v291 = vsel %vm285, %v289, %v290
      %v292 = vrot.slane %v135, 1
      %v293 = vrot.slane %v263, 1
      %v294 = vsel %vm285, %v292, %v293
      %v295 = vrot.slane %v136, 1
      %v296 = vrot.slane %v264, 1
      %v297 = vsel %vm285, %v295, %v296
      %v298 = vrot.slane %v137, 1
      %v299 = vrot.slane %v265, 1
      %v300 = vsel %vm285, %v298, %v299
      %v301 = vrot.slane %v138, 1
      %v302 = vrot.slane %v266, 1
      %v303 = vsel %vm285, %v301, %v302
      %v304 = vrot.slane %v139, 1
      %v305 = vrot.slane %v267, 1
      %v306 = vsel %vm285, %v304, %v305
      %v307 = vrot.slane %v140, 1
      %v308 = vrot.slane %v268, 1
      %v309 = vsel %vm285, %v307, %v308
      %v318 = vmax.f32 %v253, %v288
      %v319 = vmax.f32 %v254, %v291
      %v320 = vmax.f32 %v255, %v294
      %v321 = vmax.f32 %v256, %v297
      %v322 = vmax.f32 %v257, %v300
      %v323 = vmax.f32 %v258, %v303
      %v324 = vmax.f32 %v259, %v306
      %v325 = vmax.f32 %v260, %v309
      %v326 = vpack.c.bf16 %v318, %v318
      %v327 = vpack.c.bf16 %v319, %v319
      %v328 = vpack.c.bf16 %v320, %v320
      %v329 = vpack.c.bf16 %v321, %v321
      %v330 = vpack.c.bf16 %v322, %v322
      %v331 = vpack.c.bf16 %v323, %v323
      %v332 = vpack.c.bf16 %v324, %v324
      %v333 = vpack.c.bf16 %v325, %v325
      %v334 = vld [vmem:[%s111 + $0x18] sm:$0x1]
      %v335 = vld [vmem:[%s111 + $0x38] sm:$0x1]
      %v336 = vld [vmem:[%s111 + $0x58] sm:$0x1]
      %v337 = vld [vmem:[%s111 + $0x78] sm:$0x1]
      %v338 = vld [vmem:[%s111 + $0x98] sm:$0x1]
      %v339 = vld [vmem:[%s111 + $0xb8] sm:$0x1]
      %v340 = vld [vmem:[%s111 + $0xd8] sm:$0x1]
      %v341 = vld [vmem:[%s111 + $0xf8] sm:$0x1]
      %v342 = vunpack.c.l.bf16 %v326
      %v343 = vunpack.c.l.bf16 %v327
      %v344 = vunpack.c.l.bf16 %v328
      %v345 = vunpack.c.l.bf16 %v329
      %v346 = vunpack.c.l.bf16 %v330
      %v347 = vunpack.c.l.bf16 %v331
      %v348 = vunpack.c.l.bf16 %v332
      %v349 = vunpack.c.l.bf16 %v333
      %v350 = vunpack.c.l.bf16 %v334
      %v351 = vunpack.c.l.bf16 %v335
      %v352 = vunpack.c.l.bf16 %v336
      %v353 = vunpack.c.l.bf16 %v337
      %v354 = vunpack.c.l.bf16 %v338
      %v355 = vunpack.c.l.bf16 %v339
      %v356 = vunpack.c.l.bf16 %v340
      %v357 = vunpack.c.l.bf16 %v341
      %v374 = vrot.slane %v181, 1
      %v375 = vrot.slane %v350, 1
      %v376 = vsel %vm285, %v374, %v375
      %v377 = vrot.slane %v182, 1
      %v378 = vrot.slane %v351, 1
      %v379 = vsel %vm285, %v377, %v378
      %v380 = vrot.slane %v183, 1
      %v381 = vrot.slane %v352, 1
      %v382 = vsel %vm285, %v380, %v381
      %v383 = vrot.slane %v184, 1
      %v384 = vrot.slane %v353, 1
      %v385 = vsel %vm285, %v383, %v384
      %v386 = vrot.slane %v185, 1
      %v387 = vrot.slane %v354, 1
      %v388 = vsel %vm285, %v386, %v387
      %v389 = vrot.slane %v186, 1
      %v390 = vrot.slane %v355, 1
      %v391 = vsel %vm285, %v389, %v390
      %v392 = vrot.slane %v187, 1
      %v393 = vrot.slane %v356, 1
      %v394 = vsel %vm285, %v392, %v393
      %v395 = vrot.slane %v188, 1
      %v396 = vrot.slane %v357, 1
      %v397 = vsel %vm285, %v395, %v396
      %v406 = vmax.f32 %v342, %v376
      %v407 = vmax.f32 %v343, %v379
      %v408 = vmax.f32 %v344, %v382
      %v409 = vmax.f32 %v345, %v385
      %v410 = vmax.f32 %v346, %v388
      %v411 = vmax.f32 %v347, %v391
      %v412 = vmax.f32 %v348, %v394
      %v413 = vmax.f32 %v349, %v397
      %v414 = vpack.c.bf16 %v406, %v406
      %v415 = vpack.c.bf16 %v407, %v407
      %v416 = vpack.c.bf16 %v408, %v408
      %v417 = vpack.c.bf16 %v409, %v409
      %v418 = vpack.c.bf16 %v410, %v410
      %v419 = vpack.c.bf16 %v411, %v411
      %v420 = vpack.c.bf16 %v412, %v412
      %v421 = vpack.c.bf16 %v413, %v413
      %s422 = scalar_lea.vmem %s111, 32
      %v423 = vld [vmem:[%s422] sm:$0xf]
      %v424 = vld [vmem:[%s422 + $0x20] sm:$0xf]
      %v425 = vld [vmem:[%s422 + $0x40] sm:$0xf]
      %v426 = vld [vmem:[%s422 + $0x60] sm:$0xf]
      %v427 = vld [vmem:[%s422 + $0x80] sm:$0xf]
      %v428 = vld [vmem:[%s422 + $0xa0] sm:$0xf]
      %v429 = vld [vmem:[%s422 + $0xc0] sm:$0xf]
      %v430 = vld [vmem:[%s422 + $0xe0] sm:$0xf]
      %v431 = vunpack.c.l.bf16 %v414
      %v432 = vunpack.c.l.bf16 %v415
      %v433 = vunpack.c.l.bf16 %v416
      %v434 = vunpack.c.l.bf16 %v417
      %v435 = vunpack.c.l.bf16 %v418
      %v436 = vunpack.c.l.bf16 %v419
      %v437 = vunpack.c.l.bf16 %v420
      %v438 = vunpack.c.l.bf16 %v421
      %v439 = vunpack.c.l.bf16 %v423
      %v440 = vunpack.c.l.bf16 %v424
      %v441 = vunpack.c.l.bf16 %v425
      %v442 = vunpack.c.l.bf16 %v426
      %v443 = vunpack.c.l.bf16 %v427
      %v444 = vunpack.c.l.bf16 %v428
      %v445 = vunpack.c.l.bf16 %v429
      %v446 = vunpack.c.l.bf16 %v430
      %v447 = vmax.f32 %v431, %v439
      %v448 = vmax.f32 %v432, %v440
      %v449 = vmax.f32 %v433, %v441
      %v450 = vmax.f32 %v434, %v442
      %v451 = vmax.f32 %v435, %v443
      %v452 = vmax.f32 %v436, %v444
      %v453 = vmax.f32 %v437, %v445
      %v454 = vmax.f32 %v438, %v446
      %v455 = vpack.c.bf16 %v447, %v447
      %v456 = vpack.c.bf16 %v448, %v448
      %v457 = vpack.c.bf16 %v449, %v449
      %v458 = vpack.c.bf16 %v450, %v450
      %v459 = vpack.c.bf16 %v451, %v451
      %v460 = vpack.c.bf16 %v452, %v452
      %v461 = vpack.c.bf16 %v453, %v453
      %v462 = vpack.c.bf16 %v454, %v454
      %v463 = vld [vmem:[%s422 + $0x4] sm:$0xf]
      %v464 = vld [vmem:[%s422 + $0x24] sm:$0xf]
      %v465 = vld [vmem:[%s422 + $0x44] sm:$0xf]
      %v466 = vld [vmem:[%s422 + $0x64] sm:$0xf]
      %v467 = vld [vmem:[%s422 + $0x84] sm:$0xf]
      %v468 = vld [vmem:[%s422 + $0xa4] sm:$0xf]
      %v469 = vld [vmem:[%s422 + $0xc4] sm:$0xf]
      %v470 = vld [vmem:[%s422 + $0xe4] sm:$0xf]
      %v471 = vunpack.c.l.bf16 %v455
      %v472 = vunpack.c.l.bf16 %v456
      %v473 = vunpack.c.l.bf16 %v457
      %v474 = vunpack.c.l.bf16 %v458
      %v475 = vunpack.c.l.bf16 %v459
      %v476 = vunpack.c.l.bf16 %v460
      %v477 = vunpack.c.l.bf16 %v461
      %v478 = vunpack.c.l.bf16 %v462
      %v479 = vunpack.c.l.bf16 %v463
      %v480 = vunpack.c.l.bf16 %v464
      %v481 = vunpack.c.l.bf16 %v465
      %v482 = vunpack.c.l.bf16 %v466
      %v483 = vunpack.c.l.bf16 %v467
      %v484 = vunpack.c.l.bf16 %v468
      %v485 = vunpack.c.l.bf16 %v469
      %v486 = vunpack.c.l.bf16 %v470
      %v487 = vmax.f32 %v471, %v479
      %v488 = vmax.f32 %v472, %v480
      %v489 = vmax.f32 %v473, %v481
      %v490 = vmax.f32 %v474, %v482
      %v491 = vmax.f32 %v475, %v483
      %v492 = vmax.f32 %v476, %v484
      %v493 = vmax.f32 %v477, %v485
      %v494 = vmax.f32 %v478, %v486
      %v495 = vpack.c.bf16 %v487, %v487
      %v496 = vpack.c.bf16 %v488, %v488
      %v497 = vpack.c.bf16 %v489, %v489
      %v498 = vpack.c.bf16 %v490, %v490
      %v499 = vpack.c.bf16 %v491, %v491
      %v500 = vpack.c.bf16 %v492, %v492
      %v501 = vpack.c.bf16 %v493, %v493
      %v502 = vpack.c.bf16 %v494, %v494
      %v503 = vld [vmem:[%s422 + $0x10] sm:$0x1]
      %v504 = vld [vmem:[%s422 + $0x30] sm:$0x1]
      %v505 = vld [vmem:[%s422 + $0x50] sm:$0x1]
      %v506 = vld [vmem:[%s422 + $0x70] sm:$0x1]
      %v507 = vld [vmem:[%s422 + $0x90] sm:$0x1]
      %v508 = vld [vmem:[%s422 + $0xb0] sm:$0x1]
      %v509 = vld [vmem:[%s422 + $0xd0] sm:$0x1]
      %v510 = vld [vmem:[%s422 + $0xf0] sm:$0x1]
      %v511 = vunpack.c.l.bf16 %v495
      %v512 = vunpack.c.l.bf16 %v496
      %v513 = vunpack.c.l.bf16 %v497
      %v514 = vunpack.c.l.bf16 %v498
      %v515 = vunpack.c.l.bf16 %v499
      %v516 = vunpack.c.l.bf16 %v500
      %v517 = vunpack.c.l.bf16 %v501
      %v518 = vunpack.c.l.bf16 %v502
      %v519 = vunpack.c.l.bf16 %v503
      %v520 = vunpack.c.l.bf16 %v504
      %v521 = vunpack.c.l.bf16 %v505
      %v522 = vunpack.c.l.bf16 %v506
      %v523 = vunpack.c.l.bf16 %v507
      %v524 = vunpack.c.l.bf16 %v508
      %v525 = vunpack.c.l.bf16 %v509
      %v526 = vunpack.c.l.bf16 %v510
      %v543 = vrot.slane %v439, 1
      %v544 = vrot.slane %v519, 1
      %v545 = vsel %vm285, %v543, %v544
      %v546 = vrot.slane %v440, 1
      %v547 = vrot.slane %v520, 1
      %v548 = vsel %vm285, %v546, %v547
      %v549 = vrot.slane %v441, 1
      %v550 = vrot.slane %v521, 1
      %v551 = vsel %vm285, %v549, %v550
      %v552 = vrot.slane %v442, 1
      %v553 = vrot.slane %v522, 1
      %v554 = vsel %vm285, %v552, %v553
      %v555 = vrot.slane %v443, 1
      %v556 = vrot.slane %v523, 1
      %v557 = vsel %vm285, %v555, %v556
      %v558 = vrot.slane %v444, 1
      %v559 = vrot.slane %v524, 1
      %v560 = vsel %vm285, %v558, %v559
      %v561 = vrot.slane %v445, 1
      %v562 = vrot.slane %v525, 1
      %v563 = vsel %vm285, %v561, %v562
      %v564 = vrot.slane %v446, 1
      %v565 = vrot.slane %v526, 1
      %v566 = vsel %vm285, %v564, %v565
      %v575 = vmax.f32 %v511, %v545
      %v576 = vmax.f32 %v512, %v548
      %v577 = vmax.f32 %v513, %v551
      %v578 = vmax.f32 %v514, %v554
      %v579 = vmax.f32 %v515, %v557
      %v580 = vmax.f32 %v516, %v560
      %v581 = vmax.f32 %v517, %v563
      %v582 = vmax.f32 %v518, %v566
      %v583 = vpack.c.bf16 %v575, %v575
      %v584 = vpack.c.bf16 %v576, %v576
      %v585 = vpack.c.bf16 %v577, %v577
      %v586 = vpack.c.bf16 %v578, %v578
      %v587 = vpack.c.bf16 %v579, %v579
      %v588 = vpack.c.bf16 %v580, %v580
      %v589 = vpack.c.bf16 %v581, %v581
      %v590 = vpack.c.bf16 %v582, %v582
      %591 = vst [vmem:[%s116] sm:$0xf] %v583
      %592 = vst [vmem:[%s116 + $0x4] sm:$0xf] %v584
      %593 = vst [vmem:[%s116 + $0x8] sm:$0xf] %v585
      %594 = vst [vmem:[%s116 + $0xc] sm:$0xf] %v586
      %595 = vst [vmem:[%s116 + $0x10] sm:$0xf] %v587
      %596 = vst [vmem:[%s116 + $0x14] sm:$0xf] %v588
      %597 = vst [vmem:[%s116 + $0x18] sm:$0xf] %v589
      %598 = vst [vmem:[%s116 + $0x1c] sm:$0xf] %v590
      %p599 = scmp.lt.s32.totalorder %s12, 1
      %s600 = scalar_select %p599, %s12, 1
      %s601 = smul.addr %s600, 8
      %s602 = smul.addr %s601, 4
      %s603 = scalar_lea.vmem %s1, %s602
      // Predicated region
      $region25: #{_lambda_.10} parent=23 // pred_check
        %p604 = pneg %p56
      $region26: #{_lambda_.10} parent=23 // pred_check_branch
        %606 = sbr.rel (%p604) target = $region28
      $region27: #{_lambda_.10} parent=23 // pred_region
        _
      $region28: #{_lambda_.10} parent=23 // pred_fallthru
        _
    $region24: #{_lambda_.10} parent=5 // pred_fallthru
      _
    %p607 = scmp.le.s32.totalorder 2, %s7
    // Predicated region
    $region29: #{_lambda_.10} parent=5 // pred_check
      %p608 = pneg %p607
    $region30: #{_lambda_.10} parent=5 // pred_check_branch
      %610 = sbr.rel (%p608) target = $region32
    $region31: #{_lambda_.10} parent=5 // pred_region
      %s611 = ssub.s32 %s7, 2
      // Predicated region
      $region33: #{_lambda_.10} parent=31 // pred_check
        %p612 = pneg %p62
      $region34: #{_lambda_.10} parent=31 // pred_check_branch
        %614 = sbr.rel (%p612) target = $region36
      $region35: #{_lambda_.10} parent=31 // pred_region
        %p615 = scmp.lt.s32.totalorder %s13, 1
        %s616 = scalar_select %p615, %s13, 1
        %s617 = smul.addr %s616, 8
        %s618 = smul.addr %s617, 4
        %s619 = scalar_lea.vmem %s1, %s618
      $region36: #{_lambda_.10} parent=31 // pred_fallthru
        _
    $region32: #{_lambda_.10} parent=5 // pred_fallthru
      _
  $region6: #{_lambda_.10} parent=0 // loop_footer
    %s11 = sadd.s32 1, %s7
  $region7: #{_lambda_.10} parent=0 // loop_footer_branch
    %6 = sbr.rel target = $region3
  $region8: #{_lambda_.10} parent=0 // loop_exit
    _

// kernel: _lambda_.11
$region0: #{_lambda_.11}
  #allocation0 [shape = 'u32[]', space=smem, size = 0x4, offset = 0x4, fixed_abs, tag = 'smem constant byte address 0x4 - core index']
  #allocation1 [shape = 'u32[72,128]{1,0:T(1,128)}', space=vmem, size = 0x9000, scoped, tag = 'internal scratch']
  %s0 = inlined_call_operand.vmem [shape: bf16[2,8,8,128], index: 0, kind: input, shape index: {}]
  %s1 = inlined_call_operand.vmem [shape: bf16[1,128,128], index: 1, kind: input, shape index: {}]
  %s2 = inlined_call_operand.vmem [shape: f32[1,128], index: 2, kind: input, shape index: {}]
  %s3 = inlined_call_operand.vmem [shape: bf16[2,8,8,128], index: 3, kind: output, shape index: {}]
  %s4 = sld [smem:[#allocation0]]
  $region45: #{_lambda_.11} parent=0
    _
  %s6 = ssub.s32 1, %s4
  %s7 = scalar_select 0, %s6, %s4
  loop: start=0, step=1, limit=4
  $region2: #{_lambda_.11} parent=0 // loop_pre_header
    _
  $region3: #{_lambda_.11} parent=0 // loop_header
    %s9 = sphi 0, %s13
    %p10 = scmp.ge.s32.totalorder %s9, 4
    %s19 = sphi 0, %s21
    %s22 = sphi 0, %s19
    %s23 = sphi 0, %s22
    %s39 = sphi 0, %s23
    %s43 = sphi 0, %s43
    %s45 = sphi 0, %s43
    %s46 = sphi 0, %s45
    %s60 = sphi 0, %s46
    %s64 = sphi 0, %s64
    %s66 = sphi 0, %s64
    %s67 = sphi 0, %s66
    %s81 = sphi 0, %s67
    %s87 = sphi 0, %s89
    %s90 = sphi 0, %s87
    %s91 = sphi 0, %s90
    %s107 = sphi 0, %s91
  $region4: #{_lambda_.11} parent=0 // loop_header_branch
    %12 = sbr.rel (%p10) target = $region8
  $region5: #{_lambda_.11} parent=0 // loop_body
    %s14 = ssub.s32 %s9, 1
    %s15 = ssub.s32 %s9, 2
    %s16 = sadd.s32 %s9, 1
    %s17 = ssub.s32 %s9, %s16
    %p18 = scmp.eq.s32.totalorder %s17, 0
    %s20 = sadd.s32 %s19, 1
    %s21 = scalar_select %p18, %s19, %s20
    %p24 = pneg %p18
    %p25 = scmp.eq.s32.totalorder %s9, 1
    %p26 = por %p24, %p25
    %p27 = scmp.ne.s32.totalorder %s19, %s22
    %p28 = scmp.eq.s32.totalorder %s9, 0
    %p29 = por %p27, %p28
    %p30 = scmp.ne.s32.totalorder %s19, %s22
    %p31 = scmp.eq.s32.totalorder %s14, 1
    %p32 = por %p30, %p31
    %p33 = scmp.ne.s32.totalorder %s22, %s23
    %p34 = scmp.eq.s32.totalorder %s14, 0
    %p35 = por %p33, %p34
    %p36 = scmp.ne.s32.totalorder %s22, %s23
    %p37 = scmp.eq.s32.totalorder %s15, 1
    %p38 = por %p36, %p37
    %p40 = scmp.ne.s32.totalorder %s23, %s39
    %p41 = scmp.eq.s32.totalorder %s15, 0
    %p42 = por %p40, %p41
    %s44 = sadd.s32 %s43, 1
    %p47 = scmp.eq.s32.totalorder %s9, 1
    %p48 = scmp.ne.s32.totalorder %s43, %s45
    %p49 = scmp.eq.s32.totalorder %s9, 0
    %p50 = por %p48, %p49
    %p51 = scmp.ne.s32.totalorder %s43, %s45
    %p52 = scmp.eq.s32.totalorder %s14, 1
    %p53 = por %p51, %p52
    %p54 = scmp.ne.s32.totalorder %s45, %s46
    %p55 = scmp.eq.s32.totalorder %s14, 0
    %p56 = por %p54, %p55
    %p57 = scmp.ne.s32.totalorder %s45, %s46
    %p58 = scmp.eq.s32.totalorder %s15, 1
    %p59 = por %p57, %p58
    %p61 = scmp.ne.s32.totalorder %s46, %s60
    %p62 = scmp.eq.s32.totalorder %s15, 0
    %p63 = por %p61, %p62
    %s65 = sadd.s32 %s64, 1
    %p68 = scmp.eq.s32.totalorder %s9, 1
    %p69 = scmp.ne.s32.totalorder %s64, %s66
    %p70 = scmp.eq.s32.totalorder %s9, 0
    %p71 = por %p69, %p70
    %p72 = scmp.ne.s32.totalorder %s64, %s66
    %p73 = scmp.eq.s32.totalorder %s14, 1
    %p74 = por %p72, %p73
    %p75 = scmp.ne.s32.totalorder %s66, %s67
    %p76 = scmp.eq.s32.totalorder %s14, 0
    %p77 = por %p75, %p76
    %p78 = scmp.ne.s32.totalorder %s66, %s67
    %p79 = scmp.eq.s32.totalorder %s15, 1
    %p80 = por %p78, %p79
    %p82 = scmp.ne.s32.totalorder %s67, %s81
    %p83 = scmp.eq.s32.totalorder %s15, 0
    %p84 = por %p82, %p83
    %s85 = ssub.s32 %s9, %s16
    %p86 = scmp.eq.s32.totalorder %s85, 0
    %s88 = sadd.s32 %s87, 1
    %s89 = scalar_select %p86, %s87, %s88
    %p92 = pneg %p86
    %p93 = scmp.eq.s32.totalorder %s9, 1
    %p94 = por %p92, %p93
    %p95 = scmp.ne.s32.totalorder %s87, %s90
    %p96 = scmp.eq.s32.totalorder %s9, 0
    %p97 = por %p95, %p96
    %p98 = scmp.ne.s32.totalorder %s87, %s90
    %p99 = scmp.eq.s32.totalorder %s14, 1
    %p100 = por %p98, %p99
    %p101 = scmp.ne.s32.totalorder %s90, %s91
    %p102 = scmp.eq.s32.totalorder %s14, 0
    %p103 = por %p101, %p102
    %p104 = scmp.ne.s32.totalorder %s90, %s91
    %p105 = scmp.eq.s32.totalorder %s15, 1
    %p106 = por %p104, %p105
    %p108 = scmp.ne.s32.totalorder %s91, %s107
    %p109 = scmp.eq.s32.totalorder %s15, 0
    %p110 = por %p108, %p109
    %p111 = scmp.le.s32.totalorder 1, %s9
    %p112 = scmp.lt.s32.totalorder %s9, 3
    %p113 = pnand %p111, %p112
    %p114 = pneg %p113
    // Predicated region
    $region9: #{_lambda_.11} parent=5 // pred_check
      _
    $region10: #{_lambda_.11} parent=5 // pred_check_branch
      %116 = sbr.rel (%p113) target = $region12
    $region11: #{_lambda_.11} parent=5 // pred_region
      %s117 = ssub.s32 %s9, 1
      // Predicated region
      $region13: #{_lambda_.11} parent=11 // pred_check
        %p118 = pneg %p56
      $region14: #{_lambda_.11} parent=11 // pred_check_branch
        %120 = sbr.rel (%p118) target = $region16
      $region15: #{_lambda_.11} parent=11 // pred_region
        _
      $region16: #{_lambda_.11} parent=11 // pred_fallthru
        _
      // Predicated region
      $region17: #{_lambda_.11} parent=11 // pred_check
        %p121 = pneg %p77
      $region18: #{_lambda_.11} parent=11 // pred_check_branch
        %123 = sbr.rel (%p121) target = $region20
      $region19: #{_lambda_.11} parent=11 // pred_region
        _
      $region20: #{_lambda_.11} parent=11 // pred_fallthru
        _
    $region12: #{_lambda_.11} parent=5 // pred_fallthru
      _
    %p124 = scmp.lt.s32.totalorder %s9, 2
    // Predicated region
    $region21: #{_lambda_.11} parent=5 // pred_check
      %p125 = pneg %p124
    $region22: #{_lambda_.11} parent=5 // pred_check_branch
      %127 = sbr.rel (%p125) target = $region24
    $region23: #{_lambda_.11} parent=5 // pred_region
      // Predicated region
      $region25: #{_lambda_.11} parent=23 // pred_check
        %p128 = pneg %p29
      $region26: #{_lambda_.11} parent=23 // pred_check_branch
        %130 = sbr.rel (%p128) target = $region28
      $region27: #{_lambda_.11} parent=23 // pred_region
        %p131 = scmp.lt.s32.totalorder %s9, 1
        %s132 = scalar_select %p131, %s9, 1
        %s133 = smul.addr %s132, 8
        %s134 = smul.addr %s133, 4
        %s135 = scalar_lea.vmem %s0, %s134
      $region28: #{_lambda_.11} parent=23 // pred_fallthru
        _
    $region24: #{_lambda_.11} parent=5 // pred_fallthru
      _
    %p136 = scmp.le.s32.totalorder 1, %s9
    %p137 = scmp.lt.s32.totalorder %s9, 3
    %p138 = pnand %p136, %p137
    %p139 = pneg %p138
    // Predicated region
    $region29: #{_lambda_.11} parent=5 // pred_check
      _
    $region30: #{_lambda_.11} parent=5 // pred_check_branch
      %141 = sbr.rel (%p138) target = $region32
    $region31: #{_lambda_.11} parent=5 // pred_region
      %s142 = ssub.s32 %s9, 1
      %p143 = scmp.lt.s32.totalorder %s14, 1
      %s144 = scalar_select %p143, %s14, 1
      %s145 = smul.addr %s144, 8
      %s146 = smul.addr %s145, 4
      %s147 = scalar_lea.vmem %s0, %s146
      %p148 = pneg %p35
      %p149 = pneg %p32
      %p150 = pneg %p56
      %p151 = pneg %p53
      %p152 = pneg %p77
      %p153 = pneg %p74
      %p154 = pneg %p103
      %p155 = pneg %p100
      %p156 = scmp.lt.s32.totalorder %s14, 1
      %s157 = scalar_select %p156, %s14, 1
      %s158 = smul.addr %s157, 8
      %s159 = smul.addr %s158, 4
      %s160 = scalar_lea.vmem %s3, %s159
      %p161 = scmp.lt.s32.totalorder %s14, 1
      %s162 = scalar_select %p161, %s14, 1
      %s163 = smul.addr %s162, 8
      %s164 = smul.addr %s163, 4
      %s165 = scalar_lea.vmem %s0, %s164
      %p166 = scmp.lt.s32.totalorder %s14, 1
      %s167 = scalar_select %p166, %s14, 1
      %s168 = smul.addr %s167, 8
      %s169 = smul.addr %s168, 4
      %s170 = scalar_lea.vmem %s3, %s169
      %v171 = vld [vmem:[%s165] sm:$0xf]
      %v172 = vld [vmem:[%s165 + $0x4] sm:$0xf]
      %v173 = vld [vmem:[%s165 + $0x8] sm:$0xf]
      %v174 = vld [vmem:[%s165 + $0xc] sm:$0xf]
      %v175 = vld [vmem:[%s165 + $0x10] sm:$0xf]
      %v176 = vld [vmem:[%s165 + $0x14] sm:$0xf]
      %v177 = vld [vmem:[%s165 + $0x18] sm:$0xf]
      %v178 = vld [vmem:[%s165 + $0x1c] sm:$0xf]
      %v179 = vld [vmem:[%s1] sm:$0xf]
      %v180 = vld [vmem:[%s1 + $0x4] sm:$0xf]
      %v181 = vld [vmem:[%s1 + $0x8] sm:$0xf]
      %v182 = vld [vmem:[%s1 + $0xc] sm:$0xf]
      %v183 = vld [vmem:[%s1 + $0x10] sm:$0xf]
      %v184 = vld [vmem:[%s1 + $0x14] sm:$0xf]
      %v185 = vld [vmem:[%s1 + $0x18] sm:$0xf]
      %v186 = vld [vmem:[%s1 + $0x1c] sm:$0xf]
      %v187 = vld [vmem:[%s1 + $0x20] sm:$0xf]
      %v188 = vld [vmem:[%s1 + $0x24] sm:$0xf]
      %v189 = vld [vmem:[%s1 + $0x28] sm:$0xf]
      %v190 = vld [vmem:[%s1 + $0x2c] sm:$0xf]
      %v191 = vld [vmem:[%s1 + $0x30] sm:$0xf]
      %v192 = vld [vmem:[%s1 + $0x34] sm:$0xf]
      %v193 = vld [vmem:[%s1 + $0x38] sm:$0xf]
      %v194 = vld [vmem:[%s1 + $0x3c] sm:$0xf]
      %v195 = vld [vmem:[%s2] sm:$0x1]
      %v197 = vperm.slane %v195, 0
      %v207 = vunpack.c.l.b16 %v171
      %v208 = vunpack.c.l.b16 %v172
      %v209 = vunpack.c.l.b16 %v173
      %v210 = vunpack.c.l.b16 %v174
      %v211 = vunpack.c.l.b16 %v175
      %v212 = vunpack.c.l.b16 %v176
      %v213 = vunpack.c.l.b16 %v177
      %v214 = vunpack.c.l.b16 %v178
      %v215 = vpack.c.b16 %v208, %v207
      %v216 = vpack.c.b16 %v210, %v209
      %v217 = vpack.c.b16 %v212, %v211
      %v218 = vpack.c.b16 %v214, %v213
      %v239 = vunpack.c.l.b16 %v179
      %v240 = vunpack.c.l.b16 %v180
      %v241 = vunpack.c.l.b16 %v181
      %v242 = vunpack.c.l.b16 %v182
      %v243 = vunpack.c.l.b16 %v183
      %v244 = vunpack.c.l.b16 %v184
      %v245 = vunpack.c.l.b16 %v185
      %v246 = vunpack.c.l.b16 %v186
      %v247 = vunpack.c.l.b16 %v187
      %v248 = vunpack.c.l.b16 %v188
      %v249 = vunpack.c.l.b16 %v189
      %v250 = vunpack.c.l.b16 %v190
      %v251 = vunpack.c.l.b16 %v191
      %v252 = vunpack.c.l.b16 %v192
      %v253 = vunpack.c.l.b16 %v193
      %v254 = vunpack.c.l.b16 %v194
      %v255 = vpack.c.b16 %v240, %v239
      %v256 = vpack.c.b16 %v242, %v241
      %v257 = vpack.c.b16 %v244, %v243
      %v258 = vpack.c.b16 %v246, %v245
      %v259 = vpack.c.b16 %v248, %v247
      %v260 = vpack.c.b16 %v250, %v249
      %v261 = vpack.c.b16 %v252, %v251
      %v262 = vpack.c.b16 %v254, %v253
      %271 = vmatpush.bf16.msra.mxu0 %v262
      %272 = vmatpush.bf16.msra.mxu0 %v261
      %273 = vmatpush.bf16.msra.mxu0 %v260
      %274 = vmatpush.bf16.msra.mxu0 %v259
      %275 = vmatpush.bf16.msra.mxu0 %v258
      %276 = vmatpush.bf16.msra.mxu0 %v257
      %277 = vmatpush.bf16.msra.mxu0 %v256
      %278 = vmatpush.bf16.msra.mxu0 %v255
      %279 = vmatmul.bf16.gmra.mxu0 %v215
      %v280 = vpop.f32.mrf.mxu0
      %v281 = vadd.f32 %v197, %v280
      %v282 = vpop.f32.mrf.mxu0
      %v283 = vadd.f32 %v197, %v282
      %284 = vmatmul.bf16.gmra.mxu0 %v216
      %v285 = vpop.f32.mrf.mxu0
      %v286 = vadd.f32 %v197, %v285
      %v287 = vpop.f32.mrf.mxu0
      %v288 = vadd.f32 %v197, %v287
      %289 = vmatmul.bf16.gmra.mxu0 %v217
      %v290 = vpop.f32.mrf.mxu0
      %v291 = vadd.f32 %v197, %v290
      %v292 = vpop.f32.mrf.mxu0
      %v293 = vadd.f32 %v197, %v292
      %294 = vmatmul.bf16.gmra.mxu0 %v218
      %v295 = vpop.f32.mrf.mxu0
      %v296 = vadd.f32 %v197, %v295
      %v297 = vpop.f32.mrf.mxu0
      %v298 = vadd.f32 %v197, %v297
      %299 = vdwg.mxu0
      %v300 = vmax.f32 %v281, 0.0
      %v301 = vmax.f32 %v283, 0.0
      %v302 = vmax.f32 %v286, 0.0
      %v303 = vmax.f32 %v288, 0.0
      %v304 = vmax.f32 %v291, 0.0
      %v305 = vmax.f32 %v293, 0.0
      %v306 = vmax.f32 %v296, 0.0
      %v307 = vmax.f32 %v298, 0.0
      %v308 = vpack.c.bf16 %v300, %v300
      %v309 = vpack.c.bf16 %v301, %v301
      %v310 = vpack.c.bf16 %v302, %v302
      %v311 = vpack.c.bf16 %v303, %v303
      %v312 = vpack.c.bf16 %v304, %v304
      %v313 = vpack.c.bf16 %v305, %v305
      %v314 = vpack.c.bf16 %v306, %v306
      %v315 = vpack.c.bf16 %v307, %v307
      %316 = vst [vmem:[%s170] sm:$0xf] %v308
      %317 = vst [vmem:[%s170 + $0x4] sm:$0xf] %v309
      %318 = vst [vmem:[%s170 + $0x8] sm:$0xf] %v310
      %319 = vst [vmem:[%s170 + $0xc] sm:$0xf] %v311
      %320 = vst [vmem:[%s170 + $0x10] sm:$0xf] %v312
      %321 = vst [vmem:[%s170 + $0x14] sm:$0xf] %v313
      %322 = vst [vmem:[%s170 + $0x18] sm:$0xf] %v314
      %323 = vst [vmem:[%s170 + $0x1c] sm:$0xf] %v315
      %p324 = scmp.lt.s32.totalorder %s14, 1
      %s325 = scalar_select %p324, %s14, 1
      %s326 = smul.addr %s325, 8
      %s327 = smul.addr %s326, 4
      %s328 = scalar_lea.vmem %s3, %s327
      // Predicated region
      $region33: #{_lambda_.11} parent=31 // pred_check
        %p329 = pneg %p100
      $region34: #{_lambda_.11} parent=31 // pred_check_branch
        %331 = sbr.rel (%p329) target = $region36
      $region35: #{_lambda_.11} parent=31 // pred_region
        _
      $region36: #{_lambda_.11} parent=31 // pred_fallthru
        _
    $region32: #{_lambda_.11} parent=5 // pred_fallthru
      _
    %p332 = scmp.le.s32.totalorder 2, %s9
    // Predicated region
    $region37: #{_lambda_.11} parent=5 // pred_check
      %p333 = pneg %p332
    $region38: #{_lambda_.11} parent=5 // pred_check_branch
      %335 = sbr.rel (%p333) target = $region40
    $region39: #{_lambda_.11} parent=5 // pred_region
      %s336 = ssub.s32 %s9, 2
      // Predicated region
      $region41: #{_lambda_.11} parent=39 // pred_check
        %p337 = pneg %p106
      $region42: #{_lambda_.11} parent=39 // pred_check_branch
        %339 = sbr.rel (%p337) target = $region44
      $region43: #{_lambda_.11} parent=39 // pred_region
        %p340 = scmp.lt.s32.totalorder %s15, 1
        %s341 = scalar_select %p340, %s15, 1
        %s342 = smul.addr %s341, 8
        %s343 = smul.addr %s342, 4
        %s344 = scalar_lea.vmem %s3, %s343
      $region44: #{_lambda_.11} parent=39 // pred_fallthru
        _
    $region40: #{_lambda_.11} parent=5 // pred_fallthru
      _
  $region6: #{_lambda_.11} parent=0 // loop_footer
    %s13 = sadd.s32 1, %s9
  $region7: #{_lambda_.11} parent=0 // loop_footer_branch
    %8 = sbr.rel target = $region3
  $region8: #{_lambda_.11} parent=0 // loop_exit
    _

// kernel: _lambda_.9
$region0: #{_lambda_.9}
  #allocation0 [shape = 'u32[]', space=smem, size = 0x4, offset = 0x4, fixed_abs, tag = 'smem constant byte address 0x4 - core index']
  #allocation1 [shape = 'u32[72,128]{1,0:T(1,128)}', space=vmem, size = 0x9000, scoped, tag = 'internal scratch']
  %s0 = inlined_call_operand.vmem [shape: bf16[2,19,19,12], index: 0, kind: input, shape index: {}]
  %s1 = inlined_call_operand.vmem [shape: bf16[16,12,128], index: 1, kind: input, shape index: {}]
  %s2 = inlined_call_operand.vmem [shape: f32[1,128], index: 2, kind: input, shape index: {}]
  %s3 = inlined_call_operand.vmem [shape: bf16[2,16,16,128], index: 3, kind: output, shape index: {}]
  %s4 = sld [smem:[#allocation0]]
  $region45: #{_lambda_.9} parent=0
    _
  %s6 = ssub.s32 1, %s4
  %s7 = scalar_select 0, %s6, %s4
  loop: start=0, step=1, limit=4
  $region2: #{_lambda_.9} parent=0 // loop_pre_header
    _
  $region3: #{_lambda_.9} parent=0 // loop_header
    %s9 = sphi 0, %s13
    %p10 = scmp.ge.s32.totalorder %s9, 4
    %s19 = sphi 0, %s21
    %s22 = sphi 0, %s19
    %s23 = sphi 0, %s22
    %s39 = sphi 0, %s23
    %s43 = sphi 0, %s43
    %s45 = sphi 0, %s43
    %s46 = sphi 0, %s45
    %s60 = sphi 0, %s46
    %s64 = sphi 0, %s64
    %s66 = sphi 0, %s64
    %s67 = sphi 0, %s66
    %s81 = sphi 0, %s67
    %s87 = sphi 0, %s89
    %s90 = sphi 0, %s87
    %s91 = sphi 0, %s90
    %s107 = sphi 0, %s91
  $region4: #{_lambda_.9} parent=0 // loop_header_branch
    %12 = sbr.rel (%p10) target = $region8
  $region5: #{_lambda_.9} parent=0 // loop_body
    %s14 = ssub.s32 %s9, 1
    %s15 = ssub.s32 %s9, 2
    %s16 = sadd.s32 %s9, 1
    %s17 = ssub.s32 %s9, %s16
    %p18 = scmp.eq.s32.totalorder %s17, 0
    %s20 = sadd.s32 %s19, 1
    %s21 = scalar_select %p18, %s19, %s20
    %p24 = pneg %p18
    %p25 = scmp.eq.s32.totalorder %s9, 1
    %p26 = por %p24, %p25
    %p27 = scmp.ne.s32.totalorder %s19, %s22
    %p28 = scmp.eq.s32.totalorder %s9, 0
    %p29 = por %p27, %p28
    %p30 = scmp.ne.s32.totalorder %s19, %s22
    %p31 = scmp.eq.s32.totalorder %s14, 1
    %p32 = por %p30, %p31
    %p33 = scmp.ne.s32.totalorder %s22, %s23
    %p34 = scmp.eq.s32.totalorder %s14, 0
    %p35 = por %p33, %p34
    %p36 = scmp.ne.s32.totalorder %s22, %s23
    %p37 = scmp.eq.s32.totalorder %s15, 1
    %p38 = por %p36, %p37
    %p40 = scmp.ne.s32.totalorder %s23, %s39
    %p41 = scmp.eq.s32.totalorder %s15, 0
    %p42 = por %p40, %p41
    %s44 = sadd.s32 %s43, 1
    %p47 = scmp.eq.s32.totalorder %s9, 1
    %p48 = scmp.ne.s32.totalorder %s43, %s45
    %p49 = scmp.eq.s32.totalorder %s9, 0
    %p50 = por %p48, %p49
    %p51 = scmp.ne.s32.totalorder %s43, %s45
    %p52 = scmp.eq.s32.totalorder %s14, 1
    %p53 = por %p51, %p52
    %p54 = scmp.ne.s32.totalorder %s45, %s46
    %p55 = scmp.eq.s32.totalorder %s14, 0
    %p56 = por %p54, %p55
    %p57 = scmp.ne.s32.totalorder %s45, %s46
    %p58 = scmp.eq.s32.totalorder %s15, 1
    %p59 = por %p57, %p58
    %p61 = scmp.ne.s32.totalorder %s46, %s60
    %p62 = scmp.eq.s32.totalorder %s15, 0
    %p63 = por %p61, %p62
    %s65 = sadd.s32 %s64, 1
    %p68 = scmp.eq.s32.totalorder %s9, 1
    %p69 = scmp.ne.s32.totalorder %s64, %s66
    %p70 = scmp.eq.s32.totalorder %s9, 0
    %p71 = por %p69, %p70
    %p72 = scmp.ne.s32.totalorder %s64, %s66
    %p73 = scmp.eq.s32.totalorder %s14, 1
    %p74 = por %p72, %p73
    %p75 = scmp.ne.s32.totalorder %s66, %s67
    %p76 = scmp.eq.s32.totalorder %s14, 0
    %p77 = por %p75, %p76
    %p78 = scmp.ne.s32.totalorder %s66, %s67
    %p79 = scmp.eq.s32.totalorder %s15, 1
    %p80 = por %p78, %p79
    %p82 = scmp.ne.s32.totalorder %s67, %s81
    %p83 = scmp.eq.s32.totalorder %s15, 0
    %p84 = por %p82, %p83
    %s85 = ssub.s32 %s9, %s16
    %p86 = scmp.eq.s32.totalorder %s85, 0
    %s88 = sadd.s32 %s87, 1
    %s89 = scalar_select %p86, %s87, %s88
    %p92 = pneg %p86
    %p93 = scmp.eq.s32.totalorder %s9, 1
    %p94 = por %p92, %p93
    %p95 = scmp.ne.s32.totalorder %s87, %s90
    %p96 = scmp.eq.s32.totalorder %s9, 0
    %p97 = por %p95, %p96
    %p98 = scmp.ne.s32.totalorder %s87, %s90
    %p99 = scmp.eq.s32.totalorder %s14, 1
    %p100 = por %p98, %p99
    %p101 = scmp.ne.s32.totalorder %s90, %s91
    %p102 = scmp.eq.s32.totalorder %s14, 0
    %p103 = por %p101, %p102
    %p104 = scmp.ne.s32.totalorder %s90, %s91
    %p105 = scmp.eq.s32.totalorder %s15, 1
    %p106 = por %p104, %p105
    %p108 = scmp.ne.s32.totalorder %s91, %s107
    %p109 = scmp.eq.s32.totalorder %s15, 0
    %p110 = por %p108, %p109
    %p111 = scmp.le.s32.totalorder 1, %s9
    %p112 = scmp.lt.s32.totalorder %s9, 3
    %p113 = pnand %p111, %p112
    %p114 = pneg %p113
    // Predicated region
    $region9: #{_lambda_.9} parent=5 // pred_check
      _
    $region10: #{_lambda_.9} parent=5 // pred_check_branch
      %116 = sbr.rel (%p113) target = $region12
    $region11: #{_lambda_.9} parent=5 // pred_region
      %s117 = ssub.s32 %s9, 1
      // Predicated region
      $region13: #{_lambda_.9} parent=11 // pred_check
        %p118 = pneg %p56
      $region14: #{_lambda_.9} parent=11 // pred_check_branch
        %120 = sbr.rel (%p118) target = $region16
      $region15: #{_lambda_.9} parent=11 // pred_region
        _
      $region16: #{_lambda_.9} parent=11 // pred_fallthru
        _
      // Predicated region
      $region17: #{_lambda_.9} parent=11 // pred_check
        %p121 = pneg %p77
      $region18: #{_lambda_.9} parent=11 // pred_check_branch
        %123 = sbr.rel (%p121) target = $region20
      $region19: #{_lambda_.9} parent=11 // pred_region
        _
      $region20: #{_lambda_.9} parent=11 // pred_fallthru
        _
    $region12: #{_lambda_.9} parent=5 // pred_fallthru
      _
    %p124 = scmp.lt.s32.totalorder %s9, 2
    // Predicated region
    $region21: #{_lambda_.9} parent=5 // pred_check
      %p125 = pneg %p124
    $region22: #{_lambda_.9} parent=5 // pred_check_branch
      %127 = sbr.rel (%p125) target = $region24
    $region23: #{_lambda_.9} parent=5 // pred_region
      // Predicated region
      $region25: #{_lambda_.9} parent=23 // pred_check
        %p128 = pneg %p29
      $region26: #{_lambda_.9} parent=23 // pred_check_branch
        %130 = sbr.rel (%p128) target = $region28
      $region27: #{_lambda_.9} parent=23 // pred_region
        %p131 = scmp.lt.s32.totalorder %s9, 1
        %s132 = scalar_select %p131, %s9, 1
        %s133 = smul.addr %s132, 57
        %s134 = smul.addr %s133, 4
        %s135 = scalar_lea.vmem %s0, %s134
      $region28: #{_lambda_.9} parent=23 // pred_fallthru
        _
    $region24: #{_lambda_.9} parent=5 // pred_fallthru
      _
    %p136 = scmp.le.s32.totalorder 1, %s9
    %p137 = scmp.lt.s32.totalorder %s9, 3
    %p138 = pnand %p136, %p137
    %p139 = pneg %p138
    // Predicated region
    $region29: #{_lambda_.9} parent=5 // pred_check
      _
    $region30: #{_lambda_.9} parent=5 // pred_check_branch
      %141 = sbr.rel (%p138) target = $region32
    $region31: #{_lambda_.9} parent=5 // pred_region
      %s142 = ssub.s32 %s9, 1
      %p143 = scmp.lt.s32.totalorder %s14, 1
      %s144 = scalar_select %p143, %s14, 1
      %s145 = smul.addr %s144, 57
      %s146 = smul.addr %s145, 4
      %s147 = scalar_lea.vmem %s0, %s146
      %p148 = pneg %p35
      %p149 = pneg %p32
      %p150 = pneg %p56
      %p151 = pneg %p53
      %p152 = pneg %p77
      %p153 = pneg %p74
      %p154 = pneg %p103
      %p155 = pneg %p100
      %p156 = scmp.lt.s32.totalorder %s14, 1
      %s157 = scalar_select %p156, %s14, 1
      %s158 = smul.addr %s157, 32
      %s159 = smul.addr %s158, 4
      %s160 = scalar_lea.vmem %s3, %s159
      %p161 = scmp.lt.s32.totalorder %s14, 1
      %s162 = scalar_select %p161, %s14, 1
      %s163 = smul.addr %s162, 57
      %s164 = smul.addr %s163, 4
      %s165 = scalar_lea.vmem %s0, %s164
      %p166 = scmp.lt.s32.totalorder %s14, 1
      %s167 = scalar_select %p166, %s14, 1
      %s168 = smul.addr %s167, 32
      %s169 = smul.addr %s168, 4
      %s170 = scalar_lea.vmem %s3, %s169
      %v172 = vld [vmem:[%s165] sm:$0xf]
      %v173 = vld [vmem:[%s165 + $0x4] sm:$0xf]
      %v174 = vld [vmem:[%s165 + $0xc] sm:$0xf]
      %v175 = vld [vmem:[%s165 + $0x10] sm:$0xf]
      %v176 = vld [vmem:[%s165 + $0x18] sm:$0xf]
      %v177 = vld [vmem:[%s165 + $0x1c] sm:$0xf]
      %v178 = vld [vmem:[%s165 + $0x24] sm:$0xf]
      %v179 = vld [vmem:[%s165 + $0x28] sm:$0xf]
      %v180 = vld [vmem:[%s165 + $0x30] sm:$0xf]
      %v181 = vld [vmem:[%s165 + $0x34] sm:$0xf]
      %v182 = vld [vmem:[%s165 + $0x3c] sm:$0xf]
      %v183 = vld [vmem:[%s165 + $0x40] sm:$0xf]
      %v184 = vld [vmem:[%s165 + $0x48] sm:$0xf]
      %v185 = vld [vmem:[%s165 + $0x4c] sm:$0xf]
      %v186 = vld [vmem:[%s165 + $0x54] sm:$0xf]
      %v187 = vld [vmem:[%s165 + $0x58] sm:$0xf]
      %v188 = vld [vmem:[%s165 + $0x60] sm:$0xf]
      %v189 = vld [vmem:[%s165 + $0x64] sm:$0xf]
      %v190 = vld [vmem:[%s165 + $0x6c] sm:$0xf]
      %v191 = vld [vmem:[%s165 + $0x70] sm:$0xf]
      %v192 = vld [vmem:[%s165 + $0x78] sm:$0xf]
      %v193 = vld [vmem:[%s165 + $0x7c] sm:$0xf]
      %v194 = vld [vmem:[%s165 + $0x84] sm:$0xf]
      %v195 = vld [vmem:[%s165 + $0x88] sm:$0xf]
      %v196 = vld [vmem:[%s165 + $0x90] sm:$0xf]
      %v197 = vld [vmem:[%s165 + $0x94] sm:$0xf]
      %v198 = vld [vmem:[%s165 + $0x9c] sm:$0xf]
      %v199 = vld [vmem:[%s165 + $0xa0] sm:$0xf]
      %v200 = vld [vmem:[%s165 + $0xa8] sm:$0xf]
      %v201 = vld [vmem:[%s165 + $0xac] sm:$0xf]
      %v202 = vld [vmem:[%s165 + $0xb4] sm:$0xf]
      %v203 = vld [vmem:[%s165 + $0xb8] sm:$0xf]
      %v204 = vld [vmem:[%s1] sm:$0xf]
      %v205 = vld [vmem:[%s1 + $0x4] sm:$0x3]
      %v206 = vld [vmem:[%s165 + $0x8] sm:$0x1]
      %v207 = vld [vmem:[%s165 + $0x14] sm:$0x1]
      %v208 = vld [vmem:[%s165 + $0x20] sm:$0x1]
      %v209 = vld [vmem:[%s165 + $0x2c] sm:$0x1]
      %v210 = vld [vmem:[%s165 + $0x38] sm:$0x1]
      %v211 = vld [vmem:[%s165 + $0x44] sm:$0x1]
      %v212 = vld [vmem:[%s165 + $0x50] sm:$0x1]
      %v213 = vld [vmem:[%s165 + $0x5c] sm:$0x1]
      %v214 = vld [vmem:[%s165 + $0x68] sm:$0x1]
      %v215 = vld [vmem:[%s165 + $0x74] sm:$0x1]
      %v216 = vld [vmem:[%s165 + $0x80] sm:$0x1]
      %v217 = vld [vmem:[%s165 + $0x8c] sm:$0x1]
      %v218 = vld [vmem:[%s165 + $0x98] sm:$0x1]
      %v219 = vld [vmem:[%s165 + $0xa4] sm:$0x1]
      %v220 = vld [vmem:[%s165 + $0xb0] sm:$0x1]
      %v221 = vld [vmem:[%s165 + $0xbc] sm:$0x1]
      %vm222 = vsmask.f32 3328
      %vm223 = vsmask.f32 7440
      %vm224 = vmor %vm222, %vm223
      %v226 = vshrl.u32 %v172, 16
      %v228 = vrot.slane %v226, 4
      %v229 = vshll.u32 %v172, 16
      %v231 = vrot.slane %v229, 5
      %v232 = vor.u32 %v228, %v231
      %v233 = vrot.slane %v232, 4
      %v235 = vshll.u32 %v173, 16
      %v237 = vrot.slane %v235, 5
      %v238 = vsel %vm224, %v233, %v237
      %v239 = vshrl.u32 %v173, 16
      %v241 = vrot.slane %v239, 4
      %v242 = vor.u32 %v241, %v237
      %v243 = vrot.slane %v242, 4
      %v245 = vshll.u32 %v206, 16
      %v247 = vrot.slane %v245, 5
      %v248 = vsel %vm224, %v243, %v247
      %v250 = vshrl.u32 %v174, 16
      %v252 = vrot.slane %v250, 4
      %v253 = vshll.u32 %v174, 16
      %v255 = vrot.slane %v253, 5
      %v256 = vor.u32 %v252, %v255
      %v257 = vrot.slane %v256, 4
      %v259 = vshll.u32 %v175, 16
      %v261 = vrot.slane %v259, 5
      %v262 = vsel %vm224, %v257, %v261
      %v263 = vshrl.u32 %v175, 16
      %v265 = vrot.slane %v263, 4
      %v266 = vor.u32 %v265, %v261
      %v267 = vrot.slane %v266, 4
      %v269 = vshll.u32 %v207, 16
      %v271 = vrot.slane %v269, 5
      %v272 = vsel %vm224, %v267, %v271
      %v274 = vshrl.u32 %v176, 16
      %v276 = vrot.slane %v274, 4
      %v277 = vshll.u32 %v176, 16
      %v279 = vrot.slane %v277, 5
      %v280 = vor.u32 %v276, %v279
      %v281 = vrot.slane %v280, 4
      %v283 = vshll.u32 %v177, 16
      %v285 = vrot.slane %v283, 5
      %v286 = vsel %vm224, %v281, %v285
      %v287 = vshrl.u32 %v177, 16
      %v289 = vrot.slane %v287, 4
      %v290 = vor.u32 %v289, %v285
      %v291 = vrot.slane %v290, 4
      %v293 = vshll.u32 %v208, 16
      %v295 = vrot.slane %v293, 5
      %v296 = vsel %vm224, %v291, %v295
      %v298 = vshrl.u32 %v178, 16
      %v300 = vrot.slane %v298, 4
      %v301 = vshll.u32 %v178, 16
      %v303 = vrot.slane %v301, 5
      %v304 = vor.u32 %v300, %v303
      %v305 = vrot.slane %v304, 4
      %v307 = vshll.u32 %v179, 16
      %v309 = vrot.slane %v307, 5
      %v310 = vsel %vm224, %v305, %v309
      %v311 = vshrl.u32 %v179, 16
      %v313 = vrot.slane %v311, 4
      %v314 = vor.u32 %v313, %v309
      %v315 = vrot.slane %v314, 4
      %v317 = vshll.u32 %v209, 16
      %v319 = vrot.slane %v317, 5
      %v320 = vsel %vm224, %v315, %v319
      %v322 = vshrl.u32 %v180, 16
      %v324 = vrot.slane %v322, 4
      %v325 = vshll.u32 %v180, 16
      %v327 = vrot.slane %v325, 5
      %v328 = vor.u32 %v324, %v327
      %v329 = vrot.slane %v328, 4
      %v331 = vshll.u32 %v181, 16
      %v333 = vrot.slane %v331, 5
      %v334 = vsel %vm224, %v329, %v333
      %v335 = vshrl.u32 %v181, 16
      %v337 = vrot.slane %v335, 4
      %v338 = vor.u32 %v337, %v333
      %v339 = vrot.slane %v338, 4
      %v341 = vshll.u32 %v210, 16
      %v343 = vrot.slane %v341, 5
      %v344 = vsel %vm224, %v339, %v343
      %v346 = vshrl.u32 %v182, 16
      %v348 = vrot.slane %v346, 4
      %v349 = vshll.u32 %v182, 16
      %v351 = vrot.slane %v349, 5
      %v352 = vor.u32 %v348, %v351
      %v353 = vrot.slane %v352, 4
      %v355 = vshll.u32 %v183, 16
      %v357 = vrot.slane %v355, 5
      %v358 = vsel %vm224, %v353, %v357
      %v359 = vshrl.u32 %v183, 16
      %v361 = vrot.slane %v359, 4
      %v362 = vor.u32 %v361, %v357
      %v363 = vrot.slane %v362, 4
      %v365 = vshll.u32 %v211, 16
      %v367 = vrot.slane %v365, 5
      %v368 = vsel %vm224, %v363, %v367
      %v370 = vshrl.u32 %v184, 16
      %v372 = vrot.slane %v370, 4
      %v373 = vshll.u32 %v184, 16
      %v375 = vrot.slane %v373, 5
      %v376 = vor.u32 %v372, %v375
      %v377 = vrot.slane %v376, 4
      %v379 = vshll.u32 %v185, 16
      %v381 = vrot.slane %v379, 5
      %v382 = vsel %vm224, %v377, %v381
      %v383 = vshrl.u32 %v185, 16
      %v385 = vrot.slane %v383, 4
      %v386 = vor.u32 %v385, %v381
      %v387 = vrot.slane %v386, 4
      %v389 = vshll.u32 %v212, 16
      %v391 = vrot.slane %v389, 5
      %v392 = vsel %vm224, %v387, %v391
      %v394 = vshrl.u32 %v186, 16
      %v396 = vrot.slane %v394, 4
      %v397 = vshll.u32 %v186, 16
      %v399 = vrot.slane %v397, 5
      %v400 = vor.u32 %v396, %v399
      %v401 = vrot.slane %v400, 4
      %v403 = vshll.u32 %v187, 16
      %v405 = vrot.slane %v403, 5
      %v406 = vsel %vm224, %v401, %v405
      %v407 = vshrl.u32 %v187, 16
      %v409 = vrot.slane %v407, 4
      %v410 = vor.u32 %v409, %v405
      %v411 = vrot.slane %v410, 4
      %v413 = vshll.u32 %v213, 16
      %v415 = vrot.slane %v413, 5
      %v416 = vsel %vm224, %v411, %v415
      %v418 = vshrl.u32 %v188, 16
      %v420 = vrot.slane %v418, 4
      %v421 = vshll.u32 %v188, 16
      %v423 = vrot.slane %v421, 5
      %v424 = vor.u32 %v420, %v423
      %v425 = vrot.slane %v424, 4
      %v427 = vshll.u32 %v189, 16
      %v429 = vrot.slane %v427, 5
      %v430 = vsel %vm224, %v425, %v429
      %v431 = vshrl.u32 %v189, 16
      %v433 = vrot.slane %v431, 4
      %v434 = vor.u32 %v433, %v429
      %v435 = vrot.slane %v434, 4
      %v437 = vshll.u32 %v214, 16
      %v439 = vrot.slane %v437, 5
      %v440 = vsel %vm224, %v435, %v439
      %v442 = vshrl.u32 %v190, 16
      %v444 = vrot.slane %v442, 4
      %v445 = vshll.u32 %v190, 16
      %v447 = vrot.slane %v445, 5
      %v448 = vor.u32 %v444, %v447
      %v449 = vrot.slane %v448, 4
      %v451 = vshll.u32 %v191, 16
      %v453 = vrot.slane %v451, 5
      %v454 = vsel %vm224, %v449, %v453
      %v455 = vshrl.u32 %v191, 16
      %v457 = vrot.slane %v455, 4
      %v458 = vor.u32 %v457, %v453
      %v459 = vrot.slane %v458, 4
      %v461 = vshll.u32 %v215, 16
      %v463 = vrot.slane %v461, 5
      %v464 = vsel %vm224, %v459, %v463
      %v466 = vshrl.u32 %v192, 16
      %v468 = vrot.slane %v466, 4
      %v469 = vshll.u32 %v192, 16
      %v471 = vrot.slane %v469, 5
      %v472 = vor.u32 %v468, %v471
      %v473 = vrot.slane %v472, 4
      %v475 = vshll.u32 %v193, 16
      %v477 = vrot.slane %v475, 5
      %v478 = vsel %vm224, %v473, %v477
      %v479 = vshrl.u32 %v193, 16
      %v481 = vrot.slane %v479, 4
      %v482 = vor.u32 %v481, %v477
      %v483 = vrot.slane %v482, 4
      %v485 = vshll.u32 %v216, 16
      %v487 = vrot.slane %v485, 5
      %v488 = vsel %vm224, %v483, %v487
      %v490 = vshrl.u32 %v194, 16
      %v492 = vrot.slane %v490, 4
      %v493 = vshll.u32 %v194, 16
      %v495 = vrot.slane %v493, 5
      %v496 = vor.u32 %v492, %v495
      %v497 = vrot.slane %v496, 4
      %v499 = vshll.u32 %v195, 16
      %v501 = vrot.slane %v499, 5
      %v502 = vsel %vm224, %v497, %v501
      %v503 = vshrl.u32 %v195, 16
      %v505 = vrot.slane %v503, 4
      %v506 = vor.u32 %v505, %v501
      %v507 = vrot.slane %v506, 4
      %v509 = vshll.u32 %v217, 16
      %v511 = vrot.slane %v509, 5
      %v512 = vsel %vm224, %v507, %v511
      %v514 = vshrl.u32 %v196, 16
      %v516 = vrot.slane %v514, 4
      %v517 = vshll.u32 %v196, 16
      %v519 = vrot.slane %v517, 5
      %v520 = vor.u32 %v516, %v519
      %v521 = vrot.slane %v520, 4
      %v523 = vshll.u32 %v197, 16
      %v525 = vrot.slane %v523, 5
      %v526 = vsel %vm224, %v521, %v525
      %v527 = vshrl.u32 %v197, 16
      %v529 = vrot.slane %v527, 4
      %v530 = vor.u32 %v529, %v525
      %v531 = vrot.slane %v530, 4
      %v533 = vshll.u32 %v218, 16
      %v535 = vrot.slane %v533, 5
      %v536 = vsel %vm224, %v531, %v535
      %v538 = vshrl.u32 %v198, 16
      %v540 = vrot.slane %v538, 4
      %v541 = vshll.u32 %v198, 16
      %v543 = vrot.slane %v541, 5
      %v544 = vor.u32 %v540, %v543
      %v545 = vrot.slane %v544, 4
      %v547 = vshll.u32 %v199, 16
      %v549 = vrot.slane %v547, 5
      %v550 = vsel %vm224, %v545, %v549
      %v551 = vshrl.u32 %v199, 16
      %v553 = vrot.slane %v551, 4
      %v554 = vor.u32 %v553, %v549
      %v555 = vrot.slane %v554, 4
      %v557 = vshll.u32 %v219, 16
      %v559 = vrot.slane %v557, 5
      %v560 = vsel %vm224, %v555, %v559
      %v562 = vshrl.u32 %v200, 16
      %v564 = vrot.slane %v562, 4
      %v565 = vshll.u32 %v200, 16
      %v567 = vrot.slane %v565, 5
      %v568 = vor.u32 %v564, %v567
      %v569 = vrot.slane %v568, 4
      %v571 = vshll.u32 %v201, 16
      %v573 = vrot.slane %v571, 5
      %v574 = vsel %vm224, %v569, %v573
      %v575 = vshrl.u32 %v201, 16
      %v577 = vrot.slane %v575, 4
      %v578 = vor.u32 %v577, %v573
      %v579 = vrot.slane %v578, 4
      %v581 = vshll.u32 %v220, 16
      %v583 = vrot.slane %v581, 5
      %v584 = vsel %vm224, %v579, %v583
      %v586 = vshrl.u32 %v202, 16
      %v588 = vrot.slane %v586, 4
      %v589 = vshll.u32 %v202, 16
      %v591 = vrot.slane %v589, 5
      %v592 = vor.u32 %v588, %v591
      %v593 = vrot.slane %v592, 4
      %v595 = vshll.u32 %v203, 16
      %v597 = vrot.slane %v595, 5
      %v598 = vsel %vm224, %v593, %v597
      %v599 = vshrl.u32 %v203, 16
      %v601 = vrot.slane %v599, 4
      %v602 = vor.u32 %v601, %v597
      %v603 = vrot.slane %v602, 4
      %v605 = vshll.u32 %v221, 16
      %v607 = vrot.slane %v605, 5
      %v608 = vsel %vm224, %v603, %v607
      %s609 = scalar_lea.vmem %s1, 8
      %v610 = vld [vmem:[%s609] sm:$0xf]
      %v611 = vld [vmem:[%s609 + $0x4] sm:$0x3]
      %v612 = vunpack.c.l.b16 %v238
      %v613 = vunpack.c.l.b16 %v248
      %v614 = vunpack.c.l.b16 %v262
      %v615 = vunpack.c.l.b16 %v272
      %v616 = vunpack.c.l.b16 %v286
      %v617 = vunpack.c.l.b16 %v296
      %v618 = vunpack.c.l.b16 %v310
      %v619 = vunpack.c.l.b16 %v320
      %v620 = vunpack.c.l.b16 %v334
      %v621 = vunpack.c.l.b16 %v344
      %v622 = vunpack.c.l.b16 %v358
      %v623 = vunpack.c.l.b16 %v368
      %v624 = vunpack.c.l.b16 %v382
      %v625 = vunpack.c.l.b16 %v392
      %v626 = vunpack.c.l.b16 %v406
      %v627 = vunpack.c.l.b16 %v416
      %v628 = vunpack.c.l.b16 %v430
      %v629 = vunpack.c.l.b16 %v440
      %v630 = vunpack.c.l.b16 %v454
      %v631 = vunpack.c.l.b16 %v464
      %v632 = vunpack.c.l.b16 %v478
      %v633 = vunpack.c.l.b16 %v488
      %v634 = vunpack.c.l.b16 %v502
      %v635 = vunpack.c.l.b16 %v512
      %v636 = vunpack.c.l.b16 %v526
      %v637 = vunpack.c.l.b16 %v536
      %v638 = vunpack.c.l.b16 %v550
      %v639 = vunpack.c.l.b16 %v560
      %v640 = vunpack.c.l.b16 %v574
      %v641 = vunpack.c.l.b16 %v584
      %v642 = vunpack.c.l.b16 %v598
      %v643 = vunpack.c.l.b16 %v608
      %v644 = vpack.c.b16 %v613, %v612
      %v645 = vpack.c.b16 %v615, %v614
      %v646 = vpack.c.b16 %v617, %v616
      %v647 = vpack.c.b16 %v619, %v618
      %v648 = vpack.c.b16 %v621, %v620
      %v649 = vpack.c.b16 %v623, %v622
      %v650 = vpack.c.b16 %v625, %v624
      %v651 = vpack.c.b16 %v627, %v626
      %v652 = vpack.c.b16 %v629, %v628
      %v653 = vpack.c.b16 %v631, %v630
      %v654 = vpack.c.b16 %v633, %v632
      %v655 = vpack.c.b16 %v635, %v634
      %v656 = vpack.c.b16 %v637, %v636
      %v657 = vpack.c.b16 %v639, %v638
      %v658 = vpack.c.b16 %v641, %v640
      %v659 = vpack.c.b16 %v643, %v642
      %v662 = vunpack.c.l.b16 %v610
      %v663 = vunpack.c.l.b16 %v611
      %v664 = vpack.c.b16 %v663, %v662
      %vm665 = vcmask 97280
      %v667 = vsel %vm665, %v644, 0
      %v670 = vsel %vm665, %v645, 0
      %v673 = vsel %vm665, %v646, 0
      %v676 = vsel %vm665, %v647, 0
      %v679 = vsel %vm665, %v648, 0
      %v682 = vsel %vm665, %v649, 0
      %v685 = vsel %vm665, %v650, 0
      %v688 = vsel %vm665, %v651, 0
      %v691 = vsel %vm665, %v652, 0
      %v694 = vsel %vm665, %v653, 0
      %v697 = vsel %vm665, %v654, 0
      %v700 = vsel %vm665, %v655, 0
      %v703 = vsel %vm665, %v656, 0
      %v706 = vsel %vm665, %v657, 0
      %v709 = vsel %vm665, %v658, 0
      %v712 = vsel %vm665, %v659, 0
      %vm714 = vcmask 1045504
      %v716 = vsel %vm714, %v664, 0
      %718 = vmatpush.bf16.msra.mxu0 0
      %719 = vmatpush.bf16.msra.mxu0 0
      %720 = vmatpush.bf16.msra.mxu0 0
      %721 = vmatpush.bf16.msra.mxu0 0
      %722 = vmatpush.bf16.msra.mxu0 0
      %723 = vmatpush.bf16.msra.mxu0 0
      %724 = vmatpush.bf16.msra.mxu0 0
      %725 = vmatpush.bf16.msra.mxu0 %v716
      %726 = vmatmul.bf16.gmra.mxu0 %v667
      %v727 = vpop.f32.mrf.mxu0
      %v728 = vadd.f32 0.0, %v727
      %v729 = vpop.f32.mrf.mxu0
      %v730 = vadd.f32 0.0, %v729
      %731 = vmatmul.bf16.gmra.mxu0 %v670
      %v732 = vpop.f32.mrf.mxu0
      %v733 = vadd.f32 0.0, %v732
      %v734 = vpop.f32.mrf.mxu0
      %v735 = vadd.f32 0.0, %v734
      %736 = vmatmul.bf16.gmra.mxu0 %v673
      %v737 = vpop.f32.mrf.mxu0
      %v738 = vadd.f32 0.0, %v737
      %v739 = vpop.f32.mrf.mxu0
      %v740 = vadd.f32 0.0, %v739
      %741 = vmatmul.bf16.gmra.mxu0 %v676
      %v742 = vpop.f32.mrf.mxu0
      %v743 = vadd.f32 0.0, %v742
      %v744 = vpop.f32.mrf.mxu0
      %v745 = vadd.f32 0.0, %v744
      %746 = vmatmul.bf16.gmra.mxu0 %v679
      %v747 = vpop.f32.mrf.mxu0
      %v748 = vadd.f32 0.0, %v747
      %v749 = vpop.f32.mrf.mxu0
      %v750 = vadd.f32 0.0, %v749
      %751 = vmatmul.bf16.gmra.mxu0 %v682
      %v752 = vpop.f32.mrf.mxu0
      %v753 = vadd.f32 0.0, %v752
      %v754 = vpop.f32.mrf.mxu0
      %v755 = vadd.f32 0.0, %v754
      %756 = vmatmul.bf16.gmra.mxu0 %v685
      %v757 = vpop.f32.mrf.mxu0
      %v758 = vadd.f32 0.0, %v757
      %v759 = vpop.f32.mrf.mxu0
      %v760 = vadd.f32 0.0, %v759
      %761 = vmatmul.bf16.gmra.mxu0 %v688
      %v762 = vpop.f32.mrf.mxu0
      %v763 = vadd.f32 0.0, %v762
      %v764 = vpop.f32.mrf.mxu0
      %v765 = vadd.f32 0.0, %v764
      %766 = vmatmul.bf16.gmra.mxu0 %v691
      %v767 = vpop.f32.mrf.mxu0
      %v768 = vadd.f32 0.0, %v767
      %v769 = vpop.f32.mrf.mxu0
      %v770 = vadd.f32 0.0, %v769
      %771 = vmatmul.bf16.gmra.mxu0 %v694
      %v772 = vpop.f32.mrf.mxu0
      %v773 = vadd.f32 0.0, %v772
      %v774 = vpop.f32.mrf.mxu0
      %v775 = vadd.f32 0.0, %v774
      %776 = vmatmul.bf16.gmra.mxu0 %v697
      %v777 = vpop.f32.mrf.mxu0
      %v778 = vadd.f32 0.0, %v777
      %v779 = vpop.f32.mrf.mxu0
      %v780 = vadd.f32 0.0, %v779
      %781 = vmatmul.bf16.gmra.mxu0 %v700
      %v782 = vpop.f32.mrf.mxu0
      %v783 = vadd.f32 0.0, %v782
      %v784 = vpop.f32.mrf.mxu0
      %v785 = vadd.f32 0.0, %v784
      %786 = vmatmul.bf16.gmra.mxu0 %v703
      %v787 = vpop.f32.mrf.mxu0
      %v788 = vadd.f32 0.0, %v787
      %v789 = vpop.f32.mrf.mxu0
      %v790 = vadd.f32 0.0, %v789
      %791 = vmatmul.bf16.gmra.mxu0 %v706
      %v792 = vpop.f32.mrf.mxu0
      %v793 = vadd.f32 0.0, %v792
      %v794 = vpop.f32.mrf.mxu0
      %v795 = vadd.f32 0.0, %v794
      %796 = vmatmul.bf16.gmra.mxu0 %v709
      %v797 = vpop.f32.mrf.mxu0
      %v798 = vadd.f32 0.0, %v797
      %v799 = vpop.f32.mrf.mxu0
      %v800 = vadd.f32 0.0, %v799
      %801 = vmatmul.bf16.gmra.mxu0 %v712
      %v802 = vpop.f32.mrf.mxu0
      %v803 = vadd.f32 0.0, %v802
      %v804 = vpop.f32.mrf.mxu0
      %v805 = vadd.f32 0.0, %v804
      %806 = vdwg.mxu0
      %v839 = vunpack.c.l.b16 %v172
      %v840 = vunpack.c.l.b16 %v173
      %v841 = vunpack.c.l.b16 %v174
      %v842 = vunpack.c.l.b16 %v175
      %v843 = vunpack.c.l.b16 %v176
      %v844 = vunpack.c.l.b16 %v177
      %v845 = vunpack.c.l.b16 %v178
      %v846 = vunpack.c.l.b16 %v179
      %v847 = vunpack.c.l.b16 %v180
      %v848 = vunpack.c.l.b16 %v181
      %v849 = vunpack.c.l.b16 %v182
      %v850 = vunpack.c.l.b16 %v183
      %v851 = vunpack.c.l.b16 %v184
      %v852 = vunpack.c.l.b16 %v185
      %v853 = vunpack.c.l.b16 %v186
      %v854 = vunpack.c.l.b16 %v187
      %v855 = vunpack.c.l.b16 %v188
      %v856 = vunpack.c.l.b16 %v189
      %v857 = vunpack.c.l.b16 %v190
      %v858 = vunpack.c.l.b16 %v191
      %v859 = vunpack.c.l.b16 %v192
      %v860 = vunpack.c.l.b16 %v193
      %v861 = vunpack.c.l.b16 %v194
      %v862 = vunpack.c.l.b16 %v195
      %v863 = vunpack.c.l.b16 %v196
      %v864 = vunpack.c.l.b16 %v197
      %v865 = vunpack.c.l.b16 %v198
      %v866 = vunpack.c.l.b16 %v199
      %v867 = vunpack.c.l.b16 %v200
      %v868 = vunpack.c.l.b16 %v201
      %v869 = vunpack.c.l.b16 %v202
      %v870 = vunpack.c.l.b16 %v203
      %v871 = vpack.c.b16 %v840, %v839
      %v872 = vpack.c.b16 %v842, %v841
      %v873 = vpack.c.b16 %v844, %v843
      %v874 = vpack.c.b16 %v846, %v845
      %v875 = vpack.c.b16 %v848, %v847
      %v876 = vpack.c.b16 %v850, %v849
      %v877 = vpack.c.b16 %v852, %v851
      %v878 = vpack.c.b16 %v854, %v853
      %v879 = vpack.c.b16 %v856, %v855
      %v880 = vpack.c.b16 %v858, %v857
      %v881 = vpack.c.b16 %v860, %v859
      %v882 = vpack.c.b16 %v862, %v861
      %v883 = vpack.c.b16 %v864, %v863
      %v884 = vpack.c.b16 %v866, %v865
      %v885 = vpack.c.b16 %v868, %v867
      %v886 = vpack.c.b16 %v870, %v869
      %v889 = vunpack.c.l.b16 %v204
      %v890 = vunpack.c.l.b16 %v205
      %v891 = vpack.c.b16 %v890, %v889
      %v893 = vsel %vm665, %v871, 0
      %v896 = vsel %vm665, %v872, 0
      %v899 = vsel %vm665, %v873, 0
      %v902 = vsel %vm665, %v874, 0
      %v905 = vsel %vm665, %v875, 0
      %v908 = vsel %vm665, %v876, 0
      %v911 = vsel %vm665, %v877, 0
      %v914 = vsel %vm665, %v878, 0
      %v917 = vsel %vm665, %v879, 0
      %v920 = vsel %vm665, %v880, 0
      %v923 = vsel %vm665, %v881, 0
      %v926 = vsel %vm665, %v882, 0
      %v929 = vsel %vm665, %v883, 0
      %v932 = vsel %vm665, %v884, 0
      %v935 = vsel %vm665, %v885, 0
      %v938 = vsel %vm665, %v886, 0
      %v941 = vsel %vm714, %v891, 0
      %943 = vmatpush.bf16.msra.mxu0 0
      %944 = vmatpush.bf16.msra.mxu0 0
      %945 = vmatpush.bf16.msra.mxu0 0
      %946 = vmatpush.bf16.msra.mxu0 0
      %947 = vmatpush.bf16.msra.mxu0 0
      %948 = vmatpush.bf16.msra.mxu0 0
      %949 = vmatpush.bf16.msra.mxu0 0
      %950 = vmatpush.bf16.msra.mxu0 %v941
      %951 = vmatmul.bf16.gmra.mxu0 %v893
      %v952 = vpop.f32.mrf.mxu0
      %v953 = vadd.f32 %v728, %v952
      %v954 = vpop.f32.mrf.mxu0
      %v955 = vadd.f32 %v730, %v954
      %956 = vmatmul.bf16.gmra.mxu0 %v896
      %v957 = vpop.f32.mrf.mxu0
      %v958 = vadd.f32 %v733, %v957
      %v959 = vpop.f32.mrf.mxu0
      %v960 = vadd.f32 %v735, %v959
      %961 = vmatmul.bf16.gmra.mxu0 %v899
      %v962 = vpop.f32.mrf.mxu0
      %v963 = vadd.f32 %v738, %v962
      %v964 = vpop.f32.mrf.mxu0
      %v965 = vadd.f32 %v740, %v964
      %966 = vmatmul.bf16.gmra.mxu0 %v902
      %v967 = vpop.f32.mrf.mxu0
      %v968 = vadd.f32 %v743, %v967
      %v969 = vpop.f32.mrf.mxu0
      %v970 = vadd.f32 %v745, %v969
      %971 = vmatmul.bf16.gmra.mxu0 %v905
      %v972 = vpop.f32.mrf.mxu0
      %v973 = vadd.f32 %v748, %v972
      %v974 = vpop.f32.mrf.mxu0
      %v975 = vadd.f32 %v750, %v974
      %976 = vmatmul.bf16.gmra.mxu0 %v908
      %v977 = vpop.f32.mrf.mxu0
      %v978 = vadd.f32 %v753, %v977
      %v979 = vpop.f32.mrf.mxu0
      %v980 = vadd.f32 %v755, %v979
      %981 = vmatmul.bf16.gmra.mxu0 %v911
      %v982 = vpop.f32.mrf.mxu0
      %v983 = vadd.f32 %v758, %v982
      %v984 = vpop.f32.mrf.mxu0
      %v985 = vadd.f32 %v760, %v984
      %986 = vmatmul.bf16.gmra.mxu0 %v914
      %v987 = vpop.f32.mrf.mxu0
      %v988 = vadd.f32 %v763, %v987
      %v989 = vpop.f32.mrf.mxu0
      %v990 = vadd.f32 %v765, %v989
      %991 = vmatmul.bf16.gmra.mxu0 %v917
      %v992 = vpop.f32.mrf.mxu0
      %v993 = vadd.f32 %v768, %v992
      %v994 = vpop.f32.mrf.mxu0
      %v995 = vadd.f32 %v770, %v994
      %996 = vmatmul.bf16.gmra.mxu0 %v920
      %v997 = vpop.f32.mrf.mxu0
      %v998 = vadd.f32 %v773, %v997
      %v999 = vpop.f32.mrf.mxu0
      %v1000 = vadd.f32 %v775, %v999
      %1001 = vmatmul.bf16.gmra.mxu0 %v923
      %v1002 = vpop.f32.mrf.mxu0
      %v1003 = vadd.f32 %v778, %v1002
      %v1004 = vpop.f32.mrf.mxu0
      %v1005 = vadd.f32 %v780, %v1004
      %1006 = vmatmul.bf16.gmra.mxu0 %v926
      %v1007 = vpop.f32.mrf.mxu0
      %v1008 = vadd.f32 %v783, %v1007
      %v1009 = vpop.f32.mrf.mxu0
      %v1010 = vadd.f32 %v785, %v1009
      %1011 = vmatmul.bf16.gmra.mxu0 %v929
      %v1012 = vpop.f32.mrf.mxu0
      %v1013 = vadd.f32 %v788, %v1012
      %v1014 = vpop.f32.mrf.mxu0
      %v1015 = vadd.f32 %v790, %v1014
      %1016 = vmatmul.bf16.gmra.mxu0 %v932
      %v1017 = vpop.f32.mrf.mxu0
      %v1018 = vadd.f32 %v793, %v1017
      %v1019 = vpop.f32.mrf.mxu0
      %v1020 = vadd.f32 %v795, %v1019
      %1021 = vmatmul.bf16.gmra.mxu0 %v935
      %v1022 = vpop.f32.mrf.mxu0
      %v1023 = vadd.f32 %v798, %v1022
      %v1024 = vpop.f32.mrf.mxu0
      %v1025 = vadd.f32 %v800, %v1024
      %1026 = vmatmul.bf16.gmra.mxu0 %v938
      %v1027 = vpop.f32.mrf.mxu0
      %v1028 = vadd.f32 %v803, %v1027
      %v1029 = vpop.f32.mrf.mxu0
      %v1030 = vadd.f32 %v805, %v1029
      %1031 = vdwg.mxu0
      %v1032 = vld [vmem:[%s165] sm:$0xe]
      %v1033 = vld [vmem:[%s165 + $0xc] sm:$0xe]
      %v1034 = vld [vmem:[%s165 + $0x18] sm:$0xe]
      %v1035 = vld [vmem:[%s165 + $0x24] sm:$0xe]
      %v1036 = vld [vmem:[%s165 + $0x30] sm:$0xe]
      %v1037 = vld [vmem:[%s165 + $0x3c] sm:$0xe]
      %v1038 = vld [vmem:[%s165 + $0x48] sm:$0xe]
      %v1039 = vld [vmem:[%s165 + $0x54] sm:$0xe]
      %v1040 = vld [vmem:[%s165 + $0x60] sm:$0xe]
      %v1041 = vld [vmem:[%s165 + $0x6c] sm:$0xe]
      %v1042 = vld [vmem:[%s165 + $0x78] sm:$0xe]
      %v1043 = vld [vmem:[%s165 + $0x84] sm:$0xe]
      %v1044 = vld [vmem:[%s165 + $0x90] sm:$0xe]
      %v1045 = vld [vmem:[%s165 + $0x9c] sm:$0xe]
      %v1046 = vld [vmem:[%s165 + $0xa8] sm:$0xe]
      %v1047 = vld [vmem:[%s165 + $0xb4] sm:$0xe]
      %vm1080 = vcmask 1042432
      %vm1081 = vcmask 1046532
      %vm1082 = vmor %vm1080, %vm1081
      %v1083 = vrot.slane %v1032, 5
      %v1084 = vrot.slane %v1083, 4
      %v1085 = vrot.slane %v173, 5
      %v1086 = vsel %vm1082, %v1084, %v1085
      %v1087 = vrot.slane %v1085, 4
      %v1088 = vrot.slane %v206, 5
      %v1089 = vsel %vm1082, %v1087, %v1088
      %v1090 = vrot.slane %v1033, 5
      %v1091 = vrot.slane %v1090, 4
      %v1092 = vrot.slane %v175, 5
      %v1093 = vsel %vm1082, %v1091, %v1092
      %v1094 = vrot.slane %v1092, 4
      %v1095 = vrot.slane %v207, 5
      %v1096 = vsel %vm1082, %v1094, %v1095
      %v1097 = vrot.slane %v1034, 5
      %v1098 = vrot.slane %v1097, 4
      %v1099 = vrot.slane %v177, 5
      %v1100 = vsel %vm1082, %v1098, %v1099
      %v1101 = vrot.slane %v1099, 4
      %v1102 = vrot.slane %v208, 5
      %v1103 = vsel %vm1082, %v1101, %v1102
      %v1104 = vrot.slane %v1035, 5
      %v1105 = vrot.slane %v1104, 4
      %v1106 = vrot.slane %v179, 5
      %v1107 = vsel %vm1082, %v1105, %v1106
      %v1108 = vrot.slane %v1106, 4
      %v1109 = vrot.slane %v209, 5
      %v1110 = vsel %vm1082, %v1108, %v1109
      %v1111 = vrot.slane %v1036, 5
      %v1112 = vrot.slane %v1111, 4
      %v1113 = vrot.slane %v181, 5
      %v1114 = vsel %vm1082, %v1112, %v1113
      %v1115 = vrot.slane %v1113, 4
      %v1116 = vrot.slane %v210, 5
      %v1117 = vsel %vm1082, %v1115, %v1116
      %v1118 = vrot.slane %v1037, 5
      %v1119 = vrot.slane %v1118, 4
      %v1120 = vrot.slane %v183, 5
      %v1121 = vsel %vm1082, %v1119, %v1120
      %v1122 = vrot.slane %v1120, 4
      %v1123 = vrot.slane %v211, 5
      %v1124 = vsel %vm1082, %v1122, %v1123
      %v1125 = vrot.slane %v1038, 5
      %v1126 = vrot.slane %v1125, 4
      %v1127 = vrot.slane %v185, 5
      %v1128 = vsel %vm1082, %v1126, %v1127
      %v1129 = vrot.slane %v1127, 4
      %v1130 = vrot.slane %v212, 5
      %v1131 = vsel %vm1082, %v1129, %v1130
      %v1132 = vrot.slane %v1039, 5
      %v1133 = vrot.slane %v1132, 4
      %v1134 = vrot.slane %v187, 5
      %v1135 = vsel %vm1082, %v1133, %v1134
      %v1136 = vrot.slane %v1134, 4
      %v1137 = vrot.slane %v213, 5
      %v1138 = vsel %vm1082, %v1136, %v1137
      %v1139 = vrot.slane %v1040, 5
      %v1140 = vrot.slane %v1139, 4
      %v1141 = vrot.slane %v189, 5
      %v1142 = vsel %vm1082, %v1140, %v1141
      %v1143 = vrot.slane %v1141, 4
      %v1144 = vrot.slane %v214, 5
      %v1145 = vsel %vm1082, %v1143, %v1144
      %v1146 = vrot.slane %v1041, 5
      %v1147 = vrot.slane %v1146, 4
      %v1148 = vrot.slane %v191, 5
      %v1149 = vsel %vm1082, %v1147, %v1148
      %v1150 = vrot.slane %v1148, 4
      %v1151 = vrot.slane %v215, 5
      %v1152 = vsel %vm1082, %v1150, %v1151
      %v1153 = vrot.slane %v1042, 5
      %v1154 = vrot.slane %v1153, 4
      %v1155 = vrot.slane %v193, 5
      %v1156 = vsel %vm1082, %v1154, %v1155
      %v1157 = vrot.slane %v1155, 4
      %v1158 = vrot.slane %v216, 5
      %v1159 = vsel %vm1082, %v1157, %v1158
      %v1160 = vrot.slane %v1043, 5
      %v1161 = vrot.slane %v1160, 4
      %v1162 = vrot.slane %v195, 5
      %v1163 = vsel %vm1082, %v1161, %v1162
      %v1164 = vrot.slane %v1162, 4
      %v1165 = vrot.slane %v217, 5
      %v1166 = vsel %vm1082, %v1164, %v1165
      %v1167 = vrot.slane %v1044, 5
      %v1168 = vrot.slane %v1167, 4
      %v1169 = vrot.slane %v197, 5
      %v1170 = vsel %vm1082, %v1168, %v1169
      %v1171 = vrot.slane %v1169, 4
      %v1172 = vrot.slane %v218, 5
      %v1173 = vsel %vm1082, %v1171, %v1172
      %v1174 = vrot.slane %v1045, 5
      %v1175 = vrot.slane %v1174, 4
      %v1176 = vrot.slane %v199, 5
      %v1177 = vsel %vm1082, %v1175, %v1176
      %v1178 = vrot.slane %v1176, 4
      %v1179 = vrot.slane %v219, 5
      %v1180 = vsel %vm1082, %v1178, %v1179
      %v1181 = vrot.slane %v1046, 5
      %v1182 = vrot.slane %v1181, 4
      %v1183 = vrot.slane %v201, 5
      %v1184 = vsel %vm1082, %v1182, %v1183
      %v1185 = vrot.slane %v1183, 4
      %v1186 = vrot.slane %v220, 5
      %v1187 = vsel %vm1082, %v1185, %v1186
      %v1188 = vrot.slane %v1047, 5
      %v1189 = vrot.slane %v1188, 4
      %v1190 = vrot.slane %v203, 5
      %v1191 = vsel %vm1082, %v1189, %v1190
      %v1192 = vrot.slane %v1190, 4
      %v1193 = vrot.slane %v221, 5
      %v1194 = vsel %vm1082, %v1192, %v1193
      %s1195 = scalar_lea.vmem %s1, 16
      %v1196 = vld [vmem:[%s1195] sm:$0xf]
      %v1197 = vld [vmem:[%s1195 + $0x4] sm:$0x3]
      %v1198 = vunpack.c.l.b16 %v1086
      %v1199 = vunpack.c.l.b16 %v1089
      %v1200 = vunpack.c.l.b16 %v1093
      %v1201 = vunpack.c.l.b16 %v1096
      %v1202 = vunpack.c.l.b16 %v1100
      %v1203 = vunpack.c.l.b16 %v1103
      %v1204 = vunpack.c.l.b16 %v1107
      %v1205 = vunpack.c.l.b16 %v1110
      %v1206 = vunpack.c.l.b16 %v1114
      %v1207 = vunpack.c.l.b16 %v1117
      %v1208 = vunpack.c.l.b16 %v1121
      %v1209 = vunpack.c.l.b16 %v1124
      %v1210 = vunpack.c.l.b16 %v1128
      %v1211 = vunpack.c.l.b16 %v1131
      %v1212 = vunpack.c.l.b16 %v1135
      %v1213 = vunpack.c.l.b16 %v1138
      %v1214 = vunpack.c.l.b16 %v1142
      %v1215 = vunpack.c.l.b16 %v1145
      %v1216 = vunpack.c.l.b16 %v1149
      %v1217 = vunpack.c.l.b16 %v1152
      %v1218 = vunpack.c.l.b16 %v1156
      %v1219 = vunpack.c.l.b16 %v1159
      %v1220 = vunpack.c.l.b16 %v1163
      %v1221 = vunpack.c.l.b16 %v1166
      %v1222 = vunpack.c.l.b16 %v1170
      %v1223 = vunpack.c.l.b16 %v1173
      %v1224 = vunpack.c.l.b16 %v1177
      %v1225 = vunpack.c.l.b16 %v1180
      %v1226 = vunpack.c.l.b16 %v1184
      %v1227 = vunpack.c.l.b16 %v1187
      %v1228 = vunpack.c.l.b16 %v1191
      %v1229 = vunpack.c.l.b16 %v1194
      %v1230 = vpack.c.b16 %v1199, %v1198
      %v1231 = vpack.c.b16 %v1201, %v1200
      %v1232 = vpack.c.b16 %v1203, %v1202
      %v1233 = vpack.c.b16 %v1205, %v1204
      %v1234 = vpack.c.b16 %v1207, %v1206
      %v1235 = vpack.c.b16 %v1209, %v1208
      %v1236 = vpack.c.b16 %v1211, %v1210
      %v1237 = vpack.c.b16 %v1213, %v1212
      %v1238 = vpack.c.b16 %v1215, %v1214
      %v1239 = vpack.c.b16 %v1217, %v1216
      %v1240 = vpack.c.b16 %v1219, %v1218
      %v1241 = vpack.c.b16 %v1221, %v1220
      %v1242 = vpack.c.b16 %v1223, %v1222
      %v1243 = vpack.c.b16 %v1225, %v1224
      %v1244 = vpack.c.b16 %v1227, %v1226
      %v1245 = vpack.c.b16 %v1229, %v1228
      %v1248 = vunpack.c.l.b16 %v1196
      %v1249 = vunpack.c.l.b16 %v1197
      %v1250 = vpack.c.b16 %v1249, %v1248
      %v1252 = vsel %vm665, %v1230, 0
      %v1255 = vsel %vm665, %v1231, 0
      %v1258 = vsel %vm665, %v1232, 0
      %v1261 = vsel %vm665, %v1233, 0
      %v1264 = vsel %vm665, %v1234, 0
      %v1267 = vsel %vm665, %v1235, 0
      %v1270 = vsel %vm665, %v1236, 0
      %v1273 = vsel %vm665, %v1237, 0
      %v1276 = vsel %vm665, %v1238, 0
      %v1279 = vsel %vm665, %v1239, 0
      %v1282 = vsel %vm665, %v1240, 0
      %v1285 = vsel %vm665, %v1241, 0
      %v1288 = vsel %vm665, %v1242, 0
      %v1291 = vsel %vm665, %v1243, 0
      %v1294 = vsel %vm665, %v1244, 0
      %v1297 = vsel %vm665, %v1245, 0
      %v1300 = vsel %vm714, %v1250, 0
      %1302 = vmatpush.bf16.msra.mxu0 0
      %1303 = vmatpush.bf16.msra.mxu0 0
      %1304 = vmatpush.bf16.msra.mxu0 0
      %1305 = vmatpush.bf16.msra.mxu0 0
      %1306 = vmatpush.bf16.msra.mxu0 0
      %1307 = vmatpush.bf16.msra.mxu0 0
      %1308 = vmatpush.bf16.msra.mxu0 0
      %1309 = vmatpush.bf16.msra.mxu0 %v1300
      %1310 = vmatmul.bf16.gmra.mxu0 %v1252
      %v1311 = vpop.f32.mrf.mxu0
      %v1312 = vadd.f32 0.0, %v1311
      %v1313 = vpop.f32.mrf.mxu0
      %v1314 = vadd.f32 0.0, %v1313
      %1315 = vmatmul.bf16.gmra.mxu0 %v1255
      %v1316 = vpop.f32.mrf.mxu0
      %v1317 = vadd.f32 0.0, %v1316
      %v1318 = vpop.f32.mrf.mxu0
      %v1319 = vadd.f32 0.0, %v1318
      %1320 = vmatmul.bf16.gmra.mxu0 %v1258
      %v1321 = vpop.f32.mrf.mxu0
      %v1322 = vadd.f32 0.0, %v1321
      %v1323 = vpop.f32.mrf.mxu0
      %v1324 = vadd.f32 0.0, %v1323
      %1325 = vmatmul.bf16.gmra.mxu0 %v1261
      %v1326 = vpop.f32.mrf.mxu0
      %v1327 = vadd.f32 0.0, %v1326
      %v1328 = vpop.f32.mrf.mxu0
      %v1329 = vadd.f32 0.0, %v1328
      %1330 = vmatmul.bf16.gmra.mxu0 %v1264
      %v1331 = vpop.f32.mrf.mxu0
      %v1332 = vadd.f32 0.0, %v1331
      %v1333 = vpop.f32.mrf.mxu0
      %v1334 = vadd.f32 0.0, %v1333
      %1335 = vmatmul.bf16.gmra.mxu0 %v1267
      %v1336 = vpop.f32.mrf.mxu0
      %v1337 = vadd.f32 0.0, %v1336
      %v1338 = vpop.f32.mrf.mxu0
      %v1339 = vadd.f32 0.0, %v1338
      %1340 = vmatmul.bf16.gmra.mxu0 %v1270
      %v1341 = vpop.f32.mrf.mxu0
      %v1342 = vadd.f32 0.0, %v1341
      %v1343 = vpop.f32.mrf.mxu0
      %v1344 = vadd.f32 0.0, %v1343
      %1345 = vmatmul.bf16.gmra.mxu0 %v1273
      %v1346 = vpop.f32.mrf.mxu0
      %v1347 = vadd.f32 0.0, %v1346
      %v1348 = vpop.f32.mrf.mxu0
      %v1349 = vadd.f32 0.0, %v1348
      %1350 = vmatmul.bf16.gmra.mxu0 %v1276
      %v1351 = vpop.f32.mrf.mxu0
      %v1352 = vadd.f32 0.0, %v1351
      %v1353 = vpop.f32.mrf.mxu0
      %v1354 = vadd.f32 0.0, %v1353
      %1355 = vmatmul.bf16.gmra.mxu0 %v1279
      %v1356 = vpop.f32.mrf.mxu0
      %v1357 = vadd.f32 0.0, %v1356
      %v1358 = vpop.f32.mrf.mxu0
      %v1359 = vadd.f32 0.0, %v1358
      %1360 = vmatmul.bf16.gmra.mxu0 %v1282
      %v1361 = vpop.f32.mrf.mxu0
      %v1362 = vadd.f32 0.0, %v1361
      %v1363 = vpop.f32.mrf.mxu0
      %v1364 = vadd.f32 0.0, %v1363
      %1365 = vmatmul.bf16.gmra.mxu0 %v1285
      %v1366 = vpop.f32.mrf.mxu0
      %v1367 = vadd.f32 0.0, %v1366
      %v1368 = vpop.f32.mrf.mxu0
      %v1369 = vadd.f32 0.0, %v1368
      %1370 = vmatmul.bf16.gmra.mxu0 %v1288
      %v1371 = vpop.f32.mrf.mxu0
      %v1372 = vadd.f32 0.0, %v1371
      %v1373 = vpop.f32.mrf.mxu0
      %v1374 = vadd.f32 0.0, %v1373
      %1375 = vmatmul.bf16.gmra.mxu0 %v1291
      %v1376 = vpop.f32.mrf.mxu0
      %v1377 = vadd.f32 0.0, %v1376
      %v1378 = vpop.f32.mrf.mxu0
      %v1379 = vadd.f32 0.0, %v1378
      %1380 = vmatmul.bf16.gmra.mxu0 %v1294
      %v1381 = vpop.f32.mrf.mxu0
      %v1382 = vadd.f32 0.0, %v1381
      %v1383 = vpop.f32.mrf.mxu0
      %v1384 = vadd.f32 0.0, %v1383
      %1385 = vmatmul.bf16.gmra.mxu0 %v1297
      %v1386 = vpop.f32.mrf.mxu0
      %v1387 = vadd.f32 0.0, %v1386
      %v1388 = vpop.f32.mrf.mxu0
      %v1389 = vadd.f32 0.0, %v1388
      %1390 = vdwg.mxu0
      %v1391 = vadd.f32 %v953, %v1312
      %v1392 = vadd.f32 %v955, %v1314
      %v1393 = vadd.f32 %v958, %v1317
      %v1394 = vadd.f32 %v960, %v1319
      %v1395 = vadd.f32 %v963, %v1322
      %v1396 = vadd.f32 %v965, %v1324
      %v1397 = vadd.f32 %v968, %v1327
      %v1398 = vadd.f32 %v970, %v1329
      %v1399 = vadd.f32 %v973, %v1332
      %v1400 = vadd.f32 %v975, %v1334
      %v1401 = vadd.f32 %v978, %v1337
      %v1402 = vadd.f32 %v980, %v1339
      %v1403 = vadd.f32 %v983, %v1342
      %v1404 = vadd.f32 %v985, %v1344
      %v1405 = vadd.f32 %v988, %v1347
      %v1406 = vadd.f32 %v990, %v1349
      %v1407 = vadd.f32 %v993, %v1352
      %v1408 = vadd.f32 %v995, %v1354
      %v1409 = vadd.f32 %v998, %v1357
      %v1410 = vadd.f32 %v1000, %v1359
      %v1411 = vadd.f32 %v1003, %v1362
      %v1412 = vadd.f32 %v1005, %v1364
      %v1413 = vadd.f32 %v1008, %v1367
      %v1414 = vadd.f32 %v1010, %v1369
      %v1415 = vadd.f32 %v1013, %v1372
      %v1416 = vadd.f32 %v1015, %v1374
      %v1417 = vadd.f32 %v1018, %v1377
      %v1418 = vadd.f32 %v1020, %v1379
      %v1419 = vadd.f32 %v1023, %v1382
      %v1420 = vadd.f32 %v1025, %v1384
      %v1421 = vadd.f32 %v1028, %v1387
      %v1422 = vadd.f32 %v1030, %v1389
      %v1423 = vld [vmem:[%s165 + $0x8] sm:$0x3]
      %v1424 = vld [vmem:[%s165 + $0x14] sm:$0x3]
      %v1425 = vld [vmem:[%s165 + $0x20] sm:$0x3]
      %v1426 = vld [vmem:[%s165 + $0x2c] sm:$0x3]
      %v1427 = vld [vmem:[%s165 + $0x38] sm:$0x3]
      %v1428 = vld [vmem:[%s165 + $0x44] sm:$0x3]
      %v1429 = vld [vmem:[%s165 + $0x50] sm:$0x3]
      %v1430 = vld [vmem:[%s165 + $0x5c] sm:$0x3]
      %v1431 = vld [vmem:[%s165 + $0x68] sm:$0x3]
      %v1432 = vld [vmem:[%s165 + $0x74] sm:$0x3]
      %v1433 = vld [vmem:[%s165 + $0x80] sm:$0x3]
      %v1434 = vld [vmem:[%s165 + $0x8c] sm:$0x3]
      %v1435 = vld [vmem:[%s165 + $0x98] sm:$0x3]
      %v1436 = vld [vmem:[%s165 + $0xa4] sm:$0x3]
      %v1437 = vld [vmem:[%s165 + $0xb0] sm:$0x3]
      %v1438 = vld [vmem:[%s165 + $0xbc] sm:$0x3]
      %vm1439 = vsmask.f32 2304
      %vm1440 = vsmask.f32 6416
      %vm1441 = vmor %vm1439, %vm1440
      %v1443 = vshrl.u32 %v1032, 16
      %v1445 = vrot.slane %v1443, 5
      %v1446 = vshll.u32 %v1032, 16
      %v1448 = vrot.slane %v1446, 6
      %v1449 = vor.u32 %v1445, %v1448
      %v1450 = vrot.slane %v1449, 4
      %v1451 = vrot.slane %v239, 5
      %v1452 = vrot.slane %v235, 6
      %v1453 = vor.u32 %v1451, %v1452
      %v1454 = vsel %vm1441, %v1450, %v1453
      %v1455 = vrot.slane %v1453, 4
      %v1457 = vshrl.u32 %v1423, 16
      %v1459 = vrot.slane %v1457, 5
      %v1460 = vshll.u32 %v1423, 16
      %v1462 = vrot.slane %v1460, 6
      %v1463 = vor.u32 %v1459, %v1462
      %v1464 = vsel %vm1441, %v1455, %v1463
      %v1466 = vshrl.u32 %v1033, 16
      %v1468 = vrot.slane %v1466, 5
      %v1469 = vshll.u32 %v1033, 16
      %v1471 = vrot.slane %v1469, 6
      %v1472 = vor.u32 %v1468, %v1471
      %v1473 = vrot.slane %v1472, 4
      %v1474 = vrot.slane %v263, 5
      %v1475 = vrot.slane %v259, 6
      %v1476 = vor.u32 %v1474, %v1475
      %v1477 = vsel %vm1441, %v1473, %v1476
      %v1478 = vrot.slane %v1476, 4
      %v1480 = vshrl.u32 %v1424, 16
      %v1482 = vrot.slane %v1480, 5
      %v1483 = vshll.u32 %v1424, 16
      %v1485 = vrot.slane %v1483, 6
      %v1486 = vor.u32 %v1482, %v1485
      %v1487 = vsel %vm1441, %v1478, %v1486
      %v1489 = vshrl.u32 %v1034, 16
      %v1491 = vrot.slane %v1489, 5
      %v1492 = vshll.u32 %v1034, 16
      %v1494 = vrot.slane %v1492, 6
      %v1495 = vor.u32 %v1491, %v1494
      %v1496 = vrot.slane %v1495, 4
      %v1497 = vrot.slane %v287, 5
      %v1498 = vrot.slane %v283, 6
      %v1499 = vor.u32 %v1497, %v1498
      %v1500 = vsel %vm1441, %v1496, %v1499
      %v1501 = vrot.slane %v1499, 4
      %v1503 = vshrl.u32 %v1425, 16
      %v1505 = vrot.slane %v1503, 5
      %v1506 = vshll.u32 %v1425, 16
      %v1508 = vrot.slane %v1506, 6
      %v1509 = vor.u32 %v1505, %v1508
      %v1510 = vsel %vm1441, %v1501, %v1509
      %v1512 = vshrl.u32 %v1035, 16
      %v1514 = vrot.slane %v1512, 5
      %v1515 = vshll.u32 %v1035, 16
      %v1517 = vrot.slane %v1515, 6
      %v1518 = vor.u32 %v1514, %v1517
      %v1519 = vrot.slane %v1518, 4
      %v1520 = vrot.slane %v311, 5
      %v1521 = vrot.slane %v307, 6
      %v1522 = vor.u32 %v1520, %v1521
      %v1523 = vsel %vm1441, %v1519, %v1522
      %v1524 = vrot.slane %v1522, 4
      %v1526 = vshrl.u32 %v1426, 16
      %v1528 = vrot.slane %v1526, 5
      %v1529 = vshll.u32 %v1426, 16
      %v1531 = vrot.slane %v1529, 6
      %v1532 = vor.u32 %v1528, %v1531
      %v1533 = vsel %vm1441, %v1524, %v1532
      %v1535 = vshrl.u32 %v1036, 16
      %v1537 = vrot.slane %v1535, 5
      %v1538 = vshll.u32 %v1036, 16
      %v1540 = vrot.slane %v1538, 6
      %v1541 = vor.u32 %v1537, %v1540
      %v1542 = vrot.slane %v1541, 4
      %v1543 = vrot.slane %v335, 5
      %v1544 = vrot.slane %v331, 6
      %v1545 = vor.u32 %v1543, %v1544
      %v1546 = vsel %vm1441, %v1542, %v1545
      %v1547 = vrot.slane %v1545, 4
      %v1549 = vshrl.u32 %v1427, 16
      %v1551 = vrot.slane %v1549, 5
      %v1552 = vshll.u32 %v1427, 16
      %v1554 = vrot.slane %v1552, 6
      %v1555 = vor.u32 %v1551, %v1554
      %v1556 = vsel %vm1441, %v1547, %v1555
      %v1558 = vshrl.u32 %v1037, 16
      %v1560 = vrot.slane %v1558, 5
      %v1561 = vshll.u32 %v1037, 16
      %v1563 = vrot.slane %v1561, 6
      %v1564 = vor.u32 %v1560, %v1563
      %v1565 = vrot.slane %v1564, 4
      %v1566 = vrot.slane %v359, 5
      %v1567 = vrot.slane %v355, 6
      %v1568 = vor.u32 %v1566, %v1567
      %v1569 = vsel %vm1441, %v1565, %v1568
      %v1570 = vrot.slane %v1568, 4
      %v1572 = vshrl.u32 %v1428, 16
      %v1574 = vrot.slane %v1572, 5
      %v1575 = vshll.u32 %v1428, 16
      %v1577 = vrot.slane %v1575, 6
      %v1578 = vor.u32 %v1574, %v1577
      %v1579 = vsel %vm1441, %v1570, %v1578
      %v1581 = vshrl.u32 %v1038, 16
      %v1583 = vrot.slane %v1581, 5
      %v1584 = vshll.u32 %v1038, 16
      %v1586 = vrot.slane %v1584, 6
      %v1587 = vor.u32 %v1583, %v1586
      %v1588 = vrot.slane %v1587, 4
      %v1589 = vrot.slane %v383, 5
      %v1590 = vrot.slane %v379, 6
      %v1591 = vor.u32 %v1589, %v1590
      %v1592 = vsel %vm1441, %v1588, %v1591
      %v1593 = vrot.slane %v1591, 4
      %v1595 = vshrl.u32 %v1429, 16
      %v1597 = vrot.slane %v1595, 5
      %v1598 = vshll.u32 %v1429, 16
      %v1600 = vrot.slane %v1598, 6
      %v1601 = vor.u32 %v1597, %v1600
      %v1602 = vsel %vm1441, %v1593, %v1601
      %v1604 = vshrl.u32 %v1039, 16
      %v1606 = vrot.slane %v1604, 5
      %v1607 = vshll.u32 %v1039, 16
      %v1609 = vrot.slane %v1607, 6
      %v1610 = vor.u32 %v1606, %v1609
      %v1611 = vrot.slane %v1610, 4
      %v1612 = vrot.slane %v407, 5
      %v1613 = vrot.slane %v403, 6
      %v1614 = vor.u32 %v1612, %v1613
      %v1615 = vsel %vm1441, %v1611, %v1614
      %v1616 = vrot.slane %v1614, 4
      %v1618 = vshrl.u32 %v1430, 16
      %v1620 = vrot.slane %v1618, 5
      %v1621 = vshll.u32 %v1430, 16
      %v1623 = vrot.slane %v1621, 6
      %v1624 = vor.u32 %v1620, %v1623
      %v1625 = vsel %vm1441, %v1616, %v1624
      %v1627 = vshrl.u32 %v1040, 16
      %v1629 = vrot.slane %v1627, 5
      %v1630 = vshll.u32 %v1040, 16
      %v1632 = vrot.slane %v1630, 6
      %v1633 = vor.u32 %v1629, %v1632
      %v1634 = vrot.slane %v1633, 4
      %v1635 = vrot.slane %v431, 5
      %v1636 = vrot.slane %v427, 6
      %v1637 = vor.u32 %v1635, %v1636
      %v1638 = vsel %vm1441, %v1634, %v1637
      %v1639 = vrot.slane %v1637, 4
      %v1641 = vshrl.u32 %v1431, 16
      %v1643 = vrot.slane %v1641, 5
      %v1644 = vshll.u32 %v1431, 16
      %v1646 = vrot.slane %v1644, 6
      %v1647 = vor.u32 %v1643, %v1646
      %v1648 = vsel %vm1441, %v1639, %v1647
      %v1650 = vshrl.u32 %v1041, 16
      %v1652 = vrot.slane %v1650, 5
      %v1653 = vshll.u32 %v1041, 16
      %v1655 = vrot.slane %v1653, 6
      %v1656 = vor.u32 %v1652, %v1655
      %v1657 = vrot.slane %v1656, 4
      %v1658 = vrot.slane %v455, 5
      %v1659 = vrot.slane %v451, 6
      %v1660 = vor.u32 %v1658, %v1659
      %v1661 = vsel %vm1441, %v1657, %v1660
      %v1662 = vrot.slane %v1660, 4
      %v1664 = vshrl.u32 %v1432, 16
      %v1666 = vrot.slane %v1664, 5
      %v1667 = vshll.u32 %v1432, 16
      %v1669 = vrot.slane %v1667, 6
      %v1670 = vor.u32 %v1666, %v1669
      %v1671 = vsel %vm1441, %v1662, %v1670
      %v1673 = vshrl.u32 %v1042, 16
      %v1675 = vrot.slane %v1673, 5
      %v1676 = vshll.u32 %v1042, 16
      %v1678 = vrot.slane %v1676, 6
      %v1679 = vor.u32 %v1675, %v1678
      %v1680 = vrot.slane %v1679, 4
      %v1681 = vrot.slane %v479, 5
      %v1682 = vrot.slane %v475, 6
      %v1683 = vor.u32 %v1681, %v1682
      %v1684 = vsel %vm1441, %v1680, %v1683
      %v1685 = vrot.slane %v1683, 4
      %v1687 = vshrl.u32 %v1433, 16
      %v1689 = vrot.slane %v1687, 5
      %v1690 = vshll.u32 %v1433, 16
      %v1692 = vrot.slane %v1690, 6
      %v1693 = vor.u32 %v1689, %v1692
      %v1694 = vsel %vm1441, %v1685, %v1693
      %v1696 = vshrl.u32 %v1043, 16
      %v1698 = vrot.slane %v1696, 5
      %v1699 = vshll.u32 %v1043, 16
      %v1701 = vrot.slane %v1699, 6
      %v1702 = vor.u32 %v1698, %v1701
      %v1703 = vrot.slane %v1702, 4
      %v1704 = vrot.slane %v503, 5
      %v1705 = vrot.slane %v499, 6
      %v1706 = vor.u32 %v1704, %v1705
      %v1707 = vsel %vm1441, %v1703, %v1706
      %v1708 = vrot.slane %v1706, 4
      %v1710 = vshrl.u32 %v1434, 16
      %v1712 = vrot.slane %v1710, 5
      %v1713 = vshll.u32 %v1434, 16
      %v1715 = vrot.slane %v1713, 6
      %v1716 = vor.u32 %v1712, %v1715
      %v1717 = vsel %vm1441, %v1708, %v1716
      %v1719 = vshrl.u32 %v1044, 16
      %v1721 = vrot.slane %v1719, 5
      %v1722 = vshll.u32 %v1044, 16
      %v1724 = vrot.slane %v1722, 6
      %v1725 = vor.u32 %v1721, %v1724
      %v1726 = vrot.slane %v1725, 4
      %v1727 = vrot.slane %v527, 5
      %v1728 = vrot.slane %v523, 6
      %v1729 = vor.u32 %v1727, %v1728
      %v1730 = vsel %vm1441, %v1726, %v1729
      %v1731 = vrot.slane %v1729, 4
      %v1733 = vshrl.u32 %v1435, 16
      %v1735 = vrot.slane %v1733, 5
      %v1736 = vshll.u32 %v1435, 16
      %v1738 = vrot.slane %v1736, 6
      %v1739 = vor.u32 %v1735, %v1738
      %v1740 = vsel %vm1441, %v1731, %v1739
      %v1742 = vshrl.u32 %v1045, 16
      %v1744 = vrot.slane %v1742, 5
      %v1745 = vshll.u32 %v1045, 16
      %v1747 = vrot.slane %v1745, 6
      %v1748 = vor.u32 %v1744, %v1747
      %v1749 = vrot.slane %v1748, 4
      %v1750 = vrot.slane %v551, 5
      %v1751 = vrot.slane %v547, 6
      %v1752 = vor.u32 %v1750, %v1751
      %v1753 = vsel %vm1441, %v1749, %v1752
      %v1754 = vrot.slane %v1752, 4
      %v1756 = vshrl.u32 %v1436, 16
      %v1758 = vrot.slane %v1756, 5
      %v1759 = vshll.u32 %v1436, 16
      %v1761 = vrot.slane %v1759, 6
      %v1762 = vor.u32 %v1758, %v1761
      %v1763 = vsel %vm1441, %v1754, %v1762
      %v1765 = vshrl.u32 %v1046, 16
      %v1767 = vrot.slane %v1765, 5
      %v1768 = vshll.u32 %v1046, 16
      %v1770 = vrot.slane %v1768, 6
      %v1771 = vor.u32 %v1767, %v1770
      %v1772 = vrot.slane %v1771, 4
      %v1773 = vrot.slane %v575, 5
      %v1774 = vrot.slane %v571, 6
      %v1775 = vor.u32 %v1773, %v1774
      %v1776 = vsel %vm1441, %v1772, %v1775
      %v1777 = vrot.slane %v1775, 4
      %v1779 = vshrl.u32 %v1437, 16
      %v1781 = vrot.slane %v1779, 5
      %v1782 = vshll.u32 %v1437, 16
      %v1784 = vrot.slane %v1782, 6
      %v1785 = vor.u32 %v1781, %v1784
      %v1786 = vsel %vm1441, %v1777, %v1785
      %v1788 = vshrl.u32 %v1047, 16
      %v1790 = vrot.slane %v1788, 5
      %v1791 = vshll.u32 %v1047, 16
      %v1793 = vrot.slane %v1791, 6
      %v1794 = vor.u32 %v1790, %v1793
      %v1795 = vrot.slane %v1794, 4
      %v1796 = vrot.slane %v599, 5
      %v1797 = vrot.slane %v595, 6
      %v1798 = vor.u32 %v1796, %v1797
      %v1799 = vsel %vm1441, %v1795, %v1798
      %v1800 = vrot.slane %v1798, 4
      %v1802 = vshrl.u32 %v1438, 16
      %v1804 = vrot.slane %v1802, 5
      %v1805 = vshll.u32 %v1438, 16
      %v1807 = vrot.slane %v1805, 6
      %v1808 = vor.u32 %v1804, %v1807
      %v1809 = vsel %vm1441, %v1800, %v1808
      %s1810 = scalar_lea.vmem %s1, 24
      %v1811 = vld [vmem:[%s1810] sm:$0xf]
      %v1812 = vld [vmem:[%s1810 + $0x4] sm:$0x3]
      %v1813 = vunpack.c.l.b16 %v1454
      %v1814 = vunpack.c.l.b16 %v1464
      %v1815 = vunpack.c.l.b16 %v1477
      %v1816 = vunpack.c.l.b16 %v1487
      %v1817 = vunpack.c.l.b16 %v1500
      %v1818 = vunpack.c.l.b16 %v1510
      %v1819 = vunpack.c.l.b16 %v1523
      %v1820 = vunpack.c.l.b16 %v1533
      %v1821 = vunpack.c.l.b16 %v1546
      %v1822 = vunpack.c.l.b16 %v1556
      %v1823 = vunpack.c.l.b16 %v1569
      %v1824 = vunpack.c.l.b16 %v1579
      %v1825 = vunpack.c.l.b16 %v1592
      %v1826 = vunpack.c.l.b16 %v1602
      %v1827 = vunpack.c.l.b16 %v1615
      %v1828 = vunpack.c.l.b16 %v1625
      %v1829 = vunpack.c.l.b16 %v1638
      %v1830 = vunpack.c.l.b16 %v1648
      %v1831 = vunpack.c.l.b16 %v1661
      %v1832 = vunpack.c.l.b16 %v1671
      %v1833 = vunpack.c.l.b16 %v1684
      %v1834 = vunpack.c.l.b16 %v1694
      %v1835 = vunpack.c.l.b16 %v1707
      %v1836 = vunpack.c.l.b16 %v1717
      %v1837 = vunpack.c.l.b16 %v1730
      %v1838 = vunpack.c.l.b16 %v1740
      %v1839 = vunpack.c.l.b16 %v1753
      %v1840 = vunpack.c.l.b16 %v1763
      %v1841 = vunpack.c.l.b16 %v1776
      %v1842 = vunpack.c.l.b16 %v1786
      %v1843 = vunpack.c.l.b16 %v1799
      %v1844 = vunpack.c.l.b16 %v1809
      %v1845 = vpack.c.b16 %v1814, %v1813
      %v1846 = vpack.c.b16 %v1816, %v1815
      %v1847 = vpack.c.b16 %v1818, %v1817
      %v1848 = vpack.c.b16 %v1820, %v1819
      %v1849 = vpack.c.b16 %v1822, %v1821
      %v1850 = vpack.c.b16 %v1824, %v1823
      %v1851 = vpack.c.b16 %v1826, %v1825
      %v1852 = vpack.c.b16 %v1828, %v1827
      %v1853 = vpack.c.b16 %v1830, %v1829
      %v1854 = vpack.c.b16 %v1832, %v1831
      %v1855 = vpack.c.b16 %v1834, %v1833
      %v1856 = vpack.c.b16 %v1836, %v1835
      %v1857 = vpack.c.b16 %v1838, %v1837
      %v1858 = vpack.c.b16 %v1840, %v1839
      %v1859 = vpack.c.b16 %v1842, %v1841
      %v1860 = vpack.c.b16 %v1844, %v1843
      %v1863 = vunpack.c.l.b16 %v1811
      %v1864 = vunpack.c.l.b16 %v1812
      %v1865 = vpack.c.b16 %v1864, %v1863
      %v1867 = vsel %vm665, %v1845, 0
      %v1870 = vsel %vm665, %v1846, 0
      %v1873 = vsel %vm665, %v1847, 0
      %v1876 = vsel %vm665, %v1848, 0
      %v1879 = vsel %vm665, %v1849, 0
      %v1882 = vsel %vm665, %v1850, 0
      %v1885 = vsel %vm665, %v1851, 0
      %v1888 = vsel %vm665, %v1852, 0
      %v1891 = vsel %vm665, %v1853, 0
      %v1894 = vsel %vm665, %v1854, 0
      %v1897 = vsel %vm665, %v1855, 0
      %v1900 = vsel %vm665, %v1856, 0
      %v1903 = vsel %vm665, %v1857, 0
      %v1906 = vsel %vm665, %v1858, 0
      %v1909 = vsel %vm665, %v1859, 0
      %v1912 = vsel %vm665, %v1860, 0
      %v1915 = vsel %vm714, %v1865, 0
      %1917 = vmatpush.bf16.msra.mxu0 0
      %1918 = vmatpush.bf16.msra.mxu0 0
      %1919 = vmatpush.bf16.msra.mxu0 0
      %1920 = vmatpush.bf16.msra.mxu0 0
      %1921 = vmatpush.bf16.msra.mxu0 0
      %1922 = vmatpush.bf16.msra.mxu0 0
      %1923 = vmatpush.bf16.msra.mxu0 0
      %1924 = vmatpush.bf16.msra.mxu0 %v1915
      %1925 = vmatmul.bf16.gmra.mxu0 %v1867
      %v1926 = vpop.f32.mrf.mxu0
      %v1927 = vadd.f32 0.0, %v1926
      %v1928 = vpop.f32.mrf.mxu0
      %v1929 = vadd.f32 0.0, %v1928
      %1930 = vmatmul.bf16.gmra.mxu0 %v1870
      %v1931 = vpop.f32.mrf.mxu0
      %v1932 = vadd.f32 0.0, %v1931
      %v1933 = vpop.f32.mrf.mxu0
      %v1934 = vadd.f32 0.0, %v1933
      %1935 = vmatmul.bf16.gmra.mxu0 %v1873
      %v1936 = vpop.f32.mrf.mxu0
      %v1937 = vadd.f32 0.0, %v1936
      %v1938 = vpop.f32.mrf.mxu0
      %v1939 = vadd.f32 0.0, %v1938
      %1940 = vmatmul.bf16.gmra.mxu0 %v1876
      %v1941 = vpop.f32.mrf.mxu0
      %v1942 = vadd.f32 0.0, %v1941
      %v1943 = vpop.f32.mrf.mxu0
      %v1944 = vadd.f32 0.0, %v1943
      %1945 = vmatmul.bf16.gmra.mxu0 %v1879
      %v1946 = vpop.f32.mrf.mxu0
      %v1947 = vadd.f32 0.0, %v1946
      %v1948 = vpop.f32.mrf.mxu0
      %v1949 = vadd.f32 0.0, %v1948
      %1950 = vmatmul.bf16.gmra.mxu0 %v1882
      %v1951 = vpop.f32.mrf.mxu0
      %v1952 = vadd.f32 0.0, %v1951
      %v1953 = vpop.f32.mrf.mxu0
      %v1954 = vadd.f32 0.0, %v1953
      %1955 = vmatmul.bf16.gmra.mxu0 %v1885
      %v1956 = vpop.f32.mrf.mxu0
      %v1957 = vadd.f32 0.0, %v1956
      %v1958 = vpop.f32.mrf.mxu0
      %v1959 = vadd.f32 0.0, %v1958
      %1960 = vmatmul.bf16.gmra.mxu0 %v1888
      %v1961 = vpop.f32.mrf.mxu0
      %v1962 = vadd.f32 0.0, %v1961
      %v1963 = vpop.f32.mrf.mxu0
      %v1964 = vadd.f32 0.0, %v1963
      %1965 = vmatmul.bf16.gmra.mxu0 %v1891
      %v1966 = vpop.f32.mrf.mxu0
      %v1967 = vadd.f32 0.0, %v1966
      %v1968 = vpop.f32.mrf.mxu0
      %v1969 = vadd.f32 0.0, %v1968
      %1970 = vmatmul.bf16.gmra.mxu0 %v1894
      %v1971 = vpop.f32.mrf.mxu0
      %v1972 = vadd.f32 0.0, %v1971
      %v1973 = vpop.f32.mrf.mxu0
      %v1974 = vadd.f32 0.0, %v1973
      %1975 = vmatmul.bf16.gmra.mxu0 %v1897
      %v1976 = vpop.f32.mrf.mxu0
      %v1977 = vadd.f32 0.0, %v1976
      %v1978 = vpop.f32.mrf.mxu0
      %v1979 = vadd.f32 0.0, %v1978
      %1980 = vmatmul.bf16.gmra.mxu0 %v1900
      %v1981 = vpop.f32.mrf.mxu0
      %v1982 = vadd.f32 0.0, %v1981
      %v1983 = vpop.f32.mrf.mxu0
      %v1984 = vadd.f32 0.0, %v1983
      %1985 = vmatmul.bf16.gmra.mxu0 %v1903
      %v1986 = vpop.f32.mrf.mxu0
      %v1987 = vadd.f32 0.0, %v1986
      %v1988 = vpop.f32.mrf.mxu0
      %v1989 = vadd.f32 0.0, %v1988
      %1990 = vmatmul.bf16.gmra.mxu0 %v1906
      %v1991 = vpop.f32.mrf.mxu0
      %v1992 = vadd.f32 0.0, %v1991
      %v1993 = vpop.f32.mrf.mxu0
      %v1994 = vadd.f32 0.0, %v1993
      %1995 = vmatmul.bf16.gmra.mxu0 %v1909
      %v1996 = vpop.f32.mrf.mxu0
      %v1997 = vadd.f32 0.0, %v1996
      %v1998 = vpop.f32.mrf.mxu0
      %v1999 = vadd.f32 0.0, %v1998
      %2000 = vmatmul.bf16.gmra.mxu0 %v1912
      %v2001 = vpop.f32.mrf.mxu0
      %v2002 = vadd.f32 0.0, %v2001
      %v2003 = vpop.f32.mrf.mxu0
      %v2004 = vadd.f32 0.0, %v2003
      %2005 = vdwg.mxu0
      %v2006 = vadd.f32 %v1391, %v1927
      %v2007 = vadd.f32 %v1392, %v1929
      %v2008 = vadd.f32 %v1393, %v1932
      %v2009 = vadd.f32 %v1394, %v1934
      %v2010 = vadd.f32 %v1395, %v1937
      %v2011 = vadd.f32 %v1396, %v1939
      %v2012 = vadd.f32 %v1397, %v1942
      %v2013 = vadd.f32 %v1398, %v1944
      %v2014 = vadd.f32 %v1399, %v1947
      %v2015 = vadd.f32 %v1400, %v1949
      %v2016 = vadd.f32 %v1401, %v1952
      %v2017 = vadd.f32 %v1402, %v1954
      %v2018 = vadd.f32 %v1403, %v1957
      %v2019 = vadd.f32 %v1404, %v1959
      %v2020 = vadd.f32 %v1405, %v1962
      %v2021 = vadd.f32 %v1406, %v1964
      %v2022 = vadd.f32 %v1407, %v1967
      %v2023 = vadd.f32 %v1408, %v1969
      %v2024 = vadd.f32 %v1409, %v1972
      %v2025 = vadd.f32 %v1410, %v1974
      %v2026 = vadd.f32 %v1411, %v1977
      %v2027 = vadd.f32 %v1412, %v1979
      %v2028 = vadd.f32 %v1413, %v1982
      %v2029 = vadd.f32 %v1414, %v1984
      %v2030 = vadd.f32 %v1415, %v1987
      %v2031 = vadd.f32 %v1416, %v1989
      %v2032 = vadd.f32 %v1417, %v1992
      %v2033 = vadd.f32 %v1418, %v1994
      %v2034 = vadd.f32 %v1419, %v1997
      %v2035 = vadd.f32 %v1420, %v1999
      %v2036 = vadd.f32 %v1421, %v2002
      %v2037 = vadd.f32 %v1422, %v2004
      %s2038 = scalar_lea.vmem %s165, 12
      %v2039 = vld [vmem:[%s2038] sm:$0xf]
      %v2040 = vld [vmem:[%s2038 + $0x4] sm:$0xf]
      %v2041 = vld [vmem:[%s2038 + $0xc] sm:$0xf]
      %v2042 = vld [vmem:[%s2038 + $0x10] sm:$0xf]
      %v2043 = vld [vmem:[%s2038 + $0x18] sm:$0xf]
      %v2044 = vld [vmem:[%s2038 + $0x1c] sm:$0xf]
      %v2045 = vld [vmem:[%s2038 + $0x24] sm:$0xf]
      %v2046 = vld [vmem:[%s2038 + $0x28] sm:$0xf]
      %v2047 = vld [vmem:[%s2038 + $0x30] sm:$0xf]
      %v2048 = vld [vmem:[%s2038 + $0x34] sm:$0xf]
      %v2049 = vld [vmem:[%s2038 + $0x3c] sm:$0xf]
      %v2050 = vld [vmem:[%s2038 + $0x40] sm:$0xf]
      %v2051 = vld [vmem:[%s2038 + $0x48] sm:$0xf]
      %v2052 = vld [vmem:[%s2038 + $0x4c] sm:$0xf]
      %v2053 = vld [vmem:[%s2038 + $0x54] sm:$0xf]
      %v2054 = vld [vmem:[%s2038 + $0x58] sm:$0xf]
      %v2055 = vld [vmem:[%s2038 + $0x60] sm:$0xf]
      %v2056 = vld [vmem:[%s2038 + $0x64] sm:$0xf]
      %v2057 = vld [vmem:[%s2038 + $0x6c] sm:$0xf]
      %v2058 = vld [vmem:[%s2038 + $0x70] sm:$0xf]
      %v2059 = vld [vmem:[%s2038 + $0x78] sm:$0xf]
      %v2060 = vld [vmem:[%s2038 + $0x7c] sm:$0xf]
      %v2061 = vld [vmem:[%s2038 + $0x84] sm:$0xf]
      %v2062 = vld [vmem:[%s2038 + $0x88] sm:$0xf]
      %v2063 = vld [vmem:[%s2038 + $0x90] sm:$0xf]
      %v2064 = vld [vmem:[%s2038 + $0x94] sm:$0xf]
      %v2065 = vld [vmem:[%s2038 + $0x9c] sm:$0xf]
      %v2066 = vld [vmem:[%s2038 + $0xa0] sm:$0xf]
      %v2067 = vld [vmem:[%s2038 + $0xa8] sm:$0xf]
      %v2068 = vld [vmem:[%s2038 + $0xac] sm:$0xf]
      %v2069 = vld [vmem:[%s2038 + $0xb4] sm:$0xf]
      %v2070 = vld [vmem:[%s2038 + $0xb8] sm:$0xf]
      %s2071 = scalar_lea.vmem %s1, 32
      %v2072 = vld [vmem:[%s2071] sm:$0xf]
      %v2073 = vld [vmem:[%s2071 + $0x4] sm:$0x3]
      %v2106 = vunpack.c.l.b16 %v2039
      %v2107 = vunpack.c.l.b16 %v2040
      %v2108 = vunpack.c.l.b16 %v2041
      %v2109 = vunpack.c.l.b16 %v2042
      %v2110 = vunpack.c.l.b16 %v2043
      %v2111 = vunpack.c.l.b16 %v2044
      %v2112 = vunpack.c.l.b16 %v2045
      %v2113 = vunpack.c.l.b16 %v2046
      %v2114 = vunpack.c.l.b16 %v2047
      %v2115 = vunpack.c.l.b16 %v2048
      %v2116 = vunpack.c.l.b16 %v2049
      %v2117 = vunpack.c.l.b16 %v2050
      %v2118 = vunpack.c.l.b16 %v2051
      %v2119 = vunpack.c.l.b16 %v2052
      %v2120 = vunpack.c.l.b16 %v2053
      %v2121 = vunpack.c.l.b16 %v2054
      %v2122 = vunpack.c.l.b16 %v2055
      %v2123 = vunpack.c.l.b16 %v2056
      %v2124 = vunpack.c.l.b16 %v2057
      %v2125 = vunpack.c.l.b16 %v2058
      %v2126 = vunpack.c.l.b16 %v2059
      %v2127 = vunpack.c.l.b16 %v2060
      %v2128 = vunpack.c.l.b16 %v2061
      %v2129 = vunpack.c.l.b16 %v2062
      %v2130 = vunpack.c.l.b16 %v2063
      %v2131 = vunpack.c.l.b16 %v2064
      %v2132 = vunpack.c.l.b16 %v2065
      %v2133 = vunpack.c.l.b16 %v2066
      %v2134 = vunpack.c.l.b16 %v2067
      %v2135 = vunpack.c.l.b16 %v2068
      %v2136 = vunpack.c.l.b16 %v2069
      %v2137 = vunpack.c.l.b16 %v2070
      %v2138 = vpack.c.b16 %v2107, %v2106
      %v2139 = vpack.c.b16 %v2109, %v2108
      %v2140 = vpack.c.b16 %v2111, %v2110
      %v2141 = vpack.c.b16 %v2113, %v2112
      %v2142 = vpack.c.b16 %v2115, %v2114
      %v2143 = vpack.c.b16 %v2117, %v2116
      %v2144 = vpack.c.b16 %v2119, %v2118
      %v2145 = vpack.c.b16 %v2121, %v2120
      %v2146 = vpack.c.b16 %v2123, %v2122
      %v2147 = vpack.c.b16 %v2125, %v2124
      %v2148 = vpack.c.b16 %v2127, %v2126
      %v2149 = vpack.c.b16 %v2129, %v2128
      %v2150 = vpack.c.b16 %v2131, %v2130
      %v2151 = vpack.c.b16 %v2133, %v2132
      %v2152 = vpack.c.b16 %v2135, %v2134
      %v2153 = vpack.c.b16 %v2137, %v2136
      %v2156 = vunpack.c.l.b16 %v2072
      %v2157 = vunpack.c.l.b16 %v2073
      %v2158 = vpack.c.b16 %v2157, %v2156
      %v2160 = vsel %vm665, %v2138, 0
      %v2163 = vsel %vm665, %v2139, 0
      %v2166 = vsel %vm665, %v2140, 0
      %v2169 = vsel %vm665, %v2141, 0
      %v2172 = vsel %vm665, %v2142, 0
      %v2175 = vsel %vm665, %v2143, 0
      %v2178 = vsel %vm665, %v2144, 0
      %v2181 = vsel %vm665, %v2145, 0
      %v2184 = vsel %vm665, %v2146, 0
      %v2187 = vsel %vm665, %v2147, 0
      %v2190 = vsel %vm665, %v2148, 0
      %v2193 = vsel %vm665, %v2149, 0
      %v2196 = vsel %vm665, %v2150, 0
      %v2199 = vsel %vm665, %v2151, 0
      %v2202 = vsel %vm665, %v2152, 0
      %v2205 = vsel %vm665, %v2153, 0
      %v2208 = vsel %vm714, %v2158, 0
      %2210 = vmatpush.bf16.msra.mxu0 0
      %2211 = vmatpush.bf16.msra.mxu0 0
      %2212 = vmatpush.bf16.msra.mxu0 0
      %2213 = vmatpush.bf16.msra.mxu0 0
      %2214 = vmatpush.bf16.msra.mxu0 0
      %2215 = vmatpush.bf16.msra.mxu0 0
      %2216 = vmatpush.bf16.msra.mxu0 0
      %2217 = vmatpush.bf16.msra.mxu0 %v2208
      %2218 = vmatmul.bf16.gmra.mxu0 %v2160
      %v2219 = vpop.f32.mrf.mxu0
      %v2220 = vadd.f32 0.0, %v2219
      %v2221 = vpop.f32.mrf.mxu0
      %v2222 = vadd.f32 0.0, %v2221
      %2223 = vmatmul.bf16.gmra.mxu0 %v2163
      %v2224 = vpop.f32.mrf.mxu0
      %v2225 = vadd.f32 0.0, %v2224
      %v2226 = vpop.f32.mrf.mxu0
      %v2227 = vadd.f32 0.0, %v2226
      %2228 = vmatmul.bf16.gmra.mxu0 %v2166
      %v2229 = vpop.f32.mrf.mxu0
      %v2230 = vadd.f32 0.0, %v2229
      %v2231 = vpop.f32.mrf.mxu0
      %v2232 = vadd.f32 0.0, %v2231
      %2233 = vmatmul.bf16.gmra.mxu0 %v2169
      %v2234 = vpop.f32.mrf.mxu0
      %v2235 = vadd.f32 0.0, %v2234
      %v2236 = vpop.f32.mrf.mxu0
      %v2237 = vadd.f32 0.0, %v2236
      %2238 = vmatmul.bf16.gmra.mxu0 %v2172
      %v2239 = vpop.f32.mrf.mxu0
      %v2240 = vadd.f32 0.0, %v2239
      %v2241 = vpop.f32.mrf.mxu0
      %v2242 = vadd.f32 0.0, %v2241
      %2243 = vmatmul.bf16.gmra.mxu0 %v2175
      %v2244 = vpop.f32.mrf.mxu0
      %v2245 = vadd.f32 0.0, %v2244
      %v2246 = vpop.f32.mrf.mxu0
      %v2247 = vadd.f32 0.0, %v2246
      %2248 = vmatmul.bf16.gmra.mxu0 %v2178
      %v2249 = vpop.f32.mrf.mxu0
      %v2250 = vadd.f32 0.0, %v2249
      %v2251 = vpop.f32.mrf.mxu0
      %v2252 = vadd.f32 0.0, %v2251
      %2253 = vmatmul.bf16.gmra.mxu0 %v2181
      %v2254 = vpop.f32.mrf.mxu0
      %v2255 = vadd.f32 0.0, %v2254
      %v2256 = vpop.f32.mrf.mxu0
      %v2257 = vadd.f32 0.0, %v2256
      %2258 = vmatmul.bf16.gmra.mxu0 %v2184
      %v2259 = vpop.f32.mrf.mxu0
      %v2260 = vadd.f32 0.0, %v2259
      %v2261 = vpop.f32.mrf.mxu0
      %v2262 = vadd.f32 0.0, %v2261
      %2263 = vmatmul.bf16.gmra.mxu0 %v2187
      %v2264 = vpop.f32.mrf.mxu0
      %v2265 = vadd.f32 0.0, %v2264
      %v2266 = vpop.f32.mrf.mxu0
      %v2267 = vadd.f32 0.0, %v2266
      %2268 = vmatmul.bf16.gmra.mxu0 %v2190
      %v2269 = vpop.f32.mrf.mxu0
      %v2270 = vadd.f32 0.0, %v2269
      %v2271 = vpop.f32.mrf.mxu0
      %v2272 = vadd.f32 0.0, %v2271
      %2273 = vmatmul.bf16.gmra.mxu0 %v2193
      %v2274 = vpop.f32.mrf.mxu0
      %v2275 = vadd.f32 0.0, %v2274
      %v2276 = vpop.f32.mrf.mxu0
      %v2277 = vadd.f32 0.0, %v2276
      %2278 = vmatmul.bf16.gmra.mxu0 %v2196
      %v2279 = vpop.f32.mrf.mxu0
      %v2280 = vadd.f32 0.0, %v2279
      %v2281 = vpop.f32.mrf.mxu0
      %v2282 = vadd.f32 0.0, %v2281
      %2283 = vmatmul.bf16.gmra.mxu0 %v2199
      %v2284 = vpop.f32.mrf.mxu0
      %v2285 = vadd.f32 0.0, %v2284
      %v2286 = vpop.f32.mrf.mxu0
      %v2287 = vadd.f32 0.0, %v2286
      %2288 = vmatmul.bf16.gmra.mxu0 %v2202
      %v2289 = vpop.f32.mrf.mxu0
      %v2290 = vadd.f32 0.0, %v2289
      %v2291 = vpop.f32.mrf.mxu0
      %v2292 = vadd.f32 0.0, %v2291
      %2293 = vmatmul.bf16.gmra.mxu0 %v2205
      %v2294 = vpop.f32.mrf.mxu0
      %v2295 = vadd.f32 0.0, %v2294
      %v2296 = vpop.f32.mrf.mxu0
      %v2297 = vadd.f32 0.0, %v2296
      %2298 = vdwg.mxu0
      %v2299 = vadd.f32 %v2006, %v2220
      %v2300 = vadd.f32 %v2007, %v2222
      %v2301 = vadd.f32 %v2008, %v2225
      %v2302 = vadd.f32 %v2009, %v2227
      %v2303 = vadd.f32 %v2010, %v2230
      %v2304 = vadd.f32 %v2011, %v2232
      %v2305 = vadd.f32 %v2012, %v2235
      %v2306 = vadd.f32 %v2013, %v2237
      %v2307 = vadd.f32 %v2014, %v2240
      %v2308 = vadd.f32 %v2015, %v2242
      %v2309 = vadd.f32 %v2016, %v2245
      %v2310 = vadd.f32 %v2017, %v2247
      %v2311 = vadd.f32 %v2018, %v2250
      %v2312 = vadd.f32 %v2019, %v2252
      %v2313 = vadd.f32 %v2020, %v2255
      %v2314 = vadd.f32 %v2021, %v2257
      %v2315 = vadd.f32 %v2022, %v2260
      %v2316 = vadd.f32 %v2023, %v2262
      %v2317 = vadd.f32 %v2024, %v2265
      %v2318 = vadd.f32 %v2025, %v2267
      %v2319 = vadd.f32 %v2026, %v2270
      %v2320 = vadd.f32 %v2027, %v2272
      %v2321 = vadd.f32 %v2028, %v2275
      %v2322 = vadd.f32 %v2029, %v2277
      %v2323 = vadd.f32 %v2030, %v2280
      %v2324 = vadd.f32 %v2031, %v2282
      %v2325 = vadd.f32 %v2032, %v2285
      %v2326 = vadd.f32 %v2033, %v2287
      %v2327 = vadd.f32 %v2034, %v2290
      %v2328 = vadd.f32 %v2035, %v2292
      %v2329 = vadd.f32 %v2036, %v2295
      %v2330 = vadd.f32 %v2037, %v2297
      %v2331 = vld [vmem:[%s2038] sm:$0xf]
      %v2332 = vld [vmem:[%s2038 + $0x4] sm:$0xf]
      %v2333 = vld [vmem:[%s2038 + $0x8] sm:$0x1]
      %v2334 = vld [vmem:[%s2038 + $0xc] sm:$0xf]
      %v2335 = vld [vmem:[%s2038 + $0x10] sm:$0xf]
      %v2336 = vld [vmem:[%s2038 + $0x14] sm:$0x1]
      %v2337 = vld [vmem:[%s2038 + $0x18] sm:$0xf]
      %v2338 = vld [vmem:[%s2038 + $0x1c] sm:$0xf]
      %v2339 = vld [vmem:[%s2038 + $0x20] sm:$0x1]
      %v2340 = vld [vmem:[%s2038 + $0x24] sm:$0xf]
      %v2341 = vld [vmem:[%s2038 + $0x28] sm:$0xf]
      %v2342 = vld [vmem:[%s2038 + $0x2c] sm:$0x1]
      %v2343 = vld [vmem:[%s2038 + $0x30] sm:$0xf]
      %v2344 = vld [vmem:[%s2038 + $0x34] sm:$0xf]
      %v2345 = vld [vmem:[%s2038 + $0x38] sm:$0x1]
      %v2346 = vld [vmem:[%s2038 + $0x3c] sm:$0xf]
      %v2347 = vld [vmem:[%s2038 + $0x40] sm:$0xf]
      %v2348 = vld [vmem:[%s2038 + $0x44] sm:$0x1]
      %v2349 = vld [vmem:[%s2038 + $0x48] sm:$0xf]
      %v2350 = vld [vmem:[%s2038 + $0x4c] sm:$0xf]
      %v2351 = vld [vmem:[%s2038 + $0x50] sm:$0x1]
      %v2352 = vld [vmem:[%s2038 + $0x54] sm:$0xf]
      %v2353 = vld [vmem:[%s2038 + $0x58] sm:$0xf]
      %v2354 = vld [vmem:[%s2038 + $0x5c] sm:$0x1]
      %v2355 = vld [vmem:[%s2038 + $0x60] sm:$0xf]
      %v2356 = vld [vmem:[%s2038 + $0x64] sm:$0xf]
      %v2357 = vld [vmem:[%s2038 + $0x68] sm:$0x1]
      %v2358 = vld [vmem:[%s2038 + $0x6c] sm:$0xf]
      %v2359 = vld [vmem:[%s2038 + $0x70] sm:$0xf]
      %v2360 = vld [vmem:[%s2038 + $0x74] sm:$0x1]
      %v2361 = vld [vmem:[%s2038 + $0x78] sm:$0xf]
      %v2362 = vld [vmem:[%s2038 + $0x7c] sm:$0xf]
      %v2363 = vld [vmem:[%s2038 + $0x80] sm:$0x1]
      %v2364 = vld [vmem:[%s2038 + $0x84] sm:$0xf]
      %v2365 = vld [vmem:[%s2038 + $0x88] sm:$0xf]
      %v2366 = vld [vmem:[%s2038 + $0x8c] sm:$0x1]
      %v2367 = vld [vmem:[%s2038 + $0x90] sm:$0xf]
      %v2368 = vld [vmem:[%s2038 + $0x94] sm:$0xf]
      %v2369 = vld [vmem:[%s2038 + $0x98] sm:$0x1]
      %v2370 = vld [vmem:[%s2038 + $0x9c] sm:$0xf]
      %v2371 = vld [vmem:[%s2038 + $0xa0] sm:$0xf]
      %v2372 = vld [vmem:[%s2038 + $0xa4] sm:$0x1]
      %v2373 = vld [vmem:[%s2038 + $0xa8] sm:$0xf]
      %v2374 = vld [vmem:[%s2038 + $0xac] sm:$0xf]
      %v2375 = vld [vmem:[%s2038 + $0xb0] sm:$0x1]
      %v2376 = vld [vmem:[%s2038 + $0xb4] sm:$0xf]
      %v2377 = vld [vmem:[%s2038 + $0xb8] sm:$0xf]
      %v2378 = vld [vmem:[%s2038 + $0xbc] sm:$0x1]
      %v2380 = vshrl.u32 %v2331, 16
      %v2382 = vrot.slane %v2380, 4
      %v2383 = vshll.u32 %v2331, 16
      %v2385 = vrot.slane %v2383, 5
      %v2386 = vor.u32 %v2382, %v2385
      %v2387 = vrot.slane %v2386, 4
      %v2389 = vshll.u32 %v2332, 16
      %v2391 = vrot.slane %v2389, 5
      %v2392 = vsel %vm224, %v2387, %v2391
      %v2393 = vshrl.u32 %v2332, 16
      %v2395 = vrot.slane %v2393, 4
      %v2396 = vor.u32 %v2395, %v2391
      %v2397 = vrot.slane %v2396, 4
      %v2399 = vshll.u32 %v2333, 16
      %v2401 = vrot.slane %v2399, 5
      %v2402 = vsel %vm224, %v2397, %v2401
      %v2404 = vshrl.u32 %v2334, 16
      %v2406 = vrot.slane %v2404, 4
      %v2407 = vshll.u32 %v2334, 16
      %v2409 = vrot.slane %v2407, 5
      %v2410 = vor.u32 %v2406, %v2409
      %v2411 = vrot.slane %v2410, 4
      %v2413 = vshll.u32 %v2335, 16
      %v2415 = vrot.slane %v2413, 5
      %v2416 = vsel %vm224, %v2411, %v2415
      %v2417 = vshrl.u32 %v2335, 16
      %v2419 = vrot.slane %v2417, 4
      %v2420 = vor.u32 %v2419, %v2415
      %v2421 = vrot.slane %v2420, 4
      %v2423 = vshll.u32 %v2336, 16
      %v2425 = vrot.slane %v2423, 5
      %v2426 = vsel %vm224, %v2421, %v2425
      %v2428 = vshrl.u32 %v2337, 16
      %v2430 = vrot.slane %v2428, 4
      %v2431 = vshll.u32 %v2337, 16
      %v2433 = vrot.slane %v2431, 5
      %v2434 = vor.u32 %v2430, %v2433
      %v2435 = vrot.slane %v2434, 4
      %v2437 = vshll.u32 %v2338, 16
      %v2439 = vrot.slane %v2437, 5
      %v2440 = vsel %vm224, %v2435, %v2439
      %v2441 = vshrl.u32 %v2338, 16
      %v2443 = vrot.slane %v2441, 4
      %v2444 = vor.u32 %v2443, %v2439
      %v2445 = vrot.slane %v2444, 4
      %v2447 = vshll.u32 %v2339, 16
      %v2449 = vrot.slane %v2447, 5
      %v2450 = vsel %vm224, %v2445, %v2449
      %v2452 = vshrl.u32 %v2340, 16
      %v2454 = vrot.slane %v2452, 4
      %v2455 = vshll.u32 %v2340, 16
      %v2457 = vrot.slane %v2455, 5
      %v2458 = vor.u32 %v2454, %v2457
      %v2459 = vrot.slane %v2458, 4
      %v2461 = vshll.u32 %v2341, 16
      %v2463 = vrot.slane %v2461, 5
      %v2464 = vsel %vm224, %v2459, %v2463
      %v2465 = vshrl.u32 %v2341, 16
      %v2467 = vrot.slane %v2465, 4
      %v2468 = vor.u32 %v2467, %v2463
      %v2469 = vrot.slane %v2468, 4
      %v2471 = vshll.u32 %v2342, 16
      %v2473 = vrot.slane %v2471, 5
      %v2474 = vsel %vm224, %v2469, %v2473
      %v2476 = vshrl.u32 %v2343, 16
      %v2478 = vrot.slane %v2476, 4
      %v2479 = vshll.u32 %v2343, 16
      %v2481 = vrot.slane %v2479, 5
      %v2482 = vor.u32 %v2478, %v2481
      %v2483 = vrot.slane %v2482, 4
      %v2485 = vshll.u32 %v2344, 16
      %v2487 = vrot.slane %v2485, 5
      %v2488 = vsel %vm224, %v2483, %v2487
      %v2489 = vshrl.u32 %v2344, 16
      %v2491 = vrot.slane %v2489, 4
      %v2492 = vor.u32 %v2491, %v2487
      %v2493 = vrot.slane %v2492, 4
      %v2495 = vshll.u32 %v2345, 16
      %v2497 = vrot.slane %v2495, 5
      %v2498 = vsel %vm224, %v2493, %v2497
      %v2500 = vshrl.u32 %v2346, 16
      %v2502 = vrot.slane %v2500, 4
      %v2503 = vshll.u32 %v2346, 16
      %v2505 = vrot.slane %v2503, 5
      %v2506 = vor.u32 %v2502, %v2505
      %v2507 = vrot.slane %v2506, 4
      %v2509 = vshll.u32 %v2347, 16
      %v2511 = vrot.slane %v2509, 5
      %v2512 = vsel %vm224, %v2507, %v2511
      %v2513 = vshrl.u32 %v2347, 16
      %v2515 = vrot.slane %v2513, 4
      %v2516 = vor.u32 %v2515, %v2511
      %v2517 = vrot.slane %v2516, 4
      %v2519 = vshll.u32 %v2348, 16
      %v2521 = vrot.slane %v2519, 5
      %v2522 = vsel %vm224, %v2517, %v2521
      %v2524 = vshrl.u32 %v2349, 16
      %v2526 = vrot.slane %v2524, 4
      %v2527 = vshll.u32 %v2349, 16
      %v2529 = vrot.slane %v2527, 5
      %v2530 = vor.u32 %v2526, %v2529
      %v2531 = vrot.slane %v2530, 4
      %v2533 = vshll.u32 %v2350, 16
      %v2535 = vrot.slane %v2533, 5
      %v2536 = vsel %vm224, %v2531, %v2535
      %v2537 = vshrl.u32 %v2350, 16
      %v2539 = vrot.slane %v2537, 4
      %v2540 = vor.u32 %v2539, %v2535
      %v2541 = vrot.slane %v2540, 4
      %v2543 = vshll.u32 %v2351, 16
      %v2545 = vrot.slane %v2543, 5
      %v2546 = vsel %vm224, %v2541, %v2545
      %v2548 = vshrl.u32 %v2352, 16
      %v2550 = vrot.slane %v2548, 4
      %v2551 = vshll.u32 %v2352, 16
      %v2553 = vrot.slane %v2551, 5
      %v2554 = vor.u32 %v2550, %v2553
      %v2555 = vrot.slane %v2554, 4
      %v2557 = vshll.u32 %v2353, 16
      %v2559 = vrot.slane %v2557, 5
      %v2560 = vsel %vm224, %v2555, %v2559
      %v2561 = vshrl.u32 %v2353, 16
      %v2563 = vrot.slane %v2561, 4
      %v2564 = vor.u32 %v2563, %v2559
      %v2565 = vrot.slane %v2564, 4
      %v2567 = vshll.u32 %v2354, 16
      %v2569 = vrot.slane %v2567, 5
      %v2570 = vsel %vm224, %v2565, %v2569
      %v2572 = vshrl.u32 %v2355, 16
      %v2574 = vrot.slane %v2572, 4
      %v2575 = vshll.u32 %v2355, 16
      %v2577 = vrot.slane %v2575, 5
      %v2578 = vor.u32 %v2574, %v2577
      %v2579 = vrot.slane %v2578, 4
      %v2581 = vshll.u32 %v2356, 16
      %v2583 = vrot.slane %v2581, 5
      %v2584 = vsel %vm224, %v2579, %v2583
      %v2585 = vshrl.u32 %v2356, 16
      %v2587 = vrot.slane %v2585, 4
      %v2588 = vor.u32 %v2587, %v2583
      %v2589 = vrot.slane %v2588, 4
      %v2591 = vshll.u32 %v2357, 16
      %v2593 = vrot.slane %v2591, 5
      %v2594 = vsel %vm224, %v2589, %v2593
      %v2596 = vshrl.u32 %v2358, 16
      %v2598 = vrot.slane %v2596, 4
      %v2599 = vshll.u32 %v2358, 16
      %v2601 = vrot.slane %v2599, 5
      %v2602 = vor.u32 %v2598, %v2601
      %v2603 = vrot.slane %v2602, 4
      %v2605 = vshll.u32 %v2359, 16
      %v2607 = vrot.slane %v2605, 5
      %v2608 = vsel %vm224, %v2603, %v2607
      %v2609 = vshrl.u32 %v2359, 16
      %v2611 = vrot.slane %v2609, 4
      %v2612 = vor.u32 %v2611, %v2607
      %v2613 = vrot.slane %v2612, 4
      %v2615 = vshll.u32 %v2360, 16
      %v2617 = vrot.slane %v2615, 5
      %v2618 = vsel %vm224, %v2613, %v2617
      %v2620 = vshrl.u32 %v2361, 16
      %v2622 = vrot.slane %v2620, 4
      %v2623 = vshll.u32 %v2361, 16
      %v2625 = vrot.slane %v2623, 5
      %v2626 = vor.u32 %v2622, %v2625
      %v2627 = vrot.slane %v2626, 4
      %v2629 = vshll.u32 %v2362, 16
      %v2631 = vrot.slane %v2629, 5
      %v2632 = vsel %vm224, %v2627, %v2631
      %v2633 = vshrl.u32 %v2362, 16
      %v2635 = vrot.slane %v2633, 4
      %v2636 = vor.u32 %v2635, %v2631
      %v2637 = vrot.slane %v2636, 4
      %v2639 = vshll.u32 %v2363, 16
      %v2641 = vrot.slane %v2639, 5
      %v2642 = vsel %vm224, %v2637, %v2641
      %v2644 = vshrl.u32 %v2364, 16
      %v2646 = vrot.slane %v2644, 4
      %v2647 = vshll.u32 %v2364, 16
      %v2649 = vrot.slane %v2647, 5
      %v2650 = vor.u32 %v2646, %v2649
      %v2651 = vrot.slane %v2650, 4
      %v2653 = vshll.u32 %v2365, 16
      %v2655 = vrot.slane %v2653, 5
      %v2656 = vsel %vm224, %v2651, %v2655
      %v2657 = vshrl.u32 %v2365, 16
      %v2659 = vrot.slane %v2657, 4
      %v2660 = vor.u32 %v2659, %v2655
      %v2661 = vrot.slane %v2660, 4
      %v2663 = vshll.u32 %v2366, 16
      %v2665 = vrot.slane %v2663, 5
      %v2666 = vsel %vm224, %v2661, %v2665
      %v2668 = vshrl.u32 %v2367, 16
      %v2670 = vrot.slane %v2668, 4
      %v2671 = vshll.u32 %v2367, 16
      %v2673 = vrot.slane %v2671, 5
      %v2674 = vor.u32 %v2670, %v2673
      %v2675 = vrot.slane %v2674, 4
      %v2677 = vshll.u32 %v2368, 16
      %v2679 = vrot.slane %v2677, 5
      %v2680 = vsel %vm224, %v2675, %v2679
      %v2681 = vshrl.u32 %v2368, 16
      %v2683 = vrot.slane %v2681, 4
      %v2684 = vor.u32 %v2683, %v2679
      %v2685 = vrot.slane %v2684, 4
      %v2687 = vshll.u32 %v2369, 16
      %v2689 = vrot.slane %v2687, 5
      %v2690 = vsel %vm224, %v2685, %v2689
      %v2692 = vshrl.u32 %v2370, 16
      %v2694 = vrot.slane %v2692, 4
      %v2695 = vshll.u32 %v2370, 16
      %v2697 = vrot.slane %v2695, 5
      %v2698 = vor.u32 %v2694, %v2697
      %v2699 = vrot.slane %v2698, 4
      %v2701 = vshll.u32 %v2371, 16
      %v2703 = vrot.slane %v2701, 5
      %v2704 = vsel %vm224, %v2699, %v2703
      %v2705 = vshrl.u32 %v2371, 16
      %v2707 = vrot.slane %v2705, 4
      %v2708 = vor.u32 %v2707, %v2703
      %v2709 = vrot.slane %v2708, 4
      %v2711 = vshll.u32 %v2372, 16
      %v2713 = vrot.slane %v2711, 5
      %v2714 = vsel %vm224, %v2709, %v2713
      %v2716 = vshrl.u32 %v2373, 16
      %v2718 = vrot.slane %v2716, 4
      %v2719 = vshll.u32 %v2373, 16
      %v2721 = vrot.slane %v2719, 5
      %v2722 = vor.u32 %v2718, %v2721
      %v2723 = vrot.slane %v2722, 4
      %v2725 = vshll.u32 %v2374, 16
      %v2727 = vrot.slane %v2725, 5
      %v2728 = vsel %vm224, %v2723, %v2727
      %v2729 = vshrl.u32 %v2374, 16
      %v2731 = vrot.slane %v2729, 4
      %v2732 = vor.u32 %v2731, %v2727
      %v2733 = vrot.slane %v2732, 4
      %v2735 = vshll.u32 %v2375, 16
      %v2737 = vrot.slane %v2735, 5
      %v2738 = vsel %vm224, %v2733, %v2737
      %v2740 = vshrl.u32 %v2376, 16
      %v2742 = vrot.slane %v2740, 4
      %v2743 = vshll.u32 %v2376, 16
      %v2745 = vrot.slane %v2743, 5
      %v2746 = vor.u32 %v2742, %v2745
      %v2747 = vrot.slane %v2746, 4
      %v2749 = vshll.u32 %v2377, 16
      %v2751 = vrot.slane %v2749, 5
      %v2752 = vsel %vm224, %v2747, %v2751
      %v2753 = vshrl.u32 %v2377, 16
      %v2755 = vrot.slane %v2753, 4
      %v2756 = vor.u32 %v2755, %v2751
      %v2757 = vrot.slane %v2756, 4
      %v2759 = vshll.u32 %v2378, 16
      %v2761 = vrot.slane %v2759, 5
      %v2762 = vsel %vm224, %v2757, %v2761
      %s2763 = scalar_lea.vmem %s1, 40
      %v2764 = vld [vmem:[%s2763] sm:$0xf]
      %v2765 = vld [vmem:[%s2763 + $0x4] sm:$0x3]
      %v2766 = vunpack.c.l.b16 %v2392
      %v2767 = vunpack.c.l.b16 %v2402
      %v2768 = vunpack.c.l.b16 %v2416
      %v2769 = vunpack.c.l.b16 %v2426
      %v2770 = vunpack.c.l.b16 %v2440
      %v2771 = vunpack.c.l.b16 %v2450
      %v2772 = vunpack.c.l.b16 %v2464
      %v2773 = vunpack.c.l.b16 %v2474
      %v2774 = vunpack.c.l.b16 %v2488
      %v2775 = vunpack.c.l.b16 %v2498
      %v2776 = vunpack.c.l.b16 %v2512
      %v2777 = vunpack.c.l.b16 %v2522
      %v2778 = vunpack.c.l.b16 %v2536
      %v2779 = vunpack.c.l.b16 %v2546
      %v2780 = vunpack.c.l.b16 %v2560
      %v2781 = vunpack.c.l.b16 %v2570
      %v2782 = vunpack.c.l.b16 %v2584
      %v2783 = vunpack.c.l.b16 %v2594
      %v2784 = vunpack.c.l.b16 %v2608
      %v2785 = vunpack.c.l.b16 %v2618
      %v2786 = vunpack.c.l.b16 %v2632
      %v2787 = vunpack.c.l.b16 %v2642
      %v2788 = vunpack.c.l.b16 %v2656
      %v2789 = vunpack.c.l.b16 %v2666
      %v2790 = vunpack.c.l.b16 %v2680
      %v2791 = vunpack.c.l.b16 %v2690
      %v2792 = vunpack.c.l.b16 %v2704
      %v2793 = vunpack.c.l.b16 %v2714
      %v2794 = vunpack.c.l.b16 %v2728
      %v2795 = vunpack.c.l.b16 %v2738
      %v2796 = vunpack.c.l.b16 %v2752
      %v2797 = vunpack.c.l.b16 %v2762
      %v2798 = vpack.c.b16 %v2767, %v2766
      %v2799 = vpack.c.b16 %v2769, %v2768
      %v2800 = vpack.c.b16 %v2771, %v2770
      %v2801 = vpack.c.b16 %v2773, %v2772
      %v2802 = vpack.c.b16 %v2775, %v2774
      %v2803 = vpack.c.b16 %v2777, %v2776
      %v2804 = vpack.c.b16 %v2779, %v2778
      %v2805 = vpack.c.b16 %v2781, %v2780
      %v2806 = vpack.c.b16 %v2783, %v2782
      %v2807 = vpack.c.b16 %v2785, %v2784
      %v2808 = vpack.c.b16 %v2787, %v2786
      %v2809 = vpack.c.b16 %v2789, %v2788
      %v2810 = vpack.c.b16 %v2791, %v2790
      %v2811 = vpack.c.b16 %v2793, %v2792
      %v2812 = vpack.c.b16 %v2795, %v2794
      %v2813 = vpack.c.b16 %v2797, %v2796
      %v2816 = vunpack.c.l.b16 %v2764
      %v2817 = vunpack.c.l.b16 %v2765
      %v2818 = vpack.c.b16 %v2817, %v2816
      %v2820 = vsel %vm665, %v2798, 0
      %v2823 = vsel %vm665, %v2799, 0
      %v2826 = vsel %vm665, %v2800, 0
      %v2829 = vsel %vm665, %v2801, 0
      %v2832 = vsel %vm665, %v2802, 0
      %v2835 = vsel %vm665, %v2803, 0
      %v2838 = vsel %vm665, %v2804, 0
      %v2841 = vsel %vm665, %v2805, 0
      %v2844 = vsel %vm665, %v2806, 0
      %v2847 = vsel %vm665, %v2807, 0
      %v2850 = vsel %vm665, %v2808, 0
      %v2853 = vsel %vm665, %v2809, 0
      %v2856 = vsel %vm665, %v2810, 0
      %v2859 = vsel %vm665, %v2811, 0
      %v2862 = vsel %vm665, %v2812, 0
      %v2865 = vsel %vm665, %v2813, 0
      %v2868 = vsel %vm714, %v2818, 0
      %2870 = vmatpush.bf16.msra.mxu0 0
      %2871 = vmatpush.bf16.msra.mxu0 0
      %2872 = vmatpush.bf16.msra.mxu0 0
      %2873 = vmatpush.bf16.msra.mxu0 0
      %2874 = vmatpush.bf16.msra.mxu0 0
      %2875 = vmatpush.bf16.msra.mxu0 0
      %2876 = vmatpush.bf16.msra.mxu0 0
      %2877 = vmatpush.bf16.msra.mxu0 %v2868
      %2878 = vmatmul.bf16.gmra.mxu0 %v2820
      %v2879 = vpop.f32.mrf.mxu0
      %v2880 = vadd.f32 0.0, %v2879
      %v2881 = vpop.f32.mrf.mxu0
      %v2882 = vadd.f32 0.0, %v2881
      %2883 = vmatmul.bf16.gmra.mxu0 %v2823
      %v2884 = vpop.f32.mrf.mxu0
      %v2885 = vadd.f32 0.0, %v2884
      %v2886 = vpop.f32.mrf.mxu0
      %v2887 = vadd.f32 0.0, %v2886
      %2888 = vmatmul.bf16.gmra.mxu0 %v2826
      %v2889 = vpop.f32.mrf.mxu0
      %v2890 = vadd.f32 0.0, %v2889
      %v2891 = vpop.f32.mrf.mxu0
      %v2892 = vadd.f32 0.0, %v2891
      %2893 = vmatmul.bf16.gmra.mxu0 %v2829
      %v2894 = vpop.f32.mrf.mxu0
      %v2895 = vadd.f32 0.0, %v2894
      %v2896 = vpop.f32.mrf.mxu0
      %v2897 = vadd.f32 0.0, %v2896
      %2898 = vmatmul.bf16.gmra.mxu0 %v2832
      %v2899 = vpop.f32.mrf.mxu0
      %v2900 = vadd.f32 0.0, %v2899
      %v2901 = vpop.f32.mrf.mxu0
      %v2902 = vadd.f32 0.0, %v2901
      %2903 = vmatmul.bf16.gmra.mxu0 %v2835
      %v2904 = vpop.f32.mrf.mxu0
      %v2905 = vadd.f32 0.0, %v2904
      %v2906 = vpop.f32.mrf.mxu0
      %v2907 = vadd.f32 0.0, %v2906
      %2908 = vmatmul.bf16.gmra.mxu0 %v2838
      %v2909 = vpop.f32.mrf.mxu0
      %v2910 = vadd.f32 0.0, %v2909
      %v2911 = vpop.f32.mrf.mxu0
      %v2912 = vadd.f32 0.0, %v2911
      %2913 = vmatmul.bf16.gmra.mxu0 %v2841
      %v2914 = vpop.f32.mrf.mxu0
      %v2915 = vadd.f32 0.0, %v2914
      %v2916 = vpop.f32.mrf.mxu0
      %v2917 = vadd.f32 0.0, %v2916
      %2918 = vmatmul.bf16.gmra.mxu0 %v2844
      %v2919 = vpop.f32.mrf.mxu0
      %v2920 = vadd.f32 0.0, %v2919
      %v2921 = vpop.f32.mrf.mxu0
      %v2922 = vadd.f32 0.0, %v2921
      %2923 = vmatmul.bf16.gmra.mxu0 %v2847
      %v2924 = vpop.f32.mrf.mxu0
      %v2925 = vadd.f32 0.0, %v2924
      %v2926 = vpop.f32.mrf.mxu0
      %v2927 = vadd.f32 0.0, %v2926
      %2928 = vmatmul.bf16.gmra.mxu0 %v2850
      %v2929 = vpop.f32.mrf.mxu0
      %v2930 = vadd.f32 0.0, %v2929
      %v2931 = vpop.f32.mrf.mxu0
      %v2932 = vadd.f32 0.0, %v2931
      %2933 = vmatmul.bf16.gmra.mxu0 %v2853
      %v2934 = vpop.f32.mrf.mxu0
      %v2935 = vadd.f32 0.0, %v2934
      %v2936 = vpop.f32.mrf.mxu0
      %v2937 = vadd.f32 0.0, %v2936
      %2938 = vmatmul.bf16.gmra.mxu0 %v2856
      %v2939 = vpop.f32.mrf.mxu0
      %v2940 = vadd.f32 0.0, %v2939
      %v2941 = vpop.f32.mrf.mxu0
      %v2942 = vadd.f32 0.0, %v2941
      %2943 = vmatmul.bf16.gmra.mxu0 %v2859
      %v2944 = vpop.f32.mrf.mxu0
      %v2945 = vadd.f32 0.0, %v2944
      %v2946 = vpop.f32.mrf.mxu0
      %v2947 = vadd.f32 0.0, %v2946
      %2948 = vmatmul.bf16.gmra.mxu0 %v2862
      %v2949 = vpop.f32.mrf.mxu0
      %v2950 = vadd.f32 0.0, %v2949
      %v2951 = vpop.f32.mrf.mxu0
      %v2952 = vadd.f32 0.0, %v2951
      %2953 = vmatmul.bf16.gmra.mxu0 %v2865
      %v2954 = vpop.f32.mrf.mxu0
      %v2955 = vadd.f32 0.0, %v2954
      %v2956 = vpop.f32.mrf.mxu0
      %v2957 = vadd.f32 0.0, %v2956
      %2958 = vdwg.mxu0
      %v2959 = vadd.f32 %v2299, %v2880
      %v2960 = vadd.f32 %v2300, %v2882
      %v2961 = vadd.f32 %v2301, %v2885
      %v2962 = vadd.f32 %v2302, %v2887
      %v2963 = vadd.f32 %v2303, %v2890
      %v2964 = vadd.f32 %v2304, %v2892
      %v2965 = vadd.f32 %v2305, %v2895
      %v2966 = vadd.f32 %v2306, %v2897
      %v2967 = vadd.f32 %v2307, %v2900
      %v2968 = vadd.f32 %v2308, %v2902
      %v2969 = vadd.f32 %v2309, %v2905
      %v2970 = vadd.f32 %v2310, %v2907
      %v2971 = vadd.f32 %v2311, %v2910
      %v2972 = vadd.f32 %v2312, %v2912
      %v2973 = vadd.f32 %v2313, %v2915
      %v2974 = vadd.f32 %v2314, %v2917
      %v2975 = vadd.f32 %v2315, %v2920
      %v2976 = vadd.f32 %v2316, %v2922
      %v2977 = vadd.f32 %v2317, %v2925
      %v2978 = vadd.f32 %v2318, %v2927
      %v2979 = vadd.f32 %v2319, %v2930
      %v2980 = vadd.f32 %v2320, %v2932
      %v2981 = vadd.f32 %v2321, %v2935
      %v2982 = vadd.f32 %v2322, %v2937
      %v2983 = vadd.f32 %v2323, %v2940
      %v2984 = vadd.f32 %v2324, %v2942
      %v2985 = vadd.f32 %v2325, %v2945
      %v2986 = vadd.f32 %v2326, %v2947
      %v2987 = vadd.f32 %v2327, %v2950
      %v2988 = vadd.f32 %v2328, %v2952
      %v2989 = vadd.f32 %v2329, %v2955
      %v2990 = vadd.f32 %v2330, %v2957
      %v2991 = vld [vmem:[%s2038] sm:$0xe]
      %v2992 = vld [vmem:[%s2038 + $0xc] sm:$0xe]
      %v2993 = vld [vmem:[%s2038 + $0x18] sm:$0xe]
      %v2994 = vld [vmem:[%s2038 + $0x24] sm:$0xe]
      %v2995 = vld [vmem:[%s2038 + $0x30] sm:$0xe]
      %v2996 = vld [vmem:[%s2038 + $0x3c] sm:$0xe]
      %v2997 = vld [vmem:[%s2038 + $0x48] sm:$0xe]
      %v2998 = vld [vmem:[%s2038 + $0x54] sm:$0xe]
      %v2999 = vld [vmem:[%s2038 + $0x60] sm:$0xe]
      %v3000 = vld [vmem:[%s2038 + $0x6c] sm:$0xe]
      %v3001 = vld [vmem:[%s2038 + $0x78] sm:$0xe]
      %v3002 = vld [vmem:[%s2038 + $0x84] sm:$0xe]
      %v3003 = vld [vmem:[%s2038 + $0x90] sm:$0xe]
      %v3004 = vld [vmem:[%s2038 + $0x9c] sm:$0xe]
      %v3005 = vld [vmem:[%s2038 + $0xa8] sm:$0xe]
      %v3006 = vld [vmem:[%s2038 + $0xb4] sm:$0xe]
      %v3055 = vrot.slane %v2991, 5
      %v3056 = vrot.slane %v3055, 4
      %v3057 = vrot.slane %v2332, 5
      %v3058 = vsel %vm1082, %v3056, %v3057
      %v3059 = vrot.slane %v3057, 4
      %v3060 = vrot.slane %v2333, 5
      %v3061 = vsel %vm1082, %v3059, %v3060
      %v3062 = vrot.slane %v2992, 5
      %v3063 = vrot.slane %v3062, 4
      %v3064 = vrot.slane %v2335, 5
      %v3065 = vsel %vm1082, %v3063, %v3064
      %v3066 = vrot.slane %v3064, 4
      %v3067 = vrot.slane %v2336, 5
      %v3068 = vsel %vm1082, %v3066, %v3067
      %v3069 = vrot.slane %v2993, 5
      %v3070 = vrot.slane %v3069, 4
      %v3071 = vrot.slane %v2338, 5
      %v3072 = vsel %vm1082, %v3070, %v3071
      %v3073 = vrot.slane %v3071, 4
      %v3074 = vrot.slane %v2339, 5
      %v3075 = vsel %vm1082, %v3073, %v3074
      %v3076 = vrot.slane %v2994, 5
      %v3077 = vrot.slane %v3076, 4
      %v3078 = vrot.slane %v2341, 5
      %v3079 = vsel %vm1082, %v3077, %v3078
      %v3080 = vrot.slane %v3078, 4
      %v3081 = vrot.slane %v2342, 5
      %v3082 = vsel %vm1082, %v3080, %v3081
      %v3083 = vrot.slane %v2995, 5
      %v3084 = vrot.slane %v3083, 4
      %v3085 = vrot.slane %v2344, 5
      %v3086 = vsel %vm1082, %v3084, %v3085
      %v3087 = vrot.slane %v3085, 4
      %v3088 = vrot.slane %v2345, 5
      %v3089 = vsel %vm1082, %v3087, %v3088
      %v3090 = vrot.slane %v2996, 5
      %v3091 = vrot.slane %v3090, 4
      %v3092 = vrot.slane %v2347, 5
      %v3093 = vsel %vm1082, %v3091, %v3092
      %v3094 = vrot.slane %v3092, 4
      %v3095 = vrot.slane %v2348, 5
      %v3096 = vsel %vm1082, %v3094, %v3095
      %v3097 = vrot.slane %v2997, 5
      %v3098 = vrot.slane %v3097, 4
      %v3099 = vrot.slane %v2350, 5
      %v3100 = vsel %vm1082, %v3098, %v3099
      %v3101 = vrot.slane %v3099, 4
      %v3102 = vrot.slane %v2351, 5
      %v3103 = vsel %vm1082, %v3101, %v3102
      %v3104 = vrot.slane %v2998, 5
      %v3105 = vrot.slane %v3104, 4
      %v3106 = vrot.slane %v2353, 5
      %v3107 = vsel %vm1082, %v3105, %v3106
      %v3108 = vrot.slane %v3106, 4
      %v3109 = vrot.slane %v2354, 5
      %v3110 = vsel %vm1082, %v3108, %v3109
      %v3111 = vrot.slane %v2999, 5
      %v3112 = vrot.slane %v3111, 4
      %v3113 = vrot.slane %v2356, 5
      %v3114 = vsel %vm1082, %v3112, %v3113
      %v3115 = vrot.slane %v3113, 4
      %v3116 = vrot.slane %v2357, 5
      %v3117 = vsel %vm1082, %v3115, %v3116
      %v3118 = vrot.slane %v3000, 5
      %v3119 = vrot.slane %v3118, 4
      %v3120 = vrot.slane %v2359, 5
      %v3121 = vsel %vm1082, %v3119, %v3120
      %v3122 = vrot.slane %v3120, 4
      %v3123 = vrot.slane %v2360, 5
      %v3124 = vsel %vm1082, %v3122, %v3123
      %v3125 = vrot.slane %v3001, 5
      %v3126 = vrot.slane %v3125, 4
      %v3127 = vrot.slane %v2362, 5
      %v3128 = vsel %vm1082, %v3126, %v3127
      %v3129 = vrot.slane %v3127, 4
      %v3130 = vrot.slane %v2363, 5
      %v3131 = vsel %vm1082, %v3129, %v3130
      %v3132 = vrot.slane %v3002, 5
      %v3133 = vrot.slane %v3132, 4
      %v3134 = vrot.slane %v2365, 5
      %v3135 = vsel %vm1082, %v3133, %v3134
      %v3136 = vrot.slane %v3134, 4
      %v3137 = vrot.slane %v2366, 5
      %v3138 = vsel %vm1082, %v3136, %v3137
      %v3139 = vrot.slane %v3003, 5
      %v3140 = vrot.slane %v3139, 4
      %v3141 = vrot.slane %v2368, 5
      %v3142 = vsel %vm1082, %v3140, %v3141
      %v3143 = vrot.slane %v3141, 4
      %v3144 = vrot.slane %v2369, 5
      %v3145 = vsel %vm1082, %v3143, %v3144
      %v3146 = vrot.slane %v3004, 5
      %v3147 = vrot.slane %v3146, 4
      %v3148 = vrot.slane %v2371, 5
      %v3149 = vsel %vm1082, %v3147, %v3148
      %v3150 = vrot.slane %v3148, 4
      %v3151 = vrot.slane %v2372, 5
      %v3152 = vsel %vm1082, %v3150, %v3151
      %v3153 = vrot.slane %v3005, 5
      %v3154 = vrot.slane %v3153, 4
      %v3155 = vrot.slane %v2374, 5
      %v3156 = vsel %vm1082, %v3154, %v3155
      %v3157 = vrot.slane %v3155, 4
      %v3158 = vrot.slane %v2375, 5
      %v3159 = vsel %vm1082, %v3157, %v3158
      %v3160 = vrot.slane %v3006, 5
      %v3161 = vrot.slane %v3160, 4
      %v3162 = vrot.slane %v2377, 5
      %v3163 = vsel %vm1082, %v3161, %v3162
      %v3164 = vrot.slane %v3162, 4
      %v3165 = vrot.slane %v2378, 5
      %v3166 = vsel %vm1082, %v3164, %v3165
      %s3167 = scalar_lea.vmem %s1, 48
      %v3168 = vld [vmem:[%s3167] sm:$0xf]
      %v3169 = vld [vmem:[%s3167 + $0x4] sm:$0x3]
      %v3170 = vunpack.c.l.b16 %v3058
      %v3171 = vunpack.c.l.b16 %v3061
      %v3172 = vunpack.c.l.b16 %v3065
      %v3173 = vunpack.c.l.b16 %v3068
      %v3174 = vunpack.c.l.b16 %v3072
      %v3175 = vunpack.c.l.b16 %v3075
      %v3176 = vunpack.c.l.b16 %v3079
      %v3177 = vunpack.c.l.b16 %v3082
      %v3178 = vunpack.c.l.b16 %v3086
      %v3179 = vunpack.c.l.b16 %v3089
      %v3180 = vunpack.c.l.b16 %v3093
      %v3181 = vunpack.c.l.b16 %v3096
      %v3182 = vunpack.c.l.b16 %v3100
      %v3183 = vunpack.c.l.b16 %v3103
      %v3184 = vunpack.c.l.b16 %v3107
      %v3185 = vunpack.c.l.b16 %v3110
      %v3186 = vunpack.c.l.b16 %v3114
      %v3187 = vunpack.c.l.b16 %v3117
      %v3188 = vunpack.c.l.b16 %v3121
      %v3189 = vunpack.c.l.b16 %v3124
      %v3190 = vunpack.c.l.b16 %v3128
      %v3191 = vunpack.c.l.b16 %v3131
      %v3192 = vunpack.c.l.b16 %v3135
      %v3193 = vunpack.c.l.b16 %v3138
      %v3194 = vunpack.c.l.b16 %v3142
      %v3195 = vunpack.c.l.b16 %v3145
      %v3196 = vunpack.c.l.b16 %v3149
      %v3197 = vunpack.c.l.b16 %v3152
      %v3198 = vunpack.c.l.b16 %v3156
      %v3199 = vunpack.c.l.b16 %v3159
      %v3200 = vunpack.c.l.b16 %v3163
      %v3201 = vunpack.c.l.b16 %v3166
      %v3202 = vpack.c.b16 %v3171, %v3170
      %v3203 = vpack.c.b16 %v3173, %v3172
      %v3204 = vpack.c.b16 %v3175, %v3174
      %v3205 = vpack.c.b16 %v3177, %v3176
      %v3206 = vpack.c.b16 %v3179, %v3178
      %v3207 = vpack.c.b16 %v3181, %v3180
      %v3208 = vpack.c.b16 %v3183, %v3182
      %v3209 = vpack.c.b16 %v3185, %v3184
      %v3210 = vpack.c.b16 %v3187, %v3186
      %v3211 = vpack.c.b16 %v3189, %v3188
      %v3212 = vpack.c.b16 %v3191, %v3190
      %v3213 = vpack.c.b16 %v3193, %v3192
      %v3214 = vpack.c.b16 %v3195, %v3194
      %v3215 = vpack.c.b16 %v3197, %v3196
      %v3216 = vpack.c.b16 %v3199, %v3198
      %v3217 = vpack.c.b16 %v3201, %v3200
      %v3220 = vunpack.c.l.b16 %v3168
      %v3221 = vunpack.c.l.b16 %v3169
      %v3222 = vpack.c.b16 %v3221, %v3220
      %v3224 = vsel %vm665, %v3202, 0
      %v3227 = vsel %vm665, %v3203, 0
      %v3230 = vsel %vm665, %v3204, 0
      %v3233 = vsel %vm665, %v3205, 0
      %v3236 = vsel %vm665, %v3206, 0
      %v3239 = vsel %vm665, %v3207, 0
      %v3242 = vsel %vm665, %v3208, 0
      %v3245 = vsel %vm665, %v3209, 0
      %v3248 = vsel %vm665, %v3210, 0
      %v3251 = vsel %vm665, %v3211, 0
      %v3254 = vsel %vm665, %v3212, 0
      %v3257 = vsel %vm665, %v3213, 0
      %v3260 = vsel %vm665, %v3214, 0
      %v3263 = vsel %vm665, %v3215, 0
      %v3266 = vsel %vm665, %v3216, 0
      %v3269 = vsel %vm665, %v3217, 0
      %v3272 = vsel %vm714, %v3222, 0
      %3274 = vmatpush.bf16.msra.mxu0 0
      %3275 = vmatpush.bf16.msra.mxu0 0
      %3276 = vmatpush.bf16.msra.mxu0 0
      %3277 = vmatpush.bf16.msra.mxu0 0
      %3278 = vmatpush.bf16.msra.mxu0 0
      %3279 = vmatpush.bf16.msra.mxu0 0
      %3280 = vmatpush.bf16.msra.mxu0 0
      %3281 = vmatpush.bf16.msra.mxu0 %v3272
      %3282 = vmatmul.bf16.gmra.mxu0 %v3224
      %v3283 = vpop.f32.mrf.mxu0
      %v3284 = vadd.f32 0.0, %v3283
      %v3285 = vpop.f32.mrf.mxu0
      %v3286 = vadd.f32 0.0, %v3285
      %3287 = vmatmul.bf16.gmra.mxu0 %v3227
      %v3288 = vpop.f32.mrf.mxu0
      %v3289 = vadd.f32 0.0, %v3288
      %v3290 = vpop.f32.mrf.mxu0
      %v3291 = vadd.f32 0.0, %v3290
      %3292 = vmatmul.bf16.gmra.mxu0 %v3230
      %v3293 = vpop.f32.mrf.mxu0
      %v3294 = vadd.f32 0.0, %v3293
      %v3295 = vpop.f32.mrf.mxu0
      %v3296 = vadd.f32 0.0, %v3295
      %3297 = vmatmul.bf16.gmra.mxu0 %v3233
      %v3298 = vpop.f32.mrf.mxu0
      %v3299 = vadd.f32 0.0, %v3298
      %v3300 = vpop.f32.mrf.mxu0
      %v3301 = vadd.f32 0.0, %v3300
      %3302 = vmatmul.bf16.gmra.mxu0 %v3236
      %v3303 = vpop.f32.mrf.mxu0
      %v3304 = vadd.f32 0.0, %v3303
      %v3305 = vpop.f32.mrf.mxu0
      %v3306 = vadd.f32 0.0, %v3305
      %3307 = vmatmul.bf16.gmra.mxu0 %v3239
      %v3308 = vpop.f32.mrf.mxu0
      %v3309 = vadd.f32 0.0, %v3308
      %v3310 = vpop.f32.mrf.mxu0
      %v3311 = vadd.f32 0.0, %v3310
      %3312 = vmatmul.bf16.gmra.mxu0 %v3242
      %v3313 = vpop.f32.mrf.mxu0
      %v3314 = vadd.f32 0.0, %v3313
      %v3315 = vpop.f32.mrf.mxu0
      %v3316 = vadd.f32 0.0, %v3315
      %3317 = vmatmul.bf16.gmra.mxu0 %v3245
      %v3318 = vpop.f32.mrf.mxu0
      %v3319 = vadd.f32 0.0, %v3318
      %v3320 = vpop.f32.mrf.mxu0
      %v3321 = vadd.f32 0.0, %v3320
      %3322 = vmatmul.bf16.gmra.mxu0 %v3248
      %v3323 = vpop.f32.mrf.mxu0
      %v3324 = vadd.f32 0.0, %v3323
      %v3325 = vpop.f32.mrf.mxu0
      %v3326 = vadd.f32 0.0, %v3325
      %3327 = vmatmul.bf16.gmra.mxu0 %v3251
      %v3328 = vpop.f32.mrf.mxu0
      %v3329 = vadd.f32 0.0, %v3328
      %v3330 = vpop.f32.mrf.mxu0
      %v3331 = vadd.f32 0.0, %v3330
      %3332 = vmatmul.bf16.gmra.mxu0 %v3254
      %v3333 = vpop.f32.mrf.mxu0
      %v3334 = vadd.f32 0.0, %v3333
      %v3335 = vpop.f32.mrf.mxu0
      %v3336 = vadd.f32 0.0, %v3335
      %3337 = vmatmul.bf16.gmra.mxu0 %v3257
      %v3338 = vpop.f32.mrf.mxu0
      %v3339 = vadd.f32 0.0, %v3338
      %v3340 = vpop.f32.mrf.mxu0
      %v3341 = vadd.f32 0.0, %v3340
      %3342 = vmatmul.bf16.gmra.mxu0 %v3260
      %v3343 = vpop.f32.mrf.mxu0
      %v3344 = vadd.f32 0.0, %v3343
      %v3345 = vpop.f32.mrf.mxu0
      %v3346 = vadd.f32 0.0, %v3345
      %3347 = vmatmul.bf16.gmra.mxu0 %v3263
      %v3348 = vpop.f32.mrf.mxu0
      %v3349 = vadd.f32 0.0, %v3348
      %v3350 = vpop.f32.mrf.mxu0
      %v3351 = vadd.f32 0.0, %v3350
      %3352 = vmatmul.bf16.gmra.mxu0 %v3266
      %v3353 = vpop.f32.mrf.mxu0
      %v3354 = vadd.f32 0.0, %v3353
      %v3355 = vpop.f32.mrf.mxu0
      %v3356 = vadd.f32 0.0, %v3355
      %3357 = vmatmul.bf16.gmra.mxu0 %v3269
      %v3358 = vpop.f32.mrf.mxu0
      %v3359 = vadd.f32 0.0, %v3358
      %v3360 = vpop.f32.mrf.mxu0
      %v3361 = vadd.f32 0.0, %v3360
      %3362 = vdwg.mxu0
      %v3363 = vadd.f32 %v2959, %v3284
      %v3364 = vadd.f32 %v2960, %v3286
      %v3365 = vadd.f32 %v2961, %v3289
      %v3366 = vadd.f32 %v2962, %v3291
      %v3367 = vadd.f32 %v2963, %v3294
      %v3368 = vadd.f32 %v2964, %v3296
      %v3369 = vadd.f32 %v2965, %v3299
      %v3370 = vadd.f32 %v2966, %v3301
      %v3371 = vadd.f32 %v2967, %v3304
      %v3372 = vadd.f32 %v2968, %v3306
      %v3373 = vadd.f32 %v2969, %v3309
      %v3374 = vadd.f32 %v2970, %v3311
      %v3375 = vadd.f32 %v2971, %v3314
      %v3376 = vadd.f32 %v2972, %v3316
      %v3377 = vadd.f32 %v2973, %v3319
      %v3378 = vadd.f32 %v2974, %v3321
      %v3379 = vadd.f32 %v2975, %v3324
      %v3380 = vadd.f32 %v2976, %v3326
      %v3381 = vadd.f32 %v2977, %v3329
      %v3382 = vadd.f32 %v2978, %v3331
      %v3383 = vadd.f32 %v2979, %v3334
      %v3384 = vadd.f32 %v2980, %v3336
      %v3385 = vadd.f32 %v2981, %v3339
      %v3386 = vadd.f32 %v2982, %v3341
      %v3387 = vadd.f32 %v2983, %v3344
      %v3388 = vadd.f32 %v2984, %v3346
      %v3389 = vadd.f32 %v2985, %v3349
      %v3390 = vadd.f32 %v2986, %v3351
      %v3391 = vadd.f32 %v2987, %v3354
      %v3392 = vadd.f32 %v2988, %v3356
      %v3393 = vadd.f32 %v2989, %v3359
      %v3394 = vadd.f32 %v2990, %v3361
      %v3395 = vld [vmem:[%s2038 + $0x8] sm:$0x3]
      %v3396 = vld [vmem:[%s2038 + $0x14] sm:$0x3]
      %v3397 = vld [vmem:[%s2038 + $0x20] sm:$0x3]
      %v3398 = vld [vmem:[%s2038 + $0x2c] sm:$0x3]
      %v3399 = vld [vmem:[%s2038 + $0x38] sm:$0x3]
      %v3400 = vld [vmem:[%s2038 + $0x44] sm:$0x3]
      %v3401 = vld [vmem:[%s2038 + $0x50] sm:$0x3]
      %v3402 = vld [vmem:[%s2038 + $0x5c] sm:$0x3]
      %v3403 = vld [vmem:[%s2038 + $0x68] sm:$0x3]
      %v3404 = vld [vmem:[%s2038 + $0x74] sm:$0x3]
      %v3405 = vld [vmem:[%s2038 + $0x80] sm:$0x3]
      %v3406 = vld [vmem:[%s2038 + $0x8c] sm:$0x3]
      %v3407 = vld [vmem:[%s2038 + $0x98] sm:$0x3]
      %v3408 = vld [vmem:[%s2038 + $0xa4] sm:$0x3]
      %v3409 = vld [vmem:[%s2038 + $0xb0] sm:$0x3]
      %v3410 = vld [vmem:[%s2038 + $0xbc] sm:$0x3]
      %v3412 = vshrl.u32 %v2991, 16
      %v3414 = vrot.slane %v3412, 5
      %v3415 = vshll.u32 %v2991, 16
      %v3417 = vrot.slane %v3415, 6
      %v3418 = vor.u32 %v3414, %v3417
      %v3419 = vrot.slane %v3418, 4
      %v3420 = vrot.slane %v2393, 5
      %v3421 = vrot.slane %v2389, 6
      %v3422 = vor.u32 %v3420, %v3421
      %v3423 = vsel %vm1441, %v3419, %v3422
      %v3424 = vrot.slane %v3422, 4
      %v3426 = vshrl.u32 %v3395, 16
      %v3428 = vrot.slane %v3426, 5
      %v3429 = vshll.u32 %v3395, 16
      %v3431 = vrot.slane %v3429, 6
      %v3432 = vor.u32 %v3428, %v3431
      %v3433 = vsel %vm1441, %v3424, %v3432
      %v3435 = vshrl.u32 %v2992, 16
      %v3437 = vrot.slane %v3435, 5
      %v3438 = vshll.u32 %v2992, 16
      %v3440 = vrot.slane %v3438, 6
      %v3441 = vor.u32 %v3437, %v3440
      %v3442 = vrot.slane %v3441, 4
      %v3443 = vrot.slane %v2417, 5
      %v3444 = vrot.slane %v2413, 6
      %v3445 = vor.u32 %v3443, %v3444
      %v3446 = vsel %vm1441, %v3442, %v3445
      %v3447 = vrot.slane %v3445, 4
      %v3449 = vshrl.u32 %v3396, 16
      %v3451 = vrot.slane %v3449, 5
      %v3452 = vshll.u32 %v3396, 16
      %v3454 = vrot.slane %v3452, 6
      %v3455 = vor.u32 %v3451, %v3454
      %v3456 = vsel %vm1441, %v3447, %v3455
      %v3458 = vshrl.u32 %v2993, 16
      %v3460 = vrot.slane %v3458, 5
      %v3461 = vshll.u32 %v2993, 16
      %v3463 = vrot.slane %v3461, 6
      %v3464 = vor.u32 %v3460, %v3463
      %v3465 = vrot.slane %v3464, 4
      %v3466 = vrot.slane %v2441, 5
      %v3467 = vrot.slane %v2437, 6
      %v3468 = vor.u32 %v3466, %v3467
      %v3469 = vsel %vm1441, %v3465, %v3468
      %v3470 = vrot.slane %v3468, 4
      %v3472 = vshrl.u32 %v3397, 16
      %v3474 = vrot.slane %v3472, 5
      %v3475 = vshll.u32 %v3397, 16
      %v3477 = vrot.slane %v3475, 6
      %v3478 = vor.u32 %v3474, %v3477
      %v3479 = vsel %vm1441, %v3470, %v3478
      %v3481 = vshrl.u32 %v2994, 16
      %v3483 = vrot.slane %v3481, 5
      %v3484 = vshll.u32 %v2994, 16
      %v3486 = vrot.slane %v3484, 6
      %v3487 = vor.u32 %v3483, %v3486
      %v3488 = vrot.slane %v3487, 4
      %v3489 = vrot.slane %v2465, 5
      %v3490 = vrot.slane %v2461, 6
      %v3491 = vor.u32 %v3489, %v3490
      %v3492 = vsel %vm1441, %v3488, %v3491
      %v3493 = vrot.slane %v3491, 4
      %v3495 = vshrl.u32 %v3398, 16
      %v3497 = vrot.slane %v3495, 5
      %v3498 = vshll.u32 %v3398, 16
      %v3500 = vrot.slane %v3498, 6
      %v3501 = vor.u32 %v3497, %v3500
      %v3502 = vsel %vm1441, %v3493, %v3501
      %v3504 = vshrl.u32 %v2995, 16
      %v3506 = vrot.slane %v3504, 5
      %v3507 = vshll.u32 %v2995, 16
      %v3509 = vrot.slane %v3507, 6
      %v3510 = vor.u32 %v3506, %v3509
      %v3511 = vrot.slane %v3510, 4
      %v3512 = vrot.slane %v2489, 5
      %v3513 = vrot.slane %v2485, 6
      %v3514 = vor.u32 %v3512, %v3513
      %v3515 = vsel %vm1441, %v3511, %v3514
      %v3516 = vrot.slane %v3514, 4
      %v3518 = vshrl.u32 %v3399, 16
      %v3520 = vrot.slane %v3518, 5
      %v3521 = vshll.u32 %v3399, 16
      %v3523 = vrot.slane %v3521, 6
      %v3524 = vor.u32 %v3520, %v3523
      %v3525 = vsel %vm1441, %v3516, %v3524
      %v3527 = vshrl.u32 %v2996, 16
      %v3529 = vrot.slane %v3527, 5
      %v3530 = vshll.u32 %v2996, 16
      %v3532 = vrot.slane %v3530, 6
      %v3533 = vor.u32 %v3529, %v3532
      %v3534 = vrot.slane %v3533, 4
      %v3535 = vrot.slane %v2513, 5
      %v3536 = vrot.slane %v2509, 6
      %v3537 = vor.u32 %v3535, %v3536
      %v3538 = vsel %vm1441, %v3534, %v3537
      %v3539 = vrot.slane %v3537, 4
      %v3541 = vshrl.u32 %v3400, 16
      %v3543 = vrot.slane %v3541, 5
      %v3544 = vshll.u32 %v3400, 16
      %v3546 = vrot.slane %v3544, 6
      %v3547 = vor.u32 %v3543, %v3546
      %v3548 = vsel %vm1441, %v3539, %v3547
      %v3550 = vshrl.u32 %v2997, 16
      %v3552 = vrot.slane %v3550, 5
      %v3553 = vshll.u32 %v2997, 16
      %v3555 = vrot.slane %v3553, 6
      %v3556 = vor.u32 %v3552, %v3555
      %v3557 = vrot.slane %v3556, 4
      %v3558 = vrot.slane %v2537, 5
      %v3559 = vrot.slane %v2533, 6
      %v3560 = vor.u32 %v3558, %v3559
      %v3561 = vsel %vm1441, %v3557, %v3560
      %v3562 = vrot.slane %v3560, 4
      %v3564 = vshrl.u32 %v3401, 16
      %v3566 = vrot.slane %v3564, 5
      %v3567 = vshll.u32 %v3401, 16
      %v3569 = vrot.slane %v3567, 6
      %v3570 = vor.u32 %v3566, %v3569
      %v3571 = vsel %vm1441, %v3562, %v3570
      %v3573 = vshrl.u32 %v2998, 16
      %v3575 = vrot.slane %v3573, 5
      %v3576 = vshll.u32 %v2998, 16
      %v3578 = vrot.slane %v3576, 6
      %v3579 = vor.u32 %v3575, %v3578
      %v3580 = vrot.slane %v3579, 4
      %v3581 = vrot.slane %v2561, 5
      %v3582 = vrot.slane %v2557, 6
      %v3583 = vor.u32 %v3581, %v3582
      %v3584 = vsel %vm1441, %v3580, %v3583
      %v3585 = vrot.slane %v3583, 4
      %v3587 = vshrl.u32 %v3402, 16
      %v3589 = vrot.slane %v3587, 5
      %v3590 = vshll.u32 %v3402, 16
      %v3592 = vrot.slane %v3590, 6
      %v3593 = vor.u32 %v3589, %v3592
      %v3594 = vsel %vm1441, %v3585, %v3593
      %v3596 = vshrl.u32 %v2999, 16
      %v3598 = vrot.slane %v3596, 5
      %v3599 = vshll.u32 %v2999, 16
      %v3601 = vrot.slane %v3599, 6
      %v3602 = vor.u32 %v3598, %v3601
      %v3603 = vrot.slane %v3602, 4
      %v3604 = vrot.slane %v2585, 5
      %v3605 = vrot.slane %v2581, 6
      %v3606 = vor.u32 %v3604, %v3605
      %v3607 = vsel %vm1441, %v3603, %v3606
      %v3608 = vrot.slane %v3606, 4
      %v3610 = vshrl.u32 %v3403, 16
      %v3612 = vrot.slane %v3610, 5
      %v3613 = vshll.u32 %v3403, 16
      %v3615 = vrot.slane %v3613, 6
      %v3616 = vor.u32 %v3612, %v3615
      %v3617 = vsel %vm1441, %v3608, %v3616
      %v3619 = vshrl.u32 %v3000, 16
      %v3621 = vrot.slane %v3619, 5
      %v3622 = vshll.u32 %v3000, 16
      %v3624 = vrot.slane %v3622, 6
      %v3625 = vor.u32 %v3621, %v3624
      %v3626 = vrot.slane %v3625, 4
      %v3627 = vrot.slane %v2609, 5
      %v3628 = vrot.slane %v2605, 6
      %v3629 = vor.u32 %v3627, %v3628
      %v3630 = vsel %vm1441, %v3626, %v3629
      %v3631 = vrot.slane %v3629, 4
      %v3633 = vshrl.u32 %v3404, 16
      %v3635 = vrot.slane %v3633, 5
      %v3636 = vshll.u32 %v3404, 16
      %v3638 = vrot.slane %v3636, 6
      %v3639 = vor.u32 %v3635, %v3638
      %v3640 = vsel %vm1441, %v3631, %v3639
      %v3642 = vshrl.u32 %v3001, 16
      %v3644 = vrot.slane %v3642, 5
      %v3645 = vshll.u32 %v3001, 16
      %v3647 = vrot.slane %v3645, 6
      %v3648 = vor.u32 %v3644, %v3647
      %v3649 = vrot.slane %v3648, 4
      %v3650 = vrot.slane %v2633, 5
      %v3651 = vrot.slane %v2629, 6
      %v3652 = vor.u32 %v3650, %v3651
      %v3653 = vsel %vm1441, %v3649, %v3652
      %v3654 = vrot.slane %v3652, 4
      %v3656 = vshrl.u32 %v3405, 16
      %v3658 = vrot.slane %v3656, 5
      %v3659 = vshll.u32 %v3405, 16
      %v3661 = vrot.slane %v3659, 6
      %v3662 = vor.u32 %v3658, %v3661
      %v3663 = vsel %vm1441, %v3654, %v3662
      %v3665 = vshrl.u32 %v3002, 16
      %v3667 = vrot.slane %v3665, 5
      %v3668 = vshll.u32 %v3002, 16
      %v3670 = vrot.slane %v3668, 6
      %v3671 = vor.u32 %v3667, %v3670
      %v3672 = vrot.slane %v3671, 4
      %v3673 = vrot.slane %v2657, 5
      %v3674 = vrot.slane %v2653, 6
      %v3675 = vor.u32 %v3673, %v3674
      %v3676 = vsel %vm1441, %v3672, %v3675
      %v3677 = vrot.slane %v3675, 4
      %v3679 = vshrl.u32 %v3406, 16
      %v3681 = vrot.slane %v3679, 5
      %v3682 = vshll.u32 %v3406, 16
      %v3684 = vrot.slane %v3682, 6
      %v3685 = vor.u32 %v3681, %v3684
      %v3686 = vsel %vm1441, %v3677, %v3685
      %v3688 = vshrl.u32 %v3003, 16
      %v3690 = vrot.slane %v3688, 5
      %v3691 = vshll.u32 %v3003, 16
      %v3693 = vrot.slane %v3691, 6
      %v3694 = vor.u32 %v3690, %v3693
      %v3695 = vrot.slane %v3694, 4
      %v3696 = vrot.slane %v2681, 5
      %v3697 = vrot.slane %v2677, 6
      %v3698 = vor.u32 %v3696, %v3697
      %v3699 = vsel %vm1441, %v3695, %v3698
      %v3700 = vrot.slane %v3698, 4
      %v3702 = vshrl.u32 %v3407, 16
      %v3704 = vrot.slane %v3702, 5
      %v3705 = vshll.u32 %v3407, 16
      %v3707 = vrot.slane %v3705, 6
      %v3708 = vor.u32 %v3704, %v3707
      %v3709 = vsel %vm1441, %v3700, %v3708
      %v3711 = vshrl.u32 %v3004, 16
      %v3713 = vrot.slane %v3711, 5
      %v3714 = vshll.u32 %v3004, 16
      %v3716 = vrot.slane %v3714, 6
      %v3717 = vor.u32 %v3713, %v3716
      %v3718 = vrot.slane %v3717, 4
      %v3719 = vrot.slane %v2705, 5
      %v3720 = vrot.slane %v2701, 6
      %v3721 = vor.u32 %v3719, %v3720
      %v3722 = vsel %vm1441, %v3718, %v3721
      %v3723 = vrot.slane %v3721, 4
      %v3725 = vshrl.u32 %v3408, 16
      %v3727 = vrot.slane %v3725, 5
      %v3728 = vshll.u32 %v3408, 16
      %v3730 = vrot.slane %v3728, 6
      %v3731 = vor.u32 %v3727, %v3730
      %v3732 = vsel %vm1441, %v3723, %v3731
      %v3734 = vshrl.u32 %v3005, 16
      %v3736 = vrot.slane %v3734, 5
      %v3737 = vshll.u32 %v3005, 16
      %v3739 = vrot.slane %v3737, 6
      %v3740 = vor.u32 %v3736, %v3739
      %v3741 = vrot.slane %v3740, 4
      %v3742 = vrot.slane %v2729, 5
      %v3743 = vrot.slane %v2725, 6
      %v3744 = vor.u32 %v3742, %v3743
      %v3745 = vsel %vm1441, %v3741, %v3744
      %v3746 = vrot.slane %v3744, 4
      %v3748 = vshrl.u32 %v3409, 16
      %v3750 = vrot.slane %v3748, 5
      %v3751 = vshll.u32 %v3409, 16
      %v3753 = vrot.slane %v3751, 6
      %v3754 = vor.u32 %v3750, %v3753
      %v3755 = vsel %vm1441, %v3746, %v3754
      %v3757 = vshrl.u32 %v3006, 16
      %v3759 = vrot.slane %v3757, 5
      %v3760 = vshll.u32 %v3006, 16
      %v3762 = vrot.slane %v3760, 6
      %v3763 = vor.u32 %v3759, %v3762
      %v3764 = vrot.slane %v3763, 4
      %v3765 = vrot.slane %v2753, 5
      %v3766 = vrot.slane %v2749, 6
      %v3767 = vor.u32 %v3765, %v3766
      %v3768 = vsel %vm1441, %v3764, %v3767
      %v3769 = vrot.slane %v3767, 4
      %v3771 = vshrl.u32 %v3410, 16
      %v3773 = vrot.slane %v3771, 5
      %v3774 = vshll.u32 %v3410, 16
      %v3776 = vrot.slane %v3774, 6
      %v3777 = vor.u32 %v3773, %v3776
      %v3778 = vsel %vm1441, %v3769, %v3777
      %s3779 = scalar_lea.vmem %s1, 56
      %v3780 = vld [vmem:[%s3779] sm:$0xf]
      %v3781 = vld [vmem:[%s3779 + $0x4] sm:$0x3]
      %v3782 = vunpack.c.l.b16 %v3423
      %v3783 = vunpack.c.l.b16 %v3433
      %v3784 = vunpack.c.l.b16 %v3446
      %v3785 = vunpack.c.l.b16 %v3456
      %v3786 = vunpack.c.l.b16 %v3469
      %v3787 = vunpack.c.l.b16 %v3479
      %v3788 = vunpack.c.l.b16 %v3492
      %v3789 = vunpack.c.l.b16 %v3502
      %v3790 = vunpack.c.l.b16 %v3515
      %v3791 = vunpack.c.l.b16 %v3525
      %v3792 = vunpack.c.l.b16 %v3538
      %v3793 = vunpack.c.l.b16 %v3548
      %v3794 = vunpack.c.l.b16 %v3561
      %v3795 = vunpack.c.l.b16 %v3571
      %v3796 = vunpack.c.l.b16 %v3584
      %v3797 = vunpack.c.l.b16 %v3594
      %v3798 = vunpack.c.l.b16 %v3607
      %v3799 = vunpack.c.l.b16 %v3617
      %v3800 = vunpack.c.l.b16 %v3630
      %v3801 = vunpack.c.l.b16 %v3640
      %v3802 = vunpack.c.l.b16 %v3653
      %v3803 = vunpack.c.l.b16 %v3663
      %v3804 = vunpack.c.l.b16 %v3676
      %v3805 = vunpack.c.l.b16 %v3686
      %v3806 = vunpack.c.l.b16 %v3699
      %v3807 = vunpack.c.l.b16 %v3709
      %v3808 = vunpack.c.l.b16 %v3722
      %v3809 = vunpack.c.l.b16 %v3732
      %v3810 = vunpack.c.l.b16 %v3745
      %v3811 = vunpack.c.l.b16 %v3755
      %v3812 = vunpack.c.l.b16 %v3768
      %v3813 = vunpack.c.l.b16 %v3778
      %v3814 = vpack.c.b16 %v3783, %v3782
      %v3815 = vpack.c.b16 %v3785, %v3784
      %v3816 = vpack.c.b16 %v3787, %v3786
      %v3817 = vpack.c.b16 %v3789, %v3788
      %v3818 = vpack.c.b16 %v3791, %v3790
      %v3819 = vpack.c.b16 %v3793, %v3792
      %v3820 = vpack.c.b16 %v3795, %v3794
      %v3821 = vpack.c.b16 %v3797, %v3796
      %v3822 = vpack.c.b16 %v3799, %v3798
      %v3823 = vpack.c.b16 %v3801, %v3800
      %v3824 = vpack.c.b16 %v3803, %v3802
      %v3825 = vpack.c.b16 %v3805, %v3804
      %v3826 = vpack.c.b16 %v3807, %v3806
      %v3827 = vpack.c.b16 %v3809, %v3808
      %v3828 = vpack.c.b16 %v3811, %v3810
      %v3829 = vpack.c.b16 %v3813, %v3812
      %v3832 = vunpack.c.l.b16 %v3780
      %v3833 = vunpack.c.l.b16 %v3781
      %v3834 = vpack.c.b16 %v3833, %v3832
      %v3836 = vsel %vm665, %v3814, 0
      %v3839 = vsel %vm665, %v3815, 0
      %v3842 = vsel %vm665, %v3816, 0
      %v3845 = vsel %vm665, %v3817, 0
      %v3848 = vsel %vm665, %v3818, 0
      %v3851 = vsel %vm665, %v3819, 0
      %v3854 = vsel %vm665, %v3820, 0
      %v3857 = vsel %vm665, %v3821, 0
      %v3860 = vsel %vm665, %v3822, 0
      %v3863 = vsel %vm665, %v3823, 0
      %v3866 = vsel %vm665, %v3824, 0
      %v3869 = vsel %vm665, %v3825, 0
      %v3872 = vsel %vm665, %v3826, 0
      %v3875 = vsel %vm665, %v3827, 0
      %v3878 = vsel %vm665, %v3828, 0
      %v3881 = vsel %vm665, %v3829, 0
      %v3884 = vsel %vm714, %v3834, 0
      %3886 = vmatpush.bf16.msra.mxu0 0
      %3887 = vmatpush.bf16.msra.mxu0 0
      %3888 = vmatpush.bf16.msra.mxu0 0
      %3889 = vmatpush.bf16.msra.mxu0 0
      %3890 = vmatpush.bf16.msra.mxu0 0
      %3891 = vmatpush.bf16.msra.mxu0 0
      %3892 = vmatpush.bf16.msra.mxu0 0
      %3893 = vmatpush.bf16.msra.mxu0 %v3884
      %3894 = vmatmul.bf16.gmra.mxu0 %v3836
      %v3895 = vpop.f32.mrf.mxu0
      %v3896 = vadd.f32 0.0, %v3895
      %v3897 = vpop.f32.mrf.mxu0
      %v3898 = vadd.f32 0.0, %v3897
      %3899 = vmatmul.bf16.gmra.mxu0 %v3839
      %v3900 = vpop.f32.mrf.mxu0
      %v3901 = vadd.f32 0.0, %v3900
      %v3902 = vpop.f32.mrf.mxu0
      %v3903 = vadd.f32 0.0, %v3902
      %3904 = vmatmul.bf16.gmra.mxu0 %v3842
      %v3905 = vpop.f32.mrf.mxu0
      %v3906 = vadd.f32 0.0, %v3905
      %v3907 = vpop.f32.mrf.mxu0
      %v3908 = vadd.f32 0.0, %v3907
      %3909 = vmatmul.bf16.gmra.mxu0 %v3845
      %v3910 = vpop.f32.mrf.mxu0
      %v3911 = vadd.f32 0.0, %v3910
      %v3912 = vpop.f32.mrf.mxu0
      %v3913 = vadd.f32 0.0, %v3912
      %3914 = vmatmul.bf16.gmra.mxu0 %v3848
      %v3915 = vpop.f32.mrf.mxu0
      %v3916 = vadd.f32 0.0, %v3915
      %v3917 = vpop.f32.mrf.mxu0
      %v3918 = vadd.f32 0.0, %v3917
      %3919 = vmatmul.bf16.gmra.mxu0 %v3851
      %v3920 = vpop.f32.mrf.mxu0
      %v3921 = vadd.f32 0.0, %v3920
      %v3922 = vpop.f32.mrf.mxu0
      %v3923 = vadd.f32 0.0, %v3922
      %3924 = vmatmul.bf16.gmra.mxu0 %v3854
      %v3925 = vpop.f32.mrf.mxu0
      %v3926 = vadd.f32 0.0, %v3925
      %v3927 = vpop.f32.mrf.mxu0
      %v3928 = vadd.f32 0.0, %v3927
      %3929 = vmatmul.bf16.gmra.mxu0 %v3857
      %v3930 = vpop.f32.mrf.mxu0
      %v3931 = vadd.f32 0.0, %v3930
      %v3932 = vpop.f32.mrf.mxu0
      %v3933 = vadd.f32 0.0, %v3932
      %3934 = vmatmul.bf16.gmra.mxu0 %v3860
      %v3935 = vpop.f32.mrf.mxu0
      %v3936 = vadd.f32 0.0, %v3935
      %v3937 = vpop.f32.mrf.mxu0
      %v3938 = vadd.f32 0.0, %v3937
      %3939 = vmatmul.bf16.gmra.mxu0 %v3863
      %v3940 = vpop.f32.mrf.mxu0
      %v3941 = vadd.f32 0.0, %v3940
      %v3942 = vpop.f32.mrf.mxu0
      %v3943 = vadd.f32 0.0, %v3942
      %3944 = vmatmul.bf16.gmra.mxu0 %v3866
      %v3945 = vpop.f32.mrf.mxu0
      %v3946 = vadd.f32 0.0, %v3945
      %v3947 = vpop.f32.mrf.mxu0
      %v3948 = vadd.f32 0.0, %v3947
      %3949 = vmatmul.bf16.gmra.mxu0 %v3869
      %v3950 = vpop.f32.mrf.mxu0
      %v3951 = vadd.f32 0.0, %v3950
      %v3952 = vpop.f32.mrf.mxu0
      %v3953 = vadd.f32 0.0, %v3952
      %3954 = vmatmul.bf16.gmra.mxu0 %v3872
      %v3955 = vpop.f32.mrf.mxu0
      %v3956 = vadd.f32 0.0, %v3955
      %v3957 = vpop.f32.mrf.mxu0
      %v3958 = vadd.f32 0.0, %v3957
      %3959 = vmatmul.bf16.gmra.mxu0 %v3875
      %v3960 = vpop.f32.mrf.mxu0
      %v3961 = vadd.f32 0.0, %v3960
      %v3962 = vpop.f32.mrf.mxu0
      %v3963 = vadd.f32 0.0, %v3962
      %3964 = vmatmul.bf16.gmra.mxu0 %v3878
      %v3965 = vpop.f32.mrf.mxu0
      %v3966 = vadd.f32 0.0, %v3965
      %v3967 = vpop.f32.mrf.mxu0
      %v3968 = vadd.f32 0.0, %v3967
      %3969 = vmatmul.bf16.gmra.mxu0 %v3881
      %v3970 = vpop.f32.mrf.mxu0
      %v3971 = vadd.f32 0.0, %v3970
      %v3972 = vpop.f32.mrf.mxu0
      %v3973 = vadd.f32 0.0, %v3972
      %3974 = vdwg.mxu0
      %v3975 = vadd.f32 %v3363, %v3896
      %v3976 = vadd.f32 %v3364, %v3898
      %v3977 = vadd.f32 %v3365, %v3901
      %v3978 = vadd.f32 %v3366, %v3903
      %v3979 = vadd.f32 %v3367, %v3906
      %v3980 = vadd.f32 %v3368, %v3908
      %v3981 = vadd.f32 %v3369, %v3911
      %v3982 = vadd.f32 %v3370, %v3913
      %v3983 = vadd.f32 %v3371, %v3916
      %v3984 = vadd.f32 %v3372, %v3918
      %v3985 = vadd.f32 %v3373, %v3921
      %v3986 = vadd.f32 %v3374, %v3923
      %v3987 = vadd.f32 %v3375, %v3926
      %v3988 = vadd.f32 %v3376, %v3928
      %v3989 = vadd.f32 %v3377, %v3931
      %v3990 = vadd.f32 %v3378, %v3933
      %v3991 = vadd.f32 %v3379, %v3936
      %v3992 = vadd.f32 %v3380, %v3938
      %v3993 = vadd.f32 %v3381, %v3941
      %v3994 = vadd.f32 %v3382, %v3943
      %v3995 = vadd.f32 %v3383, %v3946
      %v3996 = vadd.f32 %v3384, %v3948
      %v3997 = vadd.f32 %v3385, %v3951
      %v3998 = vadd.f32 %v3386, %v3953
      %v3999 = vadd.f32 %v3387, %v3956
      %v4000 = vadd.f32 %v3388, %v3958
      %v4001 = vadd.f32 %v3389, %v3961
      %v4002 = vadd.f32 %v3390, %v3963
      %v4003 = vadd.f32 %v3391, %v3966
      %v4004 = vadd.f32 %v3392, %v3968
      %v4005 = vadd.f32 %v3393, %v3971
      %v4006 = vadd.f32 %v3394, %v3973
      %s4007 = scalar_lea.vmem %s165, 24
      %v4008 = vld [vmem:[%s4007] sm:$0xf]
      %v4009 = vld [vmem:[%s4007 + $0x4] sm:$0xf]
      %v4010 = vld [vmem:[%s4007 + $0xc] sm:$0xf]
      %v4011 = vld [vmem:[%s4007 + $0x10] sm:$0xf]
      %v4012 = vld [vmem:[%s4007 + $0x18] sm:$0xf]
      %v4013 = vld [vmem:[%s4007 + $0x1c] sm:$0xf]
      %v4014 = vld [vmem:[%s4007 + $0x24] sm:$0xf]
      %v4015 = vld [vmem:[%s4007 + $0x28] sm:$0xf]
      %v4016 = vld [vmem:[%s4007 + $0x30] sm:$0xf]
      %v4017 = vld [vmem:[%s4007 + $0x34] sm:$0xf]
      %v4018 = vld [vmem:[%s4007 + $0x3c] sm:$0xf]
      %v4019 = vld [vmem:[%s4007 + $0x40] sm:$0xf]
      %v4020 = vld [vmem:[%s4007 + $0x48] sm:$0xf]
      %v4021 = vld [vmem:[%s4007 + $0x4c] sm:$0xf]
      %v4022 = vld [vmem:[%s4007 + $0x54] sm:$0xf]
      %v4023 = vld [vmem:[%s4007 + $0x58] sm:$0xf]
      %v4024 = vld [vmem:[%s4007 + $0x60] sm:$0xf]
      %v4025 = vld [vmem:[%s4007 + $0x64] sm:$0xf]
      %v4026 = vld [vmem:[%s4007 + $0x6c] sm:$0xf]
      %v4027 = vld [vmem:[%s4007 + $0x70] sm:$0xf]
      %v4028 = vld [vmem:[%s4007 + $0x78] sm:$0xf]
      %v4029 = vld [vmem:[%s4007 + $0x7c] sm:$0xf]
      %v4030 = vld [vmem:[%s4007 + $0x84] sm:$0xf]
      %v4031 = vld [vmem:[%s4007 + $0x88] sm:$0xf]
      %v4032 = vld [vmem:[%s4007 + $0x90] sm:$0xf]
      %v4033 = vld [vmem:[%s4007 + $0x94] sm:$0xf]
      %v4034 = vld [vmem:[%s4007 + $0x9c] sm:$0xf]
      %v4035 = vld [vmem:[%s4007 + $0xa0] sm:$0xf]
      %v4036 = vld [vmem:[%s4007 + $0xa8] sm:$0xf]
      %v4037 = vld [vmem:[%s4007 + $0xac] sm:$0xf]
      %v4038 = vld [vmem:[%s4007 + $0xb4] sm:$0xf]
      %v4039 = vld [vmem:[%s4007 + $0xb8] sm:$0xf]
      %s4040 = scalar_lea.vmem %s1, 64
      %v4041 = vld [vmem:[%s4040] sm:$0xf]
      %v4042 = vld [vmem:[%s4040 + $0x4] sm:$0x3]
      %v4075 = vunpack.c.l.b16 %v4008
      %v4076 = vunpack.c.l.b16 %v4009
      %v4077 = vunpack.c.l.b16 %v4010
      %v4078 = vunpack.c.l.b16 %v4011
      %v4079 = vunpack.c.l.b16 %v4012
      %v4080 = vunpack.c.l.b16 %v4013
      %v4081 = vunpack.c.l.b16 %v4014
      %v4082 = vunpack.c.l.b16 %v4015
      %v4083 = vunpack.c.l.b16 %v4016
      %v4084 = vunpack.c.l.b16 %v4017
      %v4085 = vunpack.c.l.b16 %v4018
      %v4086 = vunpack.c.l.b16 %v4019
      %v4087 = vunpack.c.l.b16 %v4020
      %v4088 = vunpack.c.l.b16 %v4021
      %v4089 = vunpack.c.l.b16 %v4022
      %v4090 = vunpack.c.l.b16 %v4023
      %v4091 = vunpack.c.l.b16 %v4024
      %v4092 = vunpack.c.l.b16 %v4025
      %v4093 = vunpack.c.l.b16 %v4026
      %v4094 = vunpack.c.l.b16 %v4027
      %v4095 = vunpack.c.l.b16 %v4028
      %v4096 = vunpack.c.l.b16 %v4029
      %v4097 = vunpack.c.l.b16 %v4030
      %v4098 = vunpack.c.l.b16 %v4031
      %v4099 = vunpack.c.l.b16 %v4032
      %v4100 = vunpack.c.l.b16 %v4033
      %v4101 = vunpack.c.l.b16 %v4034
      %v4102 = vunpack.c.l.b16 %v4035
      %v4103 = vunpack.c.l.b16 %v4036
      %v4104 = vunpack.c.l.b16 %v4037
      %v4105 = vunpack.c.l.b16 %v4038
      %v4106 = vunpack.c.l.b16 %v4039
      %v4107 = vpack.c.b16 %v4076, %v4075
      %v4108 = vpack.c.b16 %v4078, %v4077
      %v4109 = vpack.c.b16 %v4080, %v4079
      %v4110 = vpack.c.b16 %v4082, %v4081
      %v4111 = vpack.c.b16 %v4084, %v4083
      %v4112 = vpack.c.b16 %v4086, %v4085
      %v4113 = vpack.c.b16 %v4088, %v4087
      %v4114 = vpack.c.b16 %v4090, %v4089
      %v4115 = vpack.c.b16 %v4092, %v4091
      %v4116 = vpack.c.b16 %v4094, %v4093
      %v4117 = vpack.c.b16 %v4096, %v4095
      %v4118 = vpack.c.b16 %v4098, %v4097
      %v4119 = vpack.c.b16 %v4100, %v4099
      %v4120 = vpack.c.b16 %v4102, %v4101
      %v4121 = vpack.c.b16 %v4104, %v4103
      %v4122 = vpack.c.b16 %v4106, %v4105
      %v4125 = vunpack.c.l.b16 %v4041
      %v4126 = vunpack.c.l.b16 %v4042
      %v4127 = vpack.c.b16 %v4126, %v4125
      %v4129 = vsel %vm665, %v4107, 0
      %v4132 = vsel %vm665, %v4108, 0
      %v4135 = vsel %vm665, %v4109, 0
      %v4138 = vsel %vm665, %v4110, 0
      %v4141 = vsel %vm665, %v4111, 0
      %v4144 = vsel %vm665, %v4112, 0
      %v4147 = vsel %vm665, %v4113, 0
      %v4150 = vsel %vm665, %v4114, 0
      %v4153 = vsel %vm665, %v4115, 0
      %v4156 = vsel %vm665, %v4116, 0
      %v4159 = vsel %vm665, %v4117, 0
      %v4162 = vsel %vm665, %v4118, 0
      %v4165 = vsel %vm665, %v4119, 0
      %v4168 = vsel %vm665, %v4120, 0
      %v4171 = vsel %vm665, %v4121, 0
      %v4174 = vsel %vm665, %v4122, 0
      %v4177 = vsel %vm714, %v4127, 0
      %4179 = vmatpush.bf16.msra.mxu0 0
      %4180 = vmatpush.bf16.msra.mxu0 0
      %4181 = vmatpush.bf16.msra.mxu0 0
      %4182 = vmatpush.bf16.msra.mxu0 0
      %4183 = vmatpush.bf16.msra.mxu0 0
      %4184 = vmatpush.bf16.msra.mxu0 0
      %4185 = vmatpush.bf16.msra.mxu0 0
      %4186 = vmatpush.bf16.msra.mxu0 %v4177
      %4187 = vmatmul.bf16.gmra.mxu0 %v4129
      %v4188 = vpop.f32.mrf.mxu0
      %v4189 = vadd.f32 0.0, %v4188
      %v4190 = vpop.f32.mrf.mxu0
      %v4191 = vadd.f32 0.0, %v4190
      %4192 = vmatmul.bf16.gmra.mxu0 %v4132
      %v4193 = vpop.f32.mrf.mxu0
      %v4194 = vadd.f32 0.0, %v4193
      %v4195 = vpop.f32.mrf.mxu0
      %v4196 = vadd.f32 0.0, %v4195
      %4197 = vmatmul.bf16.gmra.mxu0 %v4135
      %v4198 = vpop.f32.mrf.mxu0
      %v4199 = vadd.f32 0.0, %v4198
      %v4200 = vpop.f32.mrf.mxu0
      %v4201 = vadd.f32 0.0, %v4200
      %4202 = vmatmul.bf16.gmra.mxu0 %v4138
      %v4203 = vpop.f32.mrf.mxu0
      %v4204 = vadd.f32 0.0, %v4203
      %v4205 = vpop.f32.mrf.mxu0
      %v4206 = vadd.f32 0.0, %v4205
      %4207 = vmatmul.bf16.gmra.mxu0 %v4141
      %v4208 = vpop.f32.mrf.mxu0
      %v4209 = vadd.f32 0.0, %v4208
      %v4210 = vpop.f32.mrf.mxu0
      %v4211 = vadd.f32 0.0, %v4210
      %4212 = vmatmul.bf16.gmra.mxu0 %v4144
      %v4213 = vpop.f32.mrf.mxu0
      %v4214 = vadd.f32 0.0, %v4213
      %v4215 = vpop.f32.mrf.mxu0
      %v4216 = vadd.f32 0.0, %v4215
      %4217 = vmatmul.bf16.gmra.mxu0 %v4147
      %v4218 = vpop.f32.mrf.mxu0
      %v4219 = vadd.f32 0.0, %v4218
      %v4220 = vpop.f32.mrf.mxu0
      %v4221 = vadd.f32 0.0, %v4220
      %4222 = vmatmul.bf16.gmra.mxu0 %v4150
      %v4223 = vpop.f32.mrf.mxu0
      %v4224 = vadd.f32 0.0, %v4223
      %v4225 = vpop.f32.mrf.mxu0
      %v4226 = vadd.f32 0.0, %v4225
      %4227 = vmatmul.bf16.gmra.mxu0 %v4153
      %v4228 = vpop.f32.mrf.mxu0
      %v4229 = vadd.f32 0.0, %v4228
      %v4230 = vpop.f32.mrf.mxu0
      %v4231 = vadd.f32 0.0, %v4230
      %4232 = vmatmul.bf16.gmra.mxu0 %v4156
      %v4233 = vpop.f32.mrf.mxu0
      %v4234 = vadd.f32 0.0, %v4233
      %v4235 = vpop.f32.mrf.mxu0
      %v4236 = vadd.f32 0.0, %v4235
      %4237 = vmatmul.bf16.gmra.mxu0 %v4159
      %v4238 = vpop.f32.mrf.mxu0
      %v4239 = vadd.f32 0.0, %v4238
      %v4240 = vpop.f32.mrf.mxu0
      %v4241 = vadd.f32 0.0, %v4240
      %4242 = vmatmul.bf16.gmra.mxu0 %v4162
      %v4243 = vpop.f32.mrf.mxu0
      %v4244 = vadd.f32 0.0, %v4243
      %v4245 = vpop.f32.mrf.mxu0
      %v4246 = vadd.f32 0.0, %v4245
      %4247 = vmatmul.bf16.gmra.mxu0 %v4165
      %v4248 = vpop.f32.mrf.mxu0
      %v4249 = vadd.f32 0.0, %v4248
      %v4250 = vpop.f32.mrf.mxu0
      %v4251 = vadd.f32 0.0, %v4250
      %4252 = vmatmul.bf16.gmra.mxu0 %v4168
      %v4253 = vpop.f32.mrf.mxu0
      %v4254 = vadd.f32 0.0, %v4253
      %v4255 = vpop.f32.mrf.mxu0
      %v4256 = vadd.f32 0.0, %v4255
      %4257 = vmatmul.bf16.gmra.mxu0 %v4171
      %v4258 = vpop.f32.mrf.mxu0
      %v4259 = vadd.f32 0.0, %v4258
      %v4260 = vpop.f32.mrf.mxu0
      %v4261 = vadd.f32 0.0, %v4260
      %4262 = vmatmul.bf16.gmra.mxu0 %v4174
      %v4263 = vpop.f32.mrf.mxu0
      %v4264 = vadd.f32 0.0, %v4263
      %v4265 = vpop.f32.mrf.mxu0
      %v4266 = vadd.f32 0.0, %v4265
      %4267 = vdwg.mxu0
      %v4268 = vadd.f32 %v3975, %v4189
      %v4269 = vadd.f32 %v3976, %v4191
      %v4270 = vadd.f32 %v3977, %v4194
      %v4271 = vadd.f32 %v3978, %v4196
      %v4272 = vadd.f32 %v3979, %v4199
      %v4273 = vadd.f32 %v3980, %v4201
      %v4274 = vadd.f32 %v3981, %v4204
      %v4275 = vadd.f32 %v3982, %v4206
      %v4276 = vadd.f32 %v3983, %v4209
      %v4277 = vadd.f32 %v3984, %v4211
      %v4278 = vadd.f32 %v3985, %v4214
      %v4279 = vadd.f32 %v3986, %v4216
      %v4280 = vadd.f32 %v3987, %v4219
      %v4281 = vadd.f32 %v3988, %v4221
      %v4282 = vadd.f32 %v3989, %v4224
      %v4283 = vadd.f32 %v3990, %v4226
      %v4284 = vadd.f32 %v3991, %v4229
      %v4285 = vadd.f32 %v3992, %v4231
      %v4286 = vadd.f32 %v3993, %v4234
      %v4287 = vadd.f32 %v3994, %v4236
      %v4288 = vadd.f32 %v3995, %v4239
      %v4289 = vadd.f32 %v3996, %v4241
      %v4290 = vadd.f32 %v3997, %v4244
      %v4291 = vadd.f32 %v3998, %v4246
      %v4292 = vadd.f32 %v3999, %v4249
      %v4293 = vadd.f32 %v4000, %v4251
      %v4294 = vadd.f32 %v4001, %v4254
      %v4295 = vadd.f32 %v4002, %v4256
      %v4296 = vadd.f32 %v4003, %v4259
      %v4297 = vadd.f32 %v4004, %v4261
      %v4298 = vadd.f32 %v4005, %v4264
      %v4299 = vadd.f32 %v4006, %v4266
      %v4300 = vld [vmem:[%s4007] sm:$0xf]
      %v4301 = vld [vmem:[%s4007 + $0x4] sm:$0xf]
      %v4302 = vld [vmem:[%s4007 + $0x8] sm:$0x1]
      %v4303 = vld [vmem:[%s4007 + $0xc] sm:$0xf]
      %v4304 = vld [vmem:[%s4007 + $0x10] sm:$0xf]
      %v4305 = vld [vmem:[%s4007 + $0x14] sm:$0x1]
      %v4306 = vld [vmem:[%s4007 + $0x18] sm:$0xf]
      %v4307 = vld [vmem:[%s4007 + $0x1c] sm:$0xf]
      %v4308 = vld [vmem:[%s4007 + $0x20] sm:$0x1]
      %v4309 = vld [vmem:[%s4007 + $0x24] sm:$0xf]
      %v4310 = vld [vmem:[%s4007 + $0x28] sm:$0xf]
      %v4311 = vld [vmem:[%s4007 + $0x2c] sm:$0x1]
      %v4312 = vld [vmem:[%s4007 + $0x30] sm:$0xf]
      %v4313 = vld [vmem:[%s4007 + $0x34] sm:$0xf]
      %v4314 = vld [vmem:[%s4007 + $0x38] sm:$0x1]
      %v4315 = vld [vmem:[%s4007 + $0x3c] sm:$0xf]
      %v4316 = vld [vmem:[%s4007 + $0x40] sm:$0xf]
      %v4317 = vld [vmem:[%s4007 + $0x44] sm:$0x1]
      %v4318 = vld [vmem:[%s4007 + $0x48] sm:$0xf]
      %v4319 = vld [vmem:[%s4007 + $0x4c] sm:$0xf]
      %v4320 = vld [vmem:[%s4007 + $0x50] sm:$0x1]
      %v4321 = vld [vmem:[%s4007 + $0x54] sm:$0xf]
      %v4322 = vld [vmem:[%s4007 + $0x58] sm:$0xf]
      %v4323 = vld [vmem:[%s4007 + $0x5c] sm:$0x1]
      %v4324 = vld [vmem:[%s4007 + $0x60] sm:$0xf]
      %v4325 = vld [vmem:[%s4007 + $0x64] sm:$0xf]
      %v4326 = vld [vmem:[%s4007 + $0x68] sm:$0x1]
      %v4327 = vld [vmem:[%s4007 + $0x6c] sm:$0xf]
      %v4328 = vld [vmem:[%s4007 + $0x70] sm:$0xf]
      %v4329 = vld [vmem:[%s4007 + $0x74] sm:$0x1]
      %v4330 = vld [vmem:[%s4007 + $0x78] sm:$0xf]
      %v4331 = vld [vmem:[%s4007 + $0x7c] sm:$0xf]
      %v4332 = vld [vmem:[%s4007 + $0x80] sm:$0x1]
      %v4333 = vld [vmem:[%s4007 + $0x84] sm:$0xf]
      %v4334 = vld [vmem:[%s4007 + $0x88] sm:$0xf]
      %v4335 = vld [vmem:[%s4007 + $0x8c] sm:$0x1]
      %v4336 = vld [vmem:[%s4007 + $0x90] sm:$0xf]
      %v4337 = vld [vmem:[%s4007 + $0x94] sm:$0xf]
      %v4338 = vld [vmem:[%s4007 + $0x98] sm:$0x1]
      %v4339 = vld [vmem:[%s4007 + $0x9c] sm:$0xf]
      %v4340 = vld [vmem:[%s4007 + $0xa0] sm:$0xf]
      %v4341 = vld [vmem:[%s4007 + $0xa4] sm:$0x1]
      %v4342 = vld [vmem:[%s4007 + $0xa8] sm:$0xf]
      %v4343 = vld [vmem:[%s4007 + $0xac] sm:$0xf]
      %v4344 = vld [vmem:[%s4007 + $0xb0] sm:$0x1]
      %v4345 = vld [vmem:[%s4007 + $0xb4] sm:$0xf]
      %v4346 = vld [vmem:[%s4007 + $0xb8] sm:$0xf]
      %v4347 = vld [vmem:[%s4007 + $0xbc] sm:$0x1]
      %v4349 = vshrl.u32 %v4300, 16
      %v4351 = vrot.slane %v4349, 4
      %v4352 = vshll.u32 %v4300, 16
      %v4354 = vrot.slane %v4352, 5
      %v4355 = vor.u32 %v4351, %v4354
      %v4356 = vrot.slane %v4355, 4
      %v4358 = vshll.u32 %v4301, 16
      %v4360 = vrot.slane %v4358, 5
      %v4361 = vsel %vm224, %v4356, %v4360
      %v4362 = vshrl.u32 %v4301, 16
      %v4364 = vrot.slane %v4362, 4
      %v4365 = vor.u32 %v4364, %v4360
      %v4366 = vrot.slane %v4365, 4
      %v4368 = vshll.u32 %v4302, 16
      %v4370 = vrot.slane %v4368, 5
      %v4371 = vsel %vm224, %v4366, %v4370
      %v4373 = vshrl.u32 %v4303, 16
      %v4375 = vrot.slane %v4373, 4
      %v4376 = vshll.u32 %v4303, 16
      %v4378 = vrot.slane %v4376, 5
      %v4379 = vor.u32 %v4375, %v4378
      %v4380 = vrot.slane %v4379, 4
      %v4382 = vshll.u32 %v4304, 16
      %v4384 = vrot.slane %v4382, 5
      %v4385 = vsel %vm224, %v4380, %v4384
      %v4386 = vshrl.u32 %v4304, 16
      %v4388 = vrot.slane %v4386, 4
      %v4389 = vor.u32 %v4388, %v4384
      %v4390 = vrot.slane %v4389, 4
      %v4392 = vshll.u32 %v4305, 16
      %v4394 = vrot.slane %v4392, 5
      %v4395 = vsel %vm224, %v4390, %v4394
      %v4397 = vshrl.u32 %v4306, 16
      %v4399 = vrot.slane %v4397, 4
      %v4400 = vshll.u32 %v4306, 16
      %v4402 = vrot.slane %v4400, 5
      %v4403 = vor.u32 %v4399, %v4402
      %v4404 = vrot.slane %v4403, 4
      %v4406 = vshll.u32 %v4307, 16
      %v4408 = vrot.slane %v4406, 5
      %v4409 = vsel %vm224, %v4404, %v4408
      %v4410 = vshrl.u32 %v4307, 16
      %v4412 = vrot.slane %v4410, 4
      %v4413 = vor.u32 %v4412, %v4408
      %v4414 = vrot.slane %v4413, 4
      %v4416 = vshll.u32 %v4308, 16
      %v4418 = vrot.slane %v4416, 5
      %v4419 = vsel %vm224, %v4414, %v4418
      %v4421 = vshrl.u32 %v4309, 16
      %v4423 = vrot.slane %v4421, 4
      %v4424 = vshll.u32 %v4309, 16
      %v4426 = vrot.slane %v4424, 5
      %v4427 = vor.u32 %v4423, %v4426
      %v4428 = vrot.slane %v4427, 4
      %v4430 = vshll.u32 %v4310, 16
      %v4432 = vrot.slane %v4430, 5
      %v4433 = vsel %vm224, %v4428, %v4432
      %v4434 = vshrl.u32 %v4310, 16
      %v4436 = vrot.slane %v4434, 4
      %v4437 = vor.u32 %v4436, %v4432
      %v4438 = vrot.slane %v4437, 4
      %v4440 = vshll.u32 %v4311, 16
      %v4442 = vrot.slane %v4440, 5
      %v4443 = vsel %vm224, %v4438, %v4442
      %v4445 = vshrl.u32 %v4312, 16
      %v4447 = vrot.slane %v4445, 4
      %v4448 = vshll.u32 %v4312, 16
      %v4450 = vrot.slane %v4448, 5
      %v4451 = vor.u32 %v4447, %v4450
      %v4452 = vrot.slane %v4451, 4
      %v4454 = vshll.u32 %v4313, 16
      %v4456 = vrot.slane %v4454, 5
      %v4457 = vsel %vm224, %v4452, %v4456
      %v4458 = vshrl.u32 %v4313, 16
      %v4460 = vrot.slane %v4458, 4
      %v4461 = vor.u32 %v4460, %v4456
      %v4462 = vrot.slane %v4461, 4
      %v4464 = vshll.u32 %v4314, 16
      %v4466 = vrot.slane %v4464, 5
      %v4467 = vsel %vm224, %v4462, %v4466
      %v4469 = vshrl.u32 %v4315, 16
      %v4471 = vrot.slane %v4469, 4
      %v4472 = vshll.u32 %v4315, 16
      %v4474 = vrot.slane %v4472, 5
      %v4475 = vor.u32 %v4471, %v4474
      %v4476 = vrot.slane %v4475, 4
      %v4478 = vshll.u32 %v4316, 16
      %v4480 = vrot.slane %v4478, 5
      %v4481 = vsel %vm224, %v4476, %v4480
      %v4482 = vshrl.u32 %v4316, 16
      %v4484 = vrot.slane %v4482, 4
      %v4485 = vor.u32 %v4484, %v4480
      %v4486 = vrot.slane %v4485, 4
      %v4488 = vshll.u32 %v4317, 16
      %v4490 = vrot.slane %v4488, 5
      %v4491 = vsel %vm224, %v4486, %v4490
      %v4493 = vshrl.u32 %v4318, 16
      %v4495 = vrot.slane %v4493, 4
      %v4496 = vshll.u32 %v4318, 16
      %v4498 = vrot.slane %v4496, 5
      %v4499 = vor.u32 %v4495, %v4498
      %v4500 = vrot.slane %v4499, 4
      %v4502 = vshll.u32 %v4319, 16
      %v4504 = vrot.slane %v4502, 5
      %v4505 = vsel %vm224, %v4500, %v4504
      %v4506 = vshrl.u32 %v4319, 16
      %v4508 = vrot.slane %v4506, 4
      %v4509 = vor.u32 %v4508, %v4504
      %v4510 = vrot.slane %v4509, 4
      %v4512 = vshll.u32 %v4320, 16
      %v4514 = vrot.slane %v4512, 5
      %v4515 = vsel %vm224, %v4510, %v4514
      %v4517 = vshrl.u32 %v4321, 16
      %v4519 = vrot.slane %v4517, 4
      %v4520 = vshll.u32 %v4321, 16
      %v4522 = vrot.slane %v4520, 5
      %v4523 = vor.u32 %v4519, %v4522
      %v4524 = vrot.slane %v4523, 4
      %v4526 = vshll.u32 %v4322, 16
      %v4528 = vrot.slane %v4526, 5
      %v4529 = vsel %vm224, %v4524, %v4528
      %v4530 = vshrl.u32 %v4322, 16
      %v4532 = vrot.slane %v4530, 4
      %v4533 = vor.u32 %v4532, %v4528
      %v4534 = vrot.slane %v4533, 4
      %v4536 = vshll.u32 %v4323, 16
      %v4538 = vrot.slane %v4536, 5
      %v4539 = vsel %vm224, %v4534, %v4538
      %v4541 = vshrl.u32 %v4324, 16
      %v4543 = vrot.slane %v4541, 4
      %v4544 = vshll.u32 %v4324, 16
      %v4546 = vrot.slane %v4544, 5
      %v4547 = vor.u32 %v4543, %v4546
      %v4548 = vrot.slane %v4547, 4
      %v4550 = vshll.u32 %v4325, 16
      %v4552 = vrot.slane %v4550, 5
      %v4553 = vsel %vm224, %v4548, %v4552
      %v4554 = vshrl.u32 %v4325, 16
      %v4556 = vrot.slane %v4554, 4
      %v4557 = vor.u32 %v4556, %v4552
      %v4558 = vrot.slane %v4557, 4
      %v4560 = vshll.u32 %v4326, 16
      %v4562 = vrot.slane %v4560, 5
      %v4563 = vsel %vm224, %v4558, %v4562
      %v4565 = vshrl.u32 %v4327, 16
      %v4567 = vrot.slane %v4565, 4
      %v4568 = vshll.u32 %v4327, 16
      %v4570 = vrot.slane %v4568, 5
      %v4571 = vor.u32 %v4567, %v4570
      %v4572 = vrot.slane %v4571, 4
      %v4574 = vshll.u32 %v4328, 16
      %v4576 = vrot.slane %v4574, 5
      %v4577 = vsel %vm224, %v4572, %v4576
      %v4578 = vshrl.u32 %v4328, 16
      %v4580 = vrot.slane %v4578, 4
      %v4581 = vor.u32 %v4580, %v4576
      %v4582 = vrot.slane %v4581, 4
      %v4584 = vshll.u32 %v4329, 16
      %v4586 = vrot.slane %v4584, 5
      %v4587 = vsel %vm224, %v4582, %v4586
      %v4589 = vshrl.u32 %v4330, 16
      %v4591 = vrot.slane %v4589, 4
      %v4592 = vshll.u32 %v4330, 16
      %v4594 = vrot.slane %v4592, 5
      %v4595 = vor.u32 %v4591, %v4594
      %v4596 = vrot.slane %v4595, 4
      %v4598 = vshll.u32 %v4331, 16
      %v4600 = vrot.slane %v4598, 5
      %v4601 = vsel %vm224, %v4596, %v4600
      %v4602 = vshrl.u32 %v4331, 16
      %v4604 = vrot.slane %v4602, 4
      %v4605 = vor.u32 %v4604, %v4600
      %v4606 = vrot.slane %v4605, 4
      %v4608 = vshll.u32 %v4332, 16
      %v4610 = vrot.slane %v4608, 5
      %v4611 = vsel %vm224, %v4606, %v4610
      %v4613 = vshrl.u32 %v4333, 16
      %v4615 = vrot.slane %v4613, 4
      %v4616 = vshll.u32 %v4333, 16
      %v4618 = vrot.slane %v4616, 5
      %v4619 = vor.u32 %v4615, %v4618
      %v4620 = vrot.slane %v4619, 4
      %v4622 = vshll.u32 %v4334, 16
      %v4624 = vrot.slane %v4622, 5
      %v4625 = vsel %vm224, %v4620, %v4624
      %v4626 = vshrl.u32 %v4334, 16
      %v4628 = vrot.slane %v4626, 4
      %v4629 = vor.u32 %v4628, %v4624
      %v4630 = vrot.slane %v4629, 4
      %v4632 = vshll.u32 %v4335, 16
      %v4634 = vrot.slane %v4632, 5
      %v4635 = vsel %vm224, %v4630, %v4634
      %v4637 = vshrl.u32 %v4336, 16
      %v4639 = vrot.slane %v4637, 4
      %v4640 = vshll.u32 %v4336, 16
      %v4642 = vrot.slane %v4640, 5
      %v4643 = vor.u32 %v4639, %v4642
      %v4644 = vrot.slane %v4643, 4
      %v4646 = vshll.u32 %v4337, 16
      %v4648 = vrot.slane %v4646, 5
      %v4649 = vsel %vm224, %v4644, %v4648
      %v4650 = vshrl.u32 %v4337, 16
      %v4652 = vrot.slane %v4650, 4
      %v4653 = vor.u32 %v4652, %v4648
      %v4654 = vrot.slane %v4653, 4
      %v4656 = vshll.u32 %v4338, 16
      %v4658 = vrot.slane %v4656, 5
      %v4659 = vsel %vm224, %v4654, %v4658
      %v4661 = vshrl.u32 %v4339, 16
      %v4663 = vrot.slane %v4661, 4
      %v4664 = vshll.u32 %v4339, 16
      %v4666 = vrot.slane %v4664, 5
      %v4667 = vor.u32 %v4663, %v4666
      %v4668 = vrot.slane %v4667, 4
      %v4670 = vshll.u32 %v4340, 16
      %v4672 = vrot.slane %v4670, 5
      %v4673 = vsel %vm224, %v4668, %v4672
      %v4674 = vshrl.u32 %v4340, 16
      %v4676 = vrot.slane %v4674, 4
      %v4677 = vor.u32 %v4676, %v4672
      %v4678 = vrot.slane %v4677, 4
      %v4680 = vshll.u32 %v4341, 16
      %v4682 = vrot.slane %v4680, 5
      %v4683 = vsel %vm224, %v4678, %v4682
      %v4685 = vshrl.u32 %v4342, 16
      %v4687 = vrot.slane %v4685, 4
      %v4688 = vshll.u32 %v4342, 16
      %v4690 = vrot.slane %v4688, 5
      %v4691 = vor.u32 %v4687, %v4690
      %v4692 = vrot.slane %v4691, 4
      %v4694 = vshll.u32 %v4343, 16
      %v4696 = vrot.slane %v4694, 5
      %v4697 = vsel %vm224, %v4692, %v4696
      %v4698 = vshrl.u32 %v4343, 16
      %v4700 = vrot.slane %v4698, 4
      %v4701 = vor.u32 %v4700, %v4696
      %v4702 = vrot.slane %v4701, 4
      %v4704 = vshll.u32 %v4344, 16
      %v4706 = vrot.slane %v4704, 5
      %v4707 = vsel %vm224, %v4702, %v4706
      %v4709 = vshrl.u32 %v4345, 16
      %v4711 = vrot.slane %v4709, 4
      %v4712 = vshll.u32 %v4345, 16
      %v4714 = vrot.slane %v4712, 5
      %v4715 = vor.u32 %v4711, %v4714
      %v4716 = vrot.slane %v4715, 4
      %v4718 = vshll.u32 %v4346, 16
      %v4720 = vrot.slane %v4718, 5
      %v4721 = vsel %vm224, %v4716, %v4720
      %v4722 = vshrl.u32 %v4346, 16
      %v4724 = vrot.slane %v4722, 4
      %v4725 = vor.u32 %v4724, %v4720
      %v4726 = vrot.slane %v4725, 4
      %v4728 = vshll.u32 %v4347, 16
      %v4730 = vrot.slane %v4728, 5
      %v4731 = vsel %vm224, %v4726, %v4730
      %s4732 = scalar_lea.vmem %s1, 72
      %v4733 = vld [vmem:[%s4732] sm:$0xf]
      %v4734 = vld [vmem:[%s4732 + $0x4] sm:$0x3]
      %v4735 = vunpack.c.l.b16 %v4361
      %v4736 = vunpack.c.l.b16 %v4371
      %v4737 = vunpack.c.l.b16 %v4385
      %v4738 = vunpack.c.l.b16 %v4395
      %v4739 = vunpack.c.l.b16 %v4409
      %v4740 = vunpack.c.l.b16 %v4419
      %v4741 = vunpack.c.l.b16 %v4433
      %v4742 = vunpack.c.l.b16 %v4443
      %v4743 = vunpack.c.l.b16 %v4457
      %v4744 = vunpack.c.l.b16 %v4467
      %v4745 = vunpack.c.l.b16 %v4481
      %v4746 = vunpack.c.l.b16 %v4491
      %v4747 = vunpack.c.l.b16 %v4505
      %v4748 = vunpack.c.l.b16 %v4515
      %v4749 = vunpack.c.l.b16 %v4529
      %v4750 = vunpack.c.l.b16 %v4539
      %v4751 = vunpack.c.l.b16 %v4553
      %v4752 = vunpack.c.l.b16 %v4563
      %v4753 = vunpack.c.l.b16 %v4577
      %v4754 = vunpack.c.l.b16 %v4587
      %v4755 = vunpack.c.l.b16 %v4601
      %v4756 = vunpack.c.l.b16 %v4611
      %v4757 = vunpack.c.l.b16 %v4625
      %v4758 = vunpack.c.l.b16 %v4635
      %v4759 = vunpack.c.l.b16 %v4649
      %v4760 = vunpack.c.l.b16 %v4659
      %v4761 = vunpack.c.l.b16 %v4673
      %v4762 = vunpack.c.l.b16 %v4683
      %v4763 = vunpack.c.l.b16 %v4697
      %v4764 = vunpack.c.l.b16 %v4707
      %v4765 = vunpack.c.l.b16 %v4721
      %v4766 = vunpack.c.l.b16 %v4731
      %v4767 = vpack.c.b16 %v4736, %v4735
      %v4768 = vpack.c.b16 %v4738, %v4737
      %v4769 = vpack.c.b16 %v4740, %v4739
      %v4770 = vpack.c.b16 %v4742, %v4741
      %v4771 = vpack.c.b16 %v4744, %v4743
      %v4772 = vpack.c.b16 %v4746, %v4745
      %v4773 = vpack.c.b16 %v4748, %v4747
      %v4774 = vpack.c.b16 %v4750, %v4749
      %v4775 = vpack.c.b16 %v4752, %v4751
      %v4776 = vpack.c.b16 %v4754, %v4753
      %v4777 = vpack.c.b16 %v4756, %v4755
      %v4778 = vpack.c.b16 %v4758, %v4757
      %v4779 = vpack.c.b16 %v4760, %v4759
      %v4780 = vpack.c.b16 %v4762, %v4761
      %v4781 = vpack.c.b16 %v4764, %v4763
      %v4782 = vpack.c.b16 %v4766, %v4765
      %v4785 = vunpack.c.l.b16 %v4733
      %v4786 = vunpack.c.l.b16 %v4734
      %v4787 = vpack.c.b16 %v4786, %v4785
      %v4789 = vsel %vm665, %v4767, 0
      %v4792 = vsel %vm665, %v4768, 0
      %v4795 = vsel %vm665, %v4769, 0
      %v4798 = vsel %vm665, %v4770, 0
      %v4801 = vsel %vm665, %v4771, 0
      %v4804 = vsel %vm665, %v4772, 0
      %v4807 = vsel %vm665, %v4773, 0
      %v4810 = vsel %vm665, %v4774, 0
      %v4813 = vsel %vm665, %v4775, 0
      %v4816 = vsel %vm665, %v4776, 0
      %v4819 = vsel %vm665, %v4777, 0
      %v4822 = vsel %vm665, %v4778, 0
      %v4825 = vsel %vm665, %v4779, 0
      %v4828 = vsel %vm665, %v4780, 0
      %v4831 = vsel %vm665, %v4781, 0
      %v4834 = vsel %vm665, %v4782, 0
      %v4837 = vsel %vm714, %v4787, 0
      %4839 = vmatpush.bf16.msra.mxu0 0
      %4840 = vmatpush.bf16.msra.mxu0 0
      %4841 = vmatpush.bf16.msra.mxu0 0
      %4842 = vmatpush.bf16.msra.mxu0 0
      %4843 = vmatpush.bf16.msra.mxu0 0
      %4844 = vmatpush.bf16.msra.mxu0 0
      %4845 = vmatpush.bf16.msra.mxu0 0
      %4846 = vmatpush.bf16.msra.mxu0 %v4837
      %4847 = vmatmul.bf16.gmra.mxu0 %v4789
      %v4848 = vpop.f32.mrf.mxu0
      %v4849 = vadd.f32 0.0, %v4848
      %v4850 = vpop.f32.mrf.mxu0
      %v4851 = vadd.f32 0.0, %v4850
      %4852 = vmatmul.bf16.gmra.mxu0 %v4792
      %v4853 = vpop.f32.mrf.mxu0
      %v4854 = vadd.f32 0.0, %v4853
      %v4855 = vpop.f32.mrf.mxu0
      %v4856 = vadd.f32 0.0, %v4855
      %4857 = vmatmul.bf16.gmra.mxu0 %v4795
      %v4858 = vpop.f32.mrf.mxu0
      %v4859 = vadd.f32 0.0, %v4858
      %v4860 = vpop.f32.mrf.mxu0
      %v4861 = vadd.f32 0.0, %v4860
      %4862 = vmatmul.bf16.gmra.mxu0 %v4798
      %v4863 = vpop.f32.mrf.mxu0
      %v4864 = vadd.f32 0.0, %v4863
      %v4865 = vpop.f32.mrf.mxu0
      %v4866 = vadd.f32 0.0, %v4865
      %4867 = vmatmul.bf16.gmra.mxu0 %v4801
      %v4868 = vpop.f32.mrf.mxu0
      %v4869 = vadd.f32 0.0, %v4868
      %v4870 = vpop.f32.mrf.mxu0
      %v4871 = vadd.f32 0.0, %v4870
      %4872 = vmatmul.bf16.gmra.mxu0 %v4804
      %v4873 = vpop.f32.mrf.mxu0
      %v4874 = vadd.f32 0.0, %v4873
      %v4875 = vpop.f32.mrf.mxu0
      %v4876 = vadd.f32 0.0, %v4875
      %4877 = vmatmul.bf16.gmra.mxu0 %v4807
      %v4878 = vpop.f32.mrf.mxu0
      %v4879 = vadd.f32 0.0, %v4878
      %v4880 = vpop.f32.mrf.mxu0
      %v4881 = vadd.f32 0.0, %v4880
      %4882 = vmatmul.bf16.gmra.mxu0 %v4810
      %v4883 = vpop.f32.mrf.mxu0
      %v4884 = vadd.f32 0.0, %v4883
      %v4885 = vpop.f32.mrf.mxu0
      %v4886 = vadd.f32 0.0, %v4885
      %4887 = vmatmul.bf16.gmra.mxu0 %v4813
      %v4888 = vpop.f32.mrf.mxu0
      %v4889 = vadd.f32 0.0, %v4888
      %v4890 = vpop.f32.mrf.mxu0
      %v4891 = vadd.f32 0.0, %v4890
      %4892 = vmatmul.bf16.gmra.mxu0 %v4816
      %v4893 = vpop.f32.mrf.mxu0
      %v4894 = vadd.f32 0.0, %v4893
      %v4895 = vpop.f32.mrf.mxu0
      %v4896 = vadd.f32 0.0, %v4895
      %4897 = vmatmul.bf16.gmra.mxu0 %v4819
      %v4898 = vpop.f32.mrf.mxu0
      %v4899 = vadd.f32 0.0, %v4898
      %v4900 = vpop.f32.mrf.mxu0
      %v4901 = vadd.f32 0.0, %v4900
      %4902 = vmatmul.bf16.gmra.mxu0 %v4822
      %v4903 = vpop.f32.mrf.mxu0
      %v4904 = vadd.f32 0.0, %v4903
      %v4905 = vpop.f32.mrf.mxu0
      %v4906 = vadd.f32 0.0, %v4905
      %4907 = vmatmul.bf16.gmra.mxu0 %v4825
      %v4908 = vpop.f32.mrf.mxu0
      %v4909 = vadd.f32 0.0, %v4908
      %v4910 = vpop.f32.mrf.mxu0
      %v4911 = vadd.f32 0.0, %v4910
      %4912 = vmatmul.bf16.gmra.mxu0 %v4828
      %v4913 = vpop.f32.mrf.mxu0
      %v4914 = vadd.f32 0.0, %v4913
      %v4915 = vpop.f32.mrf.mxu0
      %v4916 = vadd.f32 0.0, %v4915
      %4917 = vmatmul.bf16.gmra.mxu0 %v4831
      %v4918 = vpop.f32.mrf.mxu0
      %v4919 = vadd.f32 0.0, %v4918
      %v4920 = vpop.f32.mrf.mxu0
      %v4921 = vadd.f32 0.0, %v4920
      %4922 = vmatmul.bf16.gmra.mxu0 %v4834
      %v4923 = vpop.f32.mrf.mxu0
      %v4924 = vadd.f32 0.0, %v4923
      %v4925 = vpop.f32.mrf.mxu0
      %v4926 = vadd.f32 0.0, %v4925
      %4927 = vdwg.mxu0
      %v4928 = vadd.f32 %v4268, %v4849
      %v4929 = vadd.f32 %v4269, %v4851
      %v4930 = vadd.f32 %v4270, %v4854
      %v4931 = vadd.f32 %v4271, %v4856
      %v4932 = vadd.f32 %v4272, %v4859
      %v4933 = vadd.f32 %v4273, %v4861
      %v4934 = vadd.f32 %v4274, %v4864
      %v4935 = vadd.f32 %v4275, %v4866
      %v4936 = vadd.f32 %v4276, %v4869
      %v4937 = vadd.f32 %v4277, %v4871
      %v4938 = vadd.f32 %v4278, %v4874
      %v4939 = vadd.f32 %v4279, %v4876
      %v4940 = vadd.f32 %v4280, %v4879
      %v4941 = vadd.f32 %v4281, %v4881
      %v4942 = vadd.f32 %v4282, %v4884
      %v4943 = vadd.f32 %v4283, %v4886
      %v4944 = vadd.f32 %v4284, %v4889
      %v4945 = vadd.f32 %v4285, %v4891
      %v4946 = vadd.f32 %v4286, %v4894
      %v4947 = vadd.f32 %v4287, %v4896
      %v4948 = vadd.f32 %v4288, %v4899
      %v4949 = vadd.f32 %v4289, %v4901
      %v4950 = vadd.f32 %v4290, %v4904
      %v4951 = vadd.f32 %v4291, %v4906
      %v4952 = vadd.f32 %v4292, %v4909
      %v4953 = vadd.f32 %v4293, %v4911
      %v4954 = vadd.f32 %v4294, %v4914
      %v4955 = vadd.f32 %v4295, %v4916
      %v4956 = vadd.f32 %v4296, %v4919
      %v4957 = vadd.f32 %v4297, %v4921
      %v4958 = vadd.f32 %v4298, %v4924
      %v4959 = vadd.f32 %v4299, %v4926
      %v4960 = vld [vmem:[%s4007] sm:$0xe]
      %v4961 = vld [vmem:[%s4007 + $0xc] sm:$0xe]
      %v4962 = vld [vmem:[%s4007 + $0x18] sm:$0xe]
      %v4963 = vld [vmem:[%s4007 + $0x24] sm:$0xe]
      %v4964 = vld [vmem:[%s4007 + $0x30] sm:$0xe]
      %v4965 = vld [vmem:[%s4007 + $0x3c] sm:$0xe]
      %v4966 = vld [vmem:[%s4007 + $0x48] sm:$0xe]
      %v4967 = vld [vmem:[%s4007 + $0x54] sm:$0xe]
      %v4968 = vld [vmem:[%s4007 + $0x60] sm:$0xe]
      %v4969 = vld [vmem:[%s4007 + $0x6c] sm:$0xe]
      %v4970 = vld [vmem:[%s4007 + $0x78] sm:$0xe]
      %v4971 = vld [vmem:[%s4007 + $0x84] sm:$0xe]
      %v4972 = vld [vmem:[%s4007 + $0x90] sm:$0xe]
      %v4973 = vld [vmem:[%s4007 + $0x9c] sm:$0xe]
      %v4974 = vld [vmem:[%s4007 + $0xa8] sm:$0xe]
      %v4975 = vld [vmem:[%s4007 + $0xb4] sm:$0xe]
      %v5024 = vrot.slane %v4960, 5
      %v5025 = vrot.slane %v5024, 4
      %v5026 = vrot.slane %v4301, 5
      %v5027 = vsel %vm1082, %v5025, %v5026
      %v5028 = vrot.slane %v5026, 4
      %v5029 = vrot.slane %v4302, 5
      %v5030 = vsel %vm1082, %v5028, %v5029
      %v5031 = vrot.slane %v4961, 5
      %v5032 = vrot.slane %v5031, 4
      %v5033 = vrot.slane %v4304, 5
      %v5034 = vsel %vm1082, %v5032, %v5033
      %v5035 = vrot.slane %v5033, 4
      %v5036 = vrot.slane %v4305, 5
      %v5037 = vsel %vm1082, %v5035, %v5036
      %v5038 = vrot.slane %v4962, 5
      %v5039 = vrot.slane %v5038, 4
      %v5040 = vrot.slane %v4307, 5
      %v5041 = vsel %vm1082, %v5039, %v5040
      %v5042 = vrot.slane %v5040, 4
      %v5043 = vrot.slane %v4308, 5
      %v5044 = vsel %vm1082, %v5042, %v5043
      %v5045 = vrot.slane %v4963, 5
      %v5046 = vrot.slane %v5045, 4
      %v5047 = vrot.slane %v4310, 5
      %v5048 = vsel %vm1082, %v5046, %v5047
      %v5049 = vrot.slane %v5047, 4
      %v5050 = vrot.slane %v4311, 5
      %v5051 = vsel %vm1082, %v5049, %v5050
      %v5052 = vrot.slane %v4964, 5
      %v5053 = vrot.slane %v5052, 4
      %v5054 = vrot.slane %v4313, 5
      %v5055 = vsel %vm1082, %v5053, %v5054
      %v5056 = vrot.slane %v5054, 4
      %v5057 = vrot.slane %v4314, 5
      %v5058 = vsel %vm1082, %v5056, %v5057
      %v5059 = vrot.slane %v4965, 5
      %v5060 = vrot.slane %v5059, 4
      %v5061 = vrot.slane %v4316, 5
      %v5062 = vsel %vm1082, %v5060, %v5061
      %v5063 = vrot.slane %v5061, 4
      %v5064 = vrot.slane %v4317, 5
      %v5065 = vsel %vm1082, %v5063, %v5064
      %v5066 = vrot.slane %v4966, 5
      %v5067 = vrot.slane %v5066, 4
      %v5068 = vrot.slane %v4319, 5
      %v5069 = vsel %vm1082, %v5067, %v5068
      %v5070 = vrot.slane %v5068, 4
      %v5071 = vrot.slane %v4320, 5
      %v5072 = vsel %vm1082, %v5070, %v5071
      %v5073 = vrot.slane %v4967, 5
      %v5074 = vrot.slane %v5073, 4
      %v5075 = vrot.slane %v4322, 5
      %v5076 = vsel %vm1082, %v5074, %v5075
      %v5077 = vrot.slane %v5075, 4
      %v5078 = vrot.slane %v4323, 5
      %v5079 = vsel %vm1082, %v5077, %v5078
      %v5080 = vrot.slane %v4968, 5
      %v5081 = vrot.slane %v5080, 4
      %v5082 = vrot.slane %v4325, 5
      %v5083 = vsel %vm1082, %v5081, %v5082
      %v5084 = vrot.slane %v5082, 4
      %v5085 = vrot.slane %v4326, 5
      %v5086 = vsel %vm1082, %v5084, %v5085
      %v5087 = vrot.slane %v4969, 5
      %v5088 = vrot.slane %v5087, 4
      %v5089 = vrot.slane %v4328, 5
      %v5090 = vsel %vm1082, %v5088, %v5089
      %v5091 = vrot.slane %v5089, 4
      %v5092 = vrot.slane %v4329, 5
      %v5093 = vsel %vm1082, %v5091, %v5092
      %v5094 = vrot.slane %v4970, 5
      %v5095 = vrot.slane %v5094, 4
      %v5096 = vrot.slane %v4331, 5
      %v5097 = vsel %vm1082, %v5095, %v5096
      %v5098 = vrot.slane %v5096, 4
      %v5099 = vrot.slane %v4332, 5
      %v5100 = vsel %vm1082, %v5098, %v5099
      %v5101 = vrot.slane %v4971, 5
      %v5102 = vrot.slane %v5101, 4
      %v5103 = vrot.slane %v4334, 5
      %v5104 = vsel %vm1082, %v5102, %v5103
      %v5105 = vrot.slane %v5103, 4
      %v5106 = vrot.slane %v4335, 5
      %v5107 = vsel %vm1082, %v5105, %v5106
      %v5108 = vrot.slane %v4972, 5
      %v5109 = vrot.slane %v5108, 4
      %v5110 = vrot.slane %v4337, 5
      %v5111 = vsel %vm1082, %v5109, %v5110
      %v5112 = vrot.slane %v5110, 4
      %v5113 = vrot.slane %v4338, 5
      %v5114 = vsel %vm1082, %v5112, %v5113
      %v5115 = vrot.slane %v4973, 5
      %v5116 = vrot.slane %v5115, 4
      %v5117 = vrot.slane %v4340, 5
      %v5118 = vsel %vm1082, %v5116, %v5117
      %v5119 = vrot.slane %v5117, 4
      %v5120 = vrot.slane %v4341, 5
      %v5121 = vsel %vm1082, %v5119, %v5120
      %v5122 = vrot.slane %v4974, 5
      %v5123 = vrot.slane %v5122, 4
      %v5124 = vrot.slane %v4343, 5
      %v5125 = vsel %vm1082, %v5123, %v5124
      %v5126 = vrot.slane %v5124, 4
      %v5127 = vrot.slane %v4344, 5
      %v5128 = vsel %vm1082, %v5126, %v5127
      %v5129 = vrot.slane %v4975, 5
      %v5130 = vrot.slane %v5129, 4
      %v5131 = vrot.slane %v4346, 5
      %v5132 = vsel %vm1082, %v5130, %v5131
      %v5133 = vrot.slane %v5131, 4
      %v5134 = vrot.slane %v4347, 5
      %v5135 = vsel %vm1082, %v5133, %v5134
      %s5136 = scalar_lea.vmem %s1, 80
      %v5137 = vld [vmem:[%s5136] sm:$0xf]
      %v5138 = vld [vmem:[%s5136 + $0x4] sm:$0x3]
      %v5139 = vunpack.c.l.b16 %v5027
      %v5140 = vunpack.c.l.b16 %v5030
      %v5141 = vunpack.c.l.b16 %v5034
      %v5142 = vunpack.c.l.b16 %v5037
      %v5143 = vunpack.c.l.b16 %v5041
      %v5144 = vunpack.c.l.b16 %v5044
      %v5145 = vunpack.c.l.b16 %v5048
      %v5146 = vunpack.c.l.b16 %v5051
      %v5147 = vunpack.c.l.b16 %v5055
      %v5148 = vunpack.c.l.b16 %v5058
      %v5149 = vunpack.c.l.b16 %v5062
      %v5150 = vunpack.c.l.b16 %v5065
      %v5151 = vunpack.c.l.b16 %v5069
      %v5152 = vunpack.c.l.b16 %v5072
      %v5153 = vunpack.c.l.b16 %v5076
      %v5154 = vunpack.c.l.b16 %v5079
      %v5155 = vunpack.c.l.b16 %v5083
      %v5156 = vunpack.c.l.b16 %v5086
      %v5157 = vunpack.c.l.b16 %v5090
      %v5158 = vunpack.c.l.b16 %v5093
      %v5159 = vunpack.c.l.b16 %v5097
      %v5160 = vunpack.c.l.b16 %v5100
      %v5161 = vunpack.c.l.b16 %v5104
      %v5162 = vunpack.c.l.b16 %v5107
      %v5163 = vunpack.c.l.b16 %v5111
      %v5164 = vunpack.c.l.b16 %v5114
      %v5165 = vunpack.c.l.b16 %v5118
      %v5166 = vunpack.c.l.b16 %v5121
      %v5167 = vunpack.c.l.b16 %v5125
      %v5168 = vunpack.c.l.b16 %v5128
      %v5169 = vunpack.c.l.b16 %v5132
      %v5170 = vunpack.c.l.b16 %v5135
      %v5171 = vpack.c.b16 %v5140, %v5139
      %v5172 = vpack.c.b16 %v5142, %v5141
      %v5173 = vpack.c.b16 %v5144, %v5143
      %v5174 = vpack.c.b16 %v5146, %v5145
      %v5175 = vpack.c.b16 %v5148, %v5147
      %v5176 = vpack.c.b16 %v5150, %v5149
      %v5177 = vpack.c.b16 %v5152, %v5151
      %v5178 = vpack.c.b16 %v5154, %v5153
      %v5179 = vpack.c.b16 %v5156, %v5155
      %v5180 = vpack.c.b16 %v5158, %v5157
      %v5181 = vpack.c.b16 %v5160, %v5159
      %v5182 = vpack.c.b16 %v5162, %v5161
      %v5183 = vpack.c.b16 %v5164, %v5163
      %v5184 = vpack.c.b16 %v5166, %v5165
      %v5185 = vpack.c.b16 %v5168, %v5167
      %v5186 = vpack.c.b16 %v5170, %v5169
      %v5189 = vunpack.c.l.b16 %v5137
      %v5190 = vunpack.c.l.b16 %v5138
      %v5191 = vpack.c.b16 %v5190, %v5189
      %v5193 = vsel %vm665, %v5171, 0
      %v5196 = vsel %vm665, %v5172, 0
      %v5199 = vsel %vm665, %v5173, 0
      %v5202 = vsel %vm665, %v5174, 0
      %v5205 = vsel %vm665, %v5175, 0
      %v5208 = vsel %vm665, %v5176, 0
      %v5211 = vsel %vm665, %v5177, 0
      %v5214 = vsel %vm665, %v5178, 0
      %v5217 = vsel %vm665, %v5179, 0
      %v5220 = vsel %vm665, %v5180, 0
      %v5223 = vsel %vm665, %v5181, 0
      %v5226 = vsel %vm665, %v5182, 0
      %v5229 = vsel %vm665, %v5183, 0
      %v5232 = vsel %vm665, %v5184, 0
      %v5235 = vsel %vm665, %v5185, 0
      %v5238 = vsel %vm665, %v5186, 0
      %v5241 = vsel %vm714, %v5191, 0
      %5243 = vmatpush.bf16.msra.mxu0 0
      %5244 = vmatpush.bf16.msra.mxu0 0
      %5245 = vmatpush.bf16.msra.mxu0 0
      %5246 = vmatpush.bf16.msra.mxu0 0
      %5247 = vmatpush.bf16.msra.mxu0 0
      %5248 = vmatpush.bf16.msra.mxu0 0
      %5249 = vmatpush.bf16.msra.mxu0 0
      %5250 = vmatpush.bf16.msra.mxu0 %v5241
      %5251 = vmatmul.bf16.gmra.mxu0 %v5193
      %v5252 = vpop.f32.mrf.mxu0
      %v5253 = vadd.f32 0.0, %v5252
      %v5254 = vpop.f32.mrf.mxu0
      %v5255 = vadd.f32 0.0, %v5254
      %5256 = vmatmul.bf16.gmra.mxu0 %v5196
      %v5257 = vpop.f32.mrf.mxu0
      %v5258 = vadd.f32 0.0, %v5257
      %v5259 = vpop.f32.mrf.mxu0
      %v5260 = vadd.f32 0.0, %v5259
      %5261 = vmatmul.bf16.gmra.mxu0 %v5199
      %v5262 = vpop.f32.mrf.mxu0
      %v5263 = vadd.f32 0.0, %v5262
      %v5264 = vpop.f32.mrf.mxu0
      %v5265 = vadd.f32 0.0, %v5264
      %5266 = vmatmul.bf16.gmra.mxu0 %v5202
      %v5267 = vpop.f32.mrf.mxu0
      %v5268 = vadd.f32 0.0, %v5267
      %v5269 = vpop.f32.mrf.mxu0
      %v5270 = vadd.f32 0.0, %v5269
      %5271 = vmatmul.bf16.gmra.mxu0 %v5205
      %v5272 = vpop.f32.mrf.mxu0
      %v5273 = vadd.f32 0.0, %v5272
      %v5274 = vpop.f32.mrf.mxu0
      %v5275 = vadd.f32 0.0, %v5274
      %5276 = vmatmul.bf16.gmra.mxu0 %v5208
      %v5277 = vpop.f32.mrf.mxu0
      %v5278 = vadd.f32 0.0, %v5277
      %v5279 = vpop.f32.mrf.mxu0
      %v5280 = vadd.f32 0.0, %v5279
      %5281 = vmatmul.bf16.gmra.mxu0 %v5211
      %v5282 = vpop.f32.mrf.mxu0
      %v5283 = vadd.f32 0.0, %v5282
      %v5284 = vpop.f32.mrf.mxu0
      %v5285 = vadd.f32 0.0, %v5284
      %5286 = vmatmul.bf16.gmra.mxu0 %v5214
      %v5287 = vpop.f32.mrf.mxu0
      %v5288 = vadd.f32 0.0, %v5287
      %v5289 = vpop.f32.mrf.mxu0
      %v5290 = vadd.f32 0.0, %v5289
      %5291 = vmatmul.bf16.gmra.mxu0 %v5217
      %v5292 = vpop.f32.mrf.mxu0
      %v5293 = vadd.f32 0.0, %v5292
      %v5294 = vpop.f32.mrf.mxu0
      %v5295 = vadd.f32 0.0, %v5294
      %5296 = vmatmul.bf16.gmra.mxu0 %v5220
      %v5297 = vpop.f32.mrf.mxu0
      %v5298 = vadd.f32 0.0, %v5297
      %v5299 = vpop.f32.mrf.mxu0
      %v5300 = vadd.f32 0.0, %v5299
      %5301 = vmatmul.bf16.gmra.mxu0 %v5223
      %v5302 = vpop.f32.mrf.mxu0
      %v5303 = vadd.f32 0.0, %v5302
      %v5304 = vpop.f32.mrf.mxu0
      %v5305 = vadd.f32 0.0, %v5304
      %5306 = vmatmul.bf16.gmra.mxu0 %v5226
      %v5307 = vpop.f32.mrf.mxu0
      %v5308 = vadd.f32 0.0, %v5307
      %v5309 = vpop.f32.mrf.mxu0
      %v5310 = vadd.f32 0.0, %v5309
      %5311 = vmatmul.bf16.gmra.mxu0 %v5229
      %v5312 = vpop.f32.mrf.mxu0
      %v5313 = vadd.f32 0.0, %v5312
      %v5314 = vpop.f32.mrf.mxu0
      %v5315 = vadd.f32 0.0, %v5314
      %5316 = vmatmul.bf16.gmra.mxu0 %v5232
      %v5317 = vpop.f32.mrf.mxu0
      %v5318 = vadd.f32 0.0, %v5317
      %v5319 = vpop.f32.mrf.mxu0
      %v5320 = vadd.f32 0.0, %v5319
      %5321 = vmatmul.bf16.gmra.mxu0 %v5235
      %v5322 = vpop.f32.mrf.mxu0
      %v5323 = vadd.f32 0.0, %v5322
      %v5324 = vpop.f32.mrf.mxu0
      %v5325 = vadd.f32 0.0, %v5324
      %5326 = vmatmul.bf16.gmra.mxu0 %v5238
      %v5327 = vpop.f32.mrf.mxu0
      %v5328 = vadd.f32 0.0, %v5327
      %v5329 = vpop.f32.mrf.mxu0
      %v5330 = vadd.f32 0.0, %v5329
      %5331 = vdwg.mxu0
      %v5332 = vadd.f32 %v4928, %v5253
      %v5333 = vadd.f32 %v4929, %v5255
      %v5334 = vadd.f32 %v4930, %v5258
      %v5335 = vadd.f32 %v4931, %v5260
      %v5336 = vadd.f32 %v4932, %v5263
      %v5337 = vadd.f32 %v4933, %v5265
      %v5338 = vadd.f32 %v4934, %v5268
      %v5339 = vadd.f32 %v4935, %v5270
      %v5340 = vadd.f32 %v4936, %v5273
      %v5341 = vadd.f32 %v4937, %v5275
      %v5342 = vadd.f32 %v4938, %v5278
      %v5343 = vadd.f32 %v4939, %v5280
      %v5344 = vadd.f32 %v4940, %v5283
      %v5345 = vadd.f32 %v4941, %v5285
      %v5346 = vadd.f32 %v4942, %v5288
      %v5347 = vadd.f32 %v4943, %v5290
      %v5348 = vadd.f32 %v4944, %v5293
      %v5349 = vadd.f32 %v4945, %v5295
      %v5350 = vadd.f32 %v4946, %v5298
      %v5351 = vadd.f32 %v4947, %v5300
      %v5352 = vadd.f32 %v4948, %v5303
      %v5353 = vadd.f32 %v4949, %v5305
      %v5354 = vadd.f32 %v4950, %v5308
      %v5355 = vadd.f32 %v4951, %v5310
      %v5356 = vadd.f32 %v4952, %v5313
      %v5357 = vadd.f32 %v4953, %v5315
      %v5358 = vadd.f32 %v4954, %v5318
      %v5359 = vadd.f32 %v4955, %v5320
      %v5360 = vadd.f32 %v4956, %v5323
      %v5361 = vadd.f32 %v4957, %v5325
      %v5362 = vadd.f32 %v4958, %v5328
      %v5363 = vadd.f32 %v4959, %v5330
      %v5364 = vld [vmem:[%s4007 + $0x8] sm:$0x3]
      %v5365 = vld [vmem:[%s4007 + $0x14] sm:$0x3]
      %v5366 = vld [vmem:[%s4007 + $0x20] sm:$0x3]
      %v5367 = vld [vmem:[%s4007 + $0x2c] sm:$0x3]
      %v5368 = vld [vmem:[%s4007 + $0x38] sm:$0x3]
      %v5369 = vld [vmem:[%s4007 + $0x44] sm:$0x3]
      %v5370 = vld [vmem:[%s4007 + $0x50] sm:$0x3]
      %v5371 = vld [vmem:[%s4007 + $0x5c] sm:$0x3]
      %v5372 = vld [vmem:[%s4007 + $0x68] sm:$0x3]
      %v5373 = vld [vmem:[%s4007 + $0x74] sm:$0x3]
      %v5374 = vld [vmem:[%s4007 + $0x80] sm:$0x3]
      %v5375 = vld [vmem:[%s4007 + $0x8c] sm:$0x3]
      %v5376 = vld [vmem:[%s4007 + $0x98] sm:$0x3]
      %v5377 = vld [vmem:[%s4007 + $0xa4] sm:$0x3]
      %v5378 = vld [vmem:[%s4007 + $0xb0] sm:$0x3]
      %v5379 = vld [vmem:[%s4007 + $0xbc] sm:$0x3]
      %v5381 = vshrl.u32 %v4960, 16
      %v5383 = vrot.slane %v5381, 5
      %v5384 = vshll.u32 %v4960, 16
      %v5386 = vrot.slane %v5384, 6
      %v5387 = vor.u32 %v5383, %v5386
      %v5388 = vrot.slane %v5387, 4
      %v5389 = vrot.slane %v4362, 5
      %v5390 = vrot.slane %v4358, 6
      %v5391 = vor.u32 %v5389, %v5390
      %v5392 = vsel %vm1441, %v5388, %v5391
      %v5393 = vrot.slane %v5391, 4
      %v5395 = vshrl.u32 %v5364, 16
      %v5397 = vrot.slane %v5395, 5
      %v5398 = vshll.u32 %v5364, 16
      %v5400 = vrot.slane %v5398, 6
      %v5401 = vor.u32 %v5397, %v5400
      %v5402 = vsel %vm1441, %v5393, %v5401
      %v5404 = vshrl.u32 %v4961, 16
      %v5406 = vrot.slane %v5404, 5
      %v5407 = vshll.u32 %v4961, 16
      %v5409 = vrot.slane %v5407, 6
      %v5410 = vor.u32 %v5406, %v5409
      %v5411 = vrot.slane %v5410, 4
      %v5412 = vrot.slane %v4386, 5
      %v5413 = vrot.slane %v4382, 6
      %v5414 = vor.u32 %v5412, %v5413
      %v5415 = vsel %vm1441, %v5411, %v5414
      %v5416 = vrot.slane %v5414, 4
      %v5418 = vshrl.u32 %v5365, 16
      %v5420 = vrot.slane %v5418, 5
      %v5421 = vshll.u32 %v5365, 16
      %v5423 = vrot.slane %v5421, 6
      %v5424 = vor.u32 %v5420, %v5423
      %v5425 = vsel %vm1441, %v5416, %v5424
      %v5427 = vshrl.u32 %v4962, 16
      %v5429 = vrot.slane %v5427, 5
      %v5430 = vshll.u32 %v4962, 16
      %v5432 = vrot.slane %v5430, 6
      %v5433 = vor.u32 %v5429, %v5432
      %v5434 = vrot.slane %v5433, 4
      %v5435 = vrot.slane %v4410, 5
      %v5436 = vrot.slane %v4406, 6
      %v5437 = vor.u32 %v5435, %v5436
      %v5438 = vsel %vm1441, %v5434, %v5437
      %v5439 = vrot.slane %v5437, 4
      %v5441 = vshrl.u32 %v5366, 16
      %v5443 = vrot.slane %v5441, 5
      %v5444 = vshll.u32 %v5366, 16
      %v5446 = vrot.slane %v5444, 6
      %v5447 = vor.u32 %v5443, %v5446
      %v5448 = vsel %vm1441, %v5439, %v5447
      %v5450 = vshrl.u32 %v4963, 16
      %v5452 = vrot.slane %v5450, 5
      %v5453 = vshll.u32 %v4963, 16
      %v5455 = vrot.slane %v5453, 6
      %v5456 = vor.u32 %v5452, %v5455
      %v5457 = vrot.slane %v5456, 4
      %v5458 = vrot.slane %v4434, 5
      %v5459 = vrot.slane %v4430, 6
      %v5460 = vor.u32 %v5458, %v5459
      %v5461 = vsel %vm1441, %v5457, %v5460
      %v5462 = vrot.slane %v5460, 4
      %v5464 = vshrl.u32 %v5367, 16
      %v5466 = vrot.slane %v5464, 5
      %v5467 = vshll.u32 %v5367, 16
      %v5469 = vrot.slane %v5467, 6
      %v5470 = vor.u32 %v5466, %v5469
      %v5471 = vsel %vm1441, %v5462, %v5470
      %v5473 = vshrl.u32 %v4964, 16
      %v5475 = vrot.slane %v5473, 5
      %v5476 = vshll.u32 %v4964, 16
      %v5478 = vrot.slane %v5476, 6
      %v5479 = vor.u32 %v5475, %v5478
      %v5480 = vrot.slane %v5479, 4
      %v5481 = vrot.slane %v4458, 5
      %v5482 = vrot.slane %v4454, 6
      %v5483 = vor.u32 %v5481, %v5482
      %v5484 = vsel %vm1441, %v5480, %v5483
      %v5485 = vrot.slane %v5483, 4
      %v5487 = vshrl.u32 %v5368, 16
      %v5489 = vrot.slane %v5487, 5
      %v5490 = vshll.u32 %v5368, 16
      %v5492 = vrot.slane %v5490, 6
      %v5493 = vor.u32 %v5489, %v5492
      %v5494 = vsel %vm1441, %v5485, %v5493
      %v5496 = vshrl.u32 %v4965, 16
      %v5498 = vrot.slane %v5496, 5
      %v5499 = vshll.u32 %v4965, 16
      %v5501 = vrot.slane %v5499, 6
      %v5502 = vor.u32 %v5498, %v5501
      %v5503 = vrot.slane %v5502, 4
      %v5504 = vrot.slane %v4482, 5
      %v5505 = vrot.slane %v4478, 6
      %v5506 = vor.u32 %v5504, %v5505
      %v5507 = vsel %vm1441, %v5503, %v5506
      %v5508 = vrot.slane %v5506, 4
      %v5510 = vshrl.u32 %v5369, 16
      %v5512 = vrot.slane %v5510, 5
      %v5513 = vshll.u32 %v5369, 16
      %v5515 = vrot.slane %v5513, 6
      %v5516 = vor.u32 %v5512, %v5515
      %v5517 = vsel %vm1441, %v5508, %v5516
      %v5519 = vshrl.u32 %v4966, 16
      %v5521 = vrot.slane %v5519, 5
      %v5522 = vshll.u32 %v4966, 16
      %v5524 = vrot.slane %v5522, 6
      %v5525 = vor.u32 %v5521, %v5524
      %v5526 = vrot.slane %v5525, 4
      %v5527 = vrot.slane %v4506, 5
      %v5528 = vrot.slane %v4502, 6
      %v5529 = vor.u32 %v5527, %v5528
      %v5530 = vsel %vm1441, %v5526, %v5529
      %v5531 = vrot.slane %v5529, 4
      %v5533 = vshrl.u32 %v5370, 16
      %v5535 = vrot.slane %v5533, 5
      %v5536 = vshll.u32 %v5370, 16
      %v5538 = vrot.slane %v5536, 6
      %v5539 = vor.u32 %v5535, %v5538
      %v5540 = vsel %vm1441, %v5531, %v5539
      %v5542 = vshrl.u32 %v4967, 16
      %v5544 = vrot.slane %v5542, 5
      %v5545 = vshll.u32 %v4967, 16
      %v5547 = vrot.slane %v5545, 6
      %v5548 = vor.u32 %v5544, %v5547
      %v5549 = vrot.slane %v5548, 4
      %v5550 = vrot.slane %v4530, 5
      %v5551 = vrot.slane %v4526, 6
      %v5552 = vor.u32 %v5550, %v5551
      %v5553 = vsel %vm1441, %v5549, %v5552
      %v5554 = vrot.slane %v5552, 4
      %v5556 = vshrl.u32 %v5371, 16
      %v5558 = vrot.slane %v5556, 5
      %v5559 = vshll.u32 %v5371, 16
      %v5561 = vrot.slane %v5559, 6
      %v5562 = vor.u32 %v5558, %v5561
      %v5563 = vsel %vm1441, %v5554, %v5562
      %v5565 = vshrl.u32 %v4968, 16
      %v5567 = vrot.slane %v5565, 5
      %v5568 = vshll.u32 %v4968, 16
      %v5570 = vrot.slane %v5568, 6
      %v5571 = vor.u32 %v5567, %v5570
      %v5572 = vrot.slane %v5571, 4
      %v5573 = vrot.slane %v4554, 5
      %v5574 = vrot.slane %v4550, 6
      %v5575 = vor.u32 %v5573, %v5574
      %v5576 = vsel %vm1441, %v5572, %v5575
      %v5577 = vrot.slane %v5575, 4
      %v5579 = vshrl.u32 %v5372, 16
      %v5581 = vrot.slane %v5579, 5
      %v5582 = vshll.u32 %v5372, 16
      %v5584 = vrot.slane %v5582, 6
      %v5585 = vor.u32 %v5581, %v5584
      %v5586 = vsel %vm1441, %v5577, %v5585
      %v5588 = vshrl.u32 %v4969, 16
      %v5590 = vrot.slane %v5588, 5
      %v5591 = vshll.u32 %v4969, 16
      %v5593 = vrot.slane %v5591, 6
      %v5594 = vor.u32 %v5590, %v5593
      %v5595 = vrot.slane %v5594, 4
      %v5596 = vrot.slane %v4578, 5
      %v5597 = vrot.slane %v4574, 6
      %v5598 = vor.u32 %v5596, %v5597
      %v5599 = vsel %vm1441, %v5595, %v5598
      %v5600 = vrot.slane %v5598, 4
      %v5602 = vshrl.u32 %v5373, 16
      %v5604 = vrot.slane %v5602, 5
      %v5605 = vshll.u32 %v5373, 16
      %v5607 = vrot.slane %v5605, 6
      %v5608 = vor.u32 %v5604, %v5607
      %v5609 = vsel %vm1441, %v5600, %v5608
      %v5611 = vshrl.u32 %v4970, 16
      %v5613 = vrot.slane %v5611, 5
      %v5614 = vshll.u32 %v4970, 16
      %v5616 = vrot.slane %v5614, 6
      %v5617 = vor.u32 %v5613, %v5616
      %v5618 = vrot.slane %v5617, 4
      %v5619 = vrot.slane %v4602, 5
      %v5620 = vrot.slane %v4598, 6
      %v5621 = vor.u32 %v5619, %v5620
      %v5622 = vsel %vm1441, %v5618, %v5621
      %v5623 = vrot.slane %v5621, 4
      %v5625 = vshrl.u32 %v5374, 16
      %v5627 = vrot.slane %v5625, 5
      %v5628 = vshll.u32 %v5374, 16
      %v5630 = vrot.slane %v5628, 6
      %v5631 = vor.u32 %v5627, %v5630
      %v5632 = vsel %vm1441, %v5623, %v5631
      %v5634 = vshrl.u32 %v4971, 16
      %v5636 = vrot.slane %v5634, 5
      %v5637 = vshll.u32 %v4971, 16
      %v5639 = vrot.slane %v5637, 6
      %v5640 = vor.u32 %v5636, %v5639
      %v5641 = vrot.slane %v5640, 4
      %v5642 = vrot.slane %v4626, 5
      %v5643 = vrot.slane %v4622, 6
      %v5644 = vor.u32 %v5642, %v5643
      %v5645 = vsel %vm1441, %v5641, %v5644
      %v5646 = vrot.slane %v5644, 4
      %v5648 = vshrl.u32 %v5375, 16
      %v5650 = vrot.slane %v5648, 5
      %v5651 = vshll.u32 %v5375, 16
      %v5653 = vrot.slane %v5651, 6
      %v5654 = vor.u32 %v5650, %v5653
      %v5655 = vsel %vm1441, %v5646, %v5654
      %v5657 = vshrl.u32 %v4972, 16
      %v5659 = vrot.slane %v5657, 5
      %v5660 = vshll.u32 %v4972, 16
      %v5662 = vrot.slane %v5660, 6
      %v5663 = vor.u32 %v5659, %v5662
      %v5664 = vrot.slane %v5663, 4
      %v5665 = vrot.slane %v4650, 5
      %v5666 = vrot.slane %v4646, 6
      %v5667 = vor.u32 %v5665, %v5666
      %v5668 = vsel %vm1441, %v5664, %v5667
      %v5669 = vrot.slane %v5667, 4
      %v5671 = vshrl.u32 %v5376, 16
      %v5673 = vrot.slane %v5671, 5
      %v5674 = vshll.u32 %v5376, 16
      %v5676 = vrot.slane %v5674, 6
      %v5677 = vor.u32 %v5673, %v5676
      %v5678 = vsel %vm1441, %v5669, %v5677
      %v5680 = vshrl.u32 %v4973, 16
      %v5682 = vrot.slane %v5680, 5
      %v5683 = vshll.u32 %v4973, 16
      %v5685 = vrot.slane %v5683, 6
      %v5686 = vor.u32 %v5682, %v5685
      %v5687 = vrot.slane %v5686, 4
      %v5688 = vrot.slane %v4674, 5
      %v5689 = vrot.slane %v4670, 6
      %v5690 = vor.u32 %v5688, %v5689
      %v5691 = vsel %vm1441, %v5687, %v5690
      %v5692 = vrot.slane %v5690, 4
      %v5694 = vshrl.u32 %v5377, 16
      %v5696 = vrot.slane %v5694, 5
      %v5697 = vshll.u32 %v5377, 16
      %v5699 = vrot.slane %v5697, 6
      %v5700 = vor.u32 %v5696, %v5699
      %v5701 = vsel %vm1441, %v5692, %v5700
      %v5703 = vshrl.u32 %v4974, 16
      %v5705 = vrot.slane %v5703, 5
      %v5706 = vshll.u32 %v4974, 16
      %v5708 = vrot.slane %v5706, 6
      %v5709 = vor.u32 %v5705, %v5708
      %v5710 = vrot.slane %v5709, 4
      %v5711 = vrot.slane %v4698, 5
      %v5712 = vrot.slane %v4694, 6
      %v5713 = vor.u32 %v5711, %v5712
      %v5714 = vsel %vm1441, %v5710, %v5713
      %v5715 = vrot.slane %v5713, 4
      %v5717 = vshrl.u32 %v5378, 16
      %v5719 = vrot.slane %v5717, 5
      %v5720 = vshll.u32 %v5378, 16
      %v5722 = vrot.slane %v5720, 6
      %v5723 = vor.u32 %v5719, %v5722
      %v5724 = vsel %vm1441, %v5715, %v5723
      %v5726 = vshrl.u32 %v4975, 16
      %v5728 = vrot.slane %v5726, 5
      %v5729 = vshll.u32 %v4975, 16
      %v5731 = vrot.slane %v5729, 6
      %v5732 = vor.u32 %v5728, %v5731
      %v5733 = vrot.slane %v5732, 4
      %v5734 = vrot.slane %v4722, 5
      %v5735 = vrot.slane %v4718, 6
      %v5736 = vor.u32 %v5734, %v5735
      %v5737 = vsel %vm1441, %v5733, %v5736
      %v5738 = vrot.slane %v5736, 4
      %v5740 = vshrl.u32 %v5379, 16
      %v5742 = vrot.slane %v5740, 5
      %v5743 = vshll.u32 %v5379, 16
      %v5745 = vrot.slane %v5743, 6
      %v5746 = vor.u32 %v5742, %v5745
      %v5747 = vsel %vm1441, %v5738, %v5746
      %s5748 = scalar_lea.vmem %s1, 88
      %v5749 = vld [vmem:[%s5748] sm:$0xf]
      %v5750 = vld [vmem:[%s5748 + $0x4] sm:$0x3]
      %v5751 = vunpack.c.l.b16 %v5392
      %v5752 = vunpack.c.l.b16 %v5402
      %v5753 = vunpack.c.l.b16 %v5415
      %v5754 = vunpack.c.l.b16 %v5425
      %v5755 = vunpack.c.l.b16 %v5438
      %v5756 = vunpack.c.l.b16 %v5448
      %v5757 = vunpack.c.l.b16 %v5461
      %v5758 = vunpack.c.l.b16 %v5471
      %v5759 = vunpack.c.l.b16 %v5484
      %v5760 = vunpack.c.l.b16 %v5494
      %v5761 = vunpack.c.l.b16 %v5507
      %v5762 = vunpack.c.l.b16 %v5517
      %v5763 = vunpack.c.l.b16 %v5530
      %v5764 = vunpack.c.l.b16 %v5540
      %v5765 = vunpack.c.l.b16 %v5553
      %v5766 = vunpack.c.l.b16 %v5563
      %v5767 = vunpack.c.l.b16 %v5576
      %v5768 = vunpack.c.l.b16 %v5586
      %v5769 = vunpack.c.l.b16 %v5599
      %v5770 = vunpack.c.l.b16 %v5609
      %v5771 = vunpack.c.l.b16 %v5622
      %v5772 = vunpack.c.l.b16 %v5632
      %v5773 = vunpack.c.l.b16 %v5645
      %v5774 = vunpack.c.l.b16 %v5655
      %v5775 = vunpack.c.l.b16 %v5668
      %v5776 = vunpack.c.l.b16 %v5678
      %v5777 = vunpack.c.l.b16 %v5691
      %v5778 = vunpack.c.l.b16 %v5701
      %v5779 = vunpack.c.l.b16 %v5714
      %v5780 = vunpack.c.l.b16 %v5724
      %v5781 = vunpack.c.l.b16 %v5737
      %v5782 = vunpack.c.l.b16 %v5747
      %v5783 = vpack.c.b16 %v5752, %v5751
      %v5784 = vpack.c.b16 %v5754, %v5753
      %v5785 = vpack.c.b16 %v5756, %v5755
      %v5786 = vpack.c.b16 %v5758, %v5757
      %v5787 = vpack.c.b16 %v5760, %v5759
      %v5788 = vpack.c.b16 %v5762, %v5761
      %v5789 = vpack.c.b16 %v5764, %v5763
      %v5790 = vpack.c.b16 %v5766, %v5765
      %v5791 = vpack.c.b16 %v5768, %v5767
      %v5792 = vpack.c.b16 %v5770, %v5769
      %v5793 = vpack.c.b16 %v5772, %v5771
      %v5794 = vpack.c.b16 %v5774, %v5773
      %v5795 = vpack.c.b16 %v5776, %v5775
      %v5796 = vpack.c.b16 %v5778, %v5777
      %v5797 = vpack.c.b16 %v5780, %v5779
      %v5798 = vpack.c.b16 %v5782, %v5781
      %v5801 = vunpack.c.l.b16 %v5749
      %v5802 = vunpack.c.l.b16 %v5750
      %v5803 = vpack.c.b16 %v5802, %v5801
      %v5805 = vsel %vm665, %v5783, 0
      %v5808 = vsel %vm665, %v5784, 0
      %v5811 = vsel %vm665, %v5785, 0
      %v5814 = vsel %vm665, %v5786, 0
      %v5817 = vsel %vm665, %v5787, 0
      %v5820 = vsel %vm665, %v5788, 0
      %v5823 = vsel %vm665, %v5789, 0
      %v5826 = vsel %vm665, %v5790, 0
      %v5829 = vsel %vm665, %v5791, 0
      %v5832 = vsel %vm665, %v5792, 0
      %v5835 = vsel %vm665, %v5793, 0
      %v5838 = vsel %vm665, %v5794, 0
      %v5841 = vsel %vm665, %v5795, 0
      %v5844 = vsel %vm665, %v5796, 0
      %v5847 = vsel %vm665, %v5797, 0
      %v5850 = vsel %vm665, %v5798, 0
      %v5853 = vsel %vm714, %v5803, 0
      %5855 = vmatpush.bf16.msra.mxu0 0
      %5856 = vmatpush.bf16.msra.mxu0 0
      %5857 = vmatpush.bf16.msra.mxu0 0
      %5858 = vmatpush.bf16.msra.mxu0 0
      %5859 = vmatpush.bf16.msra.mxu0 0
      %5860 = vmatpush.bf16.msra.mxu0 0
      %5861 = vmatpush.bf16.msra.mxu0 0
      %5862 = vmatpush.bf16.msra.mxu0 %v5853
      %5863 = vmatmul.bf16.gmra.mxu0 %v5805
      %v5864 = vpop.f32.mrf.mxu0
      %v5865 = vadd.f32 0.0, %v5864
      %v5866 = vpop.f32.mrf.mxu0
      %v5867 = vadd.f32 0.0, %v5866
      %5868 = vmatmul.bf16.gmra.mxu0 %v5808
      %v5869 = vpop.f32.mrf.mxu0
      %v5870 = vadd.f32 0.0, %v5869
      %v5871 = vpop.f32.mrf.mxu0
      %v5872 = vadd.f32 0.0, %v5871
      %5873 = vmatmul.bf16.gmra.mxu0 %v5811
      %v5874 = vpop.f32.mrf.mxu0
      %v5875 = vadd.f32 0.0, %v5874
      %v5876 = vpop.f32.mrf.mxu0
      %v5877 = vadd.f32 0.0, %v5876
      %5878 = vmatmul.bf16.gmra.mxu0 %v5814
      %v5879 = vpop.f32.mrf.mxu0
      %v5880 = vadd.f32 0.0, %v5879
      %v5881 = vpop.f32.mrf.mxu0
      %v5882 = vadd.f32 0.0, %v5881
      %5883 = vmatmul.bf16.gmra.mxu0 %v5817
      %v5884 = vpop.f32.mrf.mxu0
      %v5885 = vadd.f32 0.0, %v5884
      %v5886 = vpop.f32.mrf.mxu0
      %v5887 = vadd.f32 0.0, %v5886
      %5888 = vmatmul.bf16.gmra.mxu0 %v5820
      %v5889 = vpop.f32.mrf.mxu0
      %v5890 = vadd.f32 0.0, %v5889
      %v5891 = vpop.f32.mrf.mxu0
      %v5892 = vadd.f32 0.0, %v5891
      %5893 = vmatmul.bf16.gmra.mxu0 %v5823
      %v5894 = vpop.f32.mrf.mxu0
      %v5895 = vadd.f32 0.0, %v5894
      %v5896 = vpop.f32.mrf.mxu0
      %v5897 = vadd.f32 0.0, %v5896
      %5898 = vmatmul.bf16.gmra.mxu0 %v5826
      %v5899 = vpop.f32.mrf.mxu0
      %v5900 = vadd.f32 0.0, %v5899
      %v5901 = vpop.f32.mrf.mxu0
      %v5902 = vadd.f32 0.0, %v5901
      %5903 = vmatmul.bf16.gmra.mxu0 %v5829
      %v5904 = vpop.f32.mrf.mxu0
      %v5905 = vadd.f32 0.0, %v5904
      %v5906 = vpop.f32.mrf.mxu0
      %v5907 = vadd.f32 0.0, %v5906
      %5908 = vmatmul.bf16.gmra.mxu0 %v5832
      %v5909 = vpop.f32.mrf.mxu0
      %v5910 = vadd.f32 0.0, %v5909
      %v5911 = vpop.f32.mrf.mxu0
      %v5912 = vadd.f32 0.0, %v5911
      %5913 = vmatmul.bf16.gmra.mxu0 %v5835
      %v5914 = vpop.f32.mrf.mxu0
      %v5915 = vadd.f32 0.0, %v5914
      %v5916 = vpop.f32.mrf.mxu0
      %v5917 = vadd.f32 0.0, %v5916
      %5918 = vmatmul.bf16.gmra.mxu0 %v5838
      %v5919 = vpop.f32.mrf.mxu0
      %v5920 = vadd.f32 0.0, %v5919
      %v5921 = vpop.f32.mrf.mxu0
      %v5922 = vadd.f32 0.0, %v5921
      %5923 = vmatmul.bf16.gmra.mxu0 %v5841
      %v5924 = vpop.f32.mrf.mxu0
      %v5925 = vadd.f32 0.0, %v5924
      %v5926 = vpop.f32.mrf.mxu0
      %v5927 = vadd.f32 0.0, %v5926
      %5928 = vmatmul.bf16.gmra.mxu0 %v5844
      %v5929 = vpop.f32.mrf.mxu0
      %v5930 = vadd.f32 0.0, %v5929
      %v5931 = vpop.f32.mrf.mxu0
      %v5932 = vadd.f32 0.0, %v5931
      %5933 = vmatmul.bf16.gmra.mxu0 %v5847
      %v5934 = vpop.f32.mrf.mxu0
      %v5935 = vadd.f32 0.0, %v5934
      %v5936 = vpop.f32.mrf.mxu0
      %v5937 = vadd.f32 0.0, %v5936
      %5938 = vmatmul.bf16.gmra.mxu0 %v5850
      %v5939 = vpop.f32.mrf.mxu0
      %v5940 = vadd.f32 0.0, %v5939
      %v5941 = vpop.f32.mrf.mxu0
      %v5942 = vadd.f32 0.0, %v5941
      %5943 = vdwg.mxu0
      %v5944 = vadd.f32 %v5332, %v5865
      %v5945 = vadd.f32 %v5333, %v5867
      %v5946 = vadd.f32 %v5334, %v5870
      %v5947 = vadd.f32 %v5335, %v5872
      %v5948 = vadd.f32 %v5336, %v5875
      %v5949 = vadd.f32 %v5337, %v5877
      %v5950 = vadd.f32 %v5338, %v5880
      %v5951 = vadd.f32 %v5339, %v5882
      %v5952 = vadd.f32 %v5340, %v5885
      %v5953 = vadd.f32 %v5341, %v5887
      %v5954 = vadd.f32 %v5342, %v5890
      %v5955 = vadd.f32 %v5343, %v5892
      %v5956 = vadd.f32 %v5344, %v5895
      %v5957 = vadd.f32 %v5345, %v5897
      %v5958 = vadd.f32 %v5346, %v5900
      %v5959 = vadd.f32 %v5347, %v5902
      %v5960 = vadd.f32 %v5348, %v5905
      %v5961 = vadd.f32 %v5349, %v5907
      %v5962 = vadd.f32 %v5350, %v5910
      %v5963 = vadd.f32 %v5351, %v5912
      %v5964 = vadd.f32 %v5352, %v5915
      %v5965 = vadd.f32 %v5353, %v5917
      %v5966 = vadd.f32 %v5354, %v5920
      %v5967 = vadd.f32 %v5355, %v5922
      %v5968 = vadd.f32 %v5356, %v5925
      %v5969 = vadd.f32 %v5357, %v5927
      %v5970 = vadd.f32 %v5358, %v5930
      %v5971 = vadd.f32 %v5359, %v5932
      %v5972 = vadd.f32 %v5360, %v5935
      %v5973 = vadd.f32 %v5361, %v5937
      %v5974 = vadd.f32 %v5362, %v5940
      %v5975 = vadd.f32 %v5363, %v5942
      %s5976 = scalar_lea.vmem %s165, 36
      %v5977 = vld [vmem:[%s5976] sm:$0xf]
      %v5978 = vld [vmem:[%s5976 + $0x4] sm:$0xf]
      %v5979 = vld [vmem:[%s5976 + $0xc] sm:$0xf]
      %v5980 = vld [vmem:[%s5976 + $0x10] sm:$0xf]
      %v5981 = vld [vmem:[%s5976 + $0x18] sm:$0xf]
      %v5982 = vld [vmem:[%s5976 + $0x1c] sm:$0xf]
      %v5983 = vld [vmem:[%s5976 + $0x24] sm:$0xf]
      %v5984 = vld [vmem:[%s5976 + $0x28] sm:$0xf]
      %v5985 = vld [vmem:[%s5976 + $0x30] sm:$0xf]
      %v5986 = vld [vmem:[%s5976 + $0x34] sm:$0xf]
      %v5987 = vld [vmem:[%s5976 + $0x3c] sm:$0xf]
      %v5988 = vld [vmem:[%s5976 + $0x40] sm:$0xf]
      %v5989 = vld [vmem:[%s5976 + $0x48] sm:$0xf]
      %v5990 = vld [vmem:[%s5976 + $0x4c] sm:$0xf]
      %v5991 = vld [vmem:[%s5976 + $0x54] sm:$0xf]
      %v5992 = vld [vmem:[%s5976 + $0x58] sm:$0xf]
      %v5993 = vld [vmem:[%s5976 + $0x60] sm:$0xf]
      %v5994 = vld [vmem:[%s5976 + $0x64] sm:$0xf]
      %v5995 = vld [vmem:[%s5976 + $0x6c] sm:$0xf]
      %v5996 = vld [vmem:[%s5976 + $0x70] sm:$0xf]
      %v5997 = vld [vmem:[%s5976 + $0x78] sm:$0xf]
      %v5998 = vld [vmem:[%s5976 + $0x7c] sm:$0xf]
      %v5999 = vld [vmem:[%s5976 + $0x84] sm:$0xf]
      %v6000 = vld [vmem:[%s5976 + $0x88] sm:$0xf]
      %v6001 = vld [vmem:[%s5976 + $0x90] sm:$0xf]
      %v6002 = vld [vmem:[%s5976 + $0x94] sm:$0xf]
      %v6003 = vld [vmem:[%s5976 + $0x9c] sm:$0xf]
      %v6004 = vld [vmem:[%s5976 + $0xa0] sm:$0xf]
      %v6005 = vld [vmem:[%s5976 + $0xa8] sm:$0xf]
      %v6006 = vld [vmem:[%s5976 + $0xac] sm:$0xf]
      %v6007 = vld [vmem:[%s5976 + $0xb4] sm:$0xf]
      %v6008 = vld [vmem:[%s5976 + $0xb8] sm:$0xf]
      %s6009 = scalar_lea.vmem %s1, 96
      %v6010 = vld [vmem:[%s6009] sm:$0xf]
      %v6011 = vld [vmem:[%s6009 + $0x4] sm:$0x3]
      %v6044 = vunpack.c.l.b16 %v5977
      %v6045 = vunpack.c.l.b16 %v5978
      %v6046 = vunpack.c.l.b16 %v5979
      %v6047 = vunpack.c.l.b16 %v5980
      %v6048 = vunpack.c.l.b16 %v5981
      %v6049 = vunpack.c.l.b16 %v5982
      %v6050 = vunpack.c.l.b16 %v5983
      %v6051 = vunpack.c.l.b16 %v5984
      %v6052 = vunpack.c.l.b16 %v5985
      %v6053 = vunpack.c.l.b16 %v5986
      %v6054 = vunpack.c.l.b16 %v5987
      %v6055 = vunpack.c.l.b16 %v5988
      %v6056 = vunpack.c.l.b16 %v5989
      %v6057 = vunpack.c.l.b16 %v5990
      %v6058 = vunpack.c.l.b16 %v5991
      %v6059 = vunpack.c.l.b16 %v5992
      %v6060 = vunpack.c.l.b16 %v5993
      %v6061 = vunpack.c.l.b16 %v5994
      %v6062 = vunpack.c.l.b16 %v5995
      %v6063 = vunpack.c.l.b16 %v5996
      %v6064 = vunpack.c.l.b16 %v5997
      %v6065 = vunpack.c.l.b16 %v5998
      %v6066 = vunpack.c.l.b16 %v5999
      %v6067 = vunpack.c.l.b16 %v6000
      %v6068 = vunpack.c.l.b16 %v6001
      %v6069 = vunpack.c.l.b16 %v6002
      %v6070 = vunpack.c.l.b16 %v6003
      %v6071 = vunpack.c.l.b16 %v6004
      %v6072 = vunpack.c.l.b16 %v6005
      %v6073 = vunpack.c.l.b16 %v6006
      %v6074 = vunpack.c.l.b16 %v6007
      %v6075 = vunpack.c.l.b16 %v6008
      %v6076 = vpack.c.b16 %v6045, %v6044
      %v6077 = vpack.c.b16 %v6047, %v6046
      %v6078 = vpack.c.b16 %v6049, %v6048
      %v6079 = vpack.c.b16 %v6051, %v6050
      %v6080 = vpack.c.b16 %v6053, %v6052
      %v6081 = vpack.c.b16 %v6055, %v6054
      %v6082 = vpack.c.b16 %v6057, %v6056
      %v6083 = vpack.c.b16 %v6059, %v6058
      %v6084 = vpack.c.b16 %v6061, %v6060
      %v6085 = vpack.c.b16 %v6063, %v6062
      %v6086 = vpack.c.b16 %v6065, %v6064
      %v6087 = vpack.c.b16 %v6067, %v6066
      %v6088 = vpack.c.b16 %v6069, %v6068
      %v6089 = vpack.c.b16 %v6071, %v6070
      %v6090 = vpack.c.b16 %v6073, %v6072
      %v6091 = vpack.c.b16 %v6075, %v6074
      %v6094 = vunpack.c.l.b16 %v6010
      %v6095 = vunpack.c.l.b16 %v6011
      %v6096 = vpack.c.b16 %v6095, %v6094
      %v6098 = vsel %vm665, %v6076, 0
      %v6101 = vsel %vm665, %v6077, 0
      %v6104 = vsel %vm665, %v6078, 0
      %v6107 = vsel %vm665, %v6079, 0
      %v6110 = vsel %vm665, %v6080, 0
      %v6113 = vsel %vm665, %v6081, 0
      %v6116 = vsel %vm665, %v6082, 0
      %v6119 = vsel %vm665, %v6083, 0
      %v6122 = vsel %vm665, %v6084, 0
      %v6125 = vsel %vm665, %v6085, 0
      %v6128 = vsel %vm665, %v6086, 0
      %v6131 = vsel %vm665, %v6087, 0
      %v6134 = vsel %vm665, %v6088, 0
      %v6137 = vsel %vm665, %v6089, 0
      %v6140 = vsel %vm665, %v6090, 0
      %v6143 = vsel %vm665, %v6091, 0
      %v6146 = vsel %vm714, %v6096, 0
      %6148 = vmatpush.bf16.msra.mxu0 0
      %6149 = vmatpush.bf16.msra.mxu0 0
      %6150 = vmatpush.bf16.msra.mxu0 0
      %6151 = vmatpush.bf16.msra.mxu0 0
      %6152 = vmatpush.bf16.msra.mxu0 0
      %6153 = vmatpush.bf16.msra.mxu0 0
      %6154 = vmatpush.bf16.msra.mxu0 0
      %6155 = vmatpush.bf16.msra.mxu0 %v6146
      %6156 = vmatmul.bf16.gmra.mxu0 %v6098
      %v6157 = vpop.f32.mrf.mxu0
      %v6158 = vadd.f32 0.0, %v6157
      %v6159 = vpop.f32.mrf.mxu0
      %v6160 = vadd.f32 0.0, %v6159
      %6161 = vmatmul.bf16.gmra.mxu0 %v6101
      %v6162 = vpop.f32.mrf.mxu0
      %v6163 = vadd.f32 0.0, %v6162
      %v6164 = vpop.f32.mrf.mxu0
      %v6165 = vadd.f32 0.0, %v6164
      %6166 = vmatmul.bf16.gmra.mxu0 %v6104
      %v6167 = vpop.f32.mrf.mxu0
      %v6168 = vadd.f32 0.0, %v6167
      %v6169 = vpop.f32.mrf.mxu0
      %v6170 = vadd.f32 0.0, %v6169
      %6171 = vmatmul.bf16.gmra.mxu0 %v6107
      %v6172 = vpop.f32.mrf.mxu0
      %v6173 = vadd.f32 0.0, %v6172
      %v6174 = vpop.f32.mrf.mxu0
      %v6175 = vadd.f32 0.0, %v6174
      %6176 = vmatmul.bf16.gmra.mxu0 %v6110
      %v6177 = vpop.f32.mrf.mxu0
      %v6178 = vadd.f32 0.0, %v6177
      %v6179 = vpop.f32.mrf.mxu0
      %v6180 = vadd.f32 0.0, %v6179
      %6181 = vmatmul.bf16.gmra.mxu0 %v6113
      %v6182 = vpop.f32.mrf.mxu0
      %v6183 = vadd.f32 0.0, %v6182
      %v6184 = vpop.f32.mrf.mxu0
      %v6185 = vadd.f32 0.0, %v6184
      %6186 = vmatmul.bf16.gmra.mxu0 %v6116
      %v6187 = vpop.f32.mrf.mxu0
      %v6188 = vadd.f32 0.0, %v6187
      %v6189 = vpop.f32.mrf.mxu0
      %v6190 = vadd.f32 0.0, %v6189
      %6191 = vmatmul.bf16.gmra.mxu0 %v6119
      %v6192 = vpop.f32.mrf.mxu0
      %v6193 = vadd.f32 0.0, %v6192
      %v6194 = vpop.f32.mrf.mxu0
      %v6195 = vadd.f32 0.0, %v6194
      %6196 = vmatmul.bf16.gmra.mxu0 %v6122
      %v6197 = vpop.f32.mrf.mxu0
      %v6198 = vadd.f32 0.0, %v6197
      %v6199 = vpop.f32.mrf.mxu0
      %v6200 = vadd.f32 0.0, %v6199
      %6201 = vmatmul.bf16.gmra.mxu0 %v6125
      %v6202 = vpop.f32.mrf.mxu0
      %v6203 = vadd.f32 0.0, %v6202
      %v6204 = vpop.f32.mrf.mxu0
      %v6205 = vadd.f32 0.0, %v6204
      %6206 = vmatmul.bf16.gmra.mxu0 %v6128
      %v6207 = vpop.f32.mrf.mxu0
      %v6208 = vadd.f32 0.0, %v6207
      %v6209 = vpop.f32.mrf.mxu0
      %v6210 = vadd.f32 0.0, %v6209
      %6211 = vmatmul.bf16.gmra.mxu0 %v6131
      %v6212 = vpop.f32.mrf.mxu0
      %v6213 = vadd.f32 0.0, %v6212
      %v6214 = vpop.f32.mrf.mxu0
      %v6215 = vadd.f32 0.0, %v6214
      %6216 = vmatmul.bf16.gmra.mxu0 %v6134
      %v6217 = vpop.f32.mrf.mxu0
      %v6218 = vadd.f32 0.0, %v6217
      %v6219 = vpop.f32.mrf.mxu0
      %v6220 = vadd.f32 0.0, %v6219
      %6221 = vmatmul.bf16.gmra.mxu0 %v6137
      %v6222 = vpop.f32.mrf.mxu0
      %v6223 = vadd.f32 0.0, %v6222
      %v6224 = vpop.f32.mrf.mxu0
      %v6225 = vadd.f32 0.0, %v6224
      %6226 = vmatmul.bf16.gmra.mxu0 %v6140
      %v6227 = vpop.f32.mrf.mxu0
      %v6228 = vadd.f32 0.0, %v6227
      %v6229 = vpop.f32.mrf.mxu0
      %v6230 = vadd.f32 0.0, %v6229
      %6231 = vmatmul.bf16.gmra.mxu0 %v6143
      %v6232 = vpop.f32.mrf.mxu0
      %v6233 = vadd.f32 0.0, %v6232
      %v6234 = vpop.f32.mrf.mxu0
      %v6235 = vadd.f32 0.0, %v6234
      %6236 = vdwg.mxu0
      %v6237 = vadd.f32 %v5944, %v6158
      %v6238 = vadd.f32 %v5945, %v6160
      %v6239 = vadd.f32 %v5946, %v6163
      %v6240 = vadd.f32 %v5947, %v6165
      %v6241 = vadd.f32 %v5948, %v6168
      %v6242 = vadd.f32 %v5949, %v6170
      %v6243 = vadd.f32 %v5950, %v6173
      %v6244 = vadd.f32 %v5951, %v6175
      %v6245 = vadd.f32 %v5952, %v6178
      %v6246 = vadd.f32 %v5953, %v6180
      %v6247 = vadd.f32 %v5954, %v6183
      %v6248 = vadd.f32 %v5955, %v6185
      %v6249 = vadd.f32 %v5956, %v6188
      %v6250 = vadd.f32 %v5957, %v6190
      %v6251 = vadd.f32 %v5958, %v6193
      %v6252 = vadd.f32 %v5959, %v6195
      %v6253 = vadd.f32 %v5960, %v6198
      %v6254 = vadd.f32 %v5961, %v6200
      %v6255 = vadd.f32 %v5962, %v6203
      %v6256 = vadd.f32 %v5963, %v6205
      %v6257 = vadd.f32 %v5964, %v6208
      %v6258 = vadd.f32 %v5965, %v6210
      %v6259 = vadd.f32 %v5966, %v6213
      %v6260 = vadd.f32 %v5967, %v6215
      %v6261 = vadd.f32 %v5968, %v6218
      %v6262 = vadd.f32 %v5969, %v6220
      %v6263 = vadd.f32 %v5970, %v6223
      %v6264 = vadd.f32 %v5971, %v6225
      %v6265 = vadd.f32 %v5972, %v6228
      %v6266 = vadd.f32 %v5973, %v6230
      %v6267 = vadd.f32 %v5974, %v6233
      %v6268 = vadd.f32 %v5975, %v6235
      %v6269 = vld [vmem:[%s5976] sm:$0xf]
      %v6270 = vld [vmem:[%s5976 + $0x4] sm:$0xf]
      %v6271 = vld [vmem:[%s5976 + $0x8] sm:$0x1]
      %v6272 = vld [vmem:[%s5976 + $0xc] sm:$0xf]
      %v6273 = vld [vmem:[%s5976 + $0x10] sm:$0xf]
      %v6274 = vld [vmem:[%s5976 + $0x14] sm:$0x1]
      %v6275 = vld [vmem:[%s5976 + $0x18] sm:$0xf]
      %v6276 = vld [vmem:[%s5976 + $0x1c] sm:$0xf]
      %v6277 = vld [vmem:[%s5976 + $0x20] sm:$0x1]
      %v6278 = vld [vmem:[%s5976 + $0x24] sm:$0xf]
      %v6279 = vld [vmem:[%s5976 + $0x28] sm:$0xf]
      %v6280 = vld [vmem:[%s5976 + $0x2c] sm:$0x1]
      %v6281 = vld [vmem:[%s5976 + $0x30] sm:$0xf]
      %v6282 = vld [vmem:[%s5976 + $0x34] sm:$0xf]
      %v6283 = vld [vmem:[%s5976 + $0x38] sm:$0x1]
      %v6284 = vld [vmem:[%s5976 + $0x3c] sm:$0xf]
      %v6285 = vld [vmem:[%s5976 + $0x40] sm:$0xf]
      %v6286 = vld [vmem:[%s5976 + $0x44] sm:$0x1]
      %v6287 = vld [vmem:[%s5976 + $0x48] sm:$0xf]
      %v6288 = vld [vmem:[%s5976 + $0x4c] sm:$0xf]
      %v6289 = vld [vmem:[%s5976 + $0x50] sm:$0x1]
      %v6290 = vld [vmem:[%s5976 + $0x54] sm:$0xf]
      %v6291 = vld [vmem:[%s5976 + $0x58] sm:$0xf]
      %v6292 = vld [vmem:[%s5976 + $0x5c] sm:$0x1]
      %v6293 = vld [vmem:[%s5976 + $0x60] sm:$0xf]
      %v6294 = vld [vmem:[%s5976 + $0x64] sm:$0xf]
      %v6295 = vld [vmem:[%s5976 + $0x68] sm:$0x1]
      %v6296 = vld [vmem:[%s5976 + $0x6c] sm:$0xf]
      %v6297 = vld [vmem:[%s5976 + $0x70] sm:$0xf]
      %v6298 = vld [vmem:[%s5976 + $0x74] sm:$0x1]
      %v6299 = vld [vmem:[%s5976 + $0x78] sm:$0xf]
      %v6300 = vld [vmem:[%s5976 + $0x7c] sm:$0xf]
      %v6301 = vld [vmem:[%s5976 + $0x80] sm:$0x1]
      %v6302 = vld [vmem:[%s5976 + $0x84] sm:$0xf]
      %v6303 = vld [vmem:[%s5976 + $0x88] sm:$0xf]
      %v6304 = vld [vmem:[%s5976 + $0x8c] sm:$0x1]
      %v6305 = vld [vmem:[%s5976 + $0x90] sm:$0xf]
      %v6306 = vld [vmem:[%s5976 + $0x94] sm:$0xf]
      %v6307 = vld [vmem:[%s5976 + $0x98] sm:$0x1]
      %v6308 = vld [vmem:[%s5976 + $0x9c] sm:$0xf]
      %v6309 = vld [vmem:[%s5976 + $0xa0] sm:$0xf]
      %v6310 = vld [vmem:[%s5976 + $0xa4] sm:$0x1]
      %v6311 = vld [vmem:[%s5976 + $0xa8] sm:$0xf]
      %v6312 = vld [vmem:[%s5976 + $0xac] sm:$0xf]
      %v6313 = vld [vmem:[%s5976 + $0xb0] sm:$0x1]
      %v6314 = vld [vmem:[%s5976 + $0xb4] sm:$0xf]
      %v6315 = vld [vmem:[%s5976 + $0xb8] sm:$0xf]
      %v6316 = vld [vmem:[%s5976 + $0xbc] sm:$0x1]
      %v6318 = vshrl.u32 %v6269, 16
      %v6320 = vrot.slane %v6318, 4
      %v6321 = vshll.u32 %v6269, 16
      %v6323 = vrot.slane %v6321, 5
      %v6324 = vor.u32 %v6320, %v6323
      %v6325 = vrot.slane %v6324, 4
      %v6327 = vshll.u32 %v6270, 16
      %v6329 = vrot.slane %v6327, 5
      %v6330 = vsel %vm224, %v6325, %v6329
      %v6331 = vshrl.u32 %v6270, 16
      %v6333 = vrot.slane %v6331, 4
      %v6334 = vor.u32 %v6333, %v6329
      %v6335 = vrot.slane %v6334, 4
      %v6337 = vshll.u32 %v6271, 16
      %v6339 = vrot.slane %v6337, 5
      %v6340 = vsel %vm224, %v6335, %v6339
      %v6342 = vshrl.u32 %v6272, 16
      %v6344 = vrot.slane %v6342, 4
      %v6345 = vshll.u32 %v6272, 16
      %v6347 = vrot.slane %v6345, 5
      %v6348 = vor.u32 %v6344, %v6347
      %v6349 = vrot.slane %v6348, 4
      %v6351 = vshll.u32 %v6273, 16
      %v6353 = vrot.slane %v6351, 5
      %v6354 = vsel %vm224, %v6349, %v6353
      %v6355 = vshrl.u32 %v6273, 16
      %v6357 = vrot.slane %v6355, 4
      %v6358 = vor.u32 %v6357, %v6353
      %v6359 = vrot.slane %v6358, 4
      %v6361 = vshll.u32 %v6274, 16
      %v6363 = vrot.slane %v6361, 5
      %v6364 = vsel %vm224, %v6359, %v6363
      %v6366 = vshrl.u32 %v6275, 16
      %v6368 = vrot.slane %v6366, 4
      %v6369 = vshll.u32 %v6275, 16
      %v6371 = vrot.slane %v6369, 5
      %v6372 = vor.u32 %v6368, %v6371
      %v6373 = vrot.slane %v6372, 4
      %v6375 = vshll.u32 %v6276, 16
      %v6377 = vrot.slane %v6375, 5
      %v6378 = vsel %vm224, %v6373, %v6377
      %v6379 = vshrl.u32 %v6276, 16
      %v6381 = vrot.slane %v6379, 4
      %v6382 = vor.u32 %v6381, %v6377
      %v6383 = vrot.slane %v6382, 4
      %v6385 = vshll.u32 %v6277, 16
      %v6387 = vrot.slane %v6385, 5
      %v6388 = vsel %vm224, %v6383, %v6387
      %v6390 = vshrl.u32 %v6278, 16
      %v6392 = vrot.slane %v6390, 4
      %v6393 = vshll.u32 %v6278, 16
      %v6395 = vrot.slane %v6393, 5
      %v6396 = vor.u32 %v6392, %v6395
      %v6397 = vrot.slane %v6396, 4
      %v6399 = vshll.u32 %v6279, 16
      %v6401 = vrot.slane %v6399, 5
      %v6402 = vsel %vm224, %v6397, %v6401
      %v6403 = vshrl.u32 %v6279, 16
      %v6405 = vrot.slane %v6403, 4
      %v6406 = vor.u32 %v6405, %v6401
      %v6407 = vrot.slane %v6406, 4
      %v6409 = vshll.u32 %v6280, 16
      %v6411 = vrot.slane %v6409, 5
      %v6412 = vsel %vm224, %v6407, %v6411
      %v6414 = vshrl.u32 %v6281, 16
      %v6416 = vrot.slane %v6414, 4
      %v6417 = vshll.u32 %v6281, 16
      %v6419 = vrot.slane %v6417, 5
      %v6420 = vor.u32 %v6416, %v6419
      %v6421 = vrot.slane %v6420, 4
      %v6423 = vshll.u32 %v6282, 16
      %v6425 = vrot.slane %v6423, 5
      %v6426 = vsel %vm224, %v6421, %v6425
      %v6427 = vshrl.u32 %v6282, 16
      %v6429 = vrot.slane %v6427, 4
      %v6430 = vor.u32 %v6429, %v6425
      %v6431 = vrot.slane %v6430, 4
      %v6433 = vshll.u32 %v6283, 16
      %v6435 = vrot.slane %v6433, 5
      %v6436 = vsel %vm224, %v6431, %v6435
      %v6438 = vshrl.u32 %v6284, 16
      %v6440 = vrot.slane %v6438, 4
      %v6441 = vshll.u32 %v6284, 16
      %v6443 = vrot.slane %v6441, 5
      %v6444 = vor.u32 %v6440, %v6443
      %v6445 = vrot.slane %v6444, 4
      %v6447 = vshll.u32 %v6285, 16
      %v6449 = vrot.slane %v6447, 5
      %v6450 = vsel %vm224, %v6445, %v6449
      %v6451 = vshrl.u32 %v6285, 16
      %v6453 = vrot.slane %v6451, 4
      %v6454 = vor.u32 %v6453, %v6449
      %v6455 = vrot.slane %v6454, 4
      %v6457 = vshll.u32 %v6286, 16
      %v6459 = vrot.slane %v6457, 5
      %v6460 = vsel %vm224, %v6455, %v6459
      %v6462 = vshrl.u32 %v6287, 16
      %v6464 = vrot.slane %v6462, 4
      %v6465 = vshll.u32 %v6287, 16
      %v6467 = vrot.slane %v6465, 5
      %v6468 = vor.u32 %v6464, %v6467
      %v6469 = vrot.slane %v6468, 4
      %v6471 = vshll.u32 %v6288, 16
      %v6473 = vrot.slane %v6471, 5
      %v6474 = vsel %vm224, %v6469, %v6473
      %v6475 = vshrl.u32 %v6288, 16
      %v6477 = vrot.slane %v6475, 4
      %v6478 = vor.u32 %v6477, %v6473
      %v6479 = vrot.slane %v6478, 4
      %v6481 = vshll.u32 %v6289, 16
      %v6483 = vrot.slane %v6481, 5
      %v6484 = vsel %vm224, %v6479, %v6483
      %v6486 = vshrl.u32 %v6290, 16
      %v6488 = vrot.slane %v6486, 4
      %v6489 = vshll.u32 %v6290, 16
      %v6491 = vrot.slane %v6489, 5
      %v6492 = vor.u32 %v6488, %v6491
      %v6493 = vrot.slane %v6492, 4
      %v6495 = vshll.u32 %v6291, 16
      %v6497 = vrot.slane %v6495, 5
      %v6498 = vsel %vm224, %v6493, %v6497
      %v6499 = vshrl.u32 %v6291, 16
      %v6501 = vrot.slane %v6499, 4
      %v6502 = vor.u32 %v6501, %v6497
      %v6503 = vrot.slane %v6502, 4
      %v6505 = vshll.u32 %v6292, 16
      %v6507 = vrot.slane %v6505, 5
      %v6508 = vsel %vm224, %v6503, %v6507
      %v6510 = vshrl.u32 %v6293, 16
      %v6512 = vrot.slane %v6510, 4
      %v6513 = vshll.u32 %v6293, 16
      %v6515 = vrot.slane %v6513, 5
      %v6516 = vor.u32 %v6512, %v6515
      %v6517 = vrot.slane %v6516, 4
      %v6519 = vshll.u32 %v6294, 16
      %v6521 = vrot.slane %v6519, 5
      %v6522 = vsel %vm224, %v6517, %v6521
      %v6523 = vshrl.u32 %v6294, 16
      %v6525 = vrot.slane %v6523, 4
      %v6526 = vor.u32 %v6525, %v6521
      %v6527 = vrot.slane %v6526, 4
      %v6529 = vshll.u32 %v6295, 16
      %v6531 = vrot.slane %v6529, 5
      %v6532 = vsel %vm224, %v6527, %v6531
      %v6534 = vshrl.u32 %v6296, 16
      %v6536 = vrot.slane %v6534, 4
      %v6537 = vshll.u32 %v6296, 16
      %v6539 = vrot.slane %v6537, 5
      %v6540 = vor.u32 %v6536, %v6539
      %v6541 = vrot.slane %v6540, 4
      %v6543 = vshll.u32 %v6297, 16
      %v6545 = vrot.slane %v6543, 5
      %v6546 = vsel %vm224, %v6541, %v6545
      %v6547 = vshrl.u32 %v6297, 16
      %v6549 = vrot.slane %v6547, 4
      %v6550 = vor.u32 %v6549, %v6545
      %v6551 = vrot.slane %v6550, 4
      %v6553 = vshll.u32 %v6298, 16
      %v6555 = vrot.slane %v6553, 5
      %v6556 = vsel %vm224, %v6551, %v6555
      %v6558 = vshrl.u32 %v6299, 16
      %v6560 = vrot.slane %v6558, 4
      %v6561 = vshll.u32 %v6299, 16
      %v6563 = vrot.slane %v6561, 5
      %v6564 = vor.u32 %v6560, %v6563
      %v6565 = vrot.slane %v6564, 4
      %v6567 = vshll.u32 %v6300, 16
      %v6569 = vrot.slane %v6567, 5
      %v6570 = vsel %vm224, %v6565, %v6569
      %v6571 = vshrl.u32 %v6300, 16
      %v6573 = vrot.slane %v6571, 4
      %v6574 = vor.u32 %v6573, %v6569
      %v6575 = vrot.slane %v6574, 4
      %v6577 = vshll.u32 %v6301, 16
      %v6579 = vrot.slane %v6577, 5
      %v6580 = vsel %vm224, %v6575, %v6579
      %v6582 = vshrl.u32 %v6302, 16
      %v6584 = vrot.slane %v6582, 4
      %v6585 = vshll.u32 %v6302, 16
      %v6587 = vrot.slane %v6585, 5
      %v6588 = vor.u32 %v6584, %v6587
      %v6589 = vrot.slane %v6588, 4
      %v6591 = vshll.u32 %v6303, 16
      %v6593 = vrot.slane %v6591, 5
      %v6594 = vsel %vm224, %v6589, %v6593
      %v6595 = vshrl.u32 %v6303, 16
      %v6597 = vrot.slane %v6595, 4
      %v6598 = vor.u32 %v6597, %v6593
      %v6599 = vrot.slane %v6598, 4
      %v6601 = vshll.u32 %v6304, 16
      %v6603 = vrot.slane %v6601, 5
      %v6604 = vsel %vm224, %v6599, %v6603
      %v6606 = vshrl.u32 %v6305, 16
      %v6608 = vrot.slane %v6606, 4
      %v6609 = vshll.u32 %v6305, 16
      %v6611 = vrot.slane %v6609, 5
      %v6612 = vor.u32 %v6608, %v6611
      %v6613 = vrot.slane %v6612, 4
      %v6615 = vshll.u32 %v6306, 16
      %v6617 = vrot.slane %v6615, 5
      %v6618 = vsel %vm224, %v6613, %v6617
      %v6619 = vshrl.u32 %v6306, 16
      %v6621 = vrot.slane %v6619, 4
      %v6622 = vor.u32 %v6621, %v6617
      %v6623 = vrot.slane %v6622, 4
      %v6625 = vshll.u32 %v6307, 16
      %v6627 = vrot.slane %v6625, 5
      %v6628 = vsel %vm224, %v6623, %v6627
      %v6630 = vshrl.u32 %v6308, 16
      %v6632 = vrot.slane %v6630, 4
      %v6633 = vshll.u32 %v6308, 16
      %v6635 = vrot.slane %v6633, 5
      %v6636 = vor.u32 %v6632, %v6635
      %v6637 = vrot.slane %v6636, 4
      %v6639 = vshll.u32 %v6309, 16
      %v6641 = vrot.slane %v6639, 5
      %v6642 = vsel %vm224, %v6637, %v6641
      %v6643 = vshrl.u32 %v6309, 16
      %v6645 = vrot.slane %v6643, 4
      %v6646 = vor.u32 %v6645, %v6641
      %v6647 = vrot.slane %v6646, 4
      %v6649 = vshll.u32 %v6310, 16
      %v6651 = vrot.slane %v6649, 5
      %v6652 = vsel %vm224, %v6647, %v6651
      %v6654 = vshrl.u32 %v6311, 16
      %v6656 = vrot.slane %v6654, 4
      %v6657 = vshll.u32 %v6311, 16
      %v6659 = vrot.slane %v6657, 5
      %v6660 = vor.u32 %v6656, %v6659
      %v6661 = vrot.slane %v6660, 4
      %v6663 = vshll.u32 %v6312, 16
      %v6665 = vrot.slane %v6663, 5
      %v6666 = vsel %vm224, %v6661, %v6665
      %v6667 = vshrl.u32 %v6312, 16
      %v6669 = vrot.slane %v6667, 4
      %v6670 = vor.u32 %v6669, %v6665
      %v6671 = vrot.slane %v6670, 4
      %v6673 = vshll.u32 %v6313, 16
      %v6675 = vrot.slane %v6673, 5
      %v6676 = vsel %vm224, %v6671, %v6675
      %v6678 = vshrl.u32 %v6314, 16
      %v6680 = vrot.slane %v6678, 4
      %v6681 = vshll.u32 %v6314, 16
      %v6683 = vrot.slane %v6681, 5
      %v6684 = vor.u32 %v6680, %v6683
      %v6685 = vrot.slane %v6684, 4
      %v6687 = vshll.u32 %v6315, 16
      %v6689 = vrot.slane %v6687, 5
      %v6690 = vsel %vm224, %v6685, %v6689
      %v6691 = vshrl.u32 %v6315, 16
      %v6693 = vrot.slane %v6691, 4
      %v6694 = vor.u32 %v6693, %v6689
      %v6695 = vrot.slane %v6694, 4
      %v6697 = vshll.u32 %v6316, 16
      %v6699 = vrot.slane %v6697, 5
      %v6700 = vsel %vm224, %v6695, %v6699
      %s6701 = scalar_lea.vmem %s1, 104
      %v6702 = vld [vmem:[%s6701] sm:$0xf]
      %v6703 = vld [vmem:[%s6701 + $0x4] sm:$0x3]
      %v6704 = vunpack.c.l.b16 %v6330
      %v6705 = vunpack.c.l.b16 %v6340
      %v6706 = vunpack.c.l.b16 %v6354
      %v6707 = vunpack.c.l.b16 %v6364
      %v6708 = vunpack.c.l.b16 %v6378
      %v6709 = vunpack.c.l.b16 %v6388
      %v6710 = vunpack.c.l.b16 %v6402
      %v6711 = vunpack.c.l.b16 %v6412
      %v6712 = vunpack.c.l.b16 %v6426
      %v6713 = vunpack.c.l.b16 %v6436
      %v6714 = vunpack.c.l.b16 %v6450
      %v6715 = vunpack.c.l.b16 %v6460
      %v6716 = vunpack.c.l.b16 %v6474
      %v6717 = vunpack.c.l.b16 %v6484
      %v6718 = vunpack.c.l.b16 %v6498
      %v6719 = vunpack.c.l.b16 %v6508
      %v6720 = vunpack.c.l.b16 %v6522
      %v6721 = vunpack.c.l.b16 %v6532
      %v6722 = vunpack.c.l.b16 %v6546
      %v6723 = vunpack.c.l.b16 %v6556
      %v6724 = vunpack.c.l.b16 %v6570
      %v6725 = vunpack.c.l.b16 %v6580
      %v6726 = vunpack.c.l.b16 %v6594
      %v6727 = vunpack.c.l.b16 %v6604
      %v6728 = vunpack.c.l.b16 %v6618
      %v6729 = vunpack.c.l.b16 %v6628
      %v6730 = vunpack.c.l.b16 %v6642
      %v6731 = vunpack.c.l.b16 %v6652
      %v6732 = vunpack.c.l.b16 %v6666
      %v6733 = vunpack.c.l.b16 %v6676
      %v6734 = vunpack.c.l.b16 %v6690
      %v6735 = vunpack.c.l.b16 %v6700
      %v6736 = vpack.c.b16 %v6705, %v6704
      %v6737 = vpack.c.b16 %v6707, %v6706
      %v6738 = vpack.c.b16 %v6709, %v6708
      %v6739 = vpack.c.b16 %v6711, %v6710
      %v6740 = vpack.c.b16 %v6713, %v6712
      %v6741 = vpack.c.b16 %v6715, %v6714
      %v6742 = vpack.c.b16 %v6717, %v6716
      %v6743 = vpack.c.b16 %v6719, %v6718
      %v6744 = vpack.c.b16 %v6721, %v6720
      %v6745 = vpack.c.b16 %v6723, %v6722
      %v6746 = vpack.c.b16 %v6725, %v6724
      %v6747 = vpack.c.b16 %v6727, %v6726
      %v6748 = vpack.c.b16 %v6729, %v6728
      %v6749 = vpack.c.b16 %v6731, %v6730
      %v6750 = vpack.c.b16 %v6733, %v6732
      %v6751 = vpack.c.b16 %v6735, %v6734
      %v6754 = vunpack.c.l.b16 %v6702
      %v6755 = vunpack.c.l.b16 %v6703
      %v6756 = vpack.c.b16 %v6755, %v6754
      %v6758 = vsel %vm665, %v6736, 0
      %v6761 = vsel %vm665, %v6737, 0
      %v6764 = vsel %vm665, %v6738, 0
      %v6767 = vsel %vm665, %v6739, 0
      %v6770 = vsel %vm665, %v6740, 0
      %v6773 = vsel %vm665, %v6741, 0
      %v6776 = vsel %vm665, %v6742, 0
      %v6779 = vsel %vm665, %v6743, 0
      %v6782 = vsel %vm665, %v6744, 0
      %v6785 = vsel %vm665, %v6745, 0
      %v6788 = vsel %vm665, %v6746, 0
      %v6791 = vsel %vm665, %v6747, 0
      %v6794 = vsel %vm665, %v6748, 0
      %v6797 = vsel %vm665, %v6749, 0
      %v6800 = vsel %vm665, %v6750, 0
      %v6803 = vsel %vm665, %v6751, 0
      %v6806 = vsel %vm714, %v6756, 0
      %6808 = vmatpush.bf16.msra.mxu0 0
      %6809 = vmatpush.bf16.msra.mxu0 0
      %6810 = vmatpush.bf16.msra.mxu0 0
      %6811 = vmatpush.bf16.msra.mxu0 0
      %6812 = vmatpush.bf16.msra.mxu0 0
      %6813 = vmatpush.bf16.msra.mxu0 0
      %6814 = vmatpush.bf16.msra.mxu0 0
      %6815 = vmatpush.bf16.msra.mxu0 %v6806
      %6816 = vmatmul.bf16.gmra.mxu0 %v6758
      %v6817 = vpop.f32.mrf.mxu0
      %v6818 = vadd.f32 0.0, %v6817
      %v6819 = vpop.f32.mrf.mxu0
      %v6820 = vadd.f32 0.0, %v6819
      %6821 = vmatmul.bf16.gmra.mxu0 %v6761
      %v6822 = vpop.f32.mrf.mxu0
      %v6823 = vadd.f32 0.0, %v6822
      %v6824 = vpop.f32.mrf.mxu0
      %v6825 = vadd.f32 0.0, %v6824
      %6826 = vmatmul.bf16.gmra.mxu0 %v6764
      %v6827 = vpop.f32.mrf.mxu0
      %v6828 = vadd.f32 0.0, %v6827
      %v6829 = vpop.f32.mrf.mxu0
      %v6830 = vadd.f32 0.0, %v6829
      %6831 = vmatmul.bf16.gmra.mxu0 %v6767
      %v6832 = vpop.f32.mrf.mxu0
      %v6833 = vadd.f32 0.0, %v6832
      %v6834 = vpop.f32.mrf.mxu0
      %v6835 = vadd.f32 0.0, %v6834
      %6836 = vmatmul.bf16.gmra.mxu0 %v6770
      %v6837 = vpop.f32.mrf.mxu0
      %v6838 = vadd.f32 0.0, %v6837
      %v6839 = vpop.f32.mrf.mxu0
      %v6840 = vadd.f32 0.0, %v6839
      %6841 = vmatmul.bf16.gmra.mxu0 %v6773
      %v6842 = vpop.f32.mrf.mxu0
      %v6843 = vadd.f32 0.0, %v6842
      %v6844 = vpop.f32.mrf.mxu0
      %v6845 = vadd.f32 0.0, %v6844
      %6846 = vmatmul.bf16.gmra.mxu0 %v6776
      %v6847 = vpop.f32.mrf.mxu0
      %v6848 = vadd.f32 0.0, %v6847
      %v6849 = vpop.f32.mrf.mxu0
      %v6850 = vadd.f32 0.0, %v6849
      %6851 = vmatmul.bf16.gmra.mxu0 %v6779
      %v6852 = vpop.f32.mrf.mxu0
      %v6853 = vadd.f32 0.0, %v6852
      %v6854 = vpop.f32.mrf.mxu0
      %v6855 = vadd.f32 0.0, %v6854
      %6856 = vmatmul.bf16.gmra.mxu0 %v6782
      %v6857 = vpop.f32.mrf.mxu0
      %v6858 = vadd.f32 0.0, %v6857
      %v6859 = vpop.f32.mrf.mxu0
      %v6860 = vadd.f32 0.0, %v6859
      %6861 = vmatmul.bf16.gmra.mxu0 %v6785
      %v6862 = vpop.f32.mrf.mxu0
      %v6863 = vadd.f32 0.0, %v6862
      %v6864 = vpop.f32.mrf.mxu0
      %v6865 = vadd.f32 0.0, %v6864
      %6866 = vmatmul.bf16.gmra.mxu0 %v6788
      %v6867 = vpop.f32.mrf.mxu0
      %v6868 = vadd.f32 0.0, %v6867
      %v6869 = vpop.f32.mrf.mxu0
      %v6870 = vadd.f32 0.0, %v6869
      %6871 = vmatmul.bf16.gmra.mxu0 %v6791
      %v6872 = vpop.f32.mrf.mxu0
      %v6873 = vadd.f32 0.0, %v6872
      %v6874 = vpop.f32.mrf.mxu0
      %v6875 = vadd.f32 0.0, %v6874
      %6876 = vmatmul.bf16.gmra.mxu0 %v6794
      %v6877 = vpop.f32.mrf.mxu0
      %v6878 = vadd.f32 0.0, %v6877
      %v6879 = vpop.f32.mrf.mxu0
      %v6880 = vadd.f32 0.0, %v6879
      %6881 = vmatmul.bf16.gmra.mxu0 %v6797
      %v6882 = vpop.f32.mrf.mxu0
      %v6883 = vadd.f32 0.0, %v6882
      %v6884 = vpop.f32.mrf.mxu0
      %v6885 = vadd.f32 0.0, %v6884
      %6886 = vmatmul.bf16.gmra.mxu0 %v6800
      %v6887 = vpop.f32.mrf.mxu0
      %v6888 = vadd.f32 0.0, %v6887
      %v6889 = vpop.f32.mrf.mxu0
      %v6890 = vadd.f32 0.0, %v6889
      %6891 = vmatmul.bf16.gmra.mxu0 %v6803
      %v6892 = vpop.f32.mrf.mxu0
      %v6893 = vadd.f32 0.0, %v6892
      %v6894 = vpop.f32.mrf.mxu0
      %v6895 = vadd.f32 0.0, %v6894
      %6896 = vdwg.mxu0
      %v6897 = vadd.f32 %v6237, %v6818
      %v6898 = vadd.f32 %v6238, %v6820
      %v6899 = vadd.f32 %v6239, %v6823
      %v6900 = vadd.f32 %v6240, %v6825
      %v6901 = vadd.f32 %v6241, %v6828
      %v6902 = vadd.f32 %v6242, %v6830
      %v6903 = vadd.f32 %v6243, %v6833
      %v6904 = vadd.f32 %v6244, %v6835
      %v6905 = vadd.f32 %v6245, %v6838
      %v6906 = vadd.f32 %v6246, %v6840
      %v6907 = vadd.f32 %v6247, %v6843
      %v6908 = vadd.f32 %v6248, %v6845
      %v6909 = vadd.f32 %v6249, %v6848
      %v6910 = vadd.f32 %v6250, %v6850
      %v6911 = vadd.f32 %v6251, %v6853
      %v6912 = vadd.f32 %v6252, %v6855
      %v6913 = vadd.f32 %v6253, %v6858
      %v6914 = vadd.f32 %v6254, %v6860
      %v6915 = vadd.f32 %v6255, %v6863
      %v6916 = vadd.f32 %v6256, %v6865
      %v6917 = vadd.f32 %v6257, %v6868
      %v6918 = vadd.f32 %v6258, %v6870
      %v6919 = vadd.f32 %v6259, %v6873
      %v6920 = vadd.f32 %v6260, %v6875
      %v6921 = vadd.f32 %v6261, %v6878
      %v6922 = vadd.f32 %v6262, %v6880
      %v6923 = vadd.f32 %v6263, %v6883
      %v6924 = vadd.f32 %v6264, %v6885
      %v6925 = vadd.f32 %v6265, %v6888
      %v6926 = vadd.f32 %v6266, %v6890
      %v6927 = vadd.f32 %v6267, %v6893
      %v6928 = vadd.f32 %v6268, %v6895
      %v6929 = vld [vmem:[%s5976] sm:$0xe]
      %v6930 = vld [vmem:[%s5976 + $0xc] sm:$0xe]
      %v6931 = vld [vmem:[%s5976 + $0x18] sm:$0xe]
      %v6932 = vld [vmem:[%s5976 + $0x24] sm:$0xe]
      %v6933 = vld [vmem:[%s5976 + $0x30] sm:$0xe]
      %v6934 = vld [vmem:[%s5976 + $0x3c] sm:$0xe]
      %v6935 = vld [vmem:[%s5976 + $0x48] sm:$0xe]
      %v6936 = vld [vmem:[%s5976 + $0x54] sm:$0xe]
      %v6937 = vld [vmem:[%s5976 + $0x60] sm:$0xe]
      %v6938 = vld [vmem:[%s5976 + $0x6c] sm:$0xe]
      %v6939 = vld [vmem:[%s5976 + $0x78] sm:$0xe]
      %v6940 = vld [vmem:[%s5976 + $0x84] sm:$0xe]
      %v6941 = vld [vmem:[%s5976 + $0x90] sm:$0xe]
      %v6942 = vld [vmem:[%s5976 + $0x9c] sm:$0xe]
      %v6943 = vld [vmem:[%s5976 + $0xa8] sm:$0xe]
      %v6944 = vld [vmem:[%s5976 + $0xb4] sm:$0xe]
      %v6993 = vrot.slane %v6929, 5
      %v6994 = vrot.slane %v6993, 4
      %v6995 = vrot.slane %v6270, 5
      %v6996 = vsel %vm1082, %v6994, %v6995
      %v6997 = vrot.slane %v6995, 4
      %v6998 = vrot.slane %v6271, 5
      %v6999 = vsel %vm1082, %v6997, %v6998
      %v7000 = vrot.slane %v6930, 5
      %v7001 = vrot.slane %v7000, 4
      %v7002 = vrot.slane %v6273, 5
      %v7003 = vsel %vm1082, %v7001, %v7002
      %v7004 = vrot.slane %v7002, 4
      %v7005 = vrot.slane %v6274, 5
      %v7006 = vsel %vm1082, %v7004, %v7005
      %v7007 = vrot.slane %v6931, 5
      %v7008 = vrot.slane %v7007, 4
      %v7009 = vrot.slane %v6276, 5
      %v7010 = vsel %vm1082, %v7008, %v7009
      %v7011 = vrot.slane %v7009, 4
      %v7012 = vrot.slane %v6277, 5
      %v7013 = vsel %vm1082, %v7011, %v7012
      %v7014 = vrot.slane %v6932, 5
      %v7015 = vrot.slane %v7014, 4
      %v7016 = vrot.slane %v6279, 5
      %v7017 = vsel %vm1082, %v7015, %v7016
      %v7018 = vrot.slane %v7016, 4
      %v7019 = vrot.slane %v6280, 5
      %v7020 = vsel %vm1082, %v7018, %v7019
      %v7021 = vrot.slane %v6933, 5
      %v7022 = vrot.slane %v7021, 4
      %v7023 = vrot.slane %v6282, 5
      %v7024 = vsel %vm1082, %v7022, %v7023
      %v7025 = vrot.slane %v7023, 4
      %v7026 = vrot.slane %v6283, 5
      %v7027 = vsel %vm1082, %v7025, %v7026
      %v7028 = vrot.slane %v6934, 5
      %v7029 = vrot.slane %v7028, 4
      %v7030 = vrot.slane %v6285, 5
      %v7031 = vsel %vm1082, %v7029, %v7030
      %v7032 = vrot.slane %v7030, 4
      %v7033 = vrot.slane %v6286, 5
      %v7034 = vsel %vm1082, %v7032, %v7033
      %v7035 = vrot.slane %v6935, 5
      %v7036 = vrot.slane %v7035, 4
      %v7037 = vrot.slane %v6288, 5
      %v7038 = vsel %vm1082, %v7036, %v7037
      %v7039 = vrot.slane %v7037, 4
      %v7040 = vrot.slane %v6289, 5
      %v7041 = vsel %vm1082, %v7039, %v7040
      %v7042 = vrot.slane %v6936, 5
      %v7043 = vrot.slane %v7042, 4
      %v7044 = vrot.slane %v6291, 5
      %v7045 = vsel %vm1082, %v7043, %v7044
      %v7046 = vrot.slane %v7044, 4
      %v7047 = vrot.slane %v6292, 5
      %v7048 = vsel %vm1082, %v7046, %v7047
      %v7049 = vrot.slane %v6937, 5
      %v7050 = vrot.slane %v7049, 4
      %v7051 = vrot.slane %v6294, 5
      %v7052 = vsel %vm1082, %v7050, %v7051
      %v7053 = vrot.slane %v7051, 4
      %v7054 = vrot.slane %v6295, 5
      %v7055 = vsel %vm1082, %v7053, %v7054
      %v7056 = vrot.slane %v6938, 5
      %v7057 = vrot.slane %v7056, 4
      %v7058 = vrot.slane %v6297, 5
      %v7059 = vsel %vm1082, %v7057, %v7058
      %v7060 = vrot.slane %v7058, 4
      %v7061 = vrot.slane %v6298, 5
      %v7062 = vsel %vm1082, %v7060, %v7061
      %v7063 = vrot.slane %v6939, 5
      %v7064 = vrot.slane %v7063, 4
      %v7065 = vrot.slane %v6300, 5
      %v7066 = vsel %vm1082, %v7064, %v7065
      %v7067 = vrot.slane %v7065, 4
      %v7068 = vrot.slane %v6301, 5
      %v7069 = vsel %vm1082, %v7067, %v7068
      %v7070 = vrot.slane %v6940, 5
      %v7071 = vrot.slane %v7070, 4
      %v7072 = vrot.slane %v6303, 5
      %v7073 = vsel %vm1082, %v7071, %v7072
      %v7074 = vrot.slane %v7072, 4
      %v7075 = vrot.slane %v6304, 5
      %v7076 = vsel %vm1082, %v7074, %v7075
      %v7077 = vrot.slane %v6941, 5
      %v7078 = vrot.slane %v7077, 4
      %v7079 = vrot.slane %v6306, 5
      %v7080 = vsel %vm1082, %v7078, %v7079
      %v7081 = vrot.slane %v7079, 4
      %v7082 = vrot.slane %v6307, 5
      %v7083 = vsel %vm1082, %v7081, %v7082
      %v7084 = vrot.slane %v6942, 5
      %v7085 = vrot.slane %v7084, 4
      %v7086 = vrot.slane %v6309, 5
      %v7087 = vsel %vm1082, %v7085, %v7086
      %v7088 = vrot.slane %v7086, 4
      %v7089 = vrot.slane %v6310, 5
      %v7090 = vsel %vm1082, %v7088, %v7089
      %v7091 = vrot.slane %v6943, 5
      %v7092 = vrot.slane %v7091, 4
      %v7093 = vrot.slane %v6312, 5
      %v7094 = vsel %vm1082, %v7092, %v7093
      %v7095 = vrot.slane %v7093, 4
      %v7096 = vrot.slane %v6313, 5
      %v7097 = vsel %vm1082, %v7095, %v7096
      %v7098 = vrot.slane %v6944, 5
      %v7099 = vrot.slane %v7098, 4
      %v7100 = vrot.slane %v6315, 5
      %v7101 = vsel %vm1082, %v7099, %v7100
      %v7102 = vrot.slane %v7100, 4
      %v7103 = vrot.slane %v6316, 5
      %v7104 = vsel %vm1082, %v7102, %v7103
      %s7105 = scalar_lea.vmem %s1, 112
      %v7106 = vld [vmem:[%s7105] sm:$0xf]
      %v7107 = vld [vmem:[%s7105 + $0x4] sm:$0x3]
      %v7108 = vunpack.c.l.b16 %v6996
      %v7109 = vunpack.c.l.b16 %v6999
      %v7110 = vunpack.c.l.b16 %v7003
      %v7111 = vunpack.c.l.b16 %v7006
      %v7112 = vunpack.c.l.b16 %v7010
      %v7113 = vunpack.c.l.b16 %v7013
      %v7114 = vunpack.c.l.b16 %v7017
      %v7115 = vunpack.c.l.b16 %v7020
      %v7116 = vunpack.c.l.b16 %v7024
      %v7117 = vunpack.c.l.b16 %v7027
      %v7118 = vunpack.c.l.b16 %v7031
      %v7119 = vunpack.c.l.b16 %v7034
      %v7120 = vunpack.c.l.b16 %v7038
      %v7121 = vunpack.c.l.b16 %v7041
      %v7122 = vunpack.c.l.b16 %v7045
      %v7123 = vunpack.c.l.b16 %v7048
      %v7124 = vunpack.c.l.b16 %v7052
      %v7125 = vunpack.c.l.b16 %v7055
      %v7126 = vunpack.c.l.b16 %v7059
      %v7127 = vunpack.c.l.b16 %v7062
      %v7128 = vunpack.c.l.b16 %v7066
      %v7129 = vunpack.c.l.b16 %v7069
      %v7130 = vunpack.c.l.b16 %v7073
      %v7131 = vunpack.c.l.b16 %v7076
      %v7132 = vunpack.c.l.b16 %v7080
      %v7133 = vunpack.c.l.b16 %v7083
      %v7134 = vunpack.c.l.b16 %v7087
      %v7135 = vunpack.c.l.b16 %v7090
      %v7136 = vunpack.c.l.b16 %v7094
      %v7137 = vunpack.c.l.b16 %v7097
      %v7138 = vunpack.c.l.b16 %v7101
      %v7139 = vunpack.c.l.b16 %v7104
      %v7140 = vpack.c.b16 %v7109, %v7108
      %v7141 = vpack.c.b16 %v7111, %v7110
      %v7142 = vpack.c.b16 %v7113, %v7112
      %v7143 = vpack.c.b16 %v7115, %v7114
      %v7144 = vpack.c.b16 %v7117, %v7116
      %v7145 = vpack.c.b16 %v7119, %v7118
      %v7146 = vpack.c.b16 %v7121, %v7120
      %v7147 = vpack.c.b16 %v7123, %v7122
      %v7148 = vpack.c.b16 %v7125, %v7124
      %v7149 = vpack.c.b16 %v7127, %v7126
      %v7150 = vpack.c.b16 %v7129, %v7128
      %v7151 = vpack.c.b16 %v7131, %v7130
      %v7152 = vpack.c.b16 %v7133, %v7132
      %v7153 = vpack.c.b16 %v7135, %v7134
      %v7154 = vpack.c.b16 %v7137, %v7136
      %v7155 = vpack.c.b16 %v7139, %v7138
      %v7158 = vunpack.c.l.b16 %v7106
      %v7159 = vunpack.c.l.b16 %v7107
      %v7160 = vpack.c.b16 %v7159, %v7158
      %v7162 = vsel %vm665, %v7140, 0
      %v7165 = vsel %vm665, %v7141, 0
      %v7168 = vsel %vm665, %v7142, 0
      %v7171 = vsel %vm665, %v7143, 0
      %v7174 = vsel %vm665, %v7144, 0
      %v7177 = vsel %vm665, %v7145, 0
      %v7180 = vsel %vm665, %v7146, 0
      %v7183 = vsel %vm665, %v7147, 0
      %v7186 = vsel %vm665, %v7148, 0
      %v7189 = vsel %vm665, %v7149, 0
      %v7192 = vsel %vm665, %v7150, 0
      %v7195 = vsel %vm665, %v7151, 0
      %v7198 = vsel %vm665, %v7152, 0
      %v7201 = vsel %vm665, %v7153, 0
      %v7204 = vsel %vm665, %v7154, 0
      %v7207 = vsel %vm665, %v7155, 0
      %v7210 = vsel %vm714, %v7160, 0
      %7212 = vmatpush.bf16.msra.mxu0 0
      %7213 = vmatpush.bf16.msra.mxu0 0
      %7214 = vmatpush.bf16.msra.mxu0 0
      %7215 = vmatpush.bf16.msra.mxu0 0
      %7216 = vmatpush.bf16.msra.mxu0 0
      %7217 = vmatpush.bf16.msra.mxu0 0
      %7218 = vmatpush.bf16.msra.mxu0 0
      %7219 = vmatpush.bf16.msra.mxu0 %v7210
      %7220 = vmatmul.bf16.gmra.mxu0 %v7162
      %v7221 = vpop.f32.mrf.mxu0
      %v7222 = vadd.f32 0.0, %v7221
      %v7223 = vpop.f32.mrf.mxu0
      %v7224 = vadd.f32 0.0, %v7223
      %7225 = vmatmul.bf16.gmra.mxu0 %v7165
      %v7226 = vpop.f32.mrf.mxu0
      %v7227 = vadd.f32 0.0, %v7226
      %v7228 = vpop.f32.mrf.mxu0
      %v7229 = vadd.f32 0.0, %v7228
      %7230 = vmatmul.bf16.gmra.mxu0 %v7168
      %v7231 = vpop.f32.mrf.mxu0
      %v7232 = vadd.f32 0.0, %v7231
      %v7233 = vpop.f32.mrf.mxu0
      %v7234 = vadd.f32 0.0, %v7233
      %7235 = vmatmul.bf16.gmra.mxu0 %v7171
      %v7236 = vpop.f32.mrf.mxu0
      %v7237 = vadd.f32 0.0, %v7236
      %v7238 = vpop.f32.mrf.mxu0
      %v7239 = vadd.f32 0.0, %v7238
      %7240 = vmatmul.bf16.gmra.mxu0 %v7174
      %v7241 = vpop.f32.mrf.mxu0
      %v7242 = vadd.f32 0.0, %v7241
      %v7243 = vpop.f32.mrf.mxu0
      %v7244 = vadd.f32 0.0, %v7243
      %7245 = vmatmul.bf16.gmra.mxu0 %v7177
      %v7246 = vpop.f32.mrf.mxu0
      %v7247 = vadd.f32 0.0, %v7246
      %v7248 = vpop.f32.mrf.mxu0
      %v7249 = vadd.f32 0.0, %v7248
      %7250 = vmatmul.bf16.gmra.mxu0 %v7180
      %v7251 = vpop.f32.mrf.mxu0
      %v7252 = vadd.f32 0.0, %v7251
      %v7253 = vpop.f32.mrf.mxu0
      %v7254 = vadd.f32 0.0, %v7253
      %7255 = vmatmul.bf16.gmra.mxu0 %v7183
      %v7256 = vpop.f32.mrf.mxu0
      %v7257 = vadd.f32 0.0, %v7256
      %v7258 = vpop.f32.mrf.mxu0
      %v7259 = vadd.f32 0.0, %v7258
      %7260 = vmatmul.bf16.gmra.mxu0 %v7186
      %v7261 = vpop.f32.mrf.mxu0
      %v7262 = vadd.f32 0.0, %v7261
      %v7263 = vpop.f32.mrf.mxu0
      %v7264 = vadd.f32 0.0, %v7263
      %7265 = vmatmul.bf16.gmra.mxu0 %v7189
      %v7266 = vpop.f32.mrf.mxu0
      %v7267 = vadd.f32 0.0, %v7266
      %v7268 = vpop.f32.mrf.mxu0
      %v7269 = vadd.f32 0.0, %v7268
      %7270 = vmatmul.bf16.gmra.mxu0 %v7192
      %v7271 = vpop.f32.mrf.mxu0
      %v7272 = vadd.f32 0.0, %v7271
      %v7273 = vpop.f32.mrf.mxu0
      %v7274 = vadd.f32 0.0, %v7273
      %7275 = vmatmul.bf16.gmra.mxu0 %v7195
      %v7276 = vpop.f32.mrf.mxu0
      %v7277 = vadd.f32 0.0, %v7276
      %v7278 = vpop.f32.mrf.mxu0
      %v7279 = vadd.f32 0.0, %v7278
      %7280 = vmatmul.bf16.gmra.mxu0 %v7198
      %v7281 = vpop.f32.mrf.mxu0
      %v7282 = vadd.f32 0.0, %v7281
      %v7283 = vpop.f32.mrf.mxu0
      %v7284 = vadd.f32 0.0, %v7283
      %7285 = vmatmul.bf16.gmra.mxu0 %v7201
      %v7286 = vpop.f32.mrf.mxu0
      %v7287 = vadd.f32 0.0, %v7286
      %v7288 = vpop.f32.mrf.mxu0
      %v7289 = vadd.f32 0.0, %v7288
      %7290 = vmatmul.bf16.gmra.mxu0 %v7204
      %v7291 = vpop.f32.mrf.mxu0
      %v7292 = vadd.f32 0.0, %v7291
      %v7293 = vpop.f32.mrf.mxu0
      %v7294 = vadd.f32 0.0, %v7293
      %7295 = vmatmul.bf16.gmra.mxu0 %v7207
      %v7296 = vpop.f32.mrf.mxu0
      %v7297 = vadd.f32 0.0, %v7296
      %v7298 = vpop.f32.mrf.mxu0
      %v7299 = vadd.f32 0.0, %v7298
      %7300 = vdwg.mxu0
      %v7301 = vadd.f32 %v6897, %v7222
      %v7302 = vadd.f32 %v6898, %v7224
      %v7303 = vadd.f32 %v6899, %v7227
      %v7304 = vadd.f32 %v6900, %v7229
      %v7305 = vadd.f32 %v6901, %v7232
      %v7306 = vadd.f32 %v6902, %v7234
      %v7307 = vadd.f32 %v6903, %v7237
      %v7308 = vadd.f32 %v6904, %v7239
      %v7309 = vadd.f32 %v6905, %v7242
      %v7310 = vadd.f32 %v6906, %v7244
      %v7311 = vadd.f32 %v6907, %v7247
      %v7312 = vadd.f32 %v6908, %v7249
      %v7313 = vadd.f32 %v6909, %v7252
      %v7314 = vadd.f32 %v6910, %v7254
      %v7315 = vadd.f32 %v6911, %v7257
      %v7316 = vadd.f32 %v6912, %v7259
      %v7317 = vadd.f32 %v6913, %v7262
      %v7318 = vadd.f32 %v6914, %v7264
      %v7319 = vadd.f32 %v6915, %v7267
      %v7320 = vadd.f32 %v6916, %v7269
      %v7321 = vadd.f32 %v6917, %v7272
      %v7322 = vadd.f32 %v6918, %v7274
      %v7323 = vadd.f32 %v6919, %v7277
      %v7324 = vadd.f32 %v6920, %v7279
      %v7325 = vadd.f32 %v6921, %v7282
      %v7326 = vadd.f32 %v6922, %v7284
      %v7327 = vadd.f32 %v6923, %v7287
      %v7328 = vadd.f32 %v6924, %v7289
      %v7329 = vadd.f32 %v6925, %v7292
      %v7330 = vadd.f32 %v6926, %v7294
      %v7331 = vadd.f32 %v6927, %v7297
      %v7332 = vadd.f32 %v6928, %v7299
      %v7333 = vld [vmem:[%s5976 + $0x8] sm:$0x3]
      %v7334 = vld [vmem:[%s5976 + $0x14] sm:$0x3]
      %v7335 = vld [vmem:[%s5976 + $0x20] sm:$0x3]
      %v7336 = vld [vmem:[%s5976 + $0x2c] sm:$0x3]
      %v7337 = vld [vmem:[%s5976 + $0x38] sm:$0x3]
      %v7338 = vld [vmem:[%s5976 + $0x44] sm:$0x3]
      %v7339 = vld [vmem:[%s5976 + $0x50] sm:$0x3]
      %v7340 = vld [vmem:[%s5976 + $0x5c] sm:$0x3]
      %v7341 = vld [vmem:[%s5976 + $0x68] sm:$0x3]
      %v7342 = vld [vmem:[%s5976 + $0x74] sm:$0x3]
      %v7343 = vld [vmem:[%s5976 + $0x80] sm:$0x3]
      %v7344 = vld [vmem:[%s5976 + $0x8c] sm:$0x3]
      %v7345 = vld [vmem:[%s5976 + $0x98] sm:$0x3]
      %v7346 = vld [vmem:[%s5976 + $0xa4] sm:$0x3]
      %v7347 = vld [vmem:[%s5976 + $0xb0] sm:$0x3]
      %v7348 = vld [vmem:[%s5976 + $0xbc] sm:$0x3]
      %v7350 = vshrl.u32 %v6929, 16
      %v7352 = vrot.slane %v7350, 5
      %v7353 = vshll.u32 %v6929, 16
      %v7355 = vrot.slane %v7353, 6
      %v7356 = vor.u32 %v7352, %v7355
      %v7357 = vrot.slane %v7356, 4
      %v7358 = vrot.slane %v6331, 5
      %v7359 = vrot.slane %v6327, 6
      %v7360 = vor.u32 %v7358, %v7359
      %v7361 = vsel %vm1441, %v7357, %v7360
      %v7362 = vrot.slane %v7360, 4
      %v7364 = vshrl.u32 %v7333, 16
      %v7366 = vrot.slane %v7364, 5
      %v7367 = vshll.u32 %v7333, 16
      %v7369 = vrot.slane %v7367, 6
      %v7370 = vor.u32 %v7366, %v7369
      %v7371 = vsel %vm1441, %v7362, %v7370
      %v7373 = vshrl.u32 %v6930, 16
      %v7375 = vrot.slane %v7373, 5
      %v7376 = vshll.u32 %v6930, 16
      %v7378 = vrot.slane %v7376, 6
      %v7379 = vor.u32 %v7375, %v7378
      %v7380 = vrot.slane %v7379, 4
      %v7381 = vrot.slane %v6355, 5
      %v7382 = vrot.slane %v6351, 6
      %v7383 = vor.u32 %v7381, %v7382
      %v7384 = vsel %vm1441, %v7380, %v7383
      %v7385 = vrot.slane %v7383, 4
      %v7387 = vshrl.u32 %v7334, 16
      %v7389 = vrot.slane %v7387, 5
      %v7390 = vshll.u32 %v7334, 16
      %v7392 = vrot.slane %v7390, 6
      %v7393 = vor.u32 %v7389, %v7392
      %v7394 = vsel %vm1441, %v7385, %v7393
      %v7396 = vshrl.u32 %v6931, 16
      %v7398 = vrot.slane %v7396, 5
      %v7399 = vshll.u32 %v6931, 16
      %v7401 = vrot.slane %v7399, 6
      %v7402 = vor.u32 %v7398, %v7401
      %v7403 = vrot.slane %v7402, 4
      %v7404 = vrot.slane %v6379, 5
      %v7405 = vrot.slane %v6375, 6
      %v7406 = vor.u32 %v7404, %v7405
      %v7407 = vsel %vm1441, %v7403, %v7406
      %v7408 = vrot.slane %v7406, 4
      %v7410 = vshrl.u32 %v7335, 16
      %v7412 = vrot.slane %v7410, 5
      %v7413 = vshll.u32 %v7335, 16
      %v7415 = vrot.slane %v7413, 6
      %v7416 = vor.u32 %v7412, %v7415
      %v7417 = vsel %vm1441, %v7408, %v7416
      %v7419 = vshrl.u32 %v6932, 16
      %v7421 = vrot.slane %v7419, 5
      %v7422 = vshll.u32 %v6932, 16
      %v7424 = vrot.slane %v7422, 6
      %v7425 = vor.u32 %v7421, %v7424
      %v7426 = vrot.slane %v7425, 4
      %v7427 = vrot.slane %v6403, 5
      %v7428 = vrot.slane %v6399, 6
      %v7429 = vor.u32 %v7427, %v7428
      %v7430 = vsel %vm1441, %v7426, %v7429
      %v7431 = vrot.slane %v7429, 4
      %v7433 = vshrl.u32 %v7336, 16
      %v7435 = vrot.slane %v7433, 5
      %v7436 = vshll.u32 %v7336, 16
      %v7438 = vrot.slane %v7436, 6
      %v7439 = vor.u32 %v7435, %v7438
      %v7440 = vsel %vm1441, %v7431, %v7439
      %v7442 = vshrl.u32 %v6933, 16
      %v7444 = vrot.slane %v7442, 5
      %v7445 = vshll.u32 %v6933, 16
      %v7447 = vrot.slane %v7445, 6
      %v7448 = vor.u32 %v7444, %v7447
      %v7449 = vrot.slane %v7448, 4
      %v7450 = vrot.slane %v6427, 5
      %v7451 = vrot.slane %v6423, 6
      %v7452 = vor.u32 %v7450, %v7451
      %v7453 = vsel %vm1441, %v7449, %v7452
      %v7454 = vrot.slane %v7452, 4
      %v7456 = vshrl.u32 %v7337, 16
      %v7458 = vrot.slane %v7456, 5
      %v7459 = vshll.u32 %v7337, 16
      %v7461 = vrot.slane %v7459, 6
      %v7462 = vor.u32 %v7458, %v7461
      %v7463 = vsel %vm1441, %v7454, %v7462
      %v7465 = vshrl.u32 %v6934, 16
      %v7467 = vrot.slane %v7465, 5
      %v7468 = vshll.u32 %v6934, 16
      %v7470 = vrot.slane %v7468, 6
      %v7471 = vor.u32 %v7467, %v7470
      %v7472 = vrot.slane %v7471, 4
      %v7473 = vrot.slane %v6451, 5
      %v7474 = vrot.slane %v6447, 6
      %v7475 = vor.u32 %v7473, %v7474
      %v7476 = vsel %vm1441, %v7472, %v7475
      %v7477 = vrot.slane %v7475, 4
      %v7479 = vshrl.u32 %v7338, 16
      %v7481 = vrot.slane %v7479, 5
      %v7482 = vshll.u32 %v7338, 16
      %v7484 = vrot.slane %v7482, 6
      %v7485 = vor.u32 %v7481, %v7484
      %v7486 = vsel %vm1441, %v7477, %v7485
      %v7488 = vshrl.u32 %v6935, 16
      %v7490 = vrot.slane %v7488, 5
      %v7491 = vshll.u32 %v6935, 16
      %v7493 = vrot.slane %v7491, 6
      %v7494 = vor.u32 %v7490, %v7493
      %v7495 = vrot.slane %v7494, 4
      %v7496 = vrot.slane %v6475, 5
      %v7497 = vrot.slane %v6471, 6
      %v7498 = vor.u32 %v7496, %v7497
      %v7499 = vsel %vm1441, %v7495, %v7498
      %v7500 = vrot.slane %v7498, 4
      %v7502 = vshrl.u32 %v7339, 16
      %v7504 = vrot.slane %v7502, 5
      %v7505 = vshll.u32 %v7339, 16
      %v7507 = vrot.slane %v7505, 6
      %v7508 = vor.u32 %v7504, %v7507
      %v7509 = vsel %vm1441, %v7500, %v7508
      %v7511 = vshrl.u32 %v6936, 16
      %v7513 = vrot.slane %v7511, 5
      %v7514 = vshll.u32 %v6936, 16
      %v7516 = vrot.slane %v7514, 6
      %v7517 = vor.u32 %v7513, %v7516
      %v7518 = vrot.slane %v7517, 4
      %v7519 = vrot.slane %v6499, 5
      %v7520 = vrot.slane %v6495, 6
      %v7521 = vor.u32 %v7519, %v7520
      %v7522 = vsel %vm1441, %v7518, %v7521
      %v7523 = vrot.slane %v7521, 4
      %v7525 = vshrl.u32 %v7340, 16
      %v7527 = vrot.slane %v7525, 5
      %v7528 = vshll.u32 %v7340, 16
      %v7530 = vrot.slane %v7528, 6
      %v7531 = vor.u32 %v7527, %v7530
      %v7532 = vsel %vm1441, %v7523, %v7531
      %v7534 = vshrl.u32 %v6937, 16
      %v7536 = vrot.slane %v7534, 5
      %v7537 = vshll.u32 %v6937, 16
      %v7539 = vrot.slane %v7537, 6
      %v7540 = vor.u32 %v7536, %v7539
      %v7541 = vrot.slane %v7540, 4
      %v7542 = vrot.slane %v6523, 5
      %v7543 = vrot.slane %v6519, 6
      %v7544 = vor.u32 %v7542, %v7543
      %v7545 = vsel %vm1441, %v7541, %v7544
      %v7546 = vrot.slane %v7544, 4
      %v7548 = vshrl.u32 %v7341, 16
      %v7550 = vrot.slane %v7548, 5
      %v7551 = vshll.u32 %v7341, 16
      %v7553 = vrot.slane %v7551, 6
      %v7554 = vor.u32 %v7550, %v7553
      %v7555 = vsel %vm1441, %v7546, %v7554
      %v7557 = vshrl.u32 %v6938, 16
      %v7559 = vrot.slane %v7557, 5
      %v7560 = vshll.u32 %v6938, 16
      %v7562 = vrot.slane %v7560, 6
      %v7563 = vor.u32 %v7559, %v7562
      %v7564 = vrot.slane %v7563, 4
      %v7565 = vrot.slane %v6547, 5
      %v7566 = vrot.slane %v6543, 6
      %v7567 = vor.u32 %v7565, %v7566
      %v7568 = vsel %vm1441, %v7564, %v7567
      %v7569 = vrot.slane %v7567, 4
      %v7571 = vshrl.u32 %v7342, 16
      %v7573 = vrot.slane %v7571, 5
      %v7574 = vshll.u32 %v7342, 16
      %v7576 = vrot.slane %v7574, 6
      %v7577 = vor.u32 %v7573, %v7576
      %v7578 = vsel %vm1441, %v7569, %v7577
      %v7580 = vshrl.u32 %v6939, 16
      %v7582 = vrot.slane %v7580, 5
      %v7583 = vshll.u32 %v6939, 16
      %v7585 = vrot.slane %v7583, 6
      %v7586 = vor.u32 %v7582, %v7585
      %v7587 = vrot.slane %v7586, 4
      %v7588 = vrot.slane %v6571, 5
      %v7589 = vrot.slane %v6567, 6
      %v7590 = vor.u32 %v7588, %v7589
      %v7591 = vsel %vm1441, %v7587, %v7590
      %v7592 = vrot.slane %v7590, 4
      %v7594 = vshrl.u32 %v7343, 16
      %v7596 = vrot.slane %v7594, 5
      %v7597 = vshll.u32 %v7343, 16
      %v7599 = vrot.slane %v7597, 6
      %v7600 = vor.u32 %v7596, %v7599
      %v7601 = vsel %vm1441, %v7592, %v7600
      %v7603 = vshrl.u32 %v6940, 16
      %v7605 = vrot.slane %v7603, 5
      %v7606 = vshll.u32 %v6940, 16
      %v7608 = vrot.slane %v7606, 6
      %v7609 = vor.u32 %v7605, %v7608
      %v7610 = vrot.slane %v7609, 4
      %v7611 = vrot.slane %v6595, 5
      %v7612 = vrot.slane %v6591, 6
      %v7613 = vor.u32 %v7611, %v7612
      %v7614 = vsel %vm1441, %v7610, %v7613
      %v7615 = vrot.slane %v7613, 4
      %v7617 = vshrl.u32 %v7344, 16
      %v7619 = vrot.slane %v7617, 5
      %v7620 = vshll.u32 %v7344, 16
      %v7622 = vrot.slane %v7620, 6
      %v7623 = vor.u32 %v7619, %v7622
      %v7624 = vsel %vm1441, %v7615, %v7623
      %v7626 = vshrl.u32 %v6941, 16
      %v7628 = vrot.slane %v7626, 5
      %v7629 = vshll.u32 %v6941, 16
      %v7631 = vrot.slane %v7629, 6
      %v7632 = vor.u32 %v7628, %v7631
      %v7633 = vrot.slane %v7632, 4
      %v7634 = vrot.slane %v6619, 5
      %v7635 = vrot.slane %v6615, 6
      %v7636 = vor.u32 %v7634, %v7635
      %v7637 = vsel %vm1441, %v7633, %v7636
      %v7638 = vrot.slane %v7636, 4
      %v7640 = vshrl.u32 %v7345, 16
      %v7642 = vrot.slane %v7640, 5
      %v7643 = vshll.u32 %v7345, 16
      %v7645 = vrot.slane %v7643, 6
      %v7646 = vor.u32 %v7642, %v7645
      %v7647 = vsel %vm1441, %v7638, %v7646
      %v7649 = vshrl.u32 %v6942, 16
      %v7651 = vrot.slane %v7649, 5
      %v7652 = vshll.u32 %v6942, 16
      %v7654 = vrot.slane %v7652, 6
      %v7655 = vor.u32 %v7651, %v7654
      %v7656 = vrot.slane %v7655, 4
      %v7657 = vrot.slane %v6643, 5
      %v7658 = vrot.slane %v6639, 6
      %v7659 = vor.u32 %v7657, %v7658
      %v7660 = vsel %vm1441, %v7656, %v7659
      %v7661 = vrot.slane %v7659, 4
      %v7663 = vshrl.u32 %v7346, 16
      %v7665 = vrot.slane %v7663, 5
      %v7666 = vshll.u32 %v7346, 16
      %v7668 = vrot.slane %v7666, 6
      %v7669 = vor.u32 %v7665, %v7668
      %v7670 = vsel %vm1441, %v7661, %v7669
      %v7672 = vshrl.u32 %v6943, 16
      %v7674 = vrot.slane %v7672, 5
      %v7675 = vshll.u32 %v6943, 16
      %v7677 = vrot.slane %v7675, 6
      %v7678 = vor.u32 %v7674, %v7677
      %v7679 = vrot.slane %v7678, 4
      %v7680 = vrot.slane %v6667, 5
      %v7681 = vrot.slane %v6663, 6
      %v7682 = vor.u32 %v7680, %v7681
      %v7683 = vsel %vm1441, %v7679, %v7682
      %v7684 = vrot.slane %v7682, 4
      %v7686 = vshrl.u32 %v7347, 16
      %v7688 = vrot.slane %v7686, 5
      %v7689 = vshll.u32 %v7347, 16
      %v7691 = vrot.slane %v7689, 6
      %v7692 = vor.u32 %v7688, %v7691
      %v7693 = vsel %vm1441, %v7684, %v7692
      %v7695 = vshrl.u32 %v6944, 16
      %v7697 = vrot.slane %v7695, 5
      %v7698 = vshll.u32 %v6944, 16
      %v7700 = vrot.slane %v7698, 6
      %v7701 = vor.u32 %v7697, %v7700
      %v7702 = vrot.slane %v7701, 4
      %v7703 = vrot.slane %v6691, 5
      %v7704 = vrot.slane %v6687, 6
      %v7705 = vor.u32 %v7703, %v7704
      %v7706 = vsel %vm1441, %v7702, %v7705
      %v7707 = vrot.slane %v7705, 4
      %v7709 = vshrl.u32 %v7348, 16
      %v7711 = vrot.slane %v7709, 5
      %v7712 = vshll.u32 %v7348, 16
      %v7714 = vrot.slane %v7712, 6
      %v7715 = vor.u32 %v7711, %v7714
      %v7716 = vsel %vm1441, %v7707, %v7715
      %s7717 = scalar_lea.vmem %s1, 120
      %v7718 = vld [vmem:[%s7717] sm:$0xf]
      %v7719 = vld [vmem:[%s7717 + $0x4] sm:$0x3]
      %v7720 = vunpack.c.l.b16 %v7361
      %v7721 = vunpack.c.l.b16 %v7371
      %v7722 = vunpack.c.l.b16 %v7384
      %v7723 = vunpack.c.l.b16 %v7394
      %v7724 = vunpack.c.l.b16 %v7407
      %v7725 = vunpack.c.l.b16 %v7417
      %v7726 = vunpack.c.l.b16 %v7430
      %v7727 = vunpack.c.l.b16 %v7440
      %v7728 = vunpack.c.l.b16 %v7453
      %v7729 = vunpack.c.l.b16 %v7463
      %v7730 = vunpack.c.l.b16 %v7476
      %v7731 = vunpack.c.l.b16 %v7486
      %v7732 = vunpack.c.l.b16 %v7499
      %v7733 = vunpack.c.l.b16 %v7509
      %v7734 = vunpack.c.l.b16 %v7522
      %v7735 = vunpack.c.l.b16 %v7532
      %v7736 = vunpack.c.l.b16 %v7545
      %v7737 = vunpack.c.l.b16 %v7555
      %v7738 = vunpack.c.l.b16 %v7568
      %v7739 = vunpack.c.l.b16 %v7578
      %v7740 = vunpack.c.l.b16 %v7591
      %v7741 = vunpack.c.l.b16 %v7601
      %v7742 = vunpack.c.l.b16 %v7614
      %v7743 = vunpack.c.l.b16 %v7624
      %v7744 = vunpack.c.l.b16 %v7637
      %v7745 = vunpack.c.l.b16 %v7647
      %v7746 = vunpack.c.l.b16 %v7660
      %v7747 = vunpack.c.l.b16 %v7670
      %v7748 = vunpack.c.l.b16 %v7683
      %v7749 = vunpack.c.l.b16 %v7693
      %v7750 = vunpack.c.l.b16 %v7706
      %v7751 = vunpack.c.l.b16 %v7716
      %v7752 = vpack.c.b16 %v7721, %v7720
      %v7753 = vpack.c.b16 %v7723, %v7722
      %v7754 = vpack.c.b16 %v7725, %v7724
      %v7755 = vpack.c.b16 %v7727, %v7726
      %v7756 = vpack.c.b16 %v7729, %v7728
      %v7757 = vpack.c.b16 %v7731, %v7730
      %v7758 = vpack.c.b16 %v7733, %v7732
      %v7759 = vpack.c.b16 %v7735, %v7734
      %v7760 = vpack.c.b16 %v7737, %v7736
      %v7761 = vpack.c.b16 %v7739, %v7738
      %v7762 = vpack.c.b16 %v7741, %v7740
      %v7763 = vpack.c.b16 %v7743, %v7742
      %v7764 = vpack.c.b16 %v7745, %v7744
      %v7765 = vpack.c.b16 %v7747, %v7746
      %v7766 = vpack.c.b16 %v7749, %v7748
      %v7767 = vpack.c.b16 %v7751, %v7750
      %v7770 = vunpack.c.l.b16 %v7718
      %v7771 = vunpack.c.l.b16 %v7719
      %v7772 = vpack.c.b16 %v7771, %v7770
      %v7774 = vsel %vm665, %v7752, 0
      %v7777 = vsel %vm665, %v7753, 0
      %v7780 = vsel %vm665, %v7754, 0
      %v7783 = vsel %vm665, %v7755, 0
      %v7786 = vsel %vm665, %v7756, 0
      %v7789 = vsel %vm665, %v7757, 0
      %v7792 = vsel %vm665, %v7758, 0
      %v7795 = vsel %vm665, %v7759, 0
      %v7798 = vsel %vm665, %v7760, 0
      %v7801 = vsel %vm665, %v7761, 0
      %v7804 = vsel %vm665, %v7762, 0
      %v7807 = vsel %vm665, %v7763, 0
      %v7810 = vsel %vm665, %v7764, 0
      %v7813 = vsel %vm665, %v7765, 0
      %v7816 = vsel %vm665, %v7766, 0
      %v7819 = vsel %vm665, %v7767, 0
      %v7822 = vsel %vm714, %v7772, 0
      %7824 = vmatpush.bf16.msra.mxu0 0
      %7825 = vmatpush.bf16.msra.mxu0 0
      %7826 = vmatpush.bf16.msra.mxu0 0
      %7827 = vmatpush.bf16.msra.mxu0 0
      %7828 = vmatpush.bf16.msra.mxu0 0
      %7829 = vmatpush.bf16.msra.mxu0 0
      %7830 = vmatpush.bf16.msra.mxu0 0
      %7831 = vmatpush.bf16.msra.mxu0 %v7822
      %7832 = vmatmul.bf16.gmra.mxu0 %v7774
      %v7833 = vpop.f32.mrf.mxu0
      %v7834 = vadd.f32 0.0, %v7833
      %v7835 = vpop.f32.mrf.mxu0
      %v7836 = vadd.f32 0.0, %v7835
      %7837 = vmatmul.bf16.gmra.mxu0 %v7777
      %v7838 = vpop.f32.mrf.mxu0
      %v7839 = vadd.f32 0.0, %v7838
      %v7840 = vpop.f32.mrf.mxu0
      %v7841 = vadd.f32 0.0, %v7840
      %7842 = vmatmul.bf16.gmra.mxu0 %v7780
      %v7843 = vpop.f32.mrf.mxu0
      %v7844 = vadd.f32 0.0, %v7843
      %v7845 = vpop.f32.mrf.mxu0
      %v7846 = vadd.f32 0.0, %v7845
      %7847 = vmatmul.bf16.gmra.mxu0 %v7783
      %v7848 = vpop.f32.mrf.mxu0
      %v7849 = vadd.f32 0.0, %v7848
      %v7850 = vpop.f32.mrf.mxu0
      %v7851 = vadd.f32 0.0, %v7850
      %7852 = vmatmul.bf16.gmra.mxu0 %v7786
      %v7853 = vpop.f32.mrf.mxu0
      %v7854 = vadd.f32 0.0, %v7853
      %v7855 = vpop.f32.mrf.mxu0
      %v7856 = vadd.f32 0.0, %v7855
      %7857 = vmatmul.bf16.gmra.mxu0 %v7789
      %v7858 = vpop.f32.mrf.mxu0
      %v7859 = vadd.f32 0.0, %v7858
      %v7860 = vpop.f32.mrf.mxu0
      %v7861 = vadd.f32 0.0, %v7860
      %7862 = vmatmul.bf16.gmra.mxu0 %v7792
      %v7863 = vpop.f32.mrf.mxu0
      %v7864 = vadd.f32 0.0, %v7863
      %v7865 = vpop.f32.mrf.mxu0
      %v7866 = vadd.f32 0.0, %v7865
      %7867 = vmatmul.bf16.gmra.mxu0 %v7795
      %v7868 = vpop.f32.mrf.mxu0
      %v7869 = vadd.f32 0.0, %v7868
      %v7870 = vpop.f32.mrf.mxu0
      %v7871 = vadd.f32 0.0, %v7870
      %7872 = vmatmul.bf16.gmra.mxu0 %v7798
      %v7873 = vpop.f32.mrf.mxu0
      %v7874 = vadd.f32 0.0, %v7873
      %v7875 = vpop.f32.mrf.mxu0
      %v7876 = vadd.f32 0.0, %v7875
      %7877 = vmatmul.bf16.gmra.mxu0 %v7801
      %v7878 = vpop.f32.mrf.mxu0
      %v7879 = vadd.f32 0.0, %v7878
      %v7880 = vpop.f32.mrf.mxu0
      %v7881 = vadd.f32 0.0, %v7880
      %7882 = vmatmul.bf16.gmra.mxu0 %v7804
      %v7883 = vpop.f32.mrf.mxu0
      %v7884 = vadd.f32 0.0, %v7883
      %v7885 = vpop.f32.mrf.mxu0
      %v7886 = vadd.f32 0.0, %v7885
      %7887 = vmatmul.bf16.gmra.mxu0 %v7807
      %v7888 = vpop.f32.mrf.mxu0
      %v7889 = vadd.f32 0.0, %v7888
      %v7890 = vpop.f32.mrf.mxu0
      %v7891 = vadd.f32 0.0, %v7890
      %7892 = vmatmul.bf16.gmra.mxu0 %v7810
      %v7893 = vpop.f32.mrf.mxu0
      %v7894 = vadd.f32 0.0, %v7893
      %v7895 = vpop.f32.mrf.mxu0
      %v7896 = vadd.f32 0.0, %v7895
      %7897 = vmatmul.bf16.gmra.mxu0 %v7813
      %v7898 = vpop.f32.mrf.mxu0
      %v7899 = vadd.f32 0.0, %v7898
      %v7900 = vpop.f32.mrf.mxu0
      %v7901 = vadd.f32 0.0, %v7900
      %7902 = vmatmul.bf16.gmra.mxu0 %v7816
      %v7903 = vpop.f32.mrf.mxu0
      %v7904 = vadd.f32 0.0, %v7903
      %v7905 = vpop.f32.mrf.mxu0
      %v7906 = vadd.f32 0.0, %v7905
      %7907 = vmatmul.bf16.gmra.mxu0 %v7819
      %v7908 = vpop.f32.mrf.mxu0
      %v7909 = vadd.f32 0.0, %v7908
      %v7910 = vpop.f32.mrf.mxu0
      %v7911 = vadd.f32 0.0, %v7910
      %7912 = vdwg.mxu0
      %v7913 = vadd.f32 %v7301, %v7834
      %v7914 = vadd.f32 %v7302, %v7836
      %v7915 = vadd.f32 %v7303, %v7839
      %v7916 = vadd.f32 %v7304, %v7841
      %v7917 = vadd.f32 %v7305, %v7844
      %v7918 = vadd.f32 %v7306, %v7846
      %v7919 = vadd.f32 %v7307, %v7849
      %v7920 = vadd.f32 %v7308, %v7851
      %v7921 = vadd.f32 %v7309, %v7854
      %v7922 = vadd.f32 %v7310, %v7856
      %v7923 = vadd.f32 %v7311, %v7859
      %v7924 = vadd.f32 %v7312, %v7861
      %v7925 = vadd.f32 %v7313, %v7864
      %v7926 = vadd.f32 %v7314, %v7866
      %v7927 = vadd.f32 %v7315, %v7869
      %v7928 = vadd.f32 %v7316, %v7871
      %v7929 = vadd.f32 %v7317, %v7874
      %v7930 = vadd.f32 %v7318, %v7876
      %v7931 = vadd.f32 %v7319, %v7879
      %v7932 = vadd.f32 %v7320, %v7881
      %v7933 = vadd.f32 %v7321, %v7884
      %v7934 = vadd.f32 %v7322, %v7886
      %v7935 = vadd.f32 %v7323, %v7889
      %v7936 = vadd.f32 %v7324, %v7891
      %v7937 = vadd.f32 %v7325, %v7894
      %v7938 = vadd.f32 %v7326, %v7896
      %v7939 = vadd.f32 %v7327, %v7899
      %v7940 = vadd.f32 %v7328, %v7901
      %v7941 = vadd.f32 %v7329, %v7904
      %v7942 = vadd.f32 %v7330, %v7906
      %v7943 = vadd.f32 %v7331, %v7909
      %v7944 = vadd.f32 %v7332, %v7911
      %v7945 = vld [vmem:[%s2] sm:$0x1]
      %v7947 = vperm.slane %v7945, 0
      %v7949 = vadd.f32 %v7913, %v7947
      %v7950 = vadd.f32 %v7914, %v7947
      %v7951 = vadd.f32 %v7915, %v7947
      %v7952 = vadd.f32 %v7916, %v7947
      %v7953 = vadd.f32 %v7917, %v7947
      %v7954 = vadd.f32 %v7918, %v7947
      %v7955 = vadd.f32 %v7919, %v7947
      %v7956 = vadd.f32 %v7920, %v7947
      %v7957 = vadd.f32 %v7921, %v7947
      %v7958 = vadd.f32 %v7922, %v7947
      %v7959 = vadd.f32 %v7923, %v7947
      %v7960 = vadd.f32 %v7924, %v7947
      %v7961 = vadd.f32 %v7925, %v7947
      %v7962 = vadd.f32 %v7926, %v7947
      %v7963 = vadd.f32 %v7927, %v7947
      %v7964 = vadd.f32 %v7928, %v7947
      %v7965 = vadd.f32 %v7929, %v7947
      %v7966 = vadd.f32 %v7930, %v7947
      %v7967 = vadd.f32 %v7931, %v7947
      %v7968 = vadd.f32 %v7932, %v7947
      %v7969 = vadd.f32 %v7933, %v7947
      %v7970 = vadd.f32 %v7934, %v7947
      %v7971 = vadd.f32 %v7935, %v7947
      %v7972 = vadd.f32 %v7936, %v7947
      %v7973 = vadd.f32 %v7937, %v7947
      %v7974 = vadd.f32 %v7938, %v7947
      %v7975 = vadd.f32 %v7939, %v7947
      %v7976 = vadd.f32 %v7940, %v7947
      %v7977 = vadd.f32 %v7941, %v7947
      %v7978 = vadd.f32 %v7942, %v7947
      %v7979 = vadd.f32 %v7943, %v7947
      %v7980 = vadd.f32 %v7944, %v7947
      %v7981 = vmax.f32 %v7949, 0.0
      %v7982 = vmax.f32 %v7950, 0.0
      %v7983 = vmax.f32 %v7951, 0.0
      %v7984 = vmax.f32 %v7952, 0.0
      %v7985 = vmax.f32 %v7953, 0.0
      %v7986 = vmax.f32 %v7954, 0.0
      %v7987 = vmax.f32 %v7955, 0.0
      %v7988 = vmax.f32 %v7956, 0.0
      %v7989 = vmax.f32 %v7957, 0.0
      %v7990 = vmax.f32 %v7958, 0.0
      %v7991 = vmax.f32 %v7959, 0.0
      %v7992 = vmax.f32 %v7960, 0.0
      %v7993 = vmax.f32 %v7961, 0.0
      %v7994 = vmax.f32 %v7962, 0.0
      %v7995 = vmax.f32 %v7963, 0.0
      %v7996 = vmax.f32 %v7964, 0.0
      %v7997 = vmax.f32 %v7965, 0.0
      %v7998 = vmax.f32 %v7966, 0.0
      %v7999 = vmax.f32 %v7967, 0.0
      %v8000 = vmax.f32 %v7968, 0.0
      %v8001 = vmax.f32 %v7969, 0.0
      %v8002 = vmax.f32 %v7970, 0.0
      %v8003 = vmax.f32 %v7971, 0.0
      %v8004 = vmax.f32 %v7972, 0.0
      %v8005 = vmax.f32 %v7973, 0.0
      %v8006 = vmax.f32 %v7974, 0.0
      %v8007 = vmax.f32 %v7975, 0.0
      %v8008 = vmax.f32 %v7976, 0.0
      %v8009 = vmax.f32 %v7977, 0.0
      %v8010 = vmax.f32 %v7978, 0.0
      %v8011 = vmax.f32 %v7979, 0.0
      %v8012 = vmax.f32 %v7980, 0.0
      %v8013 = vpack.c.bf16 %v7981, %v7981
      %v8014 = vpack.c.bf16 %v7982, %v7982
      %v8015 = vpack.c.bf16 %v7983, %v7983
      %v8016 = vpack.c.bf16 %v7984, %v7984
      %v8017 = vpack.c.bf16 %v7985, %v7985
      %v8018 = vpack.c.bf16 %v7986, %v7986
      %v8019 = vpack.c.bf16 %v7987, %v7987
      %v8020 = vpack.c.bf16 %v7988, %v7988
      %v8021 = vpack.c.bf16 %v7989, %v7989
      %v8022 = vpack.c.bf16 %v7990, %v7990
      %v8023 = vpack.c.bf16 %v7991, %v7991
      %v8024 = vpack.c.bf16 %v7992, %v7992
      %v8025 = vpack.c.bf16 %v7993, %v7993
      %v8026 = vpack.c.bf16 %v7994, %v7994
      %v8027 = vpack.c.bf16 %v7995, %v7995
      %v8028 = vpack.c.bf16 %v7996, %v7996
      %v8029 = vpack.c.bf16 %v7997, %v7997
      %v8030 = vpack.c.bf16 %v7998, %v7998
      %v8031 = vpack.c.bf16 %v7999, %v7999
      %v8032 = vpack.c.bf16 %v8000, %v8000
      %v8033 = vpack.c.bf16 %v8001, %v8001
      %v8034 = vpack.c.bf16 %v8002, %v8002
      %v8035 = vpack.c.bf16 %v8003, %v8003
      %v8036 = vpack.c.bf16 %v8004, %v8004
      %v8037 = vpack.c.bf16 %v8005, %v8005
      %v8038 = vpack.c.bf16 %v8006, %v8006
      %v8039 = vpack.c.bf16 %v8007, %v8007
      %v8040 = vpack.c.bf16 %v8008, %v8008
      %v8041 = vpack.c.bf16 %v8009, %v8009
      %v8042 = vpack.c.bf16 %v8010, %v8010
      %v8043 = vpack.c.bf16 %v8011, %v8011
      %v8044 = vpack.c.bf16 %v8012, %v8012
      %8045 = vst [vmem:[%s170] sm:$0xf] %v8013
      %8046 = vst [vmem:[%s170 + $0x4] sm:$0xf] %v8014
      %8047 = vst [vmem:[%s170 + $0x8] sm:$0xf] %v8015
      %8048 = vst [vmem:[%s170 + $0xc] sm:$0xf] %v8016
      %8049 = vst [vmem:[%s170 + $0x10] sm:$0xf] %v8017
      %8050 = vst [vmem:[%s170 + $0x14] sm:$0xf] %v8018
      %8051 = vst [vmem:[%s170 + $0x18] sm:$0xf] %v8019
      %8052 = vst [vmem:[%s170 + $0x1c] sm:$0xf] %v8020
      %8053 = vst [vmem:[%s170 + $0x20] sm:$0xf] %v8021
      %8054 = vst [vmem:[%s170 + $0x24] sm:$0xf] %v8022
      %8055 = vst [vmem:[%s170 + $0x28] sm:$0xf] %v8023
      %8056 = vst [vmem:[%s170 + $0x2c] sm:$0xf] %v8024
      %8057 = vst [vmem:[%s170 + $0x30] sm:$0xf] %v8025
      %8058 = vst [vmem:[%s170 + $0x34] sm:$0xf] %v8026
      %8059 = vst [vmem:[%s170 + $0x38] sm:$0xf] %v8027
      %8060 = vst [vmem:[%s170 + $0x3c] sm:$0xf] %v8028
      %8061 = vst [vmem:[%s170 + $0x40] sm:$0xf] %v8029
      %8062 = vst [vmem:[%s170 + $0x44] sm:$0xf] %v8030
      %8063 = vst [vmem:[%s170 + $0x48] sm:$0xf] %v8031
      %8064 = vst [vmem:[%s170 + $0x4c] sm:$0xf] %v8032
      %8065 = vst [vmem:[%s170 + $0x50] sm:$0xf] %v8033
      %8066 = vst [vmem:[%s170 + $0x54] sm:$0xf] %v8034
      %8067 = vst [vmem:[%s170 + $0x58] sm:$0xf] %v8035
      %8068 = vst [vmem:[%s170 + $0x5c] sm:$0xf] %v8036
      %8069 = vst [vmem:[%s170 + $0x60] sm:$0xf] %v8037
      %8070 = vst [vmem:[%s170 + $0x64] sm:$0xf] %v8038
      %8071 = vst [vmem:[%s170 + $0x68] sm:$0xf] %v8039
      %8072 = vst [vmem:[%s170 + $0x6c] sm:$0xf] %v8040
      %8073 = vst [vmem:[%s170 + $0x70] sm:$0xf] %v8041
      %8074 = vst [vmem:[%s170 + $0x74] sm:$0xf] %v8042
      %8075 = vst [vmem:[%s170 + $0x78] sm:$0xf] %v8043
      %8076 = vst [vmem:[%s170 + $0x7c] sm:$0xf] %v8044
      %p8077 = scmp.lt.s32.totalorder %s14, 1
      %s8078 = scalar_select %p8077, %s14, 1
      %s8079 = smul.addr %s8078, 32
      %s8080 = smul.addr %s8079, 4
      %s8081 = scalar_lea.vmem %s3, %s8080
      // Predicated region
      $region33: #{_lambda_.9} parent=31 // pred_check
        %p8082 = pneg %p100
      $region34: #{_lambda_.9} parent=31 // pred_check_branch
        %8084 = sbr.rel (%p8082) target = $region36
      $region35: #{_lambda_.9} parent=31 // pred_region
        _
      $region36: #{_lambda_.9} parent=31 // pred_fallthru
        _
    $region32: #{_lambda_.9} parent=5 // pred_fallthru
      _
    %p8085 = scmp.le.s32.totalorder 2, %s9
    // Predicated region
    $region37: #{_lambda_.9} parent=5 // pred_check
      %p8086 = pneg %p8085
    $region38: #{_lambda_.9} parent=5 // pred_check_branch
      %8088 = sbr.rel (%p8086) target = $region40
    $region39: #{_lambda_.9} parent=5 // pred_region
      %s8089 = ssub.s32 %s9, 2
      // Predicated region
      $region41: #{_lambda_.9} parent=39 // pred_check
        %p8090 = pneg %p106
      $region42: #{_lambda_.9} parent=39 // pred_check_branch
        %8092 = sbr.rel (%p8090) target = $region44
      $region43: #{_lambda_.9} parent=39 // pred_region
        %p8093 = scmp.lt.s32.totalorder %s15, 1
        %s8094 = scalar_select %p8093, %s15, 1
        %s8095 = smul.addr %s8094, 32
        %s8096 = smul.addr %s8095, 4
        %s8097 = scalar_lea.vmem %s3, %s8096
      $region44: #{_lambda_.9} parent=39 // pred_fallthru
        _
    $region40: #{_lambda_.9} parent=5 // pred_fallthru
      _
  $region6: #{_lambda_.9} parent=0 // loop_footer
    %s13 = sadd.s32 1, %s9
  $region7: #{_lambda_.9} parent=0 // loop_footer_branch
    %8 = sbr.rel target = $region3
  $region8: #{_lambda_.9} parent=0 // loop_exit
    _

// kernel: _lambda_.13
$region0: #{_lambda_.13}
  #allocation0 [shape = 'u32[]', space=smem, size = 0x4, offset = 0x4, fixed_abs, tag = 'smem constant byte address 0x4 - core index']
  #allocation1 [shape = 'u32[72,128]{1,0:T(1,128)}', space=vmem, size = 0x9000, scoped, tag = 'internal scratch']
  %s0 = inlined_call_operand.vmem [shape: bf16[2,8,8,128], index: 0, kind: input, shape index: {}]
  %s1 = inlined_call_operand.vmem [shape: bf16[2,8,8,128], index: 1, kind: input, shape index: {}]
  %s2 = inlined_call_operand.vmem [shape: bf16[1,128,128], index: 2, kind: input, shape index: {}]
  %s3 = inlined_call_operand.vmem [shape: f32[1,128], index: 3, kind: input, shape index: {}]
  %s4 = inlined_call_operand.vmem [shape: bf16[1,128,128], index: 4, kind: input, shape index: {}]
  %s5 = inlined_call_operand.vmem [shape: f32[1,128], index: 5, kind: input, shape index: {}]
  %s6 = inlined_call_operand.vmem [shape: bf16[2,8,8,128], index: 6, kind: output, shape index: {}]
  %s7 = sld [smem:[#allocation0]]
  $region57: #{_lambda_.13} parent=0
    _
  %s9 = ssub.s32 1, %s7
  %s10 = scalar_select 0, %s9, %s7
  loop: start=0, step=1, limit=4
  $region2: #{_lambda_.13} parent=0 // loop_pre_header
    _
  $region3: #{_lambda_.13} parent=0 // loop_header
    %s12 = sphi 0, %s16
    %p13 = scmp.ge.s32.totalorder %s12, 4
    %s22 = sphi 0, %s24
    %s25 = sphi 0, %s22
    %s26 = sphi 0, %s25
    %s42 = sphi 0, %s26
    %s48 = sphi 0, %s50
    %s51 = sphi 0, %s48
    %s52 = sphi 0, %s51
    %s68 = sphi 0, %s52
    %s72 = sphi 0, %s72
    %s74 = sphi 0, %s72
    %s75 = sphi 0, %s74
    %s89 = sphi 0, %s75
    %s93 = sphi 0, %s93
    %s95 = sphi 0, %s93
    %s96 = sphi 0, %s95
    %s110 = sphi 0, %s96
    %s114 = sphi 0, %s114
    %s116 = sphi 0, %s114
    %s117 = sphi 0, %s116
    %s131 = sphi 0, %s117
    %s135 = sphi 0, %s135
    %s137 = sphi 0, %s135
    %s138 = sphi 0, %s137
    %s152 = sphi 0, %s138
    %s158 = sphi 0, %s160
    %s161 = sphi 0, %s158
    %s162 = sphi 0, %s161
    %s178 = sphi 0, %s162
  $region4: #{_lambda_.13} parent=0 // loop_header_branch
    %15 = sbr.rel (%p13) target = $region8
  $region5: #{_lambda_.13} parent=0 // loop_body
    %s17 = ssub.s32 %s12, 1
    %s18 = ssub.s32 %s12, 2
    %s19 = sadd.s32 %s12, 1
    %s20 = ssub.s32 %s12, %s19
    %p21 = scmp.eq.s32.totalorder %s20, 0
    %s23 = sadd.s32 %s22, 1
    %s24 = scalar_select %p21, %s22, %s23
    %p27 = pneg %p21
    %p28 = scmp.eq.s32.totalorder %s12, 1
    %p29 = por %p27, %p28
    %p30 = scmp.ne.s32.totalorder %s22, %s25
    %p31 = scmp.eq.s32.totalorder %s12, 0
    %p32 = por %p30, %p31
    %p33 = scmp.ne.s32.totalorder %s22, %s25
    %p34 = scmp.eq.s32.totalorder %s17, 1
    %p35 = por %p33, %p34
    %p36 = scmp.ne.s32.totalorder %s25, %s26
    %p37 = scmp.eq.s32.totalorder %s17, 0
    %p38 = por %p36, %p37
    %p39 = scmp.ne.s32.totalorder %s25, %s26
    %p40 = scmp.eq.s32.totalorder %s18, 1
    %p41 = por %p39, %p40
    %p43 = scmp.ne.s32.totalorder %s26, %s42
    %p44 = scmp.eq.s32.totalorder %s18, 0
    %p45 = por %p43, %p44
    %s46 = ssub.s32 %s12, %s19
    %p47 = scmp.eq.s32.totalorder %s46, 0
    %s49 = sadd.s32 %s48, 1
    %s50 = scalar_select %p47, %s48, %s49
    %p53 = pneg %p47
    %p54 = scmp.eq.s32.totalorder %s12, 1
    %p55 = por %p53, %p54
    %p56 = scmp.ne.s32.totalorder %s48, %s51
    %p57 = scmp.eq.s32.totalorder %s12, 0
    %p58 = por %p56, %p57
    %p59 = scmp.ne.s32.totalorder %s48, %s51
    %p60 = scmp.eq.s32.totalorder %s17, 1
    %p61 = por %p59, %p60
    %p62 = scmp.ne.s32.totalorder %s51, %s52
    %p63 = scmp.eq.s32.totalorder %s17, 0
    %p64 = por %p62, %p63
    %p65 = scmp.ne.s32.totalorder %s51, %s52
    %p66 = scmp.eq.s32.totalorder %s18, 1
    %p67 = por %p65, %p66
    %p69 = scmp.ne.s32.totalorder %s52, %s68
    %p70 = scmp.eq.s32.totalorder %s18, 0
    %p71 = por %p69, %p70
    %s73 = sadd.s32 %s72, 1
    %p76 = scmp.eq.s32.totalorder %s12, 1
    %p77 = scmp.ne.s32.totalorder %s72, %s74
    %p78 = scmp.eq.s32.totalorder %s12, 0
    %p79 = por %p77, %p78
    %p80 = scmp.ne.s32.totalorder %s72, %s74
    %p81 = scmp.eq.s32.totalorder %s17, 1
    %p82 = por %p80, %p81
    %p83 = scmp.ne.s32.totalorder %s74, %s75
    %p84 = scmp.eq.s32.totalorder %s17, 0
    %p85 = por %p83, %p84
    %p86 = scmp.ne.s32.totalorder %s74, %s75
    %p87 = scmp.eq.s32.totalorder %s18, 1
    %p88 = por %p86, %p87
    %p90 = scmp.ne.s32.totalorder %s75, %s89
    %p91 = scmp.eq.s32.totalorder %s18, 0
    %p92 = por %p90, %p91
    %s94 = sadd.s32 %s93, 1
    %p97 = scmp.eq.s32.totalorder %s12, 1
    %p98 = scmp.ne.s32.totalorder %s93, %s95
    %p99 = scmp.eq.s32.totalorder %s12, 0
    %p100 = por %p98, %p99
    %p101 = scmp.ne.s32.totalorder %s93, %s95
    %p102 = scmp.eq.s32.totalorder %s17, 1
    %p103 = por %p101, %p102
    %p104 = scmp.ne.s32.totalorder %s95, %s96
    %p105 = scmp.eq.s32.totalorder %s17, 0
    %p106 = por %p104, %p105
    %p107 = scmp.ne.s32.totalorder %s95, %s96
    %p108 = scmp.eq.s32.totalorder %s18, 1
    %p109 = por %p107, %p108
    %p111 = scmp.ne.s32.totalorder %s96, %s110
    %p112 = scmp.eq.s32.totalorder %s18, 0
    %p113 = por %p111, %p112
    %s115 = sadd.s32 %s114, 1
    %p118 = scmp.eq.s32.totalorder %s12, 1
    %p119 = scmp.ne.s32.totalorder %s114, %s116
    %p120 = scmp.eq.s32.totalorder %s12, 0
    %p121 = por %p119, %p120
    %p122 = scmp.ne.s32.totalorder %s114, %s116
    %p123 = scmp.eq.s32.totalorder %s17, 1
    %p124 = por %p122, %p123
    %p125 = scmp.ne.s32.totalorder %s116, %s117
    %p126 = scmp.eq.s32.totalorder %s17, 0
    %p127 = por %p125, %p126
    %p128 = scmp.ne.s32.totalorder %s116, %s117
    %p129 = scmp.eq.s32.totalorder %s18, 1
    %p130 = por %p128, %p129
    %p132 = scmp.ne.s32.totalorder %s117, %s131
    %p133 = scmp.eq.s32.totalorder %s18, 0
    %p134 = por %p132, %p133
    %s136 = sadd.s32 %s135, 1
    %p139 = scmp.eq.s32.totalorder %s12, 1
    %p140 = scmp.ne.s32.totalorder %s135, %s137
    %p141 = scmp.eq.s32.totalorder %s12, 0
    %p142 = por %p140, %p141
    %p143 = scmp.ne.s32.totalorder %s135, %s137
    %p144 = scmp.eq.s32.totalorder %s17, 1
    %p145 = por %p143, %p144
    %p146 = scmp.ne.s32.totalorder %s137, %s138
    %p147 = scmp.eq.s32.totalorder %s17, 0
    %p148 = por %p146, %p147
    %p149 = scmp.ne.s32.totalorder %s137, %s138
    %p150 = scmp.eq.s32.totalorder %s18, 1
    %p151 = por %p149, %p150
    %p153 = scmp.ne.s32.totalorder %s138, %s152
    %p154 = scmp.eq.s32.totalorder %s18, 0
    %p155 = por %p153, %p154
    %s156 = ssub.s32 %s12, %s19
    %p157 = scmp.eq.s32.totalorder %s156, 0
    %s159 = sadd.s32 %s158, 1
    %s160 = scalar_select %p157, %s158, %s159
    %p163 = pneg %p157
    %p164 = scmp.eq.s32.totalorder %s12, 1
    %p165 = por %p163, %p164
    %p166 = scmp.ne.s32.totalorder %s158, %s161
    %p167 = scmp.eq.s32.totalorder %s12, 0
    %p168 = por %p166, %p167
    %p169 = scmp.ne.s32.totalorder %s158, %s161
    %p170 = scmp.eq.s32.totalorder %s17, 1
    %p171 = por %p169, %p170
    %p172 = scmp.ne.s32.totalorder %s161, %s162
    %p173 = scmp.eq.s32.totalorder %s17, 0
    %p174 = por %p172, %p173
    %p175 = scmp.ne.s32.totalorder %s161, %s162
    %p176 = scmp.eq.s32.totalorder %s18, 1
    %p177 = por %p175, %p176
    %p179 = scmp.ne.s32.totalorder %s162, %s178
    %p180 = scmp.eq.s32.totalorder %s18, 0
    %p181 = por %p179, %p180
    %p182 = scmp.le.s32.totalorder 1, %s12
    %p183 = scmp.lt.s32.totalorder %s12, 3
    %p184 = pnand %p182, %p183
    %p185 = pneg %p184
    // Predicated region
    $region9: #{_lambda_.13} parent=5 // pred_check
      _
    $region10: #{_lambda_.13} parent=5 // pred_check_branch
      %187 = sbr.rel (%p184) target = $region12
    $region11: #{_lambda_.13} parent=5 // pred_region
      %s188 = ssub.s32 %s12, 1
      // Predicated region
      $region13: #{_lambda_.13} parent=11 // pred_check
        %p189 = pneg %p85
      $region14: #{_lambda_.13} parent=11 // pred_check_branch
        %191 = sbr.rel (%p189) target = $region16
      $region15: #{_lambda_.13} parent=11 // pred_region
        _
      $region16: #{_lambda_.13} parent=11 // pred_fallthru
        _
      // Predicated region
      $region17: #{_lambda_.13} parent=11 // pred_check
        %p192 = pneg %p106
      $region18: #{_lambda_.13} parent=11 // pred_check_branch
        %194 = sbr.rel (%p192) target = $region20
      $region19: #{_lambda_.13} parent=11 // pred_region
        _
      $region20: #{_lambda_.13} parent=11 // pred_fallthru
        _
      // Predicated region
      $region21: #{_lambda_.13} parent=11 // pred_check
        %p195 = pneg %p127
      $region22: #{_lambda_.13} parent=11 // pred_check_branch
        %197 = sbr.rel (%p195) target = $region24
      $region23: #{_lambda_.13} parent=11 // pred_region
        _
      $region24: #{_lambda_.13} parent=11 // pred_fallthru
        _
      // Predicated region
      $region25: #{_lambda_.13} parent=11 // pred_check
        %p198 = pneg %p148
      $region26: #{_lambda_.13} parent=11 // pred_check_branch
        %200 = sbr.rel (%p198) target = $region28
      $region27: #{_lambda_.13} parent=11 // pred_region
        _
      $region28: #{_lambda_.13} parent=11 // pred_fallthru
        _
    $region12: #{_lambda_.13} parent=5 // pred_fallthru
      _
    %p201 = scmp.lt.s32.totalorder %s12, 2
    // Predicated region
    $region29: #{_lambda_.13} parent=5 // pred_check
      %p202 = pneg %p201
    $region30: #{_lambda_.13} parent=5 // pred_check_branch
      %204 = sbr.rel (%p202) target = $region32
    $region31: #{_lambda_.13} parent=5 // pred_region
      // Predicated region
      $region33: #{_lambda_.13} parent=31 // pred_check
        %p205 = pneg %p32
      $region34: #{_lambda_.13} parent=31 // pred_check_branch
        %207 = sbr.rel (%p205) target = $region36
      $region35: #{_lambda_.13} parent=31 // pred_region
        %p208 = scmp.lt.s32.totalorder %s12, 1
        %s209 = scalar_select %p208, %s12, 1
        %s210 = smul.addr %s209, 8
        %s211 = smul.addr %s210, 4
        %s212 = scalar_lea.vmem %s0, %s211
      $region36: #{_lambda_.13} parent=31 // pred_fallthru
        _
      // Predicated region
      $region37: #{_lambda_.13} parent=31 // pred_check
        %p213 = pneg %p58
      $region38: #{_lambda_.13} parent=31 // pred_check_branch
        %215 = sbr.rel (%p213) target = $region40
      $region39: #{_lambda_.13} parent=31 // pred_region
        %p216 = scmp.lt.s32.totalorder %s12, 1
        %s217 = scalar_select %p216, %s12, 1
        %s218 = smul.addr %s217, 8
        %s219 = smul.addr %s218, 4
        %s220 = scalar_lea.vmem %s1, %s219
      $region40: #{_lambda_.13} parent=31 // pred_fallthru
        _
    $region32: #{_lambda_.13} parent=5 // pred_fallthru
      _
    %p221 = scmp.le.s32.totalorder 1, %s12
    %p222 = scmp.lt.s32.totalorder %s12, 3
    %p223 = pnand %p221, %p222
    %p224 = pneg %p223
    // Predicated region
    $region41: #{_lambda_.13} parent=5 // pred_check
      _
    $region42: #{_lambda_.13} parent=5 // pred_check_branch
      %226 = sbr.rel (%p223) target = $region44
    $region43: #{_lambda_.13} parent=5 // pred_region
      %s227 = ssub.s32 %s12, 1
      %p228 = scmp.lt.s32.totalorder %s17, 1
      %s229 = scalar_select %p228, %s17, 1
      %s230 = smul.addr %s229, 8
      %s231 = smul.addr %s230, 4
      %s232 = scalar_lea.vmem %s0, %s231
      %p233 = pneg %p38
      %p234 = pneg %p35
      %p235 = scmp.lt.s32.totalorder %s17, 1
      %s236 = scalar_select %p235, %s17, 1
      %s237 = smul.addr %s236, 8
      %s238 = smul.addr %s237, 4
      %s239 = scalar_lea.vmem %s1, %s238
      %p240 = pneg %p64
      %p241 = pneg %p61
      %p242 = pneg %p85
      %p243 = pneg %p82
      %p244 = pneg %p106
      %p245 = pneg %p103
      %p246 = pneg %p127
      %p247 = pneg %p124
      %p248 = pneg %p148
      %p249 = pneg %p145
      %p250 = pneg %p174
      %p251 = pneg %p171
      %p252 = scmp.lt.s32.totalorder %s17, 1
      %s253 = scalar_select %p252, %s17, 1
      %s254 = smul.addr %s253, 8
      %s255 = smul.addr %s254, 4
      %s256 = scalar_lea.vmem %s6, %s255
      %p257 = scmp.lt.s32.totalorder %s17, 1
      %s258 = scalar_select %p257, %s17, 1
      %s259 = smul.addr %s258, 8
      %s260 = smul.addr %s259, 4
      %s261 = scalar_lea.vmem %s0, %s260
      %p262 = scmp.lt.s32.totalorder %s17, 1
      %s263 = scalar_select %p262, %s17, 1
      %s264 = smul.addr %s263, 8
      %s265 = smul.addr %s264, 4
      %s266 = scalar_lea.vmem %s1, %s265
      %p267 = scmp.lt.s32.totalorder %s17, 1
      %s268 = scalar_select %p267, %s17, 1
      %s269 = smul.addr %s268, 8
      %s270 = smul.addr %s269, 4
      %s271 = scalar_lea.vmem %s6, %s270
      %v272 = vld [vmem:[%s261] sm:$0xf]
      %v273 = vld [vmem:[%s261 + $0x4] sm:$0xf]
      %v274 = vld [vmem:[%s261 + $0x8] sm:$0xf]
      %v275 = vld [vmem:[%s261 + $0xc] sm:$0xf]
      %v276 = vld [vmem:[%s261 + $0x10] sm:$0xf]
      %v277 = vld [vmem:[%s261 + $0x14] sm:$0xf]
      %v278 = vld [vmem:[%s261 + $0x18] sm:$0xf]
      %v279 = vld [vmem:[%s261 + $0x1c] sm:$0xf]
      %v280 = vld [vmem:[%s266] sm:$0xf]
      %v281 = vld [vmem:[%s266 + $0x4] sm:$0xf]
      %v282 = vld [vmem:[%s266 + $0x8] sm:$0xf]
      %v283 = vld [vmem:[%s266 + $0xc] sm:$0xf]
      %v284 = vld [vmem:[%s266 + $0x10] sm:$0xf]
      %v285 = vld [vmem:[%s266 + $0x14] sm:$0xf]
      %v286 = vld [vmem:[%s266 + $0x18] sm:$0xf]
      %v287 = vld [vmem:[%s266 + $0x1c] sm:$0xf]
      %v288 = vld [vmem:[%s2] sm:$0xf]
      %v289 = vld [vmem:[%s2 + $0x4] sm:$0xf]
      %v290 = vld [vmem:[%s2 + $0x8] sm:$0xf]
      %v291 = vld [vmem:[%s2 + $0xc] sm:$0xf]
      %v292 = vld [vmem:[%s2 + $0x10] sm:$0xf]
      %v293 = vld [vmem:[%s2 + $0x14] sm:$0xf]
      %v294 = vld [vmem:[%s2 + $0x18] sm:$0xf]
      %v295 = vld [vmem:[%s2 + $0x1c] sm:$0xf]
      %v296 = vld [vmem:[%s2 + $0x20] sm:$0xf]
      %v297 = vld [vmem:[%s2 + $0x24] sm:$0xf]
      %v298 = vld [vmem:[%s2 + $0x28] sm:$0xf]
      %v299 = vld [vmem:[%s2 + $0x2c] sm:$0xf]
      %v300 = vld [vmem:[%s2 + $0x30] sm:$0xf]
      %v301 = vld [vmem:[%s2 + $0x34] sm:$0xf]
      %v302 = vld [vmem:[%s2 + $0x38] sm:$0xf]
      %v303 = vld [vmem:[%s2 + $0x3c] sm:$0xf]
      %v304 = vld [vmem:[%s3] sm:$0x1]
      %v306 = vperm.slane %v304, 0
      %v316 = vunpack.c.l.b16 %v272
      %v317 = vunpack.c.l.b16 %v273
      %v318 = vunpack.c.l.b16 %v274
      %v319 = vunpack.c.l.b16 %v275
      %v320 = vunpack.c.l.b16 %v276
      %v321 = vunpack.c.l.b16 %v277
      %v322 = vunpack.c.l.b16 %v278
      %v323 = vunpack.c.l.b16 %v279
      %v324 = vpack.c.b16 %v317, %v316
      %v325 = vpack.c.b16 %v319, %v318
      %v326 = vpack.c.b16 %v321, %v320
      %v327 = vpack.c.b16 %v323, %v322
      %v348 = vunpack.c.l.b16 %v288
      %v349 = vunpack.c.l.b16 %v289
      %v350 = vunpack.c.l.b16 %v290
      %v351 = vunpack.c.l.b16 %v291
      %v352 = vunpack.c.l.b16 %v292
      %v353 = vunpack.c.l.b16 %v293
      %v354 = vunpack.c.l.b16 %v294
      %v355 = vunpack.c.l.b16 %v295
      %v356 = vunpack.c.l.b16 %v296
      %v357 = vunpack.c.l.b16 %v297
      %v358 = vunpack.c.l.b16 %v298
      %v359 = vunpack.c.l.b16 %v299
      %v360 = vunpack.c.l.b16 %v300
      %v361 = vunpack.c.l.b16 %v301
      %v362 = vunpack.c.l.b16 %v302
      %v363 = vunpack.c.l.b16 %v303
      %v364 = vpack.c.b16 %v349, %v348
      %v365 = vpack.c.b16 %v351, %v350
      %v366 = vpack.c.b16 %v353, %v352
      %v367 = vpack.c.b16 %v355, %v354
      %v368 = vpack.c.b16 %v357, %v356
      %v369 = vpack.c.b16 %v359, %v358
      %v370 = vpack.c.b16 %v361, %v360
      %v371 = vpack.c.b16 %v363, %v362
      %380 = vmatpush.bf16.msra.mxu0 %v371
      %381 = vmatpush.bf16.msra.mxu0 %v370
      %382 = vmatpush.bf16.msra.mxu0 %v369
      %383 = vmatpush.bf16.msra.mxu0 %v368
      %384 = vmatpush.bf16.msra.mxu0 %v367
      %385 = vmatpush.bf16.msra.mxu0 %v366
      %386 = vmatpush.bf16.msra.mxu0 %v365
      %387 = vmatpush.bf16.msra.mxu0 %v364
      %388 = vmatmul.bf16.gmra.mxu0 %v324
      %v389 = vpop.f32.mrf.mxu0
      %v390 = vadd.f32 %v306, %v389
      %v391 = vpop.f32.mrf.mxu0
      %v392 = vadd.f32 %v306, %v391
      %393 = vmatmul.bf16.gmra.mxu0 %v325
      %v394 = vpop.f32.mrf.mxu0
      %v395 = vadd.f32 %v306, %v394
      %v396 = vpop.f32.mrf.mxu0
      %v397 = vadd.f32 %v306, %v396
      %398 = vmatmul.bf16.gmra.mxu0 %v326
      %v399 = vpop.f32.mrf.mxu0
      %v400 = vadd.f32 %v306, %v399
      %v401 = vpop.f32.mrf.mxu0
      %v402 = vadd.f32 %v306, %v401
      %403 = vmatmul.bf16.gmra.mxu0 %v327
      %v404 = vpop.f32.mrf.mxu0
      %v405 = vadd.f32 %v306, %v404
      %v406 = vpop.f32.mrf.mxu0
      %v407 = vadd.f32 %v306, %v406
      %408 = vdwg.mxu0
      %v409 = vld [vmem:[%s4] sm:$0xf]
      %v410 = vld [vmem:[%s4 + $0x4] sm:$0xf]
      %v411 = vld [vmem:[%s4 + $0x8] sm:$0xf]
      %v412 = vld [vmem:[%s4 + $0xc] sm:$0xf]
      %v413 = vld [vmem:[%s4 + $0x10] sm:$0xf]
      %v414 = vld [vmem:[%s4 + $0x14] sm:$0xf]
      %v415 = vld [vmem:[%s4 + $0x18] sm:$0xf]
      %v416 = vld [vmem:[%s4 + $0x1c] sm:$0xf]
      %v417 = vld [vmem:[%s4 + $0x20] sm:$0xf]
      %v418 = vld [vmem:[%s4 + $0x24] sm:$0xf]
      %v419 = vld [vmem:[%s4 + $0x28] sm:$0xf]
      %v420 = vld [vmem:[%s4 + $0x2c] sm:$0xf]
      %v421 = vld [vmem:[%s4 + $0x30] sm:$0xf]
      %v422 = vld [vmem:[%s4 + $0x34] sm:$0xf]
      %v423 = vld [vmem:[%s4 + $0x38] sm:$0xf]
      %v424 = vld [vmem:[%s4 + $0x3c] sm:$0xf]
      %v433 = vunpack.c.l.b16 %v280
      %v434 = vunpack.c.l.b16 %v281
      %v435 = vunpack.c.l.b16 %v282
      %v436 = vunpack.c.l.b16 %v283
      %v437 = vunpack.c.l.b16 %v284
      %v438 = vunpack.c.l.b16 %v285
      %v439 = vunpack.c.l.b16 %v286
      %v440 = vunpack.c.l.b16 %v287
      %v441 = vpack.c.b16 %v434, %v433
      %v442 = vpack.c.b16 %v436, %v435
      %v443 = vpack.c.b16 %v438, %v437
      %v444 = vpack.c.b16 %v440, %v439
      %v465 = vunpack.c.l.b16 %v409
      %v466 = vunpack.c.l.b16 %v410
      %v467 = vunpack.c.l.b16 %v411
      %v468 = vunpack.c.l.b16 %v412
      %v469 = vunpack.c.l.b16 %v413
      %v470 = vunpack.c.l.b16 %v414
      %v471 = vunpack.c.l.b16 %v415
      %v472 = vunpack.c.l.b16 %v416
      %v473 = vunpack.c.l.b16 %v417
      %v474 = vunpack.c.l.b16 %v418
      %v475 = vunpack.c.l.b16 %v419
      %v476 = vunpack.c.l.b16 %v420
      %v477 = vunpack.c.l.b16 %v421
      %v478 = vunpack.c.l.b16 %v422
      %v479 = vunpack.c.l.b16 %v423
      %v480 = vunpack.c.l.b16 %v424
      %v481 = vpack.c.b16 %v466, %v465
      %v482 = vpack.c.b16 %v468, %v467
      %v483 = vpack.c.b16 %v470, %v469
      %v484 = vpack.c.b16 %v472, %v471
      %v485 = vpack.c.b16 %v474, %v473
      %v486 = vpack.c.b16 %v476, %v475
      %v487 = vpack.c.b16 %v478, %v477
      %v488 = vpack.c.b16 %v480, %v479
      %497 = vmatpush.bf16.msra.mxu0 %v488
      %498 = vmatpush.bf16.msra.mxu0 %v487
      %499 = vmatpush.bf16.msra.mxu0 %v486
      %500 = vmatpush.bf16.msra.mxu0 %v485
      %501 = vmatpush.bf16.msra.mxu0 %v484
      %502 = vmatpush.bf16.msra.mxu0 %v483
      %503 = vmatpush.bf16.msra.mxu0 %v482
      %504 = vmatpush.bf16.msra.mxu0 %v481
      %505 = vmatmul.bf16.gmra.mxu0 %v441
      %v506 = vpop.f32.mrf.mxu0
      %v507 = vadd.f32 0.0, %v506
      %v508 = vpop.f32.mrf.mxu0
      %v509 = vadd.f32 0.0, %v508
      %510 = vmatmul.bf16.gmra.mxu0 %v442
      %v511 = vpop.f32.mrf.mxu0
      %v512 = vadd.f32 0.0, %v511
      %v513 = vpop.f32.mrf.mxu0
      %v514 = vadd.f32 0.0, %v513
      %515 = vmatmul.bf16.gmra.mxu0 %v443
      %v516 = vpop.f32.mrf.mxu0
      %v517 = vadd.f32 0.0, %v516
      %v518 = vpop.f32.mrf.mxu0
      %v519 = vadd.f32 0.0, %v518
      %520 = vmatmul.bf16.gmra.mxu0 %v444
      %v521 = vpop.f32.mrf.mxu0
      %v522 = vadd.f32 0.0, %v521
      %v523 = vpop.f32.mrf.mxu0
      %v524 = vadd.f32 0.0, %v523
      %525 = vdwg.mxu0
      %v526 = vadd.f32 %v390, %v507
      %v527 = vadd.f32 %v392, %v509
      %v528 = vadd.f32 %v395, %v512
      %v529 = vadd.f32 %v397, %v514
      %v530 = vadd.f32 %v400, %v517
      %v531 = vadd.f32 %v402, %v519
      %v532 = vadd.f32 %v405, %v522
      %v533 = vadd.f32 %v407, %v524
      %v534 = vld [vmem:[%s5] sm:$0x1]
      %v536 = vperm.slane %v534, 0
      %v538 = vadd.f32 %v526, %v536
      %v539 = vadd.f32 %v527, %v536
      %v540 = vadd.f32 %v528, %v536
      %v541 = vadd.f32 %v529, %v536
      %v542 = vadd.f32 %v530, %v536
      %v543 = vadd.f32 %v531, %v536
      %v544 = vadd.f32 %v532, %v536
      %v545 = vadd.f32 %v533, %v536
      %v546 = vmax.f32 %v538, 0.0
      %v547 = vmax.f32 %v539, 0.0
      %v548 = vmax.f32 %v540, 0.0
      %v549 = vmax.f32 %v541, 0.0
      %v550 = vmax.f32 %v542, 0.0
      %v551 = vmax.f32 %v543, 0.0
      %v552 = vmax.f32 %v544, 0.0
      %v553 = vmax.f32 %v545, 0.0
      %v554 = vpack.c.bf16 %v546, %v546
      %v555 = vpack.c.bf16 %v547, %v547
      %v556 = vpack.c.bf16 %v548, %v548
      %v557 = vpack.c.bf16 %v549, %v549
      %v558 = vpack.c.bf16 %v550, %v550
      %v559 = vpack.c.bf16 %v551, %v551
      %v560 = vpack.c.bf16 %v552, %v552
      %v561 = vpack.c.bf16 %v553, %v553
      %562 = vst [vmem:[%s271] sm:$0xf] %v554
      %563 = vst [vmem:[%s271 + $0x4] sm:$0xf] %v555
      %564 = vst [vmem:[%s271 + $0x8] sm:$0xf] %v556
      %565 = vst [vmem:[%s271 + $0xc] sm:$0xf] %v557
      %566 = vst [vmem:[%s271 + $0x10] sm:$0xf] %v558
      %567 = vst [vmem:[%s271 + $0x14] sm:$0xf] %v559
      %568 = vst [vmem:[%s271 + $0x18] sm:$0xf] %v560
      %569 = vst [vmem:[%s271 + $0x1c] sm:$0xf] %v561
      %p570 = scmp.lt.s32.totalorder %s17, 1
      %s571 = scalar_select %p570, %s17, 1
      %s572 = smul.addr %s571, 8
      %s573 = smul.addr %s572, 4
      %s574 = scalar_lea.vmem %s6, %s573
      // Predicated region
      $region45: #{_lambda_.13} parent=43 // pred_check
        %p575 = pneg %p171
      $region46: #{_lambda_.13} parent=43 // pred_check_branch
        %577 = sbr.rel (%p575) target = $region48
      $region47: #{_lambda_.13} parent=43 // pred_region
        _
      $region48: #{_lambda_.13} parent=43 // pred_fallthru
        _
    $region44: #{_lambda_.13} parent=5 // pred_fallthru
      _
    %p578 = scmp.le.s32.totalorder 2, %s12
    // Predicated region
    $region49: #{_lambda_.13} parent=5 // pred_check
      %p579 = pneg %p578
    $region50: #{_lambda_.13} parent=5 // pred_check_branch
      %581 = sbr.rel (%p579) target = $region52
    $region51: #{_lambda_.13} parent=5 // pred_region
      %s582 = ssub.s32 %s12, 2
      // Predicated region
      $region53: #{_lambda_.13} parent=51 // pred_check
        %p583 = pneg %p177
      $region54: #{_lambda_.13} parent=51 // pred_check_branch
        %585 = sbr.rel (%p583) target = $region56
      $region55: #{_lambda_.13} parent=51 // pred_region
        %p586 = scmp.lt.s32.totalorder %s18, 1
        %s587 = scalar_select %p586, %s18, 1
        %s588 = smul.addr %s587, 8
        %s589 = smul.addr %s588, 4
        %s590 = scalar_lea.vmem %s6, %s589
      $region56: #{_lambda_.13} parent=51 // pred_fallthru
        _
    $region52: #{_lambda_.13} parent=5 // pred_fallthru
      _
  $region6: #{_lambda_.13} parent=0 // loop_footer
    %s16 = sadd.s32 1, %s12
  $region7: #{_lambda_.13} parent=0 // loop_footer_branch
    %11 = sbr.rel target = $region3
  $region8: #{_lambda_.13} parent=0 // loop_exit
    _

// kernel: _lambda_.16
$region0: #{_lambda_.16}
  #allocation0 [shape = 'u32[]', space=smem, size = 0x4, offset = 0x4, fixed_abs, tag = 'smem constant byte address 0x4 - core index']
  #allocation1 [shape = 'u32[72,128]{1,0:T(1,128)}', space=vmem, size = 0x9000, scoped, tag = 'internal scratch']
  %s0 = inlined_call_operand.vmem [shape: bf16[2,8,8,128], index: 0, kind: input, shape index: {}]
  %s1 = inlined_call_operand.vmem [shape: bf16[1,128,128], index: 1, kind: input, shape index: {}]
  %s2 = inlined_call_operand.vmem [shape: f32[1,128], index: 2, kind: input, shape index: {}]
  %s3 = inlined_call_operand.vmem [shape: bf16[2,8,8,128], index: 3, kind: input, shape index: {}]
  %s4 = inlined_call_operand.vmem [shape: bf16[2,8,8,128], index: 4, kind: output, shape index: {}]
  %s5 = sld [smem:[#allocation0]]
  $region49: #{_lambda_.16} parent=0
    _
  %s7 = ssub.s32 1, %s5
  %s8 = scalar_select 0, %s7, %s5
  loop: start=0, step=1, limit=4
  $region2: #{_lambda_.16} parent=0 // loop_pre_header
    _
  $region3: #{_lambda_.16} parent=0 // loop_header
    %s10 = sphi 0, %s14
    %p11 = scmp.ge.s32.totalorder %s10, 4
    %s20 = sphi 0, %s22
    %s23 = sphi 0, %s20
    %s24 = sphi 0, %s23
    %s40 = sphi 0, %s24
    %s44 = sphi 0, %s44
    %s46 = sphi 0, %s44
    %s47 = sphi 0, %s46
    %s61 = sphi 0, %s47
    %s65 = sphi 0, %s65
    %s67 = sphi 0, %s65
    %s68 = sphi 0, %s67
    %s82 = sphi 0, %s68
    %s88 = sphi 0, %s90
    %s91 = sphi 0, %s88
    %s92 = sphi 0, %s91
    %s108 = sphi 0, %s92
    %s114 = sphi 0, %s116
    %s117 = sphi 0, %s114
    %s118 = sphi 0, %s117
    %s134 = sphi 0, %s118
  $region4: #{_lambda_.16} parent=0 // loop_header_branch
    %13 = sbr.rel (%p11) target = $region8
  $region5: #{_lambda_.16} parent=0 // loop_body
    %s15 = ssub.s32 %s10, 1
    %s16 = ssub.s32 %s10, 2
    %s17 = sadd.s32 %s10, 1
    %s18 = ssub.s32 %s10, %s17
    %p19 = scmp.eq.s32.totalorder %s18, 0
    %s21 = sadd.s32 %s20, 1
    %s22 = scalar_select %p19, %s20, %s21
    %p25 = pneg %p19
    %p26 = scmp.eq.s32.totalorder %s10, 1
    %p27 = por %p25, %p26
    %p28 = scmp.ne.s32.totalorder %s20, %s23
    %p29 = scmp.eq.s32.totalorder %s10, 0
    %p30 = por %p28, %p29
    %p31 = scmp.ne.s32.totalorder %s20, %s23
    %p32 = scmp.eq.s32.totalorder %s15, 1
    %p33 = por %p31, %p32
    %p34 = scmp.ne.s32.totalorder %s23, %s24
    %p35 = scmp.eq.s32.totalorder %s15, 0
    %p36 = por %p34, %p35
    %p37 = scmp.ne.s32.totalorder %s23, %s24
    %p38 = scmp.eq.s32.totalorder %s16, 1
    %p39 = por %p37, %p38
    %p41 = scmp.ne.s32.totalorder %s24, %s40
    %p42 = scmp.eq.s32.totalorder %s16, 0
    %p43 = por %p41, %p42
    %s45 = sadd.s32 %s44, 1
    %p48 = scmp.eq.s32.totalorder %s10, 1
    %p49 = scmp.ne.s32.totalorder %s44, %s46
    %p50 = scmp.eq.s32.totalorder %s10, 0
    %p51 = por %p49, %p50
    %p52 = scmp.ne.s32.totalorder %s44, %s46
    %p53 = scmp.eq.s32.totalorder %s15, 1
    %p54 = por %p52, %p53
    %p55 = scmp.ne.s32.totalorder %s46, %s47
    %p56 = scmp.eq.s32.totalorder %s15, 0
    %p57 = por %p55, %p56
    %p58 = scmp.ne.s32.totalorder %s46, %s47
    %p59 = scmp.eq.s32.totalorder %s16, 1
    %p60 = por %p58, %p59
    %p62 = scmp.ne.s32.totalorder %s47, %s61
    %p63 = scmp.eq.s32.totalorder %s16, 0
    %p64 = por %p62, %p63
    %s66 = sadd.s32 %s65, 1
    %p69 = scmp.eq.s32.totalorder %s10, 1
    %p70 = scmp.ne.s32.totalorder %s65, %s67
    %p71 = scmp.eq.s32.totalorder %s10, 0
    %p72 = por %p70, %p71
    %p73 = scmp.ne.s32.totalorder %s65, %s67
    %p74 = scmp.eq.s32.totalorder %s15, 1
    %p75 = por %p73, %p74
    %p76 = scmp.ne.s32.totalorder %s67, %s68
    %p77 = scmp.eq.s32.totalorder %s15, 0
    %p78 = por %p76, %p77
    %p79 = scmp.ne.s32.totalorder %s67, %s68
    %p80 = scmp.eq.s32.totalorder %s16, 1
    %p81 = por %p79, %p80
    %p83 = scmp.ne.s32.totalorder %s68, %s82
    %p84 = scmp.eq.s32.totalorder %s16, 0
    %p85 = por %p83, %p84
    %s86 = ssub.s32 %s10, %s17
    %p87 = scmp.eq.s32.totalorder %s86, 0
    %s89 = sadd.s32 %s88, 1
    %s90 = scalar_select %p87, %s88, %s89
    %p93 = pneg %p87
    %p94 = scmp.eq.s32.totalorder %s10, 1
    %p95 = por %p93, %p94
    %p96 = scmp.ne.s32.totalorder %s88, %s91
    %p97 = scmp.eq.s32.totalorder %s10, 0
    %p98 = por %p96, %p97
    %p99 = scmp.ne.s32.totalorder %s88, %s91
    %p100 = scmp.eq.s32.totalorder %s15, 1
    %p101 = por %p99, %p100
    %p102 = scmp.ne.s32.totalorder %s91, %s92
    %p103 = scmp.eq.s32.totalorder %s15, 0
    %p104 = por %p102, %p103
    %p105 = scmp.ne.s32.totalorder %s91, %s92
    %p106 = scmp.eq.s32.totalorder %s16, 1
    %p107 = por %p105, %p106
    %p109 = scmp.ne.s32.totalorder %s92, %s108
    %p110 = scmp.eq.s32.totalorder %s16, 0
    %p111 = por %p109, %p110
    %s112 = ssub.s32 %s10, %s17
    %p113 = scmp.eq.s32.totalorder %s112, 0
    %s115 = sadd.s32 %s114, 1
    %s116 = scalar_select %p113, %s114, %s115
    %p119 = pneg %p113
    %p120 = scmp.eq.s32.totalorder %s10, 1
    %p121 = por %p119, %p120
    %p122 = scmp.ne.s32.totalorder %s114, %s117
    %p123 = scmp.eq.s32.totalorder %s10, 0
    %p124 = por %p122, %p123
    %p125 = scmp.ne.s32.totalorder %s114, %s117
    %p126 = scmp.eq.s32.totalorder %s15, 1
    %p127 = por %p125, %p126
    %p128 = scmp.ne.s32.totalorder %s117, %s118
    %p129 = scmp.eq.s32.totalorder %s15, 0
    %p130 = por %p128, %p129
    %p131 = scmp.ne.s32.totalorder %s117, %s118
    %p132 = scmp.eq.s32.totalorder %s16, 1
    %p133 = por %p131, %p132
    %p135 = scmp.ne.s32.totalorder %s118, %s134
    %p136 = scmp.eq.s32.totalorder %s16, 0
    %p137 = por %p135, %p136
    %p138 = scmp.le.s32.totalorder 1, %s10
    %p139 = scmp.lt.s32.totalorder %s10, 3
    %p140 = pnand %p138, %p139
    %p141 = pneg %p140
    // Predicated region
    $region9: #{_lambda_.16} parent=5 // pred_check
      _
    $region10: #{_lambda_.16} parent=5 // pred_check_branch
      %143 = sbr.rel (%p140) target = $region12
    $region11: #{_lambda_.16} parent=5 // pred_region
      %s144 = ssub.s32 %s10, 1
      // Predicated region
      $region13: #{_lambda_.16} parent=11 // pred_check
        %p145 = pneg %p57
      $region14: #{_lambda_.16} parent=11 // pred_check_branch
        %147 = sbr.rel (%p145) target = $region16
      $region15: #{_lambda_.16} parent=11 // pred_region
        _
      $region16: #{_lambda_.16} parent=11 // pred_fallthru
        _
      // Predicated region
      $region17: #{_lambda_.16} parent=11 // pred_check
        %p148 = pneg %p78
      $region18: #{_lambda_.16} parent=11 // pred_check_branch
        %150 = sbr.rel (%p148) target = $region20
      $region19: #{_lambda_.16} parent=11 // pred_region
        _
      $region20: #{_lambda_.16} parent=11 // pred_fallthru
        _
    $region12: #{_lambda_.16} parent=5 // pred_fallthru
      _
    %p151 = scmp.lt.s32.totalorder %s10, 2
    // Predicated region
    $region21: #{_lambda_.16} parent=5 // pred_check
      %p152 = pneg %p151
    $region22: #{_lambda_.16} parent=5 // pred_check_branch
      %154 = sbr.rel (%p152) target = $region24
    $region23: #{_lambda_.16} parent=5 // pred_region
      // Predicated region
      $region25: #{_lambda_.16} parent=23 // pred_check
        %p155 = pneg %p30
      $region26: #{_lambda_.16} parent=23 // pred_check_branch
        %157 = sbr.rel (%p155) target = $region28
      $region27: #{_lambda_.16} parent=23 // pred_region
        %p158 = scmp.lt.s32.totalorder %s10, 1
        %s159 = scalar_select %p158, %s10, 1
        %s160 = smul.addr %s159, 8
        %s161 = smul.addr %s160, 4
        %s162 = scalar_lea.vmem %s0, %s161
      $region28: #{_lambda_.16} parent=23 // pred_fallthru
        _
      // Predicated region
      $region29: #{_lambda_.16} parent=23 // pred_check
        %p163 = pneg %p98
      $region30: #{_lambda_.16} parent=23 // pred_check_branch
        %165 = sbr.rel (%p163) target = $region32
      $region31: #{_lambda_.16} parent=23 // pred_region
        %p166 = scmp.lt.s32.totalorder %s10, 1
        %s167 = scalar_select %p166, %s10, 1
        %s168 = smul.addr %s167, 8
        %s169 = smul.addr %s168, 4
        %s170 = scalar_lea.vmem %s3, %s169
      $region32: #{_lambda_.16} parent=23 // pred_fallthru
        _
    $region24: #{_lambda_.16} parent=5 // pred_fallthru
      _
    %p171 = scmp.le.s32.totalorder 1, %s10
    %p172 = scmp.lt.s32.totalorder %s10, 3
    %p173 = pnand %p171, %p172
    %p174 = pneg %p173
    // Predicated region
    $region33: #{_lambda_.16} parent=5 // pred_check
      _
    $region34: #{_lambda_.16} parent=5 // pred_check_branch
      %176 = sbr.rel (%p173) target = $region36
    $region35: #{_lambda_.16} parent=5 // pred_region
      %s177 = ssub.s32 %s10, 1
      %p178 = scmp.lt.s32.totalorder %s15, 1
      %s179 = scalar_select %p178, %s15, 1
      %s180 = smul.addr %s179, 8
      %s181 = smul.addr %s180, 4
      %s182 = scalar_lea.vmem %s0, %s181
      %p183 = pneg %p36
      %p184 = pneg %p33
      %p185 = pneg %p57
      %p186 = pneg %p54
      %p187 = pneg %p78
      %p188 = pneg %p75
      %p189 = scmp.lt.s32.totalorder %s15, 1
      %s190 = scalar_select %p189, %s15, 1
      %s191 = smul.addr %s190, 8
      %s192 = smul.addr %s191, 4
      %s193 = scalar_lea.vmem %s3, %s192
      %p194 = pneg %p104
      %p195 = pneg %p101
      %p196 = pneg %p130
      %p197 = pneg %p127
      %p198 = scmp.lt.s32.totalorder %s15, 1
      %s199 = scalar_select %p198, %s15, 1
      %s200 = smul.addr %s199, 8
      %s201 = smul.addr %s200, 4
      %s202 = scalar_lea.vmem %s4, %s201
      %p203 = scmp.lt.s32.totalorder %s15, 1
      %s204 = scalar_select %p203, %s15, 1
      %s205 = smul.addr %s204, 8
      %s206 = smul.addr %s205, 4
      %s207 = scalar_lea.vmem %s0, %s206
      %p208 = scmp.lt.s32.totalorder %s15, 1
      %s209 = scalar_select %p208, %s15, 1
      %s210 = smul.addr %s209, 8
      %s211 = smul.addr %s210, 4
      %s212 = scalar_lea.vmem %s3, %s211
      %p213 = scmp.lt.s32.totalorder %s15, 1
      %s214 = scalar_select %p213, %s15, 1
      %s215 = smul.addr %s214, 8
      %s216 = smul.addr %s215, 4
      %s217 = scalar_lea.vmem %s4, %s216
      %v218 = vld [vmem:[%s207] sm:$0xf]
      %v219 = vld [vmem:[%s207 + $0x4] sm:$0xf]
      %v220 = vld [vmem:[%s207 + $0x8] sm:$0xf]
      %v221 = vld [vmem:[%s207 + $0xc] sm:$0xf]
      %v222 = vld [vmem:[%s207 + $0x10] sm:$0xf]
      %v223 = vld [vmem:[%s207 + $0x14] sm:$0xf]
      %v224 = vld [vmem:[%s207 + $0x18] sm:$0xf]
      %v225 = vld [vmem:[%s207 + $0x1c] sm:$0xf]
      %v226 = vld [vmem:[%s1] sm:$0xf]
      %v227 = vld [vmem:[%s1 + $0x4] sm:$0xf]
      %v228 = vld [vmem:[%s1 + $0x8] sm:$0xf]
      %v229 = vld [vmem:[%s1 + $0xc] sm:$0xf]
      %v230 = vld [vmem:[%s1 + $0x10] sm:$0xf]
      %v231 = vld [vmem:[%s1 + $0x14] sm:$0xf]
      %v232 = vld [vmem:[%s1 + $0x18] sm:$0xf]
      %v233 = vld [vmem:[%s1 + $0x1c] sm:$0xf]
      %v234 = vld [vmem:[%s1 + $0x20] sm:$0xf]
      %v235 = vld [vmem:[%s1 + $0x24] sm:$0xf]
      %v236 = vld [vmem:[%s1 + $0x28] sm:$0xf]
      %v237 = vld [vmem:[%s1 + $0x2c] sm:$0xf]
      %v238 = vld [vmem:[%s1 + $0x30] sm:$0xf]
      %v239 = vld [vmem:[%s1 + $0x34] sm:$0xf]
      %v240 = vld [vmem:[%s1 + $0x38] sm:$0xf]
      %v241 = vld [vmem:[%s1 + $0x3c] sm:$0xf]
      %v242 = vld [vmem:[%s2] sm:$0x1]
      %v244 = vperm.slane %v242, 0
      %v254 = vunpack.c.l.b16 %v218
      %v255 = vunpack.c.l.b16 %v219
      %v256 = vunpack.c.l.b16 %v220
      %v257 = vunpack.c.l.b16 %v221
      %v258 = vunpack.c.l.b16 %v222
      %v259 = vunpack.c.l.b16 %v223
      %v260 = vunpack.c.l.b16 %v224
      %v261 = vunpack.c.l.b16 %v225
      %v262 = vpack.c.b16 %v255, %v254
      %v263 = vpack.c.b16 %v257, %v256
      %v264 = vpack.c.b16 %v259, %v258
      %v265 = vpack.c.b16 %v261, %v260
      %v286 = vunpack.c.l.b16 %v226
      %v287 = vunpack.c.l.b16 %v227
      %v288 = vunpack.c.l.b16 %v228
      %v289 = vunpack.c.l.b16 %v229
      %v290 = vunpack.c.l.b16 %v230
      %v291 = vunpack.c.l.b16 %v231
      %v292 = vunpack.c.l.b16 %v232
      %v293 = vunpack.c.l.b16 %v233
      %v294 = vunpack.c.l.b16 %v234
      %v295 = vunpack.c.l.b16 %v235
      %v296 = vunpack.c.l.b16 %v236
      %v297 = vunpack.c.l.b16 %v237
      %v298 = vunpack.c.l.b16 %v238
      %v299 = vunpack.c.l.b16 %v239
      %v300 = vunpack.c.l.b16 %v240
      %v301 = vunpack.c.l.b16 %v241
      %v302 = vpack.c.b16 %v287, %v286
      %v303 = vpack.c.b16 %v289, %v288
      %v304 = vpack.c.b16 %v291, %v290
      %v305 = vpack.c.b16 %v293, %v292
      %v306 = vpack.c.b16 %v295, %v294
      %v307 = vpack.c.b16 %v297, %v296
      %v308 = vpack.c.b16 %v299, %v298
      %v309 = vpack.c.b16 %v301, %v300
      %318 = vmatpush.bf16.msra.mxu0 %v309
      %319 = vmatpush.bf16.msra.mxu0 %v308
      %320 = vmatpush.bf16.msra.mxu0 %v307
      %321 = vmatpush.bf16.msra.mxu0 %v306
      %322 = vmatpush.bf16.msra.mxu0 %v305
      %323 = vmatpush.bf16.msra.mxu0 %v304
      %324 = vmatpush.bf16.msra.mxu0 %v303
      %325 = vmatpush.bf16.msra.mxu0 %v302
      %326 = vmatmul.bf16.gmra.mxu0 %v262
      %v327 = vpop.f32.mrf.mxu0
      %v328 = vadd.f32 %v244, %v327
      %v329 = vpop.f32.mrf.mxu0
      %v330 = vadd.f32 %v244, %v329
      %331 = vmatmul.bf16.gmra.mxu0 %v263
      %v332 = vpop.f32.mrf.mxu0
      %v333 = vadd.f32 %v244, %v332
      %v334 = vpop.f32.mrf.mxu0
      %v335 = vadd.f32 %v244, %v334
      %336 = vmatmul.bf16.gmra.mxu0 %v264
      %v337 = vpop.f32.mrf.mxu0
      %v338 = vadd.f32 %v244, %v337
      %v339 = vpop.f32.mrf.mxu0
      %v340 = vadd.f32 %v244, %v339
      %341 = vmatmul.bf16.gmra.mxu0 %v265
      %v342 = vpop.f32.mrf.mxu0
      %v343 = vadd.f32 %v244, %v342
      %v344 = vpop.f32.mrf.mxu0
      %v345 = vadd.f32 %v244, %v344
      %346 = vdwg.mxu0
      %v347 = vld [vmem:[%s212] sm:$0xf]
      %v348 = vld [vmem:[%s212 + $0x4] sm:$0xf]
      %v349 = vld [vmem:[%s212 + $0x8] sm:$0xf]
      %v350 = vld [vmem:[%s212 + $0xc] sm:$0xf]
      %v351 = vld [vmem:[%s212 + $0x10] sm:$0xf]
      %v352 = vld [vmem:[%s212 + $0x14] sm:$0xf]
      %v353 = vld [vmem:[%s212 + $0x18] sm:$0xf]
      %v354 = vld [vmem:[%s212 + $0x1c] sm:$0xf]
      %v355 = vunpack.c.l.bf16 %v347
      %v356 = vunpack.c.l.bf16 %v348
      %v357 = vunpack.c.l.bf16 %v349
      %v358 = vunpack.c.l.bf16 %v350
      %v359 = vunpack.c.l.bf16 %v351
      %v360 = vunpack.c.l.bf16 %v352
      %v361 = vunpack.c.l.bf16 %v353
      %v362 = vunpack.c.l.bf16 %v354
      %v363 = vadd.f32 %v328, %v355
      %v364 = vadd.f32 %v330, %v356
      %v365 = vadd.f32 %v333, %v357
      %v366 = vadd.f32 %v335, %v358
      %v367 = vadd.f32 %v338, %v359
      %v368 = vadd.f32 %v340, %v360
      %v369 = vadd.f32 %v343, %v361
      %v370 = vadd.f32 %v345, %v362
      %v371 = vmax.f32 %v363, 0.0
      %v372 = vmax.f32 %v364, 0.0
      %v373 = vmax.f32 %v365, 0.0
      %v374 = vmax.f32 %v366, 0.0
      %v375 = vmax.f32 %v367, 0.0
      %v376 = vmax.f32 %v368, 0.0
      %v377 = vmax.f32 %v369, 0.0
      %v378 = vmax.f32 %v370, 0.0
      %v379 = vpack.c.bf16 %v371, %v371
      %v380 = vpack.c.bf16 %v372, %v372
      %v381 = vpack.c.bf16 %v373, %v373
      %v382 = vpack.c.bf16 %v374, %v374
      %v383 = vpack.c.bf16 %v375, %v375
      %v384 = vpack.c.bf16 %v376, %v376
      %v385 = vpack.c.bf16 %v377, %v377
      %v386 = vpack.c.bf16 %v378, %v378
      %387 = vst [vmem:[%s217] sm:$0xf] %v379
      %388 = vst [vmem:[%s217 + $0x4] sm:$0xf] %v380
      %389 = vst [vmem:[%s217 + $0x8] sm:$0xf] %v381
      %390 = vst [vmem:[%s217 + $0xc] sm:$0xf] %v382
      %391 = vst [vmem:[%s217 + $0x10] sm:$0xf] %v383
      %392 = vst [vmem:[%s217 + $0x14] sm:$0xf] %v384
      %393 = vst [vmem:[%s217 + $0x18] sm:$0xf] %v385
      %394 = vst [vmem:[%s217 + $0x1c] sm:$0xf] %v386
      %p395 = scmp.lt.s32.totalorder %s15, 1
      %s396 = scalar_select %p395, %s15, 1
      %s397 = smul.addr %s396, 8
      %s398 = smul.addr %s397, 4
      %s399 = scalar_lea.vmem %s4, %s398
      // Predicated region
      $region37: #{_lambda_.16} parent=35 // pred_check
        %p400 = pneg %p127
      $region38: #{_lambda_.16} parent=35 // pred_check_branch
        %402 = sbr.rel (%p400) target = $region40
      $region39: #{_lambda_.16} parent=35 // pred_region
        _
      $region40: #{_lambda_.16} parent=35 // pred_fallthru
        _
    $region36: #{_lambda_.16} parent=5 // pred_fallthru
      _
    %p403 = scmp.le.s32.totalorder 2, %s10
    // Predicated region
    $region41: #{_lambda_.16} parent=5 // pred_check
      %p404 = pneg %p403
    $region42: #{_lambda_.16} parent=5 // pred_check_branch
      %406 = sbr.rel (%p404) target = $region44
    $region43: #{_lambda_.16} parent=5 // pred_region
      %s407 = ssub.s32 %s10, 2
      // Predicated region
      $region45: #{_lambda_.16} parent=43 // pred_check
        %p408 = pneg %p133
      $region46: #{_lambda_.16} parent=43 // pred_check_branch
        %410 = sbr.rel (%p408) target = $region48
      $region47: #{_lambda_.16} parent=43 // pred_region
        %p411 = scmp.lt.s32.totalorder %s16, 1
        %s412 = scalar_select %p411, %s16, 1
        %s413 = smul.addr %s412, 8
        %s414 = smul.addr %s413, 4
        %s415 = scalar_lea.vmem %s4, %s414
      $region48: #{_lambda_.16} parent=43 // pred_fallthru
        _
    $region44: #{_lambda_.16} parent=5 // pred_fallthru
      _
  $region6: #{_lambda_.16} parent=0 // loop_footer
    %s14 = sadd.s32 1, %s10
  $region7: #{_lambda_.16} parent=0 // loop_footer_branch
    %9 = sbr.rel target = $region3
  $region8: #{_lambda_.16} parent=0 // loop_exit
    _

// kernel: _lambda_.12
$region0: #{_lambda_.12}
  #allocation0 [shape = 'u32[]', space=smem, size = 0x4, offset = 0x4, fixed_abs, tag = 'smem constant byte address 0x4 - core index']
  #allocation1 [shape = 'u32[72,128]{1,0:T(1,128)}', space=vmem, size = 0x9000, scoped, tag = 'internal scratch']
  %s0 = inlined_call_operand.vmem [shape: bf16[2,10,10,128], index: 0, kind: input, shape index: {}]
  %s1 = inlined_call_operand.vmem [shape: bf16[9,128,128], index: 1, kind: input, shape index: {}]
  %s2 = inlined_call_operand.vmem [shape: f32[1,128], index: 2, kind: input, shape index: {}]
  %s3 = inlined_call_operand.vmem [shape: bf16[2,8,8,128], index: 3, kind: output, shape index: {}]
  %s4 = sld [smem:[#allocation0]]
  $region45: #{_lambda_.12} parent=0
    _
  %s6 = ssub.s32 1, %s4
  %s7 = scalar_select 0, %s6, %s4
  loop: start=0, step=1, limit=4
  $region2: #{_lambda_.12} parent=0 // loop_pre_header
    _
  $region3: #{_lambda_.12} parent=0 // loop_header
    %s9 = sphi 0, %s13
    %p10 = scmp.ge.s32.totalorder %s9, 4
    %s19 = sphi 0, %s21
    %s22 = sphi 0, %s19
    %s23 = sphi 0, %s22
    %s39 = sphi 0, %s23
    %s43 = sphi 0, %s43
    %s45 = sphi 0, %s43
    %s46 = sphi 0, %s45
    %s60 = sphi 0, %s46
    %s64 = sphi 0, %s64
    %s66 = sphi 0, %s64
    %s67 = sphi 0, %s66
    %s81 = sphi 0, %s67
    %s87 = sphi 0, %s89
    %s90 = sphi 0, %s87
    %s91 = sphi 0, %s90
    %s107 = sphi 0, %s91
  $region4: #{_lambda_.12} parent=0 // loop_header_branch
    %12 = sbr.rel (%p10) target = $region8
  $region5: #{_lambda_.12} parent=0 // loop_body
    %s14 = ssub.s32 %s9, 1
    %s15 = ssub.s32 %s9, 2
    %s16 = sadd.s32 %s9, 1
    %s17 = ssub.s32 %s9, %s16
    %p18 = scmp.eq.s32.totalorder %s17, 0
    %s20 = sadd.s32 %s19, 1
    %s21 = scalar_select %p18, %s19, %s20
    %p24 = pneg %p18
    %p25 = scmp.eq.s32.totalorder %s9, 1
    %p26 = por %p24, %p25
    %p27 = scmp.ne.s32.totalorder %s19, %s22
    %p28 = scmp.eq.s32.totalorder %s9, 0
    %p29 = por %p27, %p28
    %p30 = scmp.ne.s32.totalorder %s19, %s22
    %p31 = scmp.eq.s32.totalorder %s14, 1
    %p32 = por %p30, %p31
    %p33 = scmp.ne.s32.totalorder %s22, %s23
    %p34 = scmp.eq.s32.totalorder %s14, 0
    %p35 = por %p33, %p34
    %p36 = scmp.ne.s32.totalorder %s22, %s23
    %p37 = scmp.eq.s32.totalorder %s15, 1
    %p38 = por %p36, %p37
    %p40 = scmp.ne.s32.totalorder %s23, %s39
    %p41 = scmp.eq.s32.totalorder %s15, 0
    %p42 = por %p40, %p41
    %s44 = sadd.s32 %s43, 1
    %p47 = scmp.eq.s32.totalorder %s9, 1
    %p48 = scmp.ne.s32.totalorder %s43, %s45
    %p49 = scmp.eq.s32.totalorder %s9, 0
    %p50 = por %p48, %p49
    %p51 = scmp.ne.s32.totalorder %s43, %s45
    %p52 = scmp.eq.s32.totalorder %s14, 1
    %p53 = por %p51, %p52
    %p54 = scmp.ne.s32.totalorder %s45, %s46
    %p55 = scmp.eq.s32.totalorder %s14, 0
    %p56 = por %p54, %p55
    %p57 = scmp.ne.s32.totalorder %s45, %s46
    %p58 = scmp.eq.s32.totalorder %s15, 1
    %p59 = por %p57, %p58
    %p61 = scmp.ne.s32.totalorder %s46, %s60
    %p62 = scmp.eq.s32.totalorder %s15, 0
    %p63 = por %p61, %p62
    %s65 = sadd.s32 %s64, 1
    %p68 = scmp.eq.s32.totalorder %s9, 1
    %p69 = scmp.ne.s32.totalorder %s64, %s66
    %p70 = scmp.eq.s32.totalorder %s9, 0
    %p71 = por %p69, %p70
    %p72 = scmp.ne.s32.totalorder %s64, %s66
    %p73 = scmp.eq.s32.totalorder %s14, 1
    %p74 = por %p72, %p73
    %p75 = scmp.ne.s32.totalorder %s66, %s67
    %p76 = scmp.eq.s32.totalorder %s14, 0
    %p77 = por %p75, %p76
    %p78 = scmp.ne.s32.totalorder %s66, %s67
    %p79 = scmp.eq.s32.totalorder %s15, 1
    %p80 = por %p78, %p79
    %p82 = scmp.ne.s32.totalorder %s67, %s81
    %p83 = scmp.eq.s32.totalorder %s15, 0
    %p84 = por %p82, %p83
    %s85 = ssub.s32 %s9, %s16
    %p86 = scmp.eq.s32.totalorder %s85, 0
    %s88 = sadd.s32 %s87, 1
    %s89 = scalar_select %p86, %s87, %s88
    %p92 = pneg %p86
    %p93 = scmp.eq.s32.totalorder %s9, 1
    %p94 = por %p92, %p93
    %p95 = scmp.ne.s32.totalorder %s87, %s90
    %p96 = scmp.eq.s32.totalorder %s9, 0
    %p97 = por %p95, %p96
    %p98 = scmp.ne.s32.totalorder %s87, %s90
    %p99 = scmp.eq.s32.totalorder %s14, 1
    %p100 = por %p98, %p99
    %p101 = scmp.ne.s32.totalorder %s90, %s91
    %p102 = scmp.eq.s32.totalorder %s14, 0
    %p103 = por %p101, %p102
    %p104 = scmp.ne.s32.totalorder %s90, %s91
    %p105 = scmp.eq.s32.totalorder %s15, 1
    %p106 = por %p104, %p105
    %p108 = scmp.ne.s32.totalorder %s91, %s107
    %p109 = scmp.eq.s32.totalorder %s15, 0
    %p110 = por %p108, %p109
    %p111 = scmp.le.s32.totalorder 1, %s9
    %p112 = scmp.lt.s32.totalorder %s9, 3
    %p113 = pnand %p111, %p112
    %p114 = pneg %p113
    // Predicated region
    $region9: #{_lambda_.12} parent=5 // pred_check
      _
    $region10: #{_lambda_.12} parent=5 // pred_check_branch
      %116 = sbr.rel (%p113) target = $region12
    $region11: #{_lambda_.12} parent=5 // pred_region
      %s117 = ssub.s32 %s9, 1
      // Predicated region
      $region13: #{_lambda_.12} parent=11 // pred_check
        %p118 = pneg %p56
      $region14: #{_lambda_.12} parent=11 // pred_check_branch
        %120 = sbr.rel (%p118) target = $region16
      $region15: #{_lambda_.12} parent=11 // pred_region
        _
      $region16: #{_lambda_.12} parent=11 // pred_fallthru
        _
      // Predicated region
      $region17: #{_lambda_.12} parent=11 // pred_check
        %p121 = pneg %p77
      $region18: #{_lambda_.12} parent=11 // pred_check_branch
        %123 = sbr.rel (%p121) target = $region20
      $region19: #{_lambda_.12} parent=11 // pred_region
        _
      $region20: #{_lambda_.12} parent=11 // pred_fallthru
        _
    $region12: #{_lambda_.12} parent=5 // pred_fallthru
      _
    %p124 = scmp.lt.s32.totalorder %s9, 2
    // Predicated region
    $region21: #{_lambda_.12} parent=5 // pred_check
      %p125 = pneg %p124
    $region22: #{_lambda_.12} parent=5 // pred_check_branch
      %127 = sbr.rel (%p125) target = $region24
    $region23: #{_lambda_.12} parent=5 // pred_region
      // Predicated region
      $region25: #{_lambda_.12} parent=23 // pred_check
        %p128 = pneg %p29
      $region26: #{_lambda_.12} parent=23 // pred_check_branch
        %130 = sbr.rel (%p128) target = $region28
      $region27: #{_lambda_.12} parent=23 // pred_region
        %p131 = scmp.lt.s32.totalorder %s9, 1
        %s132 = scalar_select %p131, %s9, 1
        %s133 = smul.addr %s132, 20
        %s134 = smul.addr %s133, 4
        %s135 = scalar_lea.vmem %s0, %s134
      $region28: #{_lambda_.12} parent=23 // pred_fallthru
        _
    $region24: #{_lambda_.12} parent=5 // pred_fallthru
      _
    %p136 = scmp.le.s32.totalorder 1, %s9
    %p137 = scmp.lt.s32.totalorder %s9, 3
    %p138 = pnand %p136, %p137
    %p139 = pneg %p138
    // Predicated region
    $region29: #{_lambda_.12} parent=5 // pred_check
      _
    $region30: #{_lambda_.12} parent=5 // pred_check_branch
      %141 = sbr.rel (%p138) target = $region32
    $region31: #{_lambda_.12} parent=5 // pred_region
      %s142 = ssub.s32 %s9, 1
      %p143 = scmp.lt.s32.totalorder %s14, 1
      %s144 = scalar_select %p143, %s14, 1
      %s145 = smul.addr %s144, 20
      %s146 = smul.addr %s145, 4
      %s147 = scalar_lea.vmem %s0, %s146
      %p148 = pneg %p35
      %p149 = pneg %p32
      %p150 = pneg %p56
      %p151 = pneg %p53
      %p152 = pneg %p77
      %p153 = pneg %p74
      %p154 = pneg %p103
      %p155 = pneg %p100
      %p156 = scmp.lt.s32.totalorder %s14, 1
      %s157 = scalar_select %p156, %s14, 1
      %s158 = smul.addr %s157, 8
      %s159 = smul.addr %s158, 4
      %s160 = scalar_lea.vmem %s3, %s159
      %p161 = scmp.lt.s32.totalorder %s14, 1
      %s162 = scalar_select %p161, %s14, 1
      %s163 = smul.addr %s162, 20
      %s164 = smul.addr %s163, 4
      %s165 = scalar_lea.vmem %s0, %s164
      %p166 = scmp.lt.s32.totalorder %s14, 1
      %s167 = scalar_select %p166, %s14, 1
      %s168 = smul.addr %s167, 8
      %s169 = smul.addr %s168, 4
      %s170 = scalar_lea.vmem %s3, %s169
      %v171 = vld [vmem:[%s165] sm:$0xf]
      %v172 = vld [vmem:[%s165 + $0x8] sm:$0xf]
      %v173 = vld [vmem:[%s165 + $0x10] sm:$0xf]
      %v174 = vld [vmem:[%s165 + $0x18] sm:$0xf]
      %v175 = vld [vmem:[%s165 + $0x20] sm:$0xf]
      %v176 = vld [vmem:[%s165 + $0x28] sm:$0xf]
      %v177 = vld [vmem:[%s165 + $0x30] sm:$0xf]
      %v178 = vld [vmem:[%s165 + $0x38] sm:$0xf]
      %v179 = vld [vmem:[%s1] sm:$0xf]
      %v180 = vld [vmem:[%s1 + $0x4] sm:$0xf]
      %v181 = vld [vmem:[%s1 + $0x8] sm:$0xf]
      %v182 = vld [vmem:[%s1 + $0xc] sm:$0xf]
      %v183 = vld [vmem:[%s1 + $0x10] sm:$0xf]
      %v184 = vld [vmem:[%s1 + $0x14] sm:$0xf]
      %v185 = vld [vmem:[%s1 + $0x18] sm:$0xf]
      %v186 = vld [vmem:[%s1 + $0x1c] sm:$0xf]
      %v187 = vld [vmem:[%s1 + $0x20] sm:$0xf]
      %v188 = vld [vmem:[%s1 + $0x24] sm:$0xf]
      %v189 = vld [vmem:[%s1 + $0x28] sm:$0xf]
      %v190 = vld [vmem:[%s1 + $0x2c] sm:$0xf]
      %v191 = vld [vmem:[%s1 + $0x30] sm:$0xf]
      %v192 = vld [vmem:[%s1 + $0x34] sm:$0xf]
      %v193 = vld [vmem:[%s1 + $0x38] sm:$0xf]
      %v194 = vld [vmem:[%s1 + $0x3c] sm:$0xf]
      %v195 = vld [vmem:[%s165 + $0x4] sm:$0x1]
      %v196 = vld [vmem:[%s165 + $0xc] sm:$0x1]
      %v197 = vld [vmem:[%s165 + $0x14] sm:$0x1]
      %v198 = vld [vmem:[%s165 + $0x1c] sm:$0x1]
      %v199 = vld [vmem:[%s165 + $0x24] sm:$0x1]
      %v200 = vld [vmem:[%s165 + $0x2c] sm:$0x1]
      %v201 = vld [vmem:[%s165 + $0x34] sm:$0x1]
      %v202 = vld [vmem:[%s165 + $0x3c] sm:$0x1]
      %vm203 = vsmask.f32 3328
      %vm204 = vsmask.f32 7440
      %vm205 = vmor %vm203, %vm204
      %v207 = vshrl.u32 %v171, 16
      %v209 = vrot.slane %v207, 4
      %v210 = vshll.u32 %v171, 16
      %v212 = vrot.slane %v210, 5
      %v213 = vor.u32 %v209, %v212
      %v214 = vrot.slane %v213, 4
      %v216 = vshll.u32 %v195, 16
      %v218 = vrot.slane %v216, 5
      %v219 = vsel %vm205, %v214, %v218
      %v221 = vshrl.u32 %v172, 16
      %v223 = vrot.slane %v221, 4
      %v224 = vshll.u32 %v172, 16
      %v226 = vrot.slane %v224, 5
      %v227 = vor.u32 %v223, %v226
      %v228 = vrot.slane %v227, 4
      %v230 = vshll.u32 %v196, 16
      %v232 = vrot.slane %v230, 5
      %v233 = vsel %vm205, %v228, %v232
      %v235 = vshrl.u32 %v173, 16
      %v237 = vrot.slane %v235, 4
      %v238 = vshll.u32 %v173, 16
      %v240 = vrot.slane %v238, 5
      %v241 = vor.u32 %v237, %v240
      %v242 = vrot.slane %v241, 4
      %v244 = vshll.u32 %v197, 16
      %v246 = vrot.slane %v244, 5
      %v247 = vsel %vm205, %v242, %v246
      %v249 = vshrl.u32 %v174, 16
      %v251 = vrot.slane %v249, 4
      %v252 = vshll.u32 %v174, 16
      %v254 = vrot.slane %v252, 5
      %v255 = vor.u32 %v251, %v254
      %v256 = vrot.slane %v255, 4
      %v258 = vshll.u32 %v198, 16
      %v260 = vrot.slane %v258, 5
      %v261 = vsel %vm205, %v256, %v260
      %v263 = vshrl.u32 %v175, 16
      %v265 = vrot.slane %v263, 4
      %v266 = vshll.u32 %v175, 16
      %v268 = vrot.slane %v266, 5
      %v269 = vor.u32 %v265, %v268
      %v270 = vrot.slane %v269, 4
      %v272 = vshll.u32 %v199, 16
      %v274 = vrot.slane %v272, 5
      %v275 = vsel %vm205, %v270, %v274
      %v277 = vshrl.u32 %v176, 16
      %v279 = vrot.slane %v277, 4
      %v280 = vshll.u32 %v176, 16
      %v282 = vrot.slane %v280, 5
      %v283 = vor.u32 %v279, %v282
      %v284 = vrot.slane %v283, 4
      %v286 = vshll.u32 %v200, 16
      %v288 = vrot.slane %v286, 5
      %v289 = vsel %vm205, %v284, %v288
      %v291 = vshrl.u32 %v177, 16
      %v293 = vrot.slane %v291, 4
      %v294 = vshll.u32 %v177, 16
      %v296 = vrot.slane %v294, 5
      %v297 = vor.u32 %v293, %v296
      %v298 = vrot.slane %v297, 4
      %v300 = vshll.u32 %v201, 16
      %v302 = vrot.slane %v300, 5
      %v303 = vsel %vm205, %v298, %v302
      %v305 = vshrl.u32 %v178, 16
      %v307 = vrot.slane %v305, 4
      %v308 = vshll.u32 %v178, 16
      %v310 = vrot.slane %v308, 5
      %v311 = vor.u32 %v307, %v310
      %v312 = vrot.slane %v311, 4
      %v314 = vshll.u32 %v202, 16
      %v316 = vrot.slane %v314, 5
      %v317 = vsel %vm205, %v312, %v316
      %s318 = scalar_lea.vmem %s1, 64
      %v319 = vld [vmem:[%s318] sm:$0xf]
      %v320 = vld [vmem:[%s318 + $0x4] sm:$0xf]
      %v321 = vld [vmem:[%s318 + $0x8] sm:$0xf]
      %v322 = vld [vmem:[%s318 + $0xc] sm:$0xf]
      %v323 = vld [vmem:[%s318 + $0x10] sm:$0xf]
      %v324 = vld [vmem:[%s318 + $0x14] sm:$0xf]
      %v325 = vld [vmem:[%s318 + $0x18] sm:$0xf]
      %v326 = vld [vmem:[%s318 + $0x1c] sm:$0xf]
      %v327 = vld [vmem:[%s318 + $0x20] sm:$0xf]
      %v328 = vld [vmem:[%s318 + $0x24] sm:$0xf]
      %v329 = vld [vmem:[%s318 + $0x28] sm:$0xf]
      %v330 = vld [vmem:[%s318 + $0x2c] sm:$0xf]
      %v331 = vld [vmem:[%s318 + $0x30] sm:$0xf]
      %v332 = vld [vmem:[%s318 + $0x34] sm:$0xf]
      %v333 = vld [vmem:[%s318 + $0x38] sm:$0xf]
      %v334 = vld [vmem:[%s318 + $0x3c] sm:$0xf]
      %v335 = vunpack.c.l.b16 %v219
      %v336 = vunpack.c.l.b16 %v233
      %v337 = vunpack.c.l.b16 %v247
      %v338 = vunpack.c.l.b16 %v261
      %v339 = vunpack.c.l.b16 %v275
      %v340 = vunpack.c.l.b16 %v289
      %v341 = vunpack.c.l.b16 %v303
      %v342 = vunpack.c.l.b16 %v317
      %v343 = vpack.c.b16 %v336, %v335
      %v344 = vpack.c.b16 %v338, %v337
      %v345 = vpack.c.b16 %v340, %v339
      %v346 = vpack.c.b16 %v342, %v341
      %v367 = vunpack.c.l.b16 %v319
      %v368 = vunpack.c.l.b16 %v320
      %v369 = vunpack.c.l.b16 %v321
      %v370 = vunpack.c.l.b16 %v322
      %v371 = vunpack.c.l.b16 %v323
      %v372 = vunpack.c.l.b16 %v324
      %v373 = vunpack.c.l.b16 %v325
      %v374 = vunpack.c.l.b16 %v326
      %v375 = vunpack.c.l.b16 %v327
      %v376 = vunpack.c.l.b16 %v328
      %v377 = vunpack.c.l.b16 %v329
      %v378 = vunpack.c.l.b16 %v330
      %v379 = vunpack.c.l.b16 %v331
      %v380 = vunpack.c.l.b16 %v332
      %v381 = vunpack.c.l.b16 %v333
      %v382 = vunpack.c.l.b16 %v334
      %v383 = vpack.c.b16 %v368, %v367
      %v384 = vpack.c.b16 %v370, %v369
      %v385 = vpack.c.b16 %v372, %v371
      %v386 = vpack.c.b16 %v374, %v373
      %v387 = vpack.c.b16 %v376, %v375
      %v388 = vpack.c.b16 %v378, %v377
      %v389 = vpack.c.b16 %v380, %v379
      %v390 = vpack.c.b16 %v382, %v381
      %399 = vmatpush.bf16.msra.mxu0 %v390
      %400 = vmatpush.bf16.msra.mxu0 %v389
      %401 = vmatpush.bf16.msra.mxu0 %v388
      %402 = vmatpush.bf16.msra.mxu0 %v387
      %403 = vmatpush.bf16.msra.mxu0 %v386
      %404 = vmatpush.bf16.msra.mxu0 %v385
      %405 = vmatpush.bf16.msra.mxu0 %v384
      %406 = vmatpush.bf16.msra.mxu0 %v383
      %407 = vmatmul.bf16.gmra.mxu0 %v343
      %v408 = vpop.f32.mrf.mxu0
      %v409 = vadd.f32 0.0, %v408
      %v410 = vpop.f32.mrf.mxu0
      %v411 = vadd.f32 0.0, %v410
      %412 = vmatmul.bf16.gmra.mxu0 %v344
      %v413 = vpop.f32.mrf.mxu0
      %v414 = vadd.f32 0.0, %v413
      %v415 = vpop.f32.mrf.mxu0
      %v416 = vadd.f32 0.0, %v415
      %417 = vmatmul.bf16.gmra.mxu0 %v345
      %v418 = vpop.f32.mrf.mxu0
      %v419 = vadd.f32 0.0, %v418
      %v420 = vpop.f32.mrf.mxu0
      %v421 = vadd.f32 0.0, %v420
      %422 = vmatmul.bf16.gmra.mxu0 %v346
      %v423 = vpop.f32.mrf.mxu0
      %v424 = vadd.f32 0.0, %v423
      %v425 = vpop.f32.mrf.mxu0
      %v426 = vadd.f32 0.0, %v425
      %427 = vdwg.mxu0
      %v436 = vunpack.c.l.b16 %v171
      %v437 = vunpack.c.l.b16 %v172
      %v438 = vunpack.c.l.b16 %v173
      %v439 = vunpack.c.l.b16 %v174
      %v440 = vunpack.c.l.b16 %v175
      %v441 = vunpack.c.l.b16 %v176
      %v442 = vunpack.c.l.b16 %v177
      %v443 = vunpack.c.l.b16 %v178
      %v444 = vpack.c.b16 %v437, %v436
      %v445 = vpack.c.b16 %v439, %v438
      %v446 = vpack.c.b16 %v441, %v440
      %v447 = vpack.c.b16 %v443, %v442
      %v468 = vunpack.c.l.b16 %v179
      %v469 = vunpack.c.l.b16 %v180
      %v470 = vunpack.c.l.b16 %v181
      %v471 = vunpack.c.l.b16 %v182
      %v472 = vunpack.c.l.b16 %v183
      %v473 = vunpack.c.l.b16 %v184
      %v474 = vunpack.c.l.b16 %v185
      %v475 = vunpack.c.l.b16 %v186
      %v476 = vunpack.c.l.b16 %v187
      %v477 = vunpack.c.l.b16 %v188
      %v478 = vunpack.c.l.b16 %v189
      %v479 = vunpack.c.l.b16 %v190
      %v480 = vunpack.c.l.b16 %v191
      %v481 = vunpack.c.l.b16 %v192
      %v482 = vunpack.c.l.b16 %v193
      %v483 = vunpack.c.l.b16 %v194
      %v484 = vpack.c.b16 %v469, %v468
      %v485 = vpack.c.b16 %v471, %v470
      %v486 = vpack.c.b16 %v473, %v472
      %v487 = vpack.c.b16 %v475, %v474
      %v488 = vpack.c.b16 %v477, %v476
      %v489 = vpack.c.b16 %v479, %v478
      %v490 = vpack.c.b16 %v481, %v480
      %v491 = vpack.c.b16 %v483, %v482
      %500 = vmatpush.bf16.msra.mxu0 %v491
      %501 = vmatpush.bf16.msra.mxu0 %v490
      %502 = vmatpush.bf16.msra.mxu0 %v489
      %503 = vmatpush.bf16.msra.mxu0 %v488
      %504 = vmatpush.bf16.msra.mxu0 %v487
      %505 = vmatpush.bf16.msra.mxu0 %v486
      %506 = vmatpush.bf16.msra.mxu0 %v485
      %507 = vmatpush.bf16.msra.mxu0 %v484
      %508 = vmatmul.bf16.gmra.mxu0 %v444
      %v509 = vpop.f32.mrf.mxu0
      %v510 = vadd.f32 %v409, %v509
      %v511 = vpop.f32.mrf.mxu0
      %v512 = vadd.f32 %v411, %v511
      %513 = vmatmul.bf16.gmra.mxu0 %v445
      %v514 = vpop.f32.mrf.mxu0
      %v515 = vadd.f32 %v414, %v514
      %v516 = vpop.f32.mrf.mxu0
      %v517 = vadd.f32 %v416, %v516
      %518 = vmatmul.bf16.gmra.mxu0 %v446
      %v519 = vpop.f32.mrf.mxu0
      %v520 = vadd.f32 %v419, %v519
      %v521 = vpop.f32.mrf.mxu0
      %v522 = vadd.f32 %v421, %v521
      %523 = vmatmul.bf16.gmra.mxu0 %v447
      %v524 = vpop.f32.mrf.mxu0
      %v525 = vadd.f32 %v424, %v524
      %v526 = vpop.f32.mrf.mxu0
      %v527 = vadd.f32 %v426, %v526
      %528 = vdwg.mxu0
      %v529 = vld [vmem:[%s165] sm:$0xe]
      %v530 = vld [vmem:[%s165 + $0x8] sm:$0xe]
      %v531 = vld [vmem:[%s165 + $0x10] sm:$0xe]
      %v532 = vld [vmem:[%s165 + $0x18] sm:$0xe]
      %v533 = vld [vmem:[%s165 + $0x20] sm:$0xe]
      %v534 = vld [vmem:[%s165 + $0x28] sm:$0xe]
      %v535 = vld [vmem:[%s165 + $0x30] sm:$0xe]
      %v536 = vld [vmem:[%s165 + $0x38] sm:$0xe]
      %vm553 = vcmask 1042432
      %vm554 = vcmask 1046532
      %vm555 = vmor %vm553, %vm554
      %v556 = vrot.slane %v529, 5
      %v557 = vrot.slane %v556, 4
      %v558 = vrot.slane %v195, 5
      %v559 = vsel %vm555, %v557, %v558
      %v560 = vrot.slane %v530, 5
      %v561 = vrot.slane %v560, 4
      %v562 = vrot.slane %v196, 5
      %v563 = vsel %vm555, %v561, %v562
      %v564 = vrot.slane %v531, 5
      %v565 = vrot.slane %v564, 4
      %v566 = vrot.slane %v197, 5
      %v567 = vsel %vm555, %v565, %v566
      %v568 = vrot.slane %v532, 5
      %v569 = vrot.slane %v568, 4
      %v570 = vrot.slane %v198, 5
      %v571 = vsel %vm555, %v569, %v570
      %v572 = vrot.slane %v533, 5
      %v573 = vrot.slane %v572, 4
      %v574 = vrot.slane %v199, 5
      %v575 = vsel %vm555, %v573, %v574
      %v576 = vrot.slane %v534, 5
      %v577 = vrot.slane %v576, 4
      %v578 = vrot.slane %v200, 5
      %v579 = vsel %vm555, %v577, %v578
      %v580 = vrot.slane %v535, 5
      %v581 = vrot.slane %v580, 4
      %v582 = vrot.slane %v201, 5
      %v583 = vsel %vm555, %v581, %v582
      %v584 = vrot.slane %v536, 5
      %v585 = vrot.slane %v584, 4
      %v586 = vrot.slane %v202, 5
      %v587 = vsel %vm555, %v585, %v586
      %s588 = scalar_lea.vmem %s1, 128
      %v589 = vld [vmem:[%s588] sm:$0xf]
      %v590 = vld [vmem:[%s588 + $0x4] sm:$0xf]
      %v591 = vld [vmem:[%s588 + $0x8] sm:$0xf]
      %v592 = vld [vmem:[%s588 + $0xc] sm:$0xf]
      %v593 = vld [vmem:[%s588 + $0x10] sm:$0xf]
      %v594 = vld [vmem:[%s588 + $0x14] sm:$0xf]
      %v595 = vld [vmem:[%s588 + $0x18] sm:$0xf]
      %v596 = vld [vmem:[%s588 + $0x1c] sm:$0xf]
      %v597 = vld [vmem:[%s588 + $0x20] sm:$0xf]
      %v598 = vld [vmem:[%s588 + $0x24] sm:$0xf]
      %v599 = vld [vmem:[%s588 + $0x28] sm:$0xf]
      %v600 = vld [vmem:[%s588 + $0x2c] sm:$0xf]
      %v601 = vld [vmem:[%s588 + $0x30] sm:$0xf]
      %v602 = vld [vmem:[%s588 + $0x34] sm:$0xf]
      %v603 = vld [vmem:[%s588 + $0x38] sm:$0xf]
      %v604 = vld [vmem:[%s588 + $0x3c] sm:$0xf]
      %v605 = vunpack.c.l.b16 %v559
      %v606 = vunpack.c.l.b16 %v563
      %v607 = vunpack.c.l.b16 %v567
      %v608 = vunpack.c.l.b16 %v571
      %v609 = vunpack.c.l.b16 %v575
      %v610 = vunpack.c.l.b16 %v579
      %v611 = vunpack.c.l.b16 %v583
      %v612 = vunpack.c.l.b16 %v587
      %v613 = vpack.c.b16 %v606, %v605
      %v614 = vpack.c.b16 %v608, %v607
      %v615 = vpack.c.b16 %v610, %v609
      %v616 = vpack.c.b16 %v612, %v611
      %v637 = vunpack.c.l.b16 %v589
      %v638 = vunpack.c.l.b16 %v590
      %v639 = vunpack.c.l.b16 %v591
      %v640 = vunpack.c.l.b16 %v592
      %v641 = vunpack.c.l.b16 %v593
      %v642 = vunpack.c.l.b16 %v594
      %v643 = vunpack.c.l.b16 %v595
      %v644 = vunpack.c.l.b16 %v596
      %v645 = vunpack.c.l.b16 %v597
      %v646 = vunpack.c.l.b16 %v598
      %v647 = vunpack.c.l.b16 %v599
      %v648 = vunpack.c.l.b16 %v600
      %v649 = vunpack.c.l.b16 %v601
      %v650 = vunpack.c.l.b16 %v602
      %v651 = vunpack.c.l.b16 %v603
      %v652 = vunpack.c.l.b16 %v604
      %v653 = vpack.c.b16 %v638, %v637
      %v654 = vpack.c.b16 %v640, %v639
      %v655 = vpack.c.b16 %v642, %v641
      %v656 = vpack.c.b16 %v644, %v643
      %v657 = vpack.c.b16 %v646, %v645
      %v658 = vpack.c.b16 %v648, %v647
      %v659 = vpack.c.b16 %v650, %v649
      %v660 = vpack.c.b16 %v652, %v651
      %669 = vmatpush.bf16.msra.mxu0 %v660
      %670 = vmatpush.bf16.msra.mxu0 %v659
      %671 = vmatpush.bf16.msra.mxu0 %v658
      %672 = vmatpush.bf16.msra.mxu0 %v657
      %673 = vmatpush.bf16.msra.mxu0 %v656
      %674 = vmatpush.bf16.msra.mxu0 %v655
      %675 = vmatpush.bf16.msra.mxu0 %v654
      %676 = vmatpush.bf16.msra.mxu0 %v653
      %677 = vmatmul.bf16.gmra.mxu0 %v613
      %v678 = vpop.f32.mrf.mxu0
      %v679 = vadd.f32 0.0, %v678
      %v680 = vpop.f32.mrf.mxu0
      %v681 = vadd.f32 0.0, %v680
      %682 = vmatmul.bf16.gmra.mxu0 %v614
      %v683 = vpop.f32.mrf.mxu0
      %v684 = vadd.f32 0.0, %v683
      %v685 = vpop.f32.mrf.mxu0
      %v686 = vadd.f32 0.0, %v685
      %687 = vmatmul.bf16.gmra.mxu0 %v615
      %v688 = vpop.f32.mrf.mxu0
      %v689 = vadd.f32 0.0, %v688
      %v690 = vpop.f32.mrf.mxu0
      %v691 = vadd.f32 0.0, %v690
      %692 = vmatmul.bf16.gmra.mxu0 %v616
      %v693 = vpop.f32.mrf.mxu0
      %v694 = vadd.f32 0.0, %v693
      %v695 = vpop.f32.mrf.mxu0
      %v696 = vadd.f32 0.0, %v695
      %697 = vdwg.mxu0
      %v698 = vadd.f32 %v510, %v679
      %v699 = vadd.f32 %v512, %v681
      %v700 = vadd.f32 %v515, %v684
      %v701 = vadd.f32 %v517, %v686
      %v702 = vadd.f32 %v520, %v689
      %v703 = vadd.f32 %v522, %v691
      %v704 = vadd.f32 %v525, %v694
      %v705 = vadd.f32 %v527, %v696
      %s706 = scalar_lea.vmem %s165, 8
      %v707 = vld [vmem:[%s706] sm:$0xf]
      %v708 = vld [vmem:[%s706 + $0x8] sm:$0xf]
      %v709 = vld [vmem:[%s706 + $0x10] sm:$0xf]
      %v710 = vld [vmem:[%s706 + $0x18] sm:$0xf]
      %v711 = vld [vmem:[%s706 + $0x20] sm:$0xf]
      %v712 = vld [vmem:[%s706 + $0x28] sm:$0xf]
      %v713 = vld [vmem:[%s706 + $0x30] sm:$0xf]
      %v714 = vld [vmem:[%s706 + $0x38] sm:$0xf]
      %s715 = scalar_lea.vmem %s1, 192
      %v716 = vld [vmem:[%s715] sm:$0xf]
      %v717 = vld [vmem:[%s715 + $0x4] sm:$0xf]
      %v718 = vld [vmem:[%s715 + $0x8] sm:$0xf]
      %v719 = vld [vmem:[%s715 + $0xc] sm:$0xf]
      %v720 = vld [vmem:[%s715 + $0x10] sm:$0xf]
      %v721 = vld [vmem:[%s715 + $0x14] sm:$0xf]
      %v722 = vld [vmem:[%s715 + $0x18] sm:$0xf]
      %v723 = vld [vmem:[%s715 + $0x1c] sm:$0xf]
      %v724 = vld [vmem:[%s715 + $0x20] sm:$0xf]
      %v725 = vld [vmem:[%s715 + $0x24] sm:$0xf]
      %v726 = vld [vmem:[%s715 + $0x28] sm:$0xf]
      %v727 = vld [vmem:[%s715 + $0x2c] sm:$0xf]
      %v728 = vld [vmem:[%s715 + $0x30] sm:$0xf]
      %v729 = vld [vmem:[%s715 + $0x34] sm:$0xf]
      %v730 = vld [vmem:[%s715 + $0x38] sm:$0xf]
      %v731 = vld [vmem:[%s715 + $0x3c] sm:$0xf]
      %v740 = vunpack.c.l.b16 %v707
      %v741 = vunpack.c.l.b16 %v708
      %v742 = vunpack.c.l.b16 %v709
      %v743 = vunpack.c.l.b16 %v710
      %v744 = vunpack.c.l.b16 %v711
      %v745 = vunpack.c.l.b16 %v712
      %v746 = vunpack.c.l.b16 %v713
      %v747 = vunpack.c.l.b16 %v714
      %v748 = vpack.c.b16 %v741, %v740
      %v749 = vpack.c.b16 %v743, %v742
      %v750 = vpack.c.b16 %v745, %v744
      %v751 = vpack.c.b16 %v747, %v746
      %v772 = vunpack.c.l.b16 %v716
      %v773 = vunpack.c.l.b16 %v717
      %v774 = vunpack.c.l.b16 %v718
      %v775 = vunpack.c.l.b16 %v719
      %v776 = vunpack.c.l.b16 %v720
      %v777 = vunpack.c.l.b16 %v721
      %v778 = vunpack.c.l.b16 %v722
      %v779 = vunpack.c.l.b16 %v723
      %v780 = vunpack.c.l.b16 %v724
      %v781 = vunpack.c.l.b16 %v725
      %v782 = vunpack.c.l.b16 %v726
      %v783 = vunpack.c.l.b16 %v727
      %v784 = vunpack.c.l.b16 %v728
      %v785 = vunpack.c.l.b16 %v729
      %v786 = vunpack.c.l.b16 %v730
      %v787 = vunpack.c.l.b16 %v731
      %v788 = vpack.c.b16 %v773, %v772
      %v789 = vpack.c.b16 %v775, %v774
      %v790 = vpack.c.b16 %v777, %v776
      %v791 = vpack.c.b16 %v779, %v778
      %v792 = vpack.c.b16 %v781, %v780
      %v793 = vpack.c.b16 %v783, %v782
      %v794 = vpack.c.b16 %v785, %v784
      %v795 = vpack.c.b16 %v787, %v786
      %804 = vmatpush.bf16.msra.mxu0 %v795
      %805 = vmatpush.bf16.msra.mxu0 %v794
      %806 = vmatpush.bf16.msra.mxu0 %v793
      %807 = vmatpush.bf16.msra.mxu0 %v792
      %808 = vmatpush.bf16.msra.mxu0 %v791
      %809 = vmatpush.bf16.msra.mxu0 %v790
      %810 = vmatpush.bf16.msra.mxu0 %v789
      %811 = vmatpush.bf16.msra.mxu0 %v788
      %812 = vmatmul.bf16.gmra.mxu0 %v748
      %v813 = vpop.f32.mrf.mxu0
      %v814 = vadd.f32 0.0, %v813
      %v815 = vpop.f32.mrf.mxu0
      %v816 = vadd.f32 0.0, %v815
      %817 = vmatmul.bf16.gmra.mxu0 %v749
      %v818 = vpop.f32.mrf.mxu0
      %v819 = vadd.f32 0.0, %v818
      %v820 = vpop.f32.mrf.mxu0
      %v821 = vadd.f32 0.0, %v820
      %822 = vmatmul.bf16.gmra.mxu0 %v750
      %v823 = vpop.f32.mrf.mxu0
      %v824 = vadd.f32 0.0, %v823
      %v825 = vpop.f32.mrf.mxu0
      %v826 = vadd.f32 0.0, %v825
      %827 = vmatmul.bf16.gmra.mxu0 %v751
      %v828 = vpop.f32.mrf.mxu0
      %v829 = vadd.f32 0.0, %v828
      %v830 = vpop.f32.mrf.mxu0
      %v831 = vadd.f32 0.0, %v830
      %832 = vdwg.mxu0
      %v833 = vadd.f32 %v698, %v814
      %v834 = vadd.f32 %v699, %v816
      %v835 = vadd.f32 %v700, %v819
      %v836 = vadd.f32 %v701, %v821
      %v837 = vadd.f32 %v702, %v824
      %v838 = vadd.f32 %v703, %v826
      %v839 = vadd.f32 %v704, %v829
      %v840 = vadd.f32 %v705, %v831
      %v841 = vld [vmem:[%s706] sm:$0xf]
      %v842 = vld [vmem:[%s706 + $0x4] sm:$0x1]
      %v843 = vld [vmem:[%s706 + $0x8] sm:$0xf]
      %v844 = vld [vmem:[%s706 + $0xc] sm:$0x1]
      %v845 = vld [vmem:[%s706 + $0x10] sm:$0xf]
      %v846 = vld [vmem:[%s706 + $0x14] sm:$0x1]
      %v847 = vld [vmem:[%s706 + $0x18] sm:$0xf]
      %v848 = vld [vmem:[%s706 + $0x1c] sm:$0x1]
      %v849 = vld [vmem:[%s706 + $0x20] sm:$0xf]
      %v850 = vld [vmem:[%s706 + $0x24] sm:$0x1]
      %v851 = vld [vmem:[%s706 + $0x28] sm:$0xf]
      %v852 = vld [vmem:[%s706 + $0x2c] sm:$0x1]
      %v853 = vld [vmem:[%s706 + $0x30] sm:$0xf]
      %v854 = vld [vmem:[%s706 + $0x34] sm:$0x1]
      %v855 = vld [vmem:[%s706 + $0x38] sm:$0xf]
      %v856 = vld [vmem:[%s706 + $0x3c] sm:$0x1]
      %v858 = vshrl.u32 %v841, 16
      %v860 = vrot.slane %v858, 4
      %v861 = vshll.u32 %v841, 16
      %v863 = vrot.slane %v861, 5
      %v864 = vor.u32 %v860, %v863
      %v865 = vrot.slane %v864, 4
      %v867 = vshll.u32 %v842, 16
      %v869 = vrot.slane %v867, 5
      %v870 = vsel %vm205, %v865, %v869
      %v872 = vshrl.u32 %v843, 16
      %v874 = vrot.slane %v872, 4
      %v875 = vshll.u32 %v843, 16
      %v877 = vrot.slane %v875, 5
      %v878 = vor.u32 %v874, %v877
      %v879 = vrot.slane %v878, 4
      %v881 = vshll.u32 %v844, 16
      %v883 = vrot.slane %v881, 5
      %v884 = vsel %vm205, %v879, %v883
      %v886 = vshrl.u32 %v845, 16
      %v888 = vrot.slane %v886, 4
      %v889 = vshll.u32 %v845, 16
      %v891 = vrot.slane %v889, 5
      %v892 = vor.u32 %v888, %v891
      %v893 = vrot.slane %v892, 4
      %v895 = vshll.u32 %v846, 16
      %v897 = vrot.slane %v895, 5
      %v898 = vsel %vm205, %v893, %v897
      %v900 = vshrl.u32 %v847, 16
      %v902 = vrot.slane %v900, 4
      %v903 = vshll.u32 %v847, 16
      %v905 = vrot.slane %v903, 5
      %v906 = vor.u32 %v902, %v905
      %v907 = vrot.slane %v906, 4
      %v909 = vshll.u32 %v848, 16
      %v911 = vrot.slane %v909, 5
      %v912 = vsel %vm205, %v907, %v911
      %v914 = vshrl.u32 %v849, 16
      %v916 = vrot.slane %v914, 4
      %v917 = vshll.u32 %v849, 16
      %v919 = vrot.slane %v917, 5
      %v920 = vor.u32 %v916, %v919
      %v921 = vrot.slane %v920, 4
      %v923 = vshll.u32 %v850, 16
      %v925 = vrot.slane %v923, 5
      %v926 = vsel %vm205, %v921, %v925
      %v928 = vshrl.u32 %v851, 16
      %v930 = vrot.slane %v928, 4
      %v931 = vshll.u32 %v851, 16
      %v933 = vrot.slane %v931, 5
      %v934 = vor.u32 %v930, %v933
      %v935 = vrot.slane %v934, 4
      %v937 = vshll.u32 %v852, 16
      %v939 = vrot.slane %v937, 5
      %v940 = vsel %vm205, %v935, %v939
      %v942 = vshrl.u32 %v853, 16
      %v944 = vrot.slane %v942, 4
      %v945 = vshll.u32 %v853, 16
      %v947 = vrot.slane %v945, 5
      %v948 = vor.u32 %v944, %v947
      %v949 = vrot.slane %v948, 4
      %v951 = vshll.u32 %v854, 16
      %v953 = vrot.slane %v951, 5
      %v954 = vsel %vm205, %v949, %v953
      %v956 = vshrl.u32 %v855, 16
      %v958 = vrot.slane %v956, 4
      %v959 = vshll.u32 %v855, 16
      %v961 = vrot.slane %v959, 5
      %v962 = vor.u32 %v958, %v961
      %v963 = vrot.slane %v962, 4
      %v965 = vshll.u32 %v856, 16
      %v967 = vrot.slane %v965, 5
      %v968 = vsel %vm205, %v963, %v967
      %s969 = scalar_lea.vmem %s1, 256
      %v970 = vld [vmem:[%s969] sm:$0xf]
      %v971 = vld [vmem:[%s969 + $0x4] sm:$0xf]
      %v972 = vld [vmem:[%s969 + $0x8] sm:$0xf]
      %v973 = vld [vmem:[%s969 + $0xc] sm:$0xf]
      %v974 = vld [vmem:[%s969 + $0x10] sm:$0xf]
      %v975 = vld [vmem:[%s969 + $0x14] sm:$0xf]
      %v976 = vld [vmem:[%s969 + $0x18] sm:$0xf]
      %v977 = vld [vmem:[%s969 + $0x1c] sm:$0xf]
      %v978 = vld [vmem:[%s969 + $0x20] sm:$0xf]
      %v979 = vld [vmem:[%s969 + $0x24] sm:$0xf]
      %v980 = vld [vmem:[%s969 + $0x28] sm:$0xf]
      %v981 = vld [vmem:[%s969 + $0x2c] sm:$0xf]
      %v982 = vld [vmem:[%s969 + $0x30] sm:$0xf]
      %v983 = vld [vmem:[%s969 + $0x34] sm:$0xf]
      %v984 = vld [vmem:[%s969 + $0x38] sm:$0xf]
      %v985 = vld [vmem:[%s969 + $0x3c] sm:$0xf]
      %v986 = vunpack.c.l.b16 %v870
      %v987 = vunpack.c.l.b16 %v884
      %v988 = vunpack.c.l.b16 %v898
      %v989 = vunpack.c.l.b16 %v912
      %v990 = vunpack.c.l.b16 %v926
      %v991 = vunpack.c.l.b16 %v940
      %v992 = vunpack.c.l.b16 %v954
      %v993 = vunpack.c.l.b16 %v968
      %v994 = vpack.c.b16 %v987, %v986
      %v995 = vpack.c.b16 %v989, %v988
      %v996 = vpack.c.b16 %v991, %v990
      %v997 = vpack.c.b16 %v993, %v992
      %v1018 = vunpack.c.l.b16 %v970
      %v1019 = vunpack.c.l.b16 %v971
      %v1020 = vunpack.c.l.b16 %v972
      %v1021 = vunpack.c.l.b16 %v973
      %v1022 = vunpack.c.l.b16 %v974
      %v1023 = vunpack.c.l.b16 %v975
      %v1024 = vunpack.c.l.b16 %v976
      %v1025 = vunpack.c.l.b16 %v977
      %v1026 = vunpack.c.l.b16 %v978
      %v1027 = vunpack.c.l.b16 %v979
      %v1028 = vunpack.c.l.b16 %v980
      %v1029 = vunpack.c.l.b16 %v981
      %v1030 = vunpack.c.l.b16 %v982
      %v1031 = vunpack.c.l.b16 %v983
      %v1032 = vunpack.c.l.b16 %v984
      %v1033 = vunpack.c.l.b16 %v985
      %v1034 = vpack.c.b16 %v1019, %v1018
      %v1035 = vpack.c.b16 %v1021, %v1020
      %v1036 = vpack.c.b16 %v1023, %v1022
      %v1037 = vpack.c.b16 %v1025, %v1024
      %v1038 = vpack.c.b16 %v1027, %v1026
      %v1039 = vpack.c.b16 %v1029, %v1028
      %v1040 = vpack.c.b16 %v1031, %v1030
      %v1041 = vpack.c.b16 %v1033, %v1032
      %1050 = vmatpush.bf16.msra.mxu0 %v1041
      %1051 = vmatpush.bf16.msra.mxu0 %v1040
      %1052 = vmatpush.bf16.msra.mxu0 %v1039
      %1053 = vmatpush.bf16.msra.mxu0 %v1038
      %1054 = vmatpush.bf16.msra.mxu0 %v1037
      %1055 = vmatpush.bf16.msra.mxu0 %v1036
      %1056 = vmatpush.bf16.msra.mxu0 %v1035
      %1057 = vmatpush.bf16.msra.mxu0 %v1034
      %1058 = vmatmul.bf16.gmra.mxu0 %v994
      %v1059 = vpop.f32.mrf.mxu0
      %v1060 = vadd.f32 0.0, %v1059
      %v1061 = vpop.f32.mrf.mxu0
      %v1062 = vadd.f32 0.0, %v1061
      %1063 = vmatmul.bf16.gmra.mxu0 %v995
      %v1064 = vpop.f32.mrf.mxu0
      %v1065 = vadd.f32 0.0, %v1064
      %v1066 = vpop.f32.mrf.mxu0
      %v1067 = vadd.f32 0.0, %v1066
      %1068 = vmatmul.bf16.gmra.mxu0 %v996
      %v1069 = vpop.f32.mrf.mxu0
      %v1070 = vadd.f32 0.0, %v1069
      %v1071 = vpop.f32.mrf.mxu0
      %v1072 = vadd.f32 0.0, %v1071
      %1073 = vmatmul.bf16.gmra.mxu0 %v997
      %v1074 = vpop.f32.mrf.mxu0
      %v1075 = vadd.f32 0.0, %v1074
      %v1076 = vpop.f32.mrf.mxu0
      %v1077 = vadd.f32 0.0, %v1076
      %1078 = vdwg.mxu0
      %v1079 = vadd.f32 %v833, %v1060
      %v1080 = vadd.f32 %v834, %v1062
      %v1081 = vadd.f32 %v835, %v1065
      %v1082 = vadd.f32 %v836, %v1067
      %v1083 = vadd.f32 %v837, %v1070
      %v1084 = vadd.f32 %v838, %v1072
      %v1085 = vadd.f32 %v839, %v1075
      %v1086 = vadd.f32 %v840, %v1077
      %v1087 = vld [vmem:[%s706] sm:$0xe]
      %v1088 = vld [vmem:[%s706 + $0x8] sm:$0xe]
      %v1089 = vld [vmem:[%s706 + $0x10] sm:$0xe]
      %v1090 = vld [vmem:[%s706 + $0x18] sm:$0xe]
      %v1091 = vld [vmem:[%s706 + $0x20] sm:$0xe]
      %v1092 = vld [vmem:[%s706 + $0x28] sm:$0xe]
      %v1093 = vld [vmem:[%s706 + $0x30] sm:$0xe]
      %v1094 = vld [vmem:[%s706 + $0x38] sm:$0xe]
      %v1111 = vrot.slane %v1087, 5
      %v1112 = vrot.slane %v1111, 4
      %v1113 = vrot.slane %v842, 5
      %v1114 = vsel %vm555, %v1112, %v1113
      %v1115 = vrot.slane %v1088, 5
      %v1116 = vrot.slane %v1115, 4
      %v1117 = vrot.slane %v844, 5
      %v1118 = vsel %vm555, %v1116, %v1117
      %v1119 = vrot.slane %v1089, 5
      %v1120 = vrot.slane %v1119, 4
      %v1121 = vrot.slane %v846, 5
      %v1122 = vsel %vm555, %v1120, %v1121
      %v1123 = vrot.slane %v1090, 5
      %v1124 = vrot.slane %v1123, 4
      %v1125 = vrot.slane %v848, 5
      %v1126 = vsel %vm555, %v1124, %v1125
      %v1127 = vrot.slane %v1091, 5
      %v1128 = vrot.slane %v1127, 4
      %v1129 = vrot.slane %v850, 5
      %v1130 = vsel %vm555, %v1128, %v1129
      %v1131 = vrot.slane %v1092, 5
      %v1132 = vrot.slane %v1131, 4
      %v1133 = vrot.slane %v852, 5
      %v1134 = vsel %vm555, %v1132, %v1133
      %v1135 = vrot.slane %v1093, 5
      %v1136 = vrot.slane %v1135, 4
      %v1137 = vrot.slane %v854, 5
      %v1138 = vsel %vm555, %v1136, %v1137
      %v1139 = vrot.slane %v1094, 5
      %v1140 = vrot.slane %v1139, 4
      %v1141 = vrot.slane %v856, 5
      %v1142 = vsel %vm555, %v1140, %v1141
      %s1143 = scalar_lea.vmem %s1, 320
      %v1144 = vld [vmem:[%s1143] sm:$0xf]
      %v1145 = vld [vmem:[%s1143 + $0x4] sm:$0xf]
      %v1146 = vld [vmem:[%s1143 + $0x8] sm:$0xf]
      %v1147 = vld [vmem:[%s1143 + $0xc] sm:$0xf]
      %v1148 = vld [vmem:[%s1143 + $0x10] sm:$0xf]
      %v1149 = vld [vmem:[%s1143 + $0x14] sm:$0xf]
      %v1150 = vld [vmem:[%s1143 + $0x18] sm:$0xf]
      %v1151 = vld [vmem:[%s1143 + $0x1c] sm:$0xf]
      %v1152 = vld [vmem:[%s1143 + $0x20] sm:$0xf]
      %v1153 = vld [vmem:[%s1143 + $0x24] sm:$0xf]
      %v1154 = vld [vmem:[%s1143 + $0x28] sm:$0xf]
      %v1155 = vld [vmem:[%s1143 + $0x2c] sm:$0xf]
      %v1156 = vld [vmem:[%s1143 + $0x30] sm:$0xf]
      %v1157 = vld [vmem:[%s1143 + $0x34] sm:$0xf]
      %v1158 = vld [vmem:[%s1143 + $0x38] sm:$0xf]
      %v1159 = vld [vmem:[%s1143 + $0x3c] sm:$0xf]
      %v1160 = vunpack.c.l.b16 %v1114
      %v1161 = vunpack.c.l.b16 %v1118
      %v1162 = vunpack.c.l.b16 %v1122
      %v1163 = vunpack.c.l.b16 %v1126
      %v1164 = vunpack.c.l.b16 %v1130
      %v1165 = vunpack.c.l.b16 %v1134
      %v1166 = vunpack.c.l.b16 %v1138
      %v1167 = vunpack.c.l.b16 %v1142
      %v1168 = vpack.c.b16 %v1161, %v1160
      %v1169 = vpack.c.b16 %v1163, %v1162
      %v1170 = vpack.c.b16 %v1165, %v1164
      %v1171 = vpack.c.b16 %v1167, %v1166
      %v1192 = vunpack.c.l.b16 %v1144
      %v1193 = vunpack.c.l.b16 %v1145
      %v1194 = vunpack.c.l.b16 %v1146
      %v1195 = vunpack.c.l.b16 %v1147
      %v1196 = vunpack.c.l.b16 %v1148
      %v1197 = vunpack.c.l.b16 %v1149
      %v1198 = vunpack.c.l.b16 %v1150
      %v1199 = vunpack.c.l.b16 %v1151
      %v1200 = vunpack.c.l.b16 %v1152
      %v1201 = vunpack.c.l.b16 %v1153
      %v1202 = vunpack.c.l.b16 %v1154
      %v1203 = vunpack.c.l.b16 %v1155
      %v1204 = vunpack.c.l.b16 %v1156
      %v1205 = vunpack.c.l.b16 %v1157
      %v1206 = vunpack.c.l.b16 %v1158
      %v1207 = vunpack.c.l.b16 %v1159
      %v1208 = vpack.c.b16 %v1193, %v1192
      %v1209 = vpack.c.b16 %v1195, %v1194
      %v1210 = vpack.c.b16 %v1197, %v1196
      %v1211 = vpack.c.b16 %v1199, %v1198
      %v1212 = vpack.c.b16 %v1201, %v1200
      %v1213 = vpack.c.b16 %v1203, %v1202
      %v1214 = vpack.c.b16 %v1205, %v1204
      %v1215 = vpack.c.b16 %v1207, %v1206
      %1224 = vmatpush.bf16.msra.mxu0 %v1215
      %1225 = vmatpush.bf16.msra.mxu0 %v1214
      %1226 = vmatpush.bf16.msra.mxu0 %v1213
      %1227 = vmatpush.bf16.msra.mxu0 %v1212
      %1228 = vmatpush.bf16.msra.mxu0 %v1211
      %1229 = vmatpush.bf16.msra.mxu0 %v1210
      %1230 = vmatpush.bf16.msra.mxu0 %v1209
      %1231 = vmatpush.bf16.msra.mxu0 %v1208
      %1232 = vmatmul.bf16.gmra.mxu0 %v1168
      %v1233 = vpop.f32.mrf.mxu0
      %v1234 = vadd.f32 0.0, %v1233
      %v1235 = vpop.f32.mrf.mxu0
      %v1236 = vadd.f32 0.0, %v1235
      %1237 = vmatmul.bf16.gmra.mxu0 %v1169
      %v1238 = vpop.f32.mrf.mxu0
      %v1239 = vadd.f32 0.0, %v1238
      %v1240 = vpop.f32.mrf.mxu0
      %v1241 = vadd.f32 0.0, %v1240
      %1242 = vmatmul.bf16.gmra.mxu0 %v1170
      %v1243 = vpop.f32.mrf.mxu0
      %v1244 = vadd.f32 0.0, %v1243
      %v1245 = vpop.f32.mrf.mxu0
      %v1246 = vadd.f32 0.0, %v1245
      %1247 = vmatmul.bf16.gmra.mxu0 %v1171
      %v1248 = vpop.f32.mrf.mxu0
      %v1249 = vadd.f32 0.0, %v1248
      %v1250 = vpop.f32.mrf.mxu0
      %v1251 = vadd.f32 0.0, %v1250
      %1252 = vdwg.mxu0
      %v1253 = vadd.f32 %v1079, %v1234
      %v1254 = vadd.f32 %v1080, %v1236
      %v1255 = vadd.f32 %v1081, %v1239
      %v1256 = vadd.f32 %v1082, %v1241
      %v1257 = vadd.f32 %v1083, %v1244
      %v1258 = vadd.f32 %v1084, %v1246
      %v1259 = vadd.f32 %v1085, %v1249
      %v1260 = vadd.f32 %v1086, %v1251
      %s1261 = scalar_lea.vmem %s165, 16
      %v1262 = vld [vmem:[%s1261] sm:$0xf]
      %v1263 = vld [vmem:[%s1261 + $0x8] sm:$0xf]
      %v1264 = vld [vmem:[%s1261 + $0x10] sm:$0xf]
      %v1265 = vld [vmem:[%s1261 + $0x18] sm:$0xf]
      %v1266 = vld [vmem:[%s1261 + $0x20] sm:$0xf]
      %v1267 = vld [vmem:[%s1261 + $0x28] sm:$0xf]
      %v1268 = vld [vmem:[%s1261 + $0x30] sm:$0xf]
      %v1269 = vld [vmem:[%s1261 + $0x38] sm:$0xf]
      %s1270 = scalar_lea.vmem %s1, 384
      %v1271 = vld [vmem:[%s1270] sm:$0xf]
      %v1272 = vld [vmem:[%s1270 + $0x4] sm:$0xf]
      %v1273 = vld [vmem:[%s1270 + $0x8] sm:$0xf]
      %v1274 = vld [vmem:[%s1270 + $0xc] sm:$0xf]
      %v1275 = vld [vmem:[%s1270 + $0x10] sm:$0xf]
      %v1276 = vld [vmem:[%s1270 + $0x14] sm:$0xf]
      %v1277 = vld [vmem:[%s1270 + $0x18] sm:$0xf]
      %v1278 = vld [vmem:[%s1270 + $0x1c] sm:$0xf]
      %v1279 = vld [vmem:[%s1270 + $0x20] sm:$0xf]
      %v1280 = vld [vmem:[%s1270 + $0x24] sm:$0xf]
      %v1281 = vld [vmem:[%s1270 + $0x28] sm:$0xf]
      %v1282 = vld [vmem:[%s1270 + $0x2c] sm:$0xf]
      %v1283 = vld [vmem:[%s1270 + $0x30] sm:$0xf]
      %v1284 = vld [vmem:[%s1270 + $0x34] sm:$0xf]
      %v1285 = vld [vmem:[%s1270 + $0x38] sm:$0xf]
      %v1286 = vld [vmem:[%s1270 + $0x3c] sm:$0xf]
      %v1295 = vunpack.c.l.b16 %v1262
      %v1296 = vunpack.c.l.b16 %v1263
      %v1297 = vunpack.c.l.b16 %v1264
      %v1298 = vunpack.c.l.b16 %v1265
      %v1299 = vunpack.c.l.b16 %v1266
      %v1300 = vunpack.c.l.b16 %v1267
      %v1301 = vunpack.c.l.b16 %v1268
      %v1302 = vunpack.c.l.b16 %v1269
      %v1303 = vpack.c.b16 %v1296, %v1295
      %v1304 = vpack.c.b16 %v1298, %v1297
      %v1305 = vpack.c.b16 %v1300, %v1299
      %v1306 = vpack.c.b16 %v1302, %v1301
      %v1327 = vunpack.c.l.b16 %v1271
      %v1328 = vunpack.c.l.b16 %v1272
      %v1329 = vunpack.c.l.b16 %v1273
      %v1330 = vunpack.c.l.b16 %v1274
      %v1331 = vunpack.c.l.b16 %v1275
      %v1332 = vunpack.c.l.b16 %v1276
      %v1333 = vunpack.c.l.b16 %v1277
      %v1334 = vunpack.c.l.b16 %v1278
      %v1335 = vunpack.c.l.b16 %v1279
      %v1336 = vunpack.c.l.b16 %v1280
      %v1337 = vunpack.c.l.b16 %v1281
      %v1338 = vunpack.c.l.b16 %v1282
      %v1339 = vunpack.c.l.b16 %v1283
      %v1340 = vunpack.c.l.b16 %v1284
      %v1341 = vunpack.c.l.b16 %v1285
      %v1342 = vunpack.c.l.b16 %v1286
      %v1343 = vpack.c.b16 %v1328, %v1327
      %v1344 = vpack.c.b16 %v1330, %v1329
      %v1345 = vpack.c.b16 %v1332, %v1331
      %v1346 = vpack.c.b16 %v1334, %v1333
      %v1347 = vpack.c.b16 %v1336, %v1335
      %v1348 = vpack.c.b16 %v1338, %v1337
      %v1349 = vpack.c.b16 %v1340, %v1339
      %v1350 = vpack.c.b16 %v1342, %v1341
      %1359 = vmatpush.bf16.msra.mxu0 %v1350
      %1360 = vmatpush.bf16.msra.mxu0 %v1349
      %1361 = vmatpush.bf16.msra.mxu0 %v1348
      %1362 = vmatpush.bf16.msra.mxu0 %v1347
      %1363 = vmatpush.bf16.msra.mxu0 %v1346
      %1364 = vmatpush.bf16.msra.mxu0 %v1345
      %1365 = vmatpush.bf16.msra.mxu0 %v1344
      %1366 = vmatpush.bf16.msra.mxu0 %v1343
      %1367 = vmatmul.bf16.gmra.mxu0 %v1303
      %v1368 = vpop.f32.mrf.mxu0
      %v1369 = vadd.f32 0.0, %v1368
      %v1370 = vpop.f32.mrf.mxu0
      %v1371 = vadd.f32 0.0, %v1370
      %1372 = vmatmul.bf16.gmra.mxu0 %v1304
      %v1373 = vpop.f32.mrf.mxu0
      %v1374 = vadd.f32 0.0, %v1373
      %v1375 = vpop.f32.mrf.mxu0
      %v1376 = vadd.f32 0.0, %v1375
      %1377 = vmatmul.bf16.gmra.mxu0 %v1305
      %v1378 = vpop.f32.mrf.mxu0
      %v1379 = vadd.f32 0.0, %v1378
      %v1380 = vpop.f32.mrf.mxu0
      %v1381 = vadd.f32 0.0, %v1380
      %1382 = vmatmul.bf16.gmra.mxu0 %v1306
      %v1383 = vpop.f32.mrf.mxu0
      %v1384 = vadd.f32 0.0, %v1383
      %v1385 = vpop.f32.mrf.mxu0
      %v1386 = vadd.f32 0.0, %v1385
      %1387 = vdwg.mxu0
      %v1388 = vadd.f32 %v1253, %v1369
      %v1389 = vadd.f32 %v1254, %v1371
      %v1390 = vadd.f32 %v1255, %v1374
      %v1391 = vadd.f32 %v1256, %v1376
      %v1392 = vadd.f32 %v1257, %v1379
      %v1393 = vadd.f32 %v1258, %v1381
      %v1394 = vadd.f32 %v1259, %v1384
      %v1395 = vadd.f32 %v1260, %v1386
      %v1396 = vld [vmem:[%s1261] sm:$0xf]
      %v1397 = vld [vmem:[%s1261 + $0x4] sm:$0x1]
      %v1398 = vld [vmem:[%s1261 + $0x8] sm:$0xf]
      %v1399 = vld [vmem:[%s1261 + $0xc] sm:$0x1]
      %v1400 = vld [vmem:[%s1261 + $0x10] sm:$0xf]
      %v1401 = vld [vmem:[%s1261 + $0x14] sm:$0x1]
      %v1402 = vld [vmem:[%s1261 + $0x18] sm:$0xf]
      %v1403 = vld [vmem:[%s1261 + $0x1c] sm:$0x1]
      %v1404 = vld [vmem:[%s1261 + $0x20] sm:$0xf]
      %v1405 = vld [vmem:[%s1261 + $0x24] sm:$0x1]
      %v1406 = vld [vmem:[%s1261 + $0x28] sm:$0xf]
      %v1407 = vld [vmem:[%s1261 + $0x2c] sm:$0x1]
      %v1408 = vld [vmem:[%s1261 + $0x30] sm:$0xf]
      %v1409 = vld [vmem:[%s1261 + $0x34] sm:$0x1]
      %v1410 = vld [vmem:[%s1261 + $0x38] sm:$0xf]
      %v1411 = vld [vmem:[%s1261 + $0x3c] sm:$0x1]
      %v1413 = vshrl.u32 %v1396, 16
      %v1415 = vrot.slane %v1413, 4
      %v1416 = vshll.u32 %v1396, 16
      %v1418 = vrot.slane %v1416, 5
      %v1419 = vor.u32 %v1415, %v1418
      %v1420 = vrot.slane %v1419, 4
      %v1422 = vshll.u32 %v1397, 16
      %v1424 = vrot.slane %v1422, 5
      %v1425 = vsel %vm205, %v1420, %v1424
      %v1427 = vshrl.u32 %v1398, 16
      %v1429 = vrot.slane %v1427, 4
      %v1430 = vshll.u32 %v1398, 16
      %v1432 = vrot.slane %v1430, 5
      %v1433 = vor.u32 %v1429, %v1432
      %v1434 = vrot.slane %v1433, 4
      %v1436 = vshll.u32 %v1399, 16
      %v1438 = vrot.slane %v1436, 5
      %v1439 = vsel %vm205, %v1434, %v1438
      %v1441 = vshrl.u32 %v1400, 16
      %v1443 = vrot.slane %v1441, 4
      %v1444 = vshll.u32 %v1400, 16
      %v1446 = vrot.slane %v1444, 5
      %v1447 = vor.u32 %v1443, %v1446
      %v1448 = vrot.slane %v1447, 4
      %v1450 = vshll.u32 %v1401, 16
      %v1452 = vrot.slane %v1450, 5
      %v1453 = vsel %vm205, %v1448, %v1452
      %v1455 = vshrl.u32 %v1402, 16
      %v1457 = vrot.slane %v1455, 4
      %v1458 = vshll.u32 %v1402, 16
      %v1460 = vrot.slane %v1458, 5
      %v1461 = vor.u32 %v1457, %v1460
      %v1462 = vrot.slane %v1461, 4
      %v1464 = vshll.u32 %v1403, 16
      %v1466 = vrot.slane %v1464, 5
      %v1467 = vsel %vm205, %v1462, %v1466
      %v1469 = vshrl.u32 %v1404, 16
      %v1471 = vrot.slane %v1469, 4
      %v1472 = vshll.u32 %v1404, 16
      %v1474 = vrot.slane %v1472, 5
      %v1475 = vor.u32 %v1471, %v1474
      %v1476 = vrot.slane %v1475, 4
      %v1478 = vshll.u32 %v1405, 16
      %v1480 = vrot.slane %v1478, 5
      %v1481 = vsel %vm205, %v1476, %v1480
      %v1483 = vshrl.u32 %v1406, 16
      %v1485 = vrot.slane %v1483, 4
      %v1486 = vshll.u32 %v1406, 16
      %v1488 = vrot.slane %v1486, 5
      %v1489 = vor.u32 %v1485, %v1488
      %v1490 = vrot.slane %v1489, 4
      %v1492 = vshll.u32 %v1407, 16
      %v1494 = vrot.slane %v1492, 5
      %v1495 = vsel %vm205, %v1490, %v1494
      %v1497 = vshrl.u32 %v1408, 16
      %v1499 = vrot.slane %v1497, 4
      %v1500 = vshll.u32 %v1408, 16
      %v1502 = vrot.slane %v1500, 5
      %v1503 = vor.u32 %v1499, %v1502
      %v1504 = vrot.slane %v1503, 4
      %v1506 = vshll.u32 %v1409, 16
      %v1508 = vrot.slane %v1506, 5
      %v1509 = vsel %vm205, %v1504, %v1508
      %v1511 = vshrl.u32 %v1410, 16
      %v1513 = vrot.slane %v1511, 4
      %v1514 = vshll.u32 %v1410, 16
      %v1516 = vrot.slane %v1514, 5
      %v1517 = vor.u32 %v1513, %v1516
      %v1518 = vrot.slane %v1517, 4
      %v1520 = vshll.u32 %v1411, 16
      %v1522 = vrot.slane %v1520, 5
      %v1523 = vsel %vm205, %v1518, %v1522
      %s1524 = scalar_lea.vmem %s1, 448
      %v1525 = vld [vmem:[%s1524] sm:$0xf]
      %v1526 = vld [vmem:[%s1524 + $0x4] sm:$0xf]
      %v1527 = vld [vmem:[%s1524 + $0x8] sm:$0xf]
      %v1528 = vld [vmem:[%s1524 + $0xc] sm:$0xf]
      %v1529 = vld [vmem:[%s1524 + $0x10] sm:$0xf]
      %v1530 = vld [vmem:[%s1524 + $0x14] sm:$0xf]
      %v1531 = vld [vmem:[%s1524 + $0x18] sm:$0xf]
      %v1532 = vld [vmem:[%s1524 + $0x1c] sm:$0xf]
      %v1533 = vld [vmem:[%s1524 + $0x20] sm:$0xf]
      %v1534 = vld [vmem:[%s1524 + $0x24] sm:$0xf]
      %v1535 = vld [vmem:[%s1524 + $0x28] sm:$0xf]
      %v1536 = vld [vmem:[%s1524 + $0x2c] sm:$0xf]
      %v1537 = vld [vmem:[%s1524 + $0x30] sm:$0xf]
      %v1538 = vld [vmem:[%s1524 + $0x34] sm:$0xf]
      %v1539 = vld [vmem:[%s1524 + $0x38] sm:$0xf]
      %v1540 = vld [vmem:[%s1524 + $0x3c] sm:$0xf]
      %v1541 = vunpack.c.l.b16 %v1425
      %v1542 = vunpack.c.l.b16 %v1439
      %v1543 = vunpack.c.l.b16 %v1453
      %v1544 = vunpack.c.l.b16 %v1467
      %v1545 = vunpack.c.l.b16 %v1481
      %v1546 = vunpack.c.l.b16 %v1495
      %v1547 = vunpack.c.l.b16 %v1509
      %v1548 = vunpack.c.l.b16 %v1523
      %v1549 = vpack.c.b16 %v1542, %v1541
      %v1550 = vpack.c.b16 %v1544, %v1543
      %v1551 = vpack.c.b16 %v1546, %v1545
      %v1552 = vpack.c.b16 %v1548, %v1547
      %v1573 = vunpack.c.l.b16 %v1525
      %v1574 = vunpack.c.l.b16 %v1526
      %v1575 = vunpack.c.l.b16 %v1527
      %v1576 = vunpack.c.l.b16 %v1528
      %v1577 = vunpack.c.l.b16 %v1529
      %v1578 = vunpack.c.l.b16 %v1530
      %v1579 = vunpack.c.l.b16 %v1531
      %v1580 = vunpack.c.l.b16 %v1532
      %v1581 = vunpack.c.l.b16 %v1533
      %v1582 = vunpack.c.l.b16 %v1534
      %v1583 = vunpack.c.l.b16 %v1535
      %v1584 = vunpack.c.l.b16 %v1536
      %v1585 = vunpack.c.l.b16 %v1537
      %v1586 = vunpack.c.l.b16 %v1538
      %v1587 = vunpack.c.l.b16 %v1539
      %v1588 = vunpack.c.l.b16 %v1540
      %v1589 = vpack.c.b16 %v1574, %v1573
      %v1590 = vpack.c.b16 %v1576, %v1575
      %v1591 = vpack.c.b16 %v1578, %v1577
      %v1592 = vpack.c.b16 %v1580, %v1579
      %v1593 = vpack.c.b16 %v1582, %v1581
      %v1594 = vpack.c.b16 %v1584, %v1583
      %v1595 = vpack.c.b16 %v1586, %v1585
      %v1596 = vpack.c.b16 %v1588, %v1587
      %1605 = vmatpush.bf16.msra.mxu0 %v1596
      %1606 = vmatpush.bf16.msra.mxu0 %v1595
      %1607 = vmatpush.bf16.msra.mxu0 %v1594
      %1608 = vmatpush.bf16.msra.mxu0 %v1593
      %1609 = vmatpush.bf16.msra.mxu0 %v1592
      %1610 = vmatpush.bf16.msra.mxu0 %v1591
      %1611 = vmatpush.bf16.msra.mxu0 %v1590
      %1612 = vmatpush.bf16.msra.mxu0 %v1589
      %1613 = vmatmul.bf16.gmra.mxu0 %v1549
      %v1614 = vpop.f32.mrf.mxu0
      %v1615 = vadd.f32 0.0, %v1614
      %v1616 = vpop.f32.mrf.mxu0
      %v1617 = vadd.f32 0.0, %v1616
      %1618 = vmatmul.bf16.gmra.mxu0 %v1550
      %v1619 = vpop.f32.mrf.mxu0
      %v1620 = vadd.f32 0.0, %v1619
      %v1621 = vpop.f32.mrf.mxu0
      %v1622 = vadd.f32 0.0, %v1621
      %1623 = vmatmul.bf16.gmra.mxu0 %v1551
      %v1624 = vpop.f32.mrf.mxu0
      %v1625 = vadd.f32 0.0, %v1624
      %v1626 = vpop.f32.mrf.mxu0
      %v1627 = vadd.f32 0.0, %v1626
      %1628 = vmatmul.bf16.gmra.mxu0 %v1552
      %v1629 = vpop.f32.mrf.mxu0
      %v1630 = vadd.f32 0.0, %v1629
      %v1631 = vpop.f32.mrf.mxu0
      %v1632 = vadd.f32 0.0, %v1631
      %1633 = vdwg.mxu0
      %v1634 = vadd.f32 %v1388, %v1615
      %v1635 = vadd.f32 %v1389, %v1617
      %v1636 = vadd.f32 %v1390, %v1620
      %v1637 = vadd.f32 %v1391, %v1622
      %v1638 = vadd.f32 %v1392, %v1625
      %v1639 = vadd.f32 %v1393, %v1627
      %v1640 = vadd.f32 %v1394, %v1630
      %v1641 = vadd.f32 %v1395, %v1632
      %v1642 = vld [vmem:[%s1261] sm:$0xe]
      %v1643 = vld [vmem:[%s1261 + $0x8] sm:$0xe]
      %v1644 = vld [vmem:[%s1261 + $0x10] sm:$0xe]
      %v1645 = vld [vmem:[%s1261 + $0x18] sm:$0xe]
      %v1646 = vld [vmem:[%s1261 + $0x20] sm:$0xe]
      %v1647 = vld [vmem:[%s1261 + $0x28] sm:$0xe]
      %v1648 = vld [vmem:[%s1261 + $0x30] sm:$0xe]
      %v1649 = vld [vmem:[%s1261 + $0x38] sm:$0xe]
      %v1666 = vrot.slane %v1642, 5
      %v1667 = vrot.slane %v1666, 4
      %v1668 = vrot.slane %v1397, 5
      %v1669 = vsel %vm555, %v1667, %v1668
      %v1670 = vrot.slane %v1643, 5
      %v1671 = vrot.slane %v1670, 4
      %v1672 = vrot.slane %v1399, 5
      %v1673 = vsel %vm555, %v1671, %v1672
      %v1674 = vrot.slane %v1644, 5
      %v1675 = vrot.slane %v1674, 4
      %v1676 = vrot.slane %v1401, 5
      %v1677 = vsel %vm555, %v1675, %v1676
      %v1678 = vrot.slane %v1645, 5
      %v1679 = vrot.slane %v1678, 4
      %v1680 = vrot.slane %v1403, 5
      %v1681 = vsel %vm555, %v1679, %v1680
      %v1682 = vrot.slane %v1646, 5
      %v1683 = vrot.slane %v1682, 4
      %v1684 = vrot.slane %v1405, 5
      %v1685 = vsel %vm555, %v1683, %v1684
      %v1686 = vrot.slane %v1647, 5
      %v1687 = vrot.slane %v1686, 4
      %v1688 = vrot.slane %v1407, 5
      %v1689 = vsel %vm555, %v1687, %v1688
      %v1690 = vrot.slane %v1648, 5
      %v1691 = vrot.slane %v1690, 4
      %v1692 = vrot.slane %v1409, 5
      %v1693 = vsel %vm555, %v1691, %v1692
      %v1694 = vrot.slane %v1649, 5
      %v1695 = vrot.slane %v1694, 4
      %v1696 = vrot.slane %v1411, 5
      %v1697 = vsel %vm555, %v1695, %v1696
      %s1698 = scalar_lea.vmem %s1, 512
      %v1699 = vld [vmem:[%s1698] sm:$0xf]
      %v1700 = vld [vmem:[%s1698 + $0x4] sm:$0xf]
      %v1701 = vld [vmem:[%s1698 + $0x8] sm:$0xf]
      %v1702 = vld [vmem:[%s1698 + $0xc] sm:$0xf]
      %v1703 = vld [vmem:[%s1698 + $0x10] sm:$0xf]
      %v1704 = vld [vmem:[%s1698 + $0x14] sm:$0xf]
      %v1705 = vld [vmem:[%s1698 + $0x18] sm:$0xf]
      %v1706 = vld [vmem:[%s1698 + $0x1c] sm:$0xf]
      %v1707 = vld [vmem:[%s1698 + $0x20] sm:$0xf]
      %v1708 = vld [vmem:[%s1698 + $0x24] sm:$0xf]
      %v1709 = vld [vmem:[%s1698 + $0x28] sm:$0xf]
      %v1710 = vld [vmem:[%s1698 + $0x2c] sm:$0xf]
      %v1711 = vld [vmem:[%s1698 + $0x30] sm:$0xf]
      %v1712 = vld [vmem:[%s1698 + $0x34] sm:$0xf]
      %v1713 = vld [vmem:[%s1698 + $0x38] sm:$0xf]
      %v1714 = vld [vmem:[%s1698 + $0x3c] sm:$0xf]
      %v1715 = vunpack.c.l.b16 %v1669
      %v1716 = vunpack.c.l.b16 %v1673
      %v1717 = vunpack.c.l.b16 %v1677
      %v1718 = vunpack.c.l.b16 %v1681
      %v1719 = vunpack.c.l.b16 %v1685
      %v1720 = vunpack.c.l.b16 %v1689
      %v1721 = vunpack.c.l.b16 %v1693
      %v1722 = vunpack.c.l.b16 %v1697
      %v1723 = vpack.c.b16 %v1716, %v1715
      %v1724 = vpack.c.b16 %v1718, %v1717
      %v1725 = vpack.c.b16 %v1720, %v1719
      %v1726 = vpack.c.b16 %v1722, %v1721
      %v1747 = vunpack.c.l.b16 %v1699
      %v1748 = vunpack.c.l.b16 %v1700
      %v1749 = vunpack.c.l.b16 %v1701
      %v1750 = vunpack.c.l.b16 %v1702
      %v1751 = vunpack.c.l.b16 %v1703
      %v1752 = vunpack.c.l.b16 %v1704
      %v1753 = vunpack.c.l.b16 %v1705
      %v1754 = vunpack.c.l.b16 %v1706
      %v1755 = vunpack.c.l.b16 %v1707
      %v1756 = vunpack.c.l.b16 %v1708
      %v1757 = vunpack.c.l.b16 %v1709
      %v1758 = vunpack.c.l.b16 %v1710
      %v1759 = vunpack.c.l.b16 %v1711
      %v1760 = vunpack.c.l.b16 %v1712
      %v1761 = vunpack.c.l.b16 %v1713
      %v1762 = vunpack.c.l.b16 %v1714
      %v1763 = vpack.c.b16 %v1748, %v1747
      %v1764 = vpack.c.b16 %v1750, %v1749
      %v1765 = vpack.c.b16 %v1752, %v1751
      %v1766 = vpack.c.b16 %v1754, %v1753
      %v1767 = vpack.c.b16 %v1756, %v1755
      %v1768 = vpack.c.b16 %v1758, %v1757
      %v1769 = vpack.c.b16 %v1760, %v1759
      %v1770 = vpack.c.b16 %v1762, %v1761
      %1779 = vmatpush.bf16.msra.mxu0 %v1770
      %1780 = vmatpush.bf16.msra.mxu0 %v1769
      %1781 = vmatpush.bf16.msra.mxu0 %v1768
      %1782 = vmatpush.bf16.msra.mxu0 %v1767
      %1783 = vmatpush.bf16.msra.mxu0 %v1766
      %1784 = vmatpush.bf16.msra.mxu0 %v1765
      %1785 = vmatpush.bf16.msra.mxu0 %v1764
      %1786 = vmatpush.bf16.msra.mxu0 %v1763
      %1787 = vmatmul.bf16.gmra.mxu0 %v1723
      %v1788 = vpop.f32.mrf.mxu0
      %v1789 = vadd.f32 0.0, %v1788
      %v1790 = vpop.f32.mrf.mxu0
      %v1791 = vadd.f32 0.0, %v1790
      %1792 = vmatmul.bf16.gmra.mxu0 %v1724
      %v1793 = vpop.f32.mrf.mxu0
      %v1794 = vadd.f32 0.0, %v1793
      %v1795 = vpop.f32.mrf.mxu0
      %v1796 = vadd.f32 0.0, %v1795
      %1797 = vmatmul.bf16.gmra.mxu0 %v1725
      %v1798 = vpop.f32.mrf.mxu0
      %v1799 = vadd.f32 0.0, %v1798
      %v1800 = vpop.f32.mrf.mxu0
      %v1801 = vadd.f32 0.0, %v1800
      %1802 = vmatmul.bf16.gmra.mxu0 %v1726
      %v1803 = vpop.f32.mrf.mxu0
      %v1804 = vadd.f32 0.0, %v1803
      %v1805 = vpop.f32.mrf.mxu0
      %v1806 = vadd.f32 0.0, %v1805
      %1807 = vdwg.mxu0
      %v1808 = vadd.f32 %v1634, %v1789
      %v1809 = vadd.f32 %v1635, %v1791
      %v1810 = vadd.f32 %v1636, %v1794
      %v1811 = vadd.f32 %v1637, %v1796
      %v1812 = vadd.f32 %v1638, %v1799
      %v1813 = vadd.f32 %v1639, %v1801
      %v1814 = vadd.f32 %v1640, %v1804
      %v1815 = vadd.f32 %v1641, %v1806
      %v1816 = vld [vmem:[%s2] sm:$0x1]
      %v1818 = vperm.slane %v1816, 0
      %v1820 = vadd.f32 %v1808, %v1818
      %v1821 = vadd.f32 %v1809, %v1818
      %v1822 = vadd.f32 %v1810, %v1818
      %v1823 = vadd.f32 %v1811, %v1818
      %v1824 = vadd.f32 %v1812, %v1818
      %v1825 = vadd.f32 %v1813, %v1818
      %v1826 = vadd.f32 %v1814, %v1818
      %v1827 = vadd.f32 %v1815, %v1818
      %v1828 = vmax.f32 %v1820, 0.0
      %v1829 = vmax.f32 %v1821, 0.0
      %v1830 = vmax.f32 %v1822, 0.0
      %v1831 = vmax.f32 %v1823, 0.0
      %v1832 = vmax.f32 %v1824, 0.0
      %v1833 = vmax.f32 %v1825, 0.0
      %v1834 = vmax.f32 %v1826, 0.0
      %v1835 = vmax.f32 %v1827, 0.0
      %v1836 = vpack.c.bf16 %v1828, %v1828
      %v1837 = vpack.c.bf16 %v1829, %v1829
      %v1838 = vpack.c.bf16 %v1830, %v1830
      %v1839 = vpack.c.bf16 %v1831, %v1831
      %v1840 = vpack.c.bf16 %v1832, %v1832
      %v1841 = vpack.c.bf16 %v1833, %v1833
      %v1842 = vpack.c.bf16 %v1834, %v1834
      %v1843 = vpack.c.bf16 %v1835, %v1835
      %1844 = vst [vmem:[%s170] sm:$0xf] %v1836
      %1845 = vst [vmem:[%s170 + $0x4] sm:$0xf] %v1837
      %1846 = vst [vmem:[%s170 + $0x8] sm:$0xf] %v1838
      %1847 = vst [vmem:[%s170 + $0xc] sm:$0xf] %v1839
      %1848 = vst [vmem:[%s170 + $0x10] sm:$0xf] %v1840
      %1849 = vst [vmem:[%s170 + $0x14] sm:$0xf] %v1841
      %1850 = vst [vmem:[%s170 + $0x18] sm:$0xf] %v1842
      %1851 = vst [vmem:[%s170 + $0x1c] sm:$0xf] %v1843
      %p1852 = scmp.lt.s32.totalorder %s14, 1
      %s1853 = scalar_select %p1852, %s14, 1
      %s1854 = smul.addr %s1853, 8
      %s1855 = smul.addr %s1854, 4
      %s1856 = scalar_lea.vmem %s3, %s1855
      // Predicated region
      $region33: #{_lambda_.12} parent=31 // pred_check
        %p1857 = pneg %p100
      $region34: #{_lambda_.12} parent=31 // pred_check_branch
        %1859 = sbr.rel (%p1857) target = $region36
      $region35: #{_lambda_.12} parent=31 // pred_region
        _
      $region36: #{_lambda_.12} parent=31 // pred_fallthru
        _
    $region32: #{_lambda_.12} parent=5 // pred_fallthru
      _
    %p1860 = scmp.le.s32.totalorder 2, %s9
    // Predicated region
    $region37: #{_lambda_.12} parent=5 // pred_check
      %p1861 = pneg %p1860
    $region38: #{_lambda_.12} parent=5 // pred_check_branch
      %1863 = sbr.rel (%p1861) target = $region40
    $region39: #{_lambda_.12} parent=5 // pred_region
      %s1864 = ssub.s32 %s9, 2
      // Predicated region
      $region41: #{_lambda_.12} parent=39 // pred_check
        %p1865 = pneg %p106
      $region42: #{_lambda_.12} parent=39 // pred_check_branch
        %1867 = sbr.rel (%p1865) target = $region44
      $region43: #{_lambda_.12} parent=39 // pred_region
        %p1868 = scmp.lt.s32.totalorder %s15, 1
        %s1869 = scalar_select %p1868, %s15, 1
        %s1870 = smul.addr %s1869, 8
        %s1871 = smul.addr %s1870, 4
        %s1872 = scalar_lea.vmem %s3, %s1871
      $region44: #{_lambda_.12} parent=39 // pred_fallthru
        _
    $region40: #{_lambda_.12} parent=5 // pred_fallthru
      _
  $region6: #{_lambda_.12} parent=0 // loop_footer
    %s13 = sadd.s32 1, %s9
  $region7: #{_lambda_.12} parent=0 // loop_footer_branch
    %8 = sbr.rel target = $region3
  $region8: #{_lambda_.12} parent=0 // loop_exit
    _

// kernel: _lambda_.17
$region0: #{_lambda_.17}
  #allocation0 [shape = 'u32[]', space=smem, size = 0x4, offset = 0x4, fixed_abs, tag = 'smem constant byte address 0x4 - core index']
  #allocation1 [shape = 'u32[72,128]{1,0:T(1,128)}', space=vmem, size = 0x9000, scoped, tag = 'internal scratch']
  %s0 = inlined_call_operand.vmem [shape: bf16[2,8,8,128], index: 0, kind: input, shape index: {}]
  %s1 = inlined_call_operand.vmem [shape: bf16[128,128], index: 1, kind: input, shape index: {}]
  %s2 = inlined_call_operand.vmem [shape: f32[1,128], index: 2, kind: input, shape index: {}]
  %s3 = inlined_call_operand.hbm [shape: f32[2,128], index: 3, kind: output, shape index: {}]
  %s4 = sld [smem:[#allocation0]]
  $region22: #{_lambda_.17} parent=0
    _
  %s6 = ssub.s32 1, %s4
  %s7 = scalar_select 0, %s6, %s4
  $region1: #{_lambda_.17} parent=0
    #allocation2 [shape = 'u8[1024]{0}', space=vmem, size = 0x400, scoped, tag = 'output window, operand 0, single buffered']
    #allocation3 [shape = 's32[1]{0}', space=sflag, size = 0x4, scoped, tag = 'scoped memory for _lambda_.17']
    %8 = vsyncpa [#allocation3], 0
    // Predicated region
    $region2: #{_lambda_.17} parent=1 // pred_check
      _
    $region3: #{_lambda_.17} parent=1 // pred_check_branch
      %10 = sbr.rel (0) target = $region5
    $region4: #{_lambda_.17} parent=1 // pred_region
      _
    $region5: #{_lambda_.17} parent=1 // pred_fallthru
      _
    // Predicated region
    $region6: #{_lambda_.17} parent=1 // pred_check
      _
    $region7: #{_lambda_.17} parent=1 // pred_check_branch
      %12 = sbr.rel (0) target = $region9
    $region8: #{_lambda_.17} parent=1 // pred_region
      _
    $region9: #{_lambda_.17} parent=1 // pred_fallthru
      _
    // Predicated region
    $region10: #{_lambda_.17} parent=1 // pred_check
      _
    $region11: #{_lambda_.17} parent=1 // pred_check_branch
      %14 = sbr.rel (0) target = $region13
    $region12: #{_lambda_.17} parent=1 // pred_region
      _
    $region13: #{_lambda_.17} parent=1 // pred_fallthru
      _
    %v15 = vld [vmem:[%s0] sm:$0xf]
    %v16 = vld [vmem:[%s0 + $0x4] sm:$0xf]
    %v17 = vld [vmem:[%s0 + $0x8] sm:$0xf]
    %v18 = vld [vmem:[%s0 + $0xc] sm:$0xf]
    %v19 = vld [vmem:[%s0 + $0x10] sm:$0xf]
    %v20 = vld [vmem:[%s0 + $0x14] sm:$0xf]
    %v21 = vld [vmem:[%s0 + $0x18] sm:$0xf]
    %v22 = vld [vmem:[%s0 + $0x1c] sm:$0xf]
    %v23 = vld [vmem:[%s0 + $0x20] sm:$0xf]
    %v24 = vld [vmem:[%s0 + $0x24] sm:$0xf]
    %v25 = vld [vmem:[%s0 + $0x28] sm:$0xf]
    %v26 = vld [vmem:[%s0 + $0x2c] sm:$0xf]
    %v27 = vld [vmem:[%s0 + $0x30] sm:$0xf]
    %v28 = vld [vmem:[%s0 + $0x34] sm:$0xf]
    %v29 = vld [vmem:[%s0 + $0x38] sm:$0xf]
    %v30 = vld [vmem:[%s0 + $0x3c] sm:$0xf]
    %v31 = vunpack.c.l.bf16 %v15
    %v32 = vunpack.c.l.bf16 %v16
    %v33 = vunpack.c.l.bf16 %v17
    %v34 = vunpack.c.l.bf16 %v18
    %v35 = vunpack.c.l.bf16 %v19
    %v36 = vunpack.c.l.bf16 %v20
    %v37 = vunpack.c.l.bf16 %v21
    %v38 = vunpack.c.l.bf16 %v22
    %v39 = vunpack.c.l.bf16 %v23
    %v40 = vunpack.c.l.bf16 %v24
    %v41 = vunpack.c.l.bf16 %v25
    %v42 = vunpack.c.l.bf16 %v26
    %v43 = vunpack.c.l.bf16 %v27
    %v44 = vunpack.c.l.bf16 %v28
    %v45 = vunpack.c.l.bf16 %v29
    %v46 = vunpack.c.l.bf16 %v30
    %v47 = vmax.f32 %v31, %v33
    %v48 = vmax.f32 %v32, %v34
    %v49 = vmax.f32 %v47, %v35
    %v50 = vmax.f32 %v48, %v36
    %v51 = vmax.f32 %v49, %v37
    %v52 = vmax.f32 %v50, %v38
    %v53 = vmax.f32 %v51, %v52
    %v54 = vrot.slane %v53, 4
    %v55 = vmax.f32 %v53, %v54
    %v56 = vrot.slane %v55, 2
    %v57 = vmax.f32 %v55, %v56
    %v58 = vrot.slane %v57, 1
    %v59 = vmax.f32 %v57, %v58
    %v60 = vmax.f32 %v39, %v41
    %v61 = vmax.f32 %v40, %v42
    %v62 = vmax.f32 %v60, %v43
    %v63 = vmax.f32 %v61, %v44
    %v64 = vmax.f32 %v62, %v45
    %v65 = vmax.f32 %v63, %v46
    %v66 = vmax.f32 %v64, %v65
    %v67 = vrot.slane %v66, 4
    %v68 = vmax.f32 %v66, %v67
    %v69 = vrot.slane %v68, 2
    %v70 = vmax.f32 %v68, %v69
    %v71 = vrot.slane %v70, 1
    %v72 = vmax.f32 %v70, %v71
    %v73 = vpack.c.bf16 %v59, %v59
    %v74 = vpack.c.bf16 %v72, %v72
    %v75 = vld [vmem:[%s1] sm:$0xf]
    %v76 = vld [vmem:[%s1 + $0x4] sm:$0xf]
    %v77 = vld [vmem:[%s1 + $0x8] sm:$0xf]
    %v78 = vld [vmem:[%s1 + $0xc] sm:$0xf]
    %v79 = vld [vmem:[%s1 + $0x10] sm:$0xf]
    %v80 = vld [vmem:[%s1 + $0x14] sm:$0xf]
    %v81 = vld [vmem:[%s1 + $0x18] sm:$0xf]
    %v82 = vld [vmem:[%s1 + $0x1c] sm:$0xf]
    %v83 = vld [vmem:[%s1 + $0x20] sm:$0xf]
    %v84 = vld [vmem:[%s1 + $0x24] sm:$0xf]
    %v85 = vld [vmem:[%s1 + $0x28] sm:$0xf]
    %v86 = vld [vmem:[%s1 + $0x2c] sm:$0xf]
    %v87 = vld [vmem:[%s1 + $0x30] sm:$0xf]
    %v88 = vld [vmem:[%s1 + $0x34] sm:$0xf]
    %v89 = vld [vmem:[%s1 + $0x38] sm:$0xf]
    %v90 = vld [vmem:[%s1 + $0x3c] sm:$0xf]
    %v91 = vld [vmem:[%s2] sm:$0x1]
    %v93 = vperm.slane %v91, 0
    %v97 = vunpack.c.l.b16 %v73
    %v98 = vunpack.c.l.b16 %v74
    %vm99 = vcmask 1041409
    %v100 = vsel %vm99, %v98, %v97
    %v101 = vpack.c.b16 %v100, %v100
    %v119 = vunpack.c.l.b16 %v75
    %v120 = vunpack.c.l.b16 %v76
    %v121 = vunpack.c.l.b16 %v77
    %v122 = vunpack.c.l.b16 %v78
    %v123 = vunpack.c.l.b16 %v79
    %v124 = vunpack.c.l.b16 %v80
    %v125 = vunpack.c.l.b16 %v81
    %v126 = vunpack.c.l.b16 %v82
    %v127 = vunpack.c.l.b16 %v83
    %v128 = vunpack.c.l.b16 %v84
    %v129 = vunpack.c.l.b16 %v85
    %v130 = vunpack.c.l.b16 %v86
    %v131 = vunpack.c.l.b16 %v87
    %v132 = vunpack.c.l.b16 %v88
    %v133 = vunpack.c.l.b16 %v89
    %v134 = vunpack.c.l.b16 %v90
    %v135 = vpack.c.b16 %v120, %v119
    %v136 = vpack.c.b16 %v122, %v121
    %v137 = vpack.c.b16 %v124, %v123
    %v138 = vpack.c.b16 %v126, %v125
    %v139 = vpack.c.b16 %v128, %v127
    %v140 = vpack.c.b16 %v130, %v129
    %v141 = vpack.c.b16 %v132, %v131
    %v142 = vpack.c.b16 %v134, %v133
    %151 = vmatpush.bf16.msra.mxu0 %v142
    %152 = vmatpush.bf16.msra.mxu0 %v141
    %153 = vmatpush.bf16.msra.mxu0 %v140
    %154 = vmatpush.bf16.msra.mxu0 %v139
    %155 = vmatpush.bf16.msra.mxu0 %v138
    %156 = vmatpush.bf16.msra.mxu0 %v137
    %157 = vmatpush.bf16.msra.mxu0 %v136
    %158 = vmatpush.bf16.msra.mxu0 %v135
    %159 = vmatmul.bf16.gmra.mxu0 %v101
    %v160 = vpop.f32.mrf.mxu0
    %v161 = vadd.f32 %v93, %v160
    %v162 = vpop.f32.mrf.mxu0
    %163 = vdwg.mxu0
    %164 = vst [vmem:[#allocation2] sm:$0x3] %v161
    // Predicated region
    $region14: #{_lambda_.17} parent=1 // pred_check
      _
    $region15: #{_lambda_.17} parent=1 // pred_check_branch
      %166 = sbr.rel (0) target = $region17
    $region16: #{_lambda_.17} parent=1 // pred_region
      %168 = vsyncadd [#allocation3], 0
      %s170 = sshll.u32 [#allocation2], 4
      %s171 = int_to_ptr.vmem [resolvable:$true] %s170
      %s172 = sshll.u32 %s3, 4
      %s173 = int_to_ptr.hbm [resolvable:$true] %s172
      %175 = dma.vmem_to_hbm [thread:$0]  %s171, 32, %s173, [#allocation3]
    $region17: #{_lambda_.17} parent=1 // pred_fallthru
      _
    // Predicated region
    $region18: #{_lambda_.17} parent=1 // pred_check
      _
    $region19: #{_lambda_.17} parent=1 // pred_check_branch
      %177 = sbr.rel (0) target = $region21
    $region20: #{_lambda_.17} parent=1 // pred_region
      %179 = dma.done [#allocation3], 32
    $region21: #{_lambda_.17} parent=1 // pred_fallthru
      _
    %180 = vsyncpa [#allocation3], 1

</llo_original>
